<compile_context>
chip_gen: v7x
topology: tpu7x:2x2x1
jax: 0.10.0
libtpu: 0.0.40
codegen_flags: <defaults>
</compile_context>

<pallas_src>
import math

import jax
import jax.numpy as jnp
from jax.experimental import pallas as pl
from jax.experimental.pallas import tpu as pltpu


def _layer_norm(h, gamma, beta, eps):
    """LayerNorm over the last axis, computed in f32."""
    mu = jnp.mean(h, axis=-1, keepdims=True)
    hc = h - mu
    var = jnp.mean(hc * hc, axis=-1, keepdims=True)
    inv = jax.lax.rsqrt(var + eps)
    return hc * inv * gamma + beta


def _pick_batch_tile(B, S, target_rows=256):
    """Largest divisor of B whose row count Tb*S stays near `target_rows`
    (feeds the MXU M dimension), while keeping >= 2 grid steps when B allows it
    so both v7x TensorCores get work (no-op on single-TC v5e/v6e)."""
    divisors = [d for d in range(1, B + 1) if B % d == 0]
    tb = 1
    for d in divisors:
        if d * S <= max(target_rows, S):
            tb = d
    if B // tb < 2:
        smaller = [d for d in divisors if B // d >= 2]
        if smaller:
            tb = smaller[-1]
    return tb


def _vmem_limit_bytes(batch_tile, S, H, ffn_tile, compute_dtype):
    """Rough per-step VMEM need (single-buffered weights, double-buffered x/out,
    in-kernel f32 temporaries), doubled for headroom, clamped to [16, 64] MiB."""
    cdb = jnp.dtype(compute_dtype).itemsize
    M = batch_tile * S
    weights = (3 * H * H + H * H + 4 * H * H + 4 * H * H) * cdb   # wqkv, wo, w1, w2
    small = (3 * H + H + 4 * H + H + 4 * H) * 4                   # biases + LN params
    io = 2 * 2 * (M * H * cdb)                                    # x + out, double-buffered
    scratch = 4 * (3 * M * H            # qkv (f32)
                   + batch_tile * S * S  # one head of scores (f32)
                   + M * ffn_tile        # one FFN chunk (f32)
                   + 4 * M * H)          # attn_out / h1 / ffn acc / h2 (f32)
    need = weights + small + io + scratch
    return int(min(64 * 2 ** 20, max(2 * need, 16 * 2 ** 20)))


def make_transformer_layer_kernel(seq_len, hidden_dim, num_heads, batch_tile,
                                  ffn_tile, compute_dtype=jnp.bfloat16, eps=1e-5):
    S, H = seq_len, hidden_dim
    nh = num_heads
    hd = H // nh
    Tb = batch_tile
    M = Tb * S
    FF = 4 * H
    cd = compute_dtype

    def kernel(x_ref,
               wqkv_ref, bqkv_ref, wo_ref, bo_ref,
               w1_ref, b1_ref, w2_ref, b2_ref,
               g1_ref, be1_ref, g2_ref, be2_ref,
               o_ref):
        # ---- inputs: fold the batch tile into the matmul M dimension --------
        x_lp = x_ref[...].reshape(M, H)      # (Tb*S, H) bf16, major-dim merge (free)
        x_f32 = x_lp.astype(jnp.float32)     # residual path in f32

        # ---- fused QKV projection: one (M,H)@(H,3H) MXU pass ----------------
        # 1/sqrt(head_dim) is pre-folded into the Q columns of wqkv/bqkv.
        qkv = jnp.dot(x_lp, wqkv_ref[...],
                      preferred_element_type=jnp.float32) + bqkv_ref[...]

        # ---- attention; head-merge fused into the output projection ---------
        # Per-head static loop: lane slices at hd boundaries + major-dim reshapes
        # only (no nh<->S transposes); each head's output directly feeds an
        # (M,hd)@(hd,H) partial of Wo, so no (S,nh,hd)->(S,H) relayout copy.
        attn_out = jnp.zeros((M, H), jnp.float32)
        for h in range(nh):
            q_h = qkv[:, 0 * H + h * hd:0 * H + (h + 1) * hd].astype(cd).reshape(Tb, S, hd)
            k_h = qkv[:, 1 * H + h * hd:1 * H + (h + 1) * hd].astype(cd).reshape(Tb, S, hd)
            v_h = qkv[:, 2 * H + h * hd:2 * H + (h + 1) * hd].astype(cd).reshape(Tb, S, hd)

            s = jnp.einsum('bqd,bkd->bqk', q_h, k_h,
                           preferred_element_type=jnp.float32)     # (Tb,S,S) f32
            s = s - jnp.max(s, axis=-1, keepdims=True)
            e = jnp.exp(s)
            # Softmax denominator on the EUP (approx=False for tighter parity).
            p = e * pl.reciprocal(jnp.sum(e, axis=-1, keepdims=True), approx=True)
            # TODO(synk): attention/FFN dropout is identity in eval mode; training-mode
            #             stochastic dropout (pltpu.prng_*) is not implemented here.
            o_h = jnp.einsum('bqk,bkd->bqd', p.astype(cd), v_h,
                             preferred_element_type=jnp.float32)   # (Tb,S,hd) f32
            # TODO(synk): for long sequences replace this full (Tb,S,S) score path
            #             with a flash-style KV-tiled online softmax.
            attn_out = attn_out + jnp.dot(
                o_h.reshape(M, hd).astype(cd),
                wo_ref[h * hd:(h + 1) * hd, :],
                preferred_element_type=jnp.float32)
        attn_out = attn_out + bo_ref[...]

        # ---- residual + LayerNorm1 (f32) -------------------------------------
        h1 = _layer_norm(x_f32 + attn_out, g1_ref[...], be1_ref[...], eps)
        h1_cd = h1.astype(cd)

        # ---- FeedForward: fc1 -> relu -> fc2, N-tiled over the 4H dimension --
        # Bounds the live f32 intermediate to (M, ffn_tile).
        ffn = jnp.zeros((M, H), jnp.float32)
        for c0 in range(0, FF, ffn_tile):
            w = min(ffn_tile, FF - c0)
            f = jnp.dot(h1_cd, w1_ref[:, c0:c0 + w],
                        preferred_element_type=jnp.float32) + b1_ref[:, c0:c0 + w]
            f = jnp.maximum(f, 0.0)
            ffn = ffn + jnp.dot(f.astype(cd), w2_ref[c0:c0 + w, :],
                                preferred_element_type=jnp.float32)
        ffn = ffn + b2_ref[...]

        # ---- residual + LayerNorm2 (f32) --------------------------------------
        h2 = _layer_norm(h1 + ffn, g2_ref[...], be2_ref[...], eps)

        o_ref[...] = h2.reshape(Tb, S, H).astype(o_ref.dtype)

    return kernel


def prepare_params(params, num_heads, compute_dtype=jnp.bfloat16):
    """One-time parameter prep (do NOT re-run per forward call):
      * fuse Q/K/V into a single (H, 3H) projection,
      * fold 1/sqrt(head_dim) into the Q columns (weight and bias),
      * cast matmul weights to the MXU compute dtype (bf16) once; biases and
        LayerNorm parameters stay f32.
    Returns the flat tuple of kernel operands."""
    H = params["wq"].shape[0]
    hd = H // num_heads
    scale = 1.0 / math.sqrt(float(hd))
    cd = compute_dtype

    wqkv = jnp.concatenate([params["wq"] * scale, params["wk"], params["wv"]], axis=1)
    bqkv = jnp.concatenate([params["bq"] * scale, params["bk"], params["bv"]], axis=1)

    return (
        wqkv.astype(cd), bqkv.astype(jnp.float32),
        params["wo"].astype(cd), params["bo"].astype(jnp.float32),
        params["w1"].astype(cd), params["b1"].astype(jnp.float32),
        params["w2"].astype(cd), params["b2"].astype(jnp.float32),
        params["g1"].astype(jnp.float32), params["beta1"].astype(jnp.float32),
        params["g2"].astype(jnp.float32), params["beta2"].astype(jnp.float32),
    )


def transformer_layer(x, prepared, num_heads, *, compute_dtype=jnp.bfloat16,
                      out_dtype=jnp.bfloat16, batch_tile=None, ffn_tile=2048):
    """x: (B, S, H) float32, prepared: output of prepare_params.
    Returns (B, S, H) in out_dtype (bf16 by default; cast outside if f32 needed)."""
    B, S, H = x.shape
    assert H % num_heads == 0
    Tb = batch_tile if batch_tile is not None else _pick_batch_tile(B, S)
    assert B % Tb == 0

    FF = 4 * H
    if FF <= ffn_tile:
        ffn_tile = FF                       # single chunk at small H
    else:
        ffn_tile = max(128, (ffn_tile // 128) * 128)   # lane-aligned chunks

    kernel = make_transformer_layer_kernel(S, H, num_heads, Tb, ffn_tile,
                                           compute_dtype)
    vmem_limit = _vmem_limit_bytes(Tb, S, H, ffn_tile, compute_dtype)
    x_cd = x.astype(compute_dtype)

    def call(single_buffer_weights):
        def const_spec(a):
            # Constant block over the batch grid: loaded once, reused each step.
            if single_buffer_weights:
                # Constant index_map -> nothing to prefetch; single-buffer to
                # halve the resident weight footprint in VMEM.
                return pl.BlockSpec(a.shape, lambda b: (0,) * a.ndim,
                                    pipeline_mode=pl.Buffered(1))
            return pl.BlockSpec(a.shape, lambda b: (0,) * a.ndim)

        in_specs = [pl.BlockSpec((Tb, S, H), lambda b: (b, 0, 0))]
        in_specs += [const_spec(a) for a in prepared]

        return pl.pallas_call(
            kernel,
            out_shape=jax.ShapeDtypeStruct((B, S, H), out_dtype),
            grid_spec=pltpu.PrefetchScalarGridSpec(
                num_scalar_prefetch=0,
                grid=(B // Tb,),
                in_specs=in_specs,
                out_specs=pl.BlockSpec((Tb, S, H), lambda b: (b, 0, 0)),
            ),
            compiler_params=pltpu.CompilerParams(
                dimension_semantics=("parallel",),
                vmem_limit_bytes=vmem_limit),
        )(x_cd, *prepared)

    try:
        return jax.block_until_ready(call(single_buffer_weights=True))
    except Exception:
        # Fallback if this jax version rejects pipeline_mode=pl.Buffered(1):
        # default double buffering (correct, slightly more VMEM).
        return call(single_buffer_weights=False)


def init_params(key, hidden_dim):
    """Deterministic synthetic init (uniform, like nn.Linear's default scale)."""
    H = hidden_dim
    ks = jax.random.split(key, 12)

    def linear(kw, kb, n_in, n_out):
        bound = 1.0 / math.sqrt(n_in)
        w = jax.random.uniform(kw, (n_in, n_out), jnp.float32, -bound, bound)
        b = jax.random.uniform(kb, (1, n_out), jnp.float32, -bound, bound)
        return w, b

    wq, bq = linear(ks[0], ks[1], H, H)
    wk, bk = linear(ks[2], ks[3], H, H)
    wv, bv = linear(ks[4], ks[5], H, H)
    wo, bo = linear(ks[6], ks[7], H, H)
    w1, b1 = linear(ks[8], ks[9], H, 4 * H)
    w2, b2 = linear(ks[10], ks[11], 4 * H, H)

    return {
        "wq": wq, "bq": bq, "wk": wk, "bk": bk, "wv": wv, "bv": bv,
        "wo": wo, "bo": bo, "w1": w1, "b1": b1, "w2": w2, "b2": b2,
        # nn.LayerNorm defaults: weight=1, bias=0.
        "g1": jnp.ones((1, H), jnp.float32), "beta1": jnp.zeros((1, H), jnp.float32),
        "g2": jnp.ones((1, H), jnp.float32), "beta2": jnp.zeros((1, H), jnp.float32),
    }


def reference_transformer_layer(x, params, num_heads, *,
                                compute_dtype=jnp.bfloat16, eps=1e-5):
    """Pure-JAX reference mirroring the PyTorch forward (eval mode) with the
    kernel's mixed precision (bf16 MXU inputs, f32 accumulation / softmax / LN)."""
    B, S, H = x.shape
    nh = num_heads
    hd = H // nh
    cd = compute_dtype
    scale = 1.0 / math.sqrt(float(hd))

    def mm(a, w):
        return jnp.dot(a.astype(cd), w.astype(cd),
                       preferred_element_type=jnp.float32)

    x_lp = x.astype(cd)
    x_f32 = x_lp.astype(jnp.float32)

    q = mm(x_lp, params["wq"]) + params["bq"]
    k = mm(x_lp, params["wk"]) + params["bk"]
    v = mm(x_lp, params["wv"]) + params["bv"]

    def split_heads(t):  # (B,S,H) f32 -> (B,nh,S,hd) compute dtype
        return t.astype(cd).reshape(B, S, nh, hd).transpose(0, 2, 1, 3)

    qh, kh, vh = split_heads(q), split_heads(k), split_heads(v)
    s = jnp.einsum('bhqd,bhkd->bhqk', qh, kh,
                   preferred_element_type=jnp.float32) * scale
    s = s - jnp.max(s, axis=-1, keepdims=True)
    e = jnp.exp(s)
    p = e / jnp.sum(e, axis=-1, keepdims=True)
    attn = jnp.einsum('bhqk,bhkd->bhqd', p.astype(cd), vh,
                      preferred_element_type=jnp.float32)
    attn = attn.transpose(0, 2, 1, 3).reshape(B, S, H)
    attn_out = mm(attn, params["wo"]) + params["bo"]

    h1 = _layer_norm(x_f32 + attn_out, params["g1"], params["beta1"], eps)
    f = jnp.maximum(mm(h1, params["w1"]) + params["b1"], 0.0)
    f = mm(f, params["w2"]) + params["b2"]
    h2 = _layer_norm(h1 + f, params["g2"], params["beta2"], eps)
    return h2


if __name__ == "__main__":
    # Small but TPU-friendly shapes: H multiple of 128 (lane-dense), head_dim=128.
    batch, seq, hidden, num_heads = 2, 16, 256, 2

    key = jax.random.PRNGKey(0)
    kx, kp = jax.random.split(key)
    x = jax.random.normal(kx, (batch, seq, hidden), jnp.float32)
    params = init_params(kp, hidden)
    prepared = prepare_params(params, num_heads)   # one-time: fuse, fold scale, cast bf16

    out = transformer_layer(x, prepared, num_heads)
    out = jax.block_until_ready(out)

    ref = reference_transformer_layer(x, params, num_heads)
    assert out.shape == (batch, seq, hidden)
    out_f32 = out.astype(jnp.float32)
    max_err = jnp.max(jnp.abs(out_f32 - ref))
    assert jnp.allclose(out_f32, ref, atol=3e-2, rtol=3e-2), (
        f"mismatch vs reference (max abs err {max_err})")

    print("KERNEL_OK")
</pallas_src>

<mosaic_0001>
module attributes {stable_mosaic.version = 11 : i64} {
  func.func @kernel(%arg0: i32, %arg1: memref<1x16x256xbf16, #tpu.memory_space<vmem>>, %arg2: memref<256x768xbf16, #tpu.memory_space<vmem>>, %arg3: memref<1x768xf32, #tpu.memory_space<vmem>>, %arg4: memref<256x256xbf16, #tpu.memory_space<vmem>>, %arg5: memref<1x256xf32, #tpu.memory_space<vmem>>, %arg6: memref<256x1024xbf16, #tpu.memory_space<vmem>>, %arg7: memref<1x1024xf32, #tpu.memory_space<vmem>>, %arg8: memref<1024x256xbf16, #tpu.memory_space<vmem>>, %arg9: memref<1x256xf32, #tpu.memory_space<vmem>>, %arg10: memref<1x256xf32, #tpu.memory_space<vmem>>, %arg11: memref<1x256xf32, #tpu.memory_space<vmem>>, %arg12: memref<1x256xf32, #tpu.memory_space<vmem>>, %arg13: memref<1x256xf32, #tpu.memory_space<vmem>>, %arg14: memref<1x16x256xbf16, #tpu.memory_space<vmem>>) attributes {dimension_semantics = [#tpu.dimension_semantics<parallel>], iteration_bounds = array<i64: 2>, scalar_prefetch = 0 : i64, scratch_operands = 0 : i64, tpu.core_type = #tpu.core_type<tc>, window_params = [{transform_indices = @transform_0, window_bounds = array<i64: 1, 16, 256>}, {pipeline_mode = #tpu.pipeline_mode<synchronous>, transform_indices = @transform_1, window_bounds = array<i64: 256, 768>}, {pipeline_mode = #tpu.pipeline_mode<synchronous>, transform_indices = @transform_2, window_bounds = array<i64: 1, 768>}, {pipeline_mode = #tpu.pipeline_mode<synchronous>, transform_indices = @transform_3, window_bounds = array<i64: 256, 256>}, {pipeline_mode = #tpu.pipeline_mode<synchronous>, transform_indices = @transform_4, window_bounds = array<i64: 1, 256>}, {pipeline_mode = #tpu.pipeline_mode<synchronous>, transform_indices = @transform_5, window_bounds = array<i64: 256, 1024>}, {pipeline_mode = #tpu.pipeline_mode<synchronous>, transform_indices = @transform_6, window_bounds = array<i64: 1, 1024>}, {pipeline_mode = #tpu.pipeline_mode<synchronous>, transform_indices = @transform_7, window_bounds = array<i64: 1024, 256>}, {pipeline_mode = #tpu.pipeline_mode<synchronous>, transform_indices = @transform_8, window_bounds = array<i64: 1, 256>}, {pipeline_mode = #tpu.pipeline_mode<synchronous>, transform_indices = @transform_9, window_bounds = array<i64: 1, 256>}, {pipeline_mode = #tpu.pipeline_mode<synchronous>, transform_indices = @transform_10, window_bounds = array<i64: 1, 256>}, {pipeline_mode = #tpu.pipeline_mode<synchronous>, transform_indices = @transform_11, window_bounds = array<i64: 1, 256>}, {pipeline_mode = #tpu.pipeline_mode<synchronous>, transform_indices = @transform_12, window_bounds = array<i64: 1, 256>}, {transform_indices = @transform_13, window_bounds = array<i64: 1, 16, 256>}]} {
    %c0 = arith.constant 0 : index
    %c0_0 = arith.constant 0 : index
    %c0_1 = arith.constant 0 : index
    %0 = vector.load %arg1[%c0, %c0_0, %c0_1] : memref<1x16x256xbf16, #tpu.memory_space<vmem>>, vector<1x16x256xbf16>
    %1 = vector.shape_cast %0 : vector<1x16x256xbf16> to vector<16x256xbf16>
    %2 = arith.extf %1 : vector<16x256xbf16> to vector<16x256xf32>
    %c0_2 = arith.constant 0 : index
    %c0_3 = arith.constant 0 : index
    %3 = vector.load %arg2[%c0_2, %c0_3] : memref<256x768xbf16, #tpu.memory_space<vmem>>, vector<256x768xbf16>
    %cst = arith.constant dense<0.000000e+00> : vector<16x768xf32>
    %4 = tpu.matmul %1, %3, %cst {dimension_numbers = #tpu.dot_dimension_numbers<[1], [0], [0], [1], [0, 0, 1, 1], [], []>} : vector<16x256xbf16>, vector<256x768xbf16>, vector<16x768xf32> -> vector<16x768xf32>
    %c0_4 = arith.constant 0 : index
    %c0_5 = arith.constant 0 : index
    %5 = vector.load %arg3[%c0_4, %c0_5] : memref<1x768xf32, #tpu.memory_space<vmem>>, vector<1x768xf32>
    %6 = vector.broadcast %5 : vector<1x768xf32> to vector<16x768xf32>
    %7 = arith.addf %4, %6 : vector<16x768xf32>
    %cst_6 = arith.constant 0.000000e+00 : f32
    %8 = vector.broadcast %cst_6 : f32 to vector<16x256xf32>
    %9 = vector.extract_strided_slice %7 {offsets = [0, 0], sizes = [16, 128], strides = [1, 1]} : vector<16x768xf32> to vector<16x128xf32>
    %10 = arith.truncf %9 : vector<16x128xf32> to vector<16x128xbf16>
    %11 = vector.shape_cast %10 : vector<16x128xbf16> to vector<1x16x128xbf16>
    %12 = vector.extract_strided_slice %7 {offsets = [0, 256], sizes = [16, 128], strides = [1, 1]} : vector<16x768xf32> to vector<16x128xf32>
    %13 = arith.truncf %12 : vector<16x128xf32> to vector<16x128xbf16>
    %14 = vector.shape_cast %13 : vector<16x128xbf16> to vector<1x16x128xbf16>
    %15 = vector.extract_strided_slice %7 {offsets = [0, 512], sizes = [16, 128], strides = [1, 1]} : vector<16x768xf32> to vector<16x128xf32>
    %16 = arith.truncf %15 : vector<16x128xf32> to vector<16x128xbf16>
    %17 = vector.shape_cast %16 : vector<16x128xbf16> to vector<1x16x128xbf16>
    "tpu.trace_start"() <{level = 10 : i32, message = "bqd,bkd->bqk"}> : () -> ()
    %cst_7 = arith.constant dense<0.000000e+00> : vector<1x16x16xf32>
    %18 = tpu.matmul %11, %14, %cst_7 {dimension_numbers = #tpu.dot_dimension_numbers<[2], [2], [1], [1], [0, 0, 0, 1, 1, 1], [0], [0]>} : vector<1x16x128xbf16>, vector<1x16x128xbf16>, vector<1x16x16xf32> -> vector<1x16x16xf32>
    "tpu.trace_stop"() : () -> ()
    %cst_8 = arith.constant dense<0xFF800000> : vector<1x16xf32>
    %19 = vector.multi_reduction <maximumf>, %18, %cst_8 [2] : vector<1x16x16xf32> to vector<1x16xf32>
    %20 = vector.shape_cast %19 : vector<1x16xf32> to vector<1x16x1xf32>
    %21 = vector.broadcast %20 : vector<1x16x1xf32> to vector<1x16x16xf32>
    %22 = arith.subf %18, %21 : vector<1x16x16xf32>
    %23 = math.exp %22 : vector<1x16x16xf32>
    %cst_9 = arith.constant dense<0.000000e+00> : vector<1x16xf32>
    %24 = vector.multi_reduction <add>, %23, %cst_9 [2] : vector<1x16x16xf32> to vector<1x16xf32>
    %25 = vector.shape_cast %24 : vector<1x16xf32> to vector<1x16x1xf32>
    %26 = tpu.reciprocal %25 {approx = true} : vector<1x16x1xf32> -> vector<1x16x1xf32>
    %27 = vector.broadcast %26 : vector<1x16x1xf32> to vector<1x16x16xf32>
    %28 = arith.mulf %23, %27 : vector<1x16x16xf32>
    %29 = arith.truncf %28 : vector<1x16x16xf32> to vector<1x16x16xbf16>
    "tpu.trace_start"() <{level = 10 : i32, message = "bqk,bkd->bqd"}> : () -> ()
    %cst_10 = arith.constant dense<0.000000e+00> : vector<1x16x128xf32>
    %30 = tpu.matmul %29, %17, %cst_10 {dimension_numbers = #tpu.dot_dimension_numbers<[2], [1], [1], [2], [0, 0, 0, 1, 1, 2], [0], [0]>} : vector<1x16x16xbf16>, vector<1x16x128xbf16>, vector<1x16x128xf32> -> vector<1x16x128xf32>
    "tpu.trace_stop"() : () -> ()
    %31 = vector.shape_cast %30 : vector<1x16x128xf32> to vector<16x128xf32>
    %32 = arith.truncf %31 : vector<16x128xf32> to vector<16x128xbf16>
    %c0_11 = arith.constant 0 : index
    %c0_12 = arith.constant 0 : index
    %33 = vector.load %arg4[%c0_11, %c0_12] : memref<256x256xbf16, #tpu.memory_space<vmem>>, vector<128x256xbf16>
    %cst_13 = arith.constant dense<0.000000e+00> : vector<16x256xf32>
    %34 = tpu.matmul %32, %33, %cst_13 {dimension_numbers = #tpu.dot_dimension_numbers<[1], [0], [0], [1], [0, 0, 1, 1], [], []>} : vector<16x128xbf16>, vector<128x256xbf16>, vector<16x256xf32> -> vector<16x256xf32>
    %35 = arith.addf %8, %34 : vector<16x256xf32>
    %36 = vector.extract_strided_slice %7 {offsets = [0, 128], sizes = [16, 128], strides = [1, 1]} : vector<16x768xf32> to vector<16x128xf32>
    %37 = arith.truncf %36 : vector<16x128xf32> to vector<16x128xbf16>
    %38 = vector.shape_cast %37 : vector<16x128xbf16> to vector<1x16x128xbf16>
    %39 = vector.extract_strided_slice %7 {offsets = [0, 384], sizes = [16, 128], strides = [1, 1]} : vector<16x768xf32> to vector<16x128xf32>
    %40 = arith.truncf %39 : vector<16x128xf32> to vector<16x128xbf16>
    %41 = vector.shape_cast %40 : vector<16x128xbf16> to vector<1x16x128xbf16>
    %42 = vector.extract_strided_slice %7 {offsets = [0, 640], sizes = [16, 128], strides = [1, 1]} : vector<16x768xf32> to vector<16x128xf32>
    %43 = arith.truncf %42 : vector<16x128xf32> to vector<16x128xbf16>
    %44 = vector.shape_cast %43 : vector<16x128xbf16> to vector<1x16x128xbf16>
    "tpu.trace_start"() <{level = 10 : i32, message = "bqd,bkd->bqk"}> : () -> ()
    %cst_14 = arith.constant dense<0.000000e+00> : vector<1x16x16xf32>
    %45 = tpu.matmul %38, %41, %cst_14 {dimension_numbers = #tpu.dot_dimension_numbers<[2], [2], [1], [1], [0, 0, 0, 1, 1, 1], [0], [0]>} : vector<1x16x128xbf16>, vector<1x16x128xbf16>, vector<1x16x16xf32> -> vector<1x16x16xf32>
    "tpu.trace_stop"() : () -> ()
    %cst_15 = arith.constant dense<0xFF800000> : vector<1x16xf32>
    %46 = vector.multi_reduction <maximumf>, %45, %cst_15 [2] : vector<1x16x16xf32> to vector<1x16xf32>
    %47 = vector.shape_cast %46 : vector<1x16xf32> to vector<1x16x1xf32>
    %48 = vector.broadcast %47 : vector<1x16x1xf32> to vector<1x16x16xf32>
    %49 = arith.subf %45, %48 : vector<1x16x16xf32>
    %50 = math.exp %49 : vector<1x16x16xf32>
    %cst_16 = arith.constant dense<0.000000e+00> : vector<1x16xf32>
    %51 = vector.multi_reduction <add>, %50, %cst_16 [2] : vector<1x16x16xf32> to vector<1x16xf32>
    %52 = vector.shape_cast %51 : vector<1x16xf32> to vector<1x16x1xf32>
    %53 = tpu.reciprocal %52 {approx = true} : vector<1x16x1xf32> -> vector<1x16x1xf32>
    %54 = vector.broadcast %53 : vector<1x16x1xf32> to vector<1x16x16xf32>
    %55 = arith.mulf %50, %54 : vector<1x16x16xf32>
    %56 = arith.truncf %55 : vector<1x16x16xf32> to vector<1x16x16xbf16>
    "tpu.trace_start"() <{level = 10 : i32, message = "bqk,bkd->bqd"}> : () -> ()
    %cst_17 = arith.constant dense<0.000000e+00> : vector<1x16x128xf32>
    %57 = tpu.matmul %56, %44, %cst_17 {dimension_numbers = #tpu.dot_dimension_numbers<[2], [1], [1], [2], [0, 0, 0, 1, 1, 2], [0], [0]>} : vector<1x16x16xbf16>, vector<1x16x128xbf16>, vector<1x16x128xf32> -> vector<1x16x128xf32>
    "tpu.trace_stop"() : () -> ()
    %58 = vector.shape_cast %57 : vector<1x16x128xf32> to vector<16x128xf32>
    %59 = arith.truncf %58 : vector<16x128xf32> to vector<16x128xbf16>
    %c128 = arith.constant 128 : index
    %c0_18 = arith.constant 0 : index
    %60 = vector.load %arg4[%c128, %c0_18] : memref<256x256xbf16, #tpu.memory_space<vmem>>, vector<128x256xbf16>
    %cst_19 = arith.constant dense<0.000000e+00> : vector<16x256xf32>
    %61 = tpu.matmul %59, %60, %cst_19 {dimension_numbers = #tpu.dot_dimension_numbers<[1], [0], [0], [1], [0, 0, 1, 1], [], []>} : vector<16x128xbf16>, vector<128x256xbf16>, vector<16x256xf32> -> vector<16x256xf32>
    %62 = arith.addf %35, %61 : vector<16x256xf32>
    %c0_20 = arith.constant 0 : index
    %c0_21 = arith.constant 0 : index
    %63 = vector.load %arg5[%c0_20, %c0_21] : memref<1x256xf32, #tpu.memory_space<vmem>>, vector<1x256xf32>
    %64 = vector.broadcast %63 : vector<1x256xf32> to vector<16x256xf32>
    %65 = arith.addf %62, %64 : vector<16x256xf32>
    %66 = arith.addf %2, %65 : vector<16x256xf32>
    %c0_22 = arith.constant 0 : index
    %c0_23 = arith.constant 0 : index
    %67 = vector.load %arg10[%c0_22, %c0_23] : memref<1x256xf32, #tpu.memory_space<vmem>>, vector<1x256xf32>
    %c0_24 = arith.constant 0 : index
    %c0_25 = arith.constant 0 : index
    %68 = vector.load %arg11[%c0_24, %c0_25] : memref<1x256xf32, #tpu.memory_space<vmem>>, vector<1x256xf32>
    %cst_26 = arith.constant dense<0.000000e+00> : vector<16xf32>
    %69 = vector.multi_reduction <add>, %66, %cst_26 [1] : vector<16x256xf32> to vector<16xf32>
    %70 = vector.shape_cast %69 : vector<16xf32> to vector<16x1xf32>
    %cst_27 = arith.constant 2.560000e+02 : f32
    %71 = vector.broadcast %cst_27 : f32 to vector<16x1xf32>
    %72 = arith.divf %70, %71 : vector<16x1xf32>
    %73 = vector.broadcast %72 : vector<16x1xf32> to vector<16x256xf32>
    %74 = arith.subf %66, %73 : vector<16x256xf32>
    %75 = arith.mulf %74, %74 : vector<16x256xf32>
    %cst_28 = arith.constant dense<0.000000e+00> : vector<16xf32>
    %76 = vector.multi_reduction <add>, %75, %cst_28 [1] : vector<16x256xf32> to vector<16xf32>
    %77 = vector.shape_cast %76 : vector<16xf32> to vector<16x1xf32>
    %cst_29 = arith.constant 2.560000e+02 : f32
    %78 = vector.broadcast %cst_29 : f32 to vector<16x1xf32>
    %79 = arith.divf %77, %78 : vector<16x1xf32>
    %cst_30 = arith.constant 9.99999974E-6 : f32
    %80 = vector.broadcast %cst_30 : f32 to vector<16x1xf32>
    %81 = arith.addf %79, %80 : vector<16x1xf32>
    %82 = math.rsqrt %81 : vector<16x1xf32>
    %83 = vector.broadcast %82 : vector<16x1xf32> to vector<16x256xf32>
    %84 = arith.mulf %74, %83 : vector<16x256xf32>
    %85 = vector.broadcast %67 : vector<1x256xf32> to vector<16x256xf32>
    %86 = arith.mulf %84, %85 : vector<16x256xf32>
    %87 = vector.broadcast %68 : vector<1x256xf32> to vector<16x256xf32>
    %88 = arith.addf %86, %87 : vector<16x256xf32>
    %89 = arith.truncf %88 : vector<16x256xf32> to vector<16x256xbf16>
    %cst_31 = arith.constant 0.000000e+00 : f32
    %90 = vector.broadcast %cst_31 : f32 to vector<16x256xf32>
    %c0_32 = arith.constant 0 : index
    %c0_33 = arith.constant 0 : index
    %91 = vector.load %arg6[%c0_32, %c0_33] : memref<256x1024xbf16, #tpu.memory_space<vmem>>, vector<256x1024xbf16>
    %cst_34 = arith.constant dense<0.000000e+00> : vector<16x1024xf32>
    %92 = tpu.matmul %89, %91, %cst_34 {dimension_numbers = #tpu.dot_dimension_numbers<[1], [0], [0], [1], [0, 0, 1, 1], [], []>} : vector<16x256xbf16>, vector<256x1024xbf16>, vector<16x1024xf32> -> vector<16x1024xf32>
    %c0_35 = arith.constant 0 : index
    %c0_36 = arith.constant 0 : index
    %93 = vector.load %arg7[%c0_35, %c0_36] : memref<1x1024xf32, #tpu.memory_space<vmem>>, vector<1x1024xf32>
    %94 = vector.broadcast %93 : vector<1x1024xf32> to vector<16x1024xf32>
    %95 = arith.addf %92, %94 : vector<16x1024xf32>
    %cst_37 = arith.constant 0.000000e+00 : f32
    %96 = vector.broadcast %cst_37 : f32 to vector<16x1024xf32>
    %97 = arith.maximumf %95, %96 : vector<16x1024xf32>
    %98 = arith.truncf %97 : vector<16x1024xf32> to vector<16x1024xbf16>
    %c0_38 = arith.constant 0 : index
    %c0_39 = arith.constant 0 : index
    %99 = vector.load %arg8[%c0_38, %c0_39] : memref<1024x256xbf16, #tpu.memory_space<vmem>>, vector<1024x256xbf16>
    %cst_40 = arith.constant dense<0.000000e+00> : vector<16x256xf32>
    %100 = tpu.matmul %98, %99, %cst_40 {dimension_numbers = #tpu.dot_dimension_numbers<[1], [0], [0], [1], [0, 0, 1, 1], [], []>} : vector<16x1024xbf16>, vector<1024x256xbf16>, vector<16x256xf32> -> vector<16x256xf32>
    %101 = arith.addf %90, %100 : vector<16x256xf32>
    %c0_41 = arith.constant 0 : index
    %c0_42 = arith.constant 0 : index
    %102 = vector.load %arg9[%c0_41, %c0_42] : memref<1x256xf32, #tpu.memory_space<vmem>>, vector<1x256xf32>
    %103 = vector.broadcast %102 : vector<1x256xf32> to vector<16x256xf32>
    %104 = arith.addf %101, %103 : vector<16x256xf32>
    %105 = arith.addf %88, %104 : vector<16x256xf32>
    %c0_43 = arith.constant 0 : index
    %c0_44 = arith.constant 0 : index
    %106 = vector.load %arg12[%c0_43, %c0_44] : memref<1x256xf32, #tpu.memory_space<vmem>>, vector<1x256xf32>
    %c0_45 = arith.constant 0 : index
    %c0_46 = arith.constant 0 : index
    %107 = vector.load %arg13[%c0_45, %c0_46] : memref<1x256xf32, #tpu.memory_space<vmem>>, vector<1x256xf32>
    %cst_47 = arith.constant dense<0.000000e+00> : vector<16xf32>
    %108 = vector.multi_reduction <add>, %105, %cst_47 [1] : vector<16x256xf32> to vector<16xf32>
    %109 = vector.shape_cast %108 : vector<16xf32> to vector<16x1xf32>
    %cst_48 = arith.constant 2.560000e+02 : f32
    %110 = vector.broadcast %cst_48 : f32 to vector<16x1xf32>
    %111 = arith.divf %109, %110 : vector<16x1xf32>
    %112 = vector.broadcast %111 : vector<16x1xf32> to vector<16x256xf32>
    %113 = arith.subf %105, %112 : vector<16x256xf32>
    %114 = arith.mulf %113, %113 : vector<16x256xf32>
    %cst_49 = arith.constant dense<0.000000e+00> : vector<16xf32>
    %115 = vector.multi_reduction <add>, %114, %cst_49 [1] : vector<16x256xf32> to vector<16xf32>
    %116 = vector.shape_cast %115 : vector<16xf32> to vector<16x1xf32>
    %cst_50 = arith.constant 2.560000e+02 : f32
    %117 = vector.broadcast %cst_50 : f32 to vector<16x1xf32>
    %118 = arith.divf %116, %117 : vector<16x1xf32>
    %cst_51 = arith.constant 9.99999974E-6 : f32
    %119 = vector.broadcast %cst_51 : f32 to vector<16x1xf32>
    %120 = arith.addf %118, %119 : vector<16x1xf32>
    %121 = math.rsqrt %120 : vector<16x1xf32>
    %122 = vector.broadcast %121 : vector<16x1xf32> to vector<16x256xf32>
    %123 = arith.mulf %113, %122 : vector<16x256xf32>
    %124 = vector.broadcast %106 : vector<1x256xf32> to vector<16x256xf32>
    %125 = arith.mulf %123, %124 : vector<16x256xf32>
    %126 = vector.broadcast %107 : vector<1x256xf32> to vector<16x256xf32>
    %127 = arith.addf %125, %126 : vector<16x256xf32>
    %128 = vector.shape_cast %127 : vector<16x256xf32> to vector<1x16x256xf32>
    %129 = arith.truncf %128 : vector<1x16x256xf32> to vector<1x16x256xbf16>
    %c0_52 = arith.constant 0 : index
    %c0_53 = arith.constant 0 : index
    %c0_54 = arith.constant 0 : index
    %130 = vector.load %arg14[%c0_52, %c0_53, %c0_54] : memref<1x16x256xbf16, #tpu.memory_space<vmem>>, vector<1x16x256xbf16>
    tpu.vector_store %arg14[%c0_52, %c0_53, %c0_54], %129 {strides = array<i32>} : memref<1x16x256xbf16, #tpu.memory_space<vmem>>, vector<1x16x256xbf16>,
    return
  }
  func.func @transform_0(%arg0: i32) -> (i32, i32, i32) {
    %c0_i32 = arith.constant 0 : i32
    %c0_i32_0 = arith.constant 0 : i32
    %c0_i32_1 = arith.constant 0 : i32
    return %arg0, %c0_i32, %c0_i32_0 : i32, i32, i32
  }
  func.func @transform_1(%arg0: i32) -> (i32, i32) {
    %c0_i32 = arith.constant 0 : i32
    %c0_i32_0 = arith.constant 0 : i32
    %c0_i32_1 = arith.constant 0 : i32
    return %c0_i32, %c0_i32_0 : i32, i32
  }
  func.func @transform_2(%arg0: i32) -> (i32, i32) {
    %c0_i32 = arith.constant 0 : i32
    %c0_i32_0 = arith.constant 0 : i32
    %c0_i32_1 = arith.constant 0 : i32
    return %c0_i32, %c0_i32_0 : i32, i32
  }
  func.func @transform_3(%arg0: i32) -> (i32, i32) {
    %c0_i32 = arith.constant 0 : i32
    %c0_i32_0 = arith.constant 0 : i32
    %c0_i32_1 = arith.constant 0 : i32
    return %c0_i32, %c0_i32_0 : i32, i32
  }
  func.func @transform_4(%arg0: i32) -> (i32, i32) {
    %c0_i32 = arith.constant 0 : i32
    %c0_i32_0 = arith.constant 0 : i32
    %c0_i32_1 = arith.constant 0 : i32
    return %c0_i32, %c0_i32_0 : i32, i32
  }
  func.func @transform_5(%arg0: i32) -> (i32, i32) {
    %c0_i32 = arith.constant 0 : i32
    %c0_i32_0 = arith.constant 0 : i32
    %c0_i32_1 = arith.constant 0 : i32
    return %c0_i32, %c0_i32_0 : i32, i32
  }
  func.func @transform_6(%arg0: i32) -> (i32, i32) {
    %c0_i32 = arith.constant 0 : i32
    %c0_i32_0 = arith.constant 0 : i32
    %c0_i32_1 = arith.constant 0 : i32
    return %c0_i32, %c0_i32_0 : i32, i32
  }
  func.func @transform_7(%arg0: i32) -> (i32, i32) {
    %c0_i32 = arith.constant 0 : i32
    %c0_i32_0 = arith.constant 0 : i32
    %c0_i32_1 = arith.constant 0 : i32
    return %c0_i32, %c0_i32_0 : i32, i32
  }
  func.func @transform_8(%arg0: i32) -> (i32, i32) {
    %c0_i32 = arith.constant 0 : i32
    %c0_i32_0 = arith.constant 0 : i32
    %c0_i32_1 = arith.constant 0 : i32
    return %c0_i32, %c0_i32_0 : i32, i32
  }
  func.func @transform_9(%arg0: i32) -> (i32, i32) {
    %c0_i32 = arith.constant 0 : i32
    %c0_i32_0 = arith.constant 0 : i32
    %c0_i32_1 = arith.constant 0 : i32
    return %c0_i32, %c0_i32_0 : i32, i32
  }
  func.func @transform_10(%arg0: i32) -> (i32, i32) {
    %c0_i32 = arith.constant 0 : i32
    %c0_i32_0 = arith.constant 0 : i32
    %c0_i32_1 = arith.constant 0 : i32
    return %c0_i32, %c0_i32_0 : i32, i32
  }
  func.func @transform_11(%arg0: i32) -> (i32, i32) {
    %c0_i32 = arith.constant 0 : i32
    %c0_i32_0 = arith.constant 0 : i32
    %c0_i32_1 = arith.constant 0 : i32
    return %c0_i32, %c0_i32_0 : i32, i32
  }
  func.func @transform_12(%arg0: i32) -> (i32, i32) {
    %c0_i32 = arith.constant 0 : i32
    %c0_i32_0 = arith.constant 0 : i32
    %c0_i32_1 = arith.constant 0 : i32
    return %c0_i32, %c0_i32_0 : i32, i32
  }
  func.func @transform_13(%arg0: i32) -> (i32, i32, i32) {
    %c0_i32 = arith.constant 0 : i32
    %c0_i32_0 = arith.constant 0 : i32
    %c0_i32_1 = arith.constant 0 : i32
    return %arg0, %c0_i32, %c0_i32_0 : i32, i32, i32
  }
}

module attributes {stable_mosaic.version = 11 : i64} {
  func.func @kernel(%arg0: i32, %arg1: memref<1x16x256xbf16, #tpu.memory_space<vmem>>, %arg2: memref<256x768xbf16, #tpu.memory_space<vmem>>, %arg3: memref<1x768xf32, #tpu.memory_space<vmem>>, %arg4: memref<256x256xbf16, #tpu.memory_space<vmem>>, %arg5: memref<1x256xf32, #tpu.memory_space<vmem>>, %arg6: memref<256x1024xbf16, #tpu.memory_space<vmem>>, %arg7: memref<1x1024xf32, #tpu.memory_space<vmem>>, %arg8: memref<1024x256xbf16, #tpu.memory_space<vmem>>, %arg9: memref<1x256xf32, #tpu.memory_space<vmem>>, %arg10: memref<1x256xf32, #tpu.memory_space<vmem>>, %arg11: memref<1x256xf32, #tpu.memory_space<vmem>>, %arg12: memref<1x256xf32, #tpu.memory_space<vmem>>, %arg13: memref<1x256xf32, #tpu.memory_space<vmem>>, %arg14: memref<1x16x256xbf16, #tpu.memory_space<vmem>>) attributes {dimension_semantics = [#tpu.dimension_semantics<parallel>], iteration_bounds = array<i64: 2>, scalar_prefetch = 0 : i64, scratch_operands = 0 : i64, tpu.core_type = #tpu.core_type<tc>, window_params = [{transform_indices = @transform_0, window_bounds = array<i64: 1, 16, 256>}, {pipeline_mode = #tpu.pipeline_mode<synchronous>, transform_indices = @transform_1, window_bounds = array<i64: 256, 768>}, {pipeline_mode = #tpu.pipeline_mode<synchronous>, transform_indices = @transform_2, window_bounds = array<i64: 1, 768>}, {pipeline_mode = #tpu.pipeline_mode<synchronous>, transform_indices = @transform_3, window_bounds = array<i64: 256, 256>}, {pipeline_mode = #tpu.pipeline_mode<synchronous>, transform_indices = @transform_4, window_bounds = array<i64: 1, 256>}, {pipeline_mode = #tpu.pipeline_mode<synchronous>, transform_indices = @transform_5, window_bounds = array<i64: 256, 1024>}, {pipeline_mode = #tpu.pipeline_mode<synchronous>, transform_indices = @transform_6, window_bounds = array<i64: 1, 1024>}, {pipeline_mode = #tpu.pipeline_mode<synchronous>, transform_indices = @transform_7, window_bounds = array<i64: 1024, 256>}, {pipeline_mode = #tpu.pipeline_mode<synchronous>, transform_indices = @transform_8, window_bounds = array<i64: 1, 256>}, {pipeline_mode = #tpu.pipeline_mode<synchronous>, transform_indices = @transform_9, window_bounds = array<i64: 1, 256>}, {pipeline_mode = #tpu.pipeline_mode<synchronous>, transform_indices = @transform_10, window_bounds = array<i64: 1, 256>}, {pipeline_mode = #tpu.pipeline_mode<synchronous>, transform_indices = @transform_11, window_bounds = array<i64: 1, 256>}, {pipeline_mode = #tpu.pipeline_mode<synchronous>, transform_indices = @transform_12, window_bounds = array<i64: 1, 256>}, {transform_indices = @transform_13, window_bounds = array<i64: 1, 16, 256>}]} {
    %c0 = arith.constant 0 : index
    %c0_0 = arith.constant 0 : index
    %c0_1 = arith.constant 0 : index
    %0 = vector.load %arg1[%c0, %c0_0, %c0_1] : memref<1x16x256xbf16, #tpu.memory_space<vmem>>, vector<1x16x256xbf16>
    %1 = vector.shape_cast %0 : vector<1x16x256xbf16> to vector<16x256xbf16>
    %2 = arith.extf %1 : vector<16x256xbf16> to vector<16x256xf32>
    %c0_2 = arith.constant 0 : index
    %c0_3 = arith.constant 0 : index
    %3 = vector.load %arg2[%c0_2, %c0_3] : memref<256x768xbf16, #tpu.memory_space<vmem>>, vector<256x768xbf16>
    %cst = arith.constant dense<0.000000e+00> : vector<16x768xf32>
    %4 = tpu.matmul %1, %3, %cst {dimension_numbers = #tpu.dot_dimension_numbers<[1], [0], [0], [1], [0, 0, 1, 1], [], []>} : vector<16x256xbf16>, vector<256x768xbf16>, vector<16x768xf32> -> vector<16x768xf32>
    %c0_4 = arith.constant 0 : index
    %c0_5 = arith.constant 0 : index
    %5 = vector.load %arg3[%c0_4, %c0_5] : memref<1x768xf32, #tpu.memory_space<vmem>>, vector<1x768xf32>
    %6 = vector.broadcast %5 : vector<1x768xf32> to vector<16x768xf32>
    %7 = arith.addf %4, %6 : vector<16x768xf32>
    %cst_6 = arith.constant 0.000000e+00 : f32
    %8 = vector.broadcast %cst_6 : f32 to vector<16x256xf32>
    %9 = vector.extract_strided_slice %7 {offsets = [0, 0], sizes = [16, 128], strides = [1, 1]} : vector<16x768xf32> to vector<16x128xf32>
    %10 = arith.truncf %9 : vector<16x128xf32> to vector<16x128xbf16>
    %11 = vector.shape_cast %10 : vector<16x128xbf16> to vector<1x16x128xbf16>
    %12 = vector.extract_strided_slice %7 {offsets = [0, 256], sizes = [16, 128], strides = [1, 1]} : vector<16x768xf32> to vector<16x128xf32>
    %13 = arith.truncf %12 : vector<16x128xf32> to vector<16x128xbf16>
    %14 = vector.shape_cast %13 : vector<16x128xbf16> to vector<1x16x128xbf16>
    %15 = vector.extract_strided_slice %7 {offsets = [0, 512], sizes = [16, 128], strides = [1, 1]} : vector<16x768xf32> to vector<16x128xf32>
    %16 = arith.truncf %15 : vector<16x128xf32> to vector<16x128xbf16>
    %17 = vector.shape_cast %16 : vector<16x128xbf16> to vector<1x16x128xbf16>
    "tpu.trace_start"() <{level = 10 : i32, message = "bqd,bkd->bqk"}> : () -> ()
    %cst_7 = arith.constant dense<0.000000e+00> : vector<1x16x16xf32>
    %18 = tpu.matmul %11, %14, %cst_7 {dimension_numbers = #tpu.dot_dimension_numbers<[2], [2], [1], [1], [0, 0, 0, 1, 1, 1], [0], [0]>} : vector<1x16x128xbf16>, vector<1x16x128xbf16>, vector<1x16x16xf32> -> vector<1x16x16xf32>
    "tpu.trace_stop"() : () -> ()
    %cst_8 = arith.constant dense<0xFF800000> : vector<1x16xf32>
    %19 = vector.multi_reduction <maximumf>, %18, %cst_8 [2] : vector<1x16x16xf32> to vector<1x16xf32>
    %20 = vector.shape_cast %19 : vector<1x16xf32> to vector<1x16x1xf32>
    %21 = vector.broadcast %20 : vector<1x16x1xf32> to vector<1x16x16xf32>
    %22 = arith.subf %18, %21 : vector<1x16x16xf32>
    %23 = math.exp %22 : vector<1x16x16xf32>
    %cst_9 = arith.constant dense<0.000000e+00> : vector<1x16xf32>
    %24 = vector.multi_reduction <add>, %23, %cst_9 [2] : vector<1x16x16xf32> to vector<1x16xf32>
    %25 = vector.shape_cast %24 : vector<1x16xf32> to vector<1x16x1xf32>
    %26 = tpu.reciprocal %25 {approx = true} : vector<1x16x1xf32> -> vector<1x16x1xf32>
    %27 = vector.broadcast %26 : vector<1x16x1xf32> to vector<1x16x16xf32>
    %28 = arith.mulf %23, %27 : vector<1x16x16xf32>
    %29 = arith.truncf %28 : vector<1x16x16xf32> to vector<1x16x16xbf16>
    "tpu.trace_start"() <{level = 10 : i32, message = "bqk,bkd->bqd"}> : () -> ()
    %cst_10 = arith.constant dense<0.000000e+00> : vector<1x16x128xf32>
    %30 = tpu.matmul %29, %17, %cst_10 {dimension_numbers = #tpu.dot_dimension_numbers<[2], [1], [1], [2], [0, 0, 0, 1, 1, 2], [0], [0]>} : vector<1x16x16xbf16>, vector<1x16x128xbf16>, vector<1x16x128xf32> -> vector<1x16x128xf32>
    "tpu.trace_stop"() : () -> ()
    %31 = vector.shape_cast %30 : vector<1x16x128xf32> to vector<16x128xf32>
    %32 = arith.truncf %31 : vector<16x128xf32> to vector<16x128xbf16>
    %c0_11 = arith.constant 0 : index
    %c0_12 = arith.constant 0 : index
    %33 = vector.load %arg4[%c0_11, %c0_12] : memref<256x256xbf16, #tpu.memory_space<vmem>>, vector<128x256xbf16>
    %cst_13 = arith.constant dense<0.000000e+00> : vector<16x256xf32>
    %34 = tpu.matmul %32, %33, %cst_13 {dimension_numbers = #tpu.dot_dimension_numbers<[1], [0], [0], [1], [0, 0, 1, 1], [], []>} : vector<16x128xbf16>, vector<128x256xbf16>, vector<16x256xf32> -> vector<16x256xf32>
    %35 = arith.addf %8, %34 : vector<16x256xf32>
    %36 = vector.extract_strided_slice %7 {offsets = [0, 128], sizes = [16, 128], strides = [1, 1]} : vector<16x768xf32> to vector<16x128xf32>
    %37 = arith.truncf %36 : vector<16x128xf32> to vector<16x128xbf16>
    %38 = vector.shape_cast %37 : vector<16x128xbf16> to vector<1x16x128xbf16>
    %39 = vector.extract_strided_slice %7 {offsets = [0, 384], sizes = [16, 128], strides = [1, 1]} : vector<16x768xf32> to vector<16x128xf32>
    %40 = arith.truncf %39 : vector<16x128xf32> to vector<16x128xbf16>
    %41 = vector.shape_cast %40 : vector<16x128xbf16> to vector<1x16x128xbf16>
    %42 = vector.extract_strided_slice %7 {offsets = [0, 640], sizes = [16, 128], strides = [1, 1]} : vector<16x768xf32> to vector<16x128xf32>
    %43 = arith.truncf %42 : vector<16x128xf32> to vector<16x128xbf16>
    %44 = vector.shape_cast %43 : vector<16x128xbf16> to vector<1x16x128xbf16>
    "tpu.trace_start"() <{level = 10 : i32, message = "bqd,bkd->bqk"}> : () -> ()
    %cst_14 = arith.constant dense<0.000000e+00> : vector<1x16x16xf32>
    %45 = tpu.matmul %38, %41, %cst_14 {dimension_numbers = #tpu.dot_dimension_numbers<[2], [2], [1], [1], [0, 0, 0, 1, 1, 1], [0], [0]>} : vector<1x16x128xbf16>, vector<1x16x128xbf16>, vector<1x16x16xf32> -> vector<1x16x16xf32>
    "tpu.trace_stop"() : () -> ()
    %cst_15 = arith.constant dense<0xFF800000> : vector<1x16xf32>
    %46 = vector.multi_reduction <maximumf>, %45, %cst_15 [2] : vector<1x16x16xf32> to vector<1x16xf32>
    %47 = vector.shape_cast %46 : vector<1x16xf32> to vector<1x16x1xf32>
    %48 = vector.broadcast %47 : vector<1x16x1xf32> to vector<1x16x16xf32>
    %49 = arith.subf %45, %48 : vector<1x16x16xf32>
    %50 = math.exp %49 : vector<1x16x16xf32>
    %cst_16 = arith.constant dense<0.000000e+00> : vector<1x16xf32>
    %51 = vector.multi_reduction <add>, %50, %cst_16 [2] : vector<1x16x16xf32> to vector<1x16xf32>
    %52 = vector.shape_cast %51 : vector<1x16xf32> to vector<1x16x1xf32>
    %53 = tpu.reciprocal %52 {approx = true} : vector<1x16x1xf32> -> vector<1x16x1xf32>
    %54 = vector.broadcast %53 : vector<1x16x1xf32> to vector<1x16x16xf32>
    %55 = arith.mulf %50, %54 : vector<1x16x16xf32>
    %56 = arith.truncf %55 : vector<1x16x16xf32> to vector<1x16x16xbf16>
    "tpu.trace_start"() <{level = 10 : i32, message = "bqk,bkd->bqd"}> : () -> ()
    %cst_17 = arith.constant dense<0.000000e+00> : vector<1x16x128xf32>
    %57 = tpu.matmul %56, %44, %cst_17 {dimension_numbers = #tpu.dot_dimension_numbers<[2], [1], [1], [2], [0, 0, 0, 1, 1, 2], [0], [0]>} : vector<1x16x16xbf16>, vector<1x16x128xbf16>, vector<1x16x128xf32> -> vector<1x16x128xf32>
    "tpu.trace_stop"() : () -> ()
    %58 = vector.shape_cast %57 : vector<1x16x128xf32> to vector<16x128xf32>
    %59 = arith.truncf %58 : vector<16x128xf32> to vector<16x128xbf16>
    %c128 = arith.constant 128 : index
    %c0_18 = arith.constant 0 : index
    %60 = vector.load %arg4[%c128, %c0_18] : memref<256x256xbf16, #tpu.memory_space<vmem>>, vector<128x256xbf16>
    %cst_19 = arith.constant dense<0.000000e+00> : vector<16x256xf32>
    %61 = tpu.matmul %59, %60, %cst_19 {dimension_numbers = #tpu.dot_dimension_numbers<[1], [0], [0], [1], [0, 0, 1, 1], [], []>} : vector<16x128xbf16>, vector<128x256xbf16>, vector<16x256xf32> -> vector<16x256xf32>
    %62 = arith.addf %35, %61 : vector<16x256xf32>
    %c0_20 = arith.constant 0 : index
    %c0_21 = arith.constant 0 : index
    %63 = vector.load %arg5[%c0_20, %c0_21] : memref<1x256xf32, #tpu.memory_space<vmem>>, vector<1x256xf32>
    %64 = vector.broadcast %63 : vector<1x256xf32> to vector<16x256xf32>
    %65 = arith.addf %62, %64 : vector<16x256xf32>
    %66 = arith.addf %2, %65 : vector<16x256xf32>
    %c0_22 = arith.constant 0 : index
    %c0_23 = arith.constant 0 : index
    %67 = vector.load %arg10[%c0_22, %c0_23] : memref<1x256xf32, #tpu.memory_space<vmem>>, vector<1x256xf32>
    %c0_24 = arith.constant 0 : index
    %c0_25 = arith.constant 0 : index
    %68 = vector.load %arg11[%c0_24, %c0_25] : memref<1x256xf32, #tpu.memory_space<vmem>>, vector<1x256xf32>
    %cst_26 = arith.constant dense<0.000000e+00> : vector<16xf32>
    %69 = vector.multi_reduction <add>, %66, %cst_26 [1] : vector<16x256xf32> to vector<16xf32>
    %70 = vector.shape_cast %69 : vector<16xf32> to vector<16x1xf32>
    %cst_27 = arith.constant 2.560000e+02 : f32
    %71 = vector.broadcast %cst_27 : f32 to vector<16x1xf32>
    %72 = arith.divf %70, %71 : vector<16x1xf32>
    %73 = vector.broadcast %72 : vector<16x1xf32> to vector<16x256xf32>
    %74 = arith.subf %66, %73 : vector<16x256xf32>
    %75 = arith.mulf %74, %74 : vector<16x256xf32>
    %cst_28 = arith.constant dense<0.000000e+00> : vector<16xf32>
    %76 = vector.multi_reduction <add>, %75, %cst_28 [1] : vector<16x256xf32> to vector<16xf32>
    %77 = vector.shape_cast %76 : vector<16xf32> to vector<16x1xf32>
    %cst_29 = arith.constant 2.560000e+02 : f32
    %78 = vector.broadcast %cst_29 : f32 to vector<16x1xf32>
    %79 = arith.divf %77, %78 : vector<16x1xf32>
    %cst_30 = arith.constant 9.99999974E-6 : f32
    %80 = vector.broadcast %cst_30 : f32 to vector<16x1xf32>
    %81 = arith.addf %79, %80 : vector<16x1xf32>
    %82 = math.rsqrt %81 : vector<16x1xf32>
    %83 = vector.broadcast %82 : vector<16x1xf32> to vector<16x256xf32>
    %84 = arith.mulf %74, %83 : vector<16x256xf32>
    %85 = vector.broadcast %67 : vector<1x256xf32> to vector<16x256xf32>
    %86 = arith.mulf %84, %85 : vector<16x256xf32>
    %87 = vector.broadcast %68 : vector<1x256xf32> to vector<16x256xf32>
    %88 = arith.addf %86, %87 : vector<16x256xf32>
    %89 = arith.truncf %88 : vector<16x256xf32> to vector<16x256xbf16>
    %cst_31 = arith.constant 0.000000e+00 : f32
    %90 = vector.broadcast %cst_31 : f32 to vector<16x256xf32>
    %c0_32 = arith.constant 0 : index
    %c0_33 = arith.constant 0 : index
    %91 = vector.load %arg6[%c0_32, %c0_33] : memref<256x1024xbf16, #tpu.memory_space<vmem>>, vector<256x1024xbf16>
    %cst_34 = arith.constant dense<0.000000e+00> : vector<16x1024xf32>
    %92 = tpu.matmul %89, %91, %cst_34 {dimension_numbers = #tpu.dot_dimension_numbers<[1], [0], [0], [1], [0, 0, 1, 1], [], []>} : vector<16x256xbf16>, vector<256x1024xbf16>, vector<16x1024xf32> -> vector<16x1024xf32>
    %c0_35 = arith.constant 0 : index
    %c0_36 = arith.constant 0 : index
    %93 = vector.load %arg7[%c0_35, %c0_36] : memref<1x1024xf32, #tpu.memory_space<vmem>>, vector<1x1024xf32>
    %94 = vector.broadcast %93 : vector<1x1024xf32> to vector<16x1024xf32>
    %95 = arith.addf %92, %94 : vector<16x1024xf32>
    %cst_37 = arith.constant 0.000000e+00 : f32
    %96 = vector.broadcast %cst_37 : f32 to vector<16x1024xf32>
    %97 = arith.maximumf %95, %96 : vector<16x1024xf32>
    %98 = arith.truncf %97 : vector<16x1024xf32> to vector<16x1024xbf16>
    %c0_38 = arith.constant 0 : index
    %c0_39 = arith.constant 0 : index
    %99 = vector.load %arg8[%c0_38, %c0_39] : memref<1024x256xbf16, #tpu.memory_space<vmem>>, vector<1024x256xbf16>
    %cst_40 = arith.constant dense<0.000000e+00> : vector<16x256xf32>
    %100 = tpu.matmul %98, %99, %cst_40 {dimension_numbers = #tpu.dot_dimension_numbers<[1], [0], [0], [1], [0, 0, 1, 1], [], []>} : vector<16x1024xbf16>, vector<1024x256xbf16>, vector<16x256xf32> -> vector<16x256xf32>
    %101 = arith.addf %90, %100 : vector<16x256xf32>
    %c0_41 = arith.constant 0 : index
    %c0_42 = arith.constant 0 : index
    %102 = vector.load %arg9[%c0_41, %c0_42] : memref<1x256xf32, #tpu.memory_space<vmem>>, vector<1x256xf32>
    %103 = vector.broadcast %102 : vector<1x256xf32> to vector<16x256xf32>
    %104 = arith.addf %101, %103 : vector<16x256xf32>
    %105 = arith.addf %88, %104 : vector<16x256xf32>
    %c0_43 = arith.constant 0 : index
    %c0_44 = arith.constant 0 : index
    %106 = vector.load %arg12[%c0_43, %c0_44] : memref<1x256xf32, #tpu.memory_space<vmem>>, vector<1x256xf32>
    %c0_45 = arith.constant 0 : index
    %c0_46 = arith.constant 0 : index
    %107 = vector.load %arg13[%c0_45, %c0_46] : memref<1x256xf32, #tpu.memory_space<vmem>>, vector<1x256xf32>
    %cst_47 = arith.constant dense<0.000000e+00> : vector<16xf32>
    %108 = vector.multi_reduction <add>, %105, %cst_47 [1] : vector<16x256xf32> to vector<16xf32>
    %109 = vector.shape_cast %108 : vector<16xf32> to vector<16x1xf32>
    %cst_48 = arith.constant 2.560000e+02 : f32
    %110 = vector.broadcast %cst_48 : f32 to vector<16x1xf32>
    %111 = arith.divf %109, %110 : vector<16x1xf32>
    %112 = vector.broadcast %111 : vector<16x1xf32> to vector<16x256xf32>
    %113 = arith.subf %105, %112 : vector<16x256xf32>
    %114 = arith.mulf %113, %113 : vector<16x256xf32>
    %cst_49 = arith.constant dense<0.000000e+00> : vector<16xf32>
    %115 = vector.multi_reduction <add>, %114, %cst_49 [1] : vector<16x256xf32> to vector<16xf32>
    %116 = vector.shape_cast %115 : vector<16xf32> to vector<16x1xf32>
    %cst_50 = arith.constant 2.560000e+02 : f32
    %117 = vector.broadcast %cst_50 : f32 to vector<16x1xf32>
    %118 = arith.divf %116, %117 : vector<16x1xf32>
    %cst_51 = arith.constant 9.99999974E-6 : f32
    %119 = vector.broadcast %cst_51 : f32 to vector<16x1xf32>
    %120 = arith.addf %118, %119 : vector<16x1xf32>
    %121 = math.rsqrt %120 : vector<16x1xf32>
    %122 = vector.broadcast %121 : vector<16x1xf32> to vector<16x256xf32>
    %123 = arith.mulf %113, %122 : vector<16x256xf32>
    %124 = vector.broadcast %106 : vector<1x256xf32> to vector<16x256xf32>
    %125 = arith.mulf %123, %124 : vector<16x256xf32>
    %126 = vector.broadcast %107 : vector<1x256xf32> to vector<16x256xf32>
    %127 = arith.addf %125, %126 : vector<16x256xf32>
    %128 = vector.shape_cast %127 : vector<16x256xf32> to vector<1x16x256xf32>
    %129 = arith.truncf %128 : vector<1x16x256xf32> to vector<1x16x256xbf16>
    %c0_52 = arith.constant 0 : index
    %c0_53 = arith.constant 0 : index
    %c0_54 = arith.constant 0 : index
    %130 = vector.load %arg14[%c0_52, %c0_53, %c0_54] : memref<1x16x256xbf16, #tpu.memory_space<vmem>>, vector<1x16x256xbf16>
    tpu.vector_store %arg14[%c0_52, %c0_53, %c0_54], %129 {strides = array<i32>} : memref<1x16x256xbf16, #tpu.memory_space<vmem>>, vector<1x16x256xbf16>,
    return
  }
  func.func @transform_0(%arg0: i32) -> (i32, i32, i32) {
    %c0_i32 = arith.constant 0 : i32
    %c0_i32_0 = arith.constant 0 : i32
    %c0_i32_1 = arith.constant 0 : i32
    return %arg0, %c0_i32, %c0_i32_0 : i32, i32, i32
  }
  func.func @transform_1(%arg0: i32) -> (i32, i32) {
    %c0_i32 = arith.constant 0 : i32
    %c0_i32_0 = arith.constant 0 : i32
    %c0_i32_1 = arith.constant 0 : i32
    return %c0_i32, %c0_i32_0 : i32, i32
  }
  func.func @transform_2(%arg0: i32) -> (i32, i32) {
    %c0_i32 = arith.constant 0 : i32
    %c0_i32_0 = arith.constant 0 : i32
    %c0_i32_1 = arith.constant 0 : i32
    return %c0_i32, %c0_i32_0 : i32, i32
  }
  func.func @transform_3(%arg0: i32) -> (i32, i32) {
    %c0_i32 = arith.constant 0 : i32
    %c0_i32_0 = arith.constant 0 : i32
    %c0_i32_1 = arith.constant 0 : i32
    return %c0_i32, %c0_i32_0 : i32, i32
  }
  func.func @transform_4(%arg0: i32) -> (i32, i32) {
    %c0_i32 = arith.constant 0 : i32
    %c0_i32_0 = arith.constant 0 : i32
    %c0_i32_1 = arith.constant 0 : i32
    return %c0_i32, %c0_i32_0 : i32, i32
  }
  func.func @transform_5(%arg0: i32) -> (i32, i32) {
    %c0_i32 = arith.constant 0 : i32
    %c0_i32_0 = arith.constant 0 : i32
    %c0_i32_1 = arith.constant 0 : i32
    return %c0_i32, %c0_i32_0 : i32, i32
  }
  func.func @transform_6(%arg0: i32) -> (i32, i32) {
    %c0_i32 = arith.constant 0 : i32
    %c0_i32_0 = arith.constant 0 : i32
    %c0_i32_1 = arith.constant 0 : i32
    return %c0_i32, %c0_i32_0 : i32, i32
  }
  func.func @transform_7(%arg0: i32) -> (i32, i32) {
    %c0_i32 = arith.constant 0 : i32
    %c0_i32_0 = arith.constant 0 : i32
    %c0_i32_1 = arith.constant 0 : i32
    return %c0_i32, %c0_i32_0 : i32, i32
  }
  func.func @transform_8(%arg0: i32) -> (i32, i32) {
    %c0_i32 = arith.constant 0 : i32
    %c0_i32_0 = arith.constant 0 : i32
    %c0_i32_1 = arith.constant 0 : i32
    return %c0_i32, %c0_i32_0 : i32, i32
  }
  func.func @transform_9(%arg0: i32) -> (i32, i32) {
    %c0_i32 = arith.constant 0 : i32
    %c0_i32_0 = arith.constant 0 : i32
    %c0_i32_1 = arith.constant 0 : i32
    return %c0_i32, %c0_i32_0 : i32, i32
  }
  func.func @transform_10(%arg0: i32) -> (i32, i32) {
    %c0_i32 = arith.constant 0 : i32
    %c0_i32_0 = arith.constant 0 : i32
    %c0_i32_1 = arith.constant 0 : i32
    return %c0_i32, %c0_i32_0 : i32, i32
  }
  func.func @transform_11(%arg0: i32) -> (i32, i32) {
    %c0_i32 = arith.constant 0 : i32
    %c0_i32_0 = arith.constant 0 : i32
    %c0_i32_1 = arith.constant 0 : i32
    return %c0_i32, %c0_i32_0 : i32, i32
  }
  func.func @transform_12(%arg0: i32) -> (i32, i32) {
    %c0_i32 = arith.constant 0 : i32
    %c0_i32_0 = arith.constant 0 : i32
    %c0_i32_1 = arith.constant 0 : i32
    return %c0_i32, %c0_i32_0 : i32, i32
  }
  func.func @transform_13(%arg0: i32) -> (i32, i32, i32) {
    %c0_i32 = arith.constant 0 : i32
    %c0_i32_0 = arith.constant 0 : i32
    %c0_i32_1 = arith.constant 0 : i32
    return %arg0, %c0_i32, %c0_i32_0 : i32, i32, i32
  }
}

</mosaic_0001>

<llo_original>
// kernel: tpu_custom_call.1
$region0: #{tpu_custom_call.1}
  #allocation0 [shape = 'u32[]', space=smem, size = 0x4, offset = 0x4, fixed_abs, tag = 'smem constant byte address 0x4 - core index']
  #allocation1 [shape = 'u32[144,128]{1,0:T(1,128)}', space=vmem, size = 0x12000, scoped, tag = 'internal scratch']
  %s0 = inlined_call_operand.hbm [shape: bf16[2,16,256], index: 0, kind: input, shape index: {}]
  %s1 = inlined_call_operand.hbm [shape: bf16[256,768], index: 1, kind: input, shape index: {}]
  %s2 = inlined_call_operand.vmem [shape: f32[1,768], index: 2, kind: input, shape index: {}]
  %s3 = inlined_call_operand.hbm [shape: bf16[256,256], index: 3, kind: input, shape index: {}]
  %s4 = inlined_call_operand.hbm [shape: f32[1,256], index: 4, kind: input, shape index: {}]
  %s5 = inlined_call_operand.hbm [shape: bf16[256,1024], index: 5, kind: input, shape index: {}]
  %s6 = inlined_call_operand.vmem [shape: f32[1,1024], index: 6, kind: input, shape index: {}]
  %s7 = inlined_call_operand.hbm [shape: bf16[1024,256], index: 7, kind: input, shape index: {}]
  %s8 = inlined_call_operand.vmem [shape: f32[1,256], index: 8, kind: input, shape index: {}]
  %s9 = inlined_call_operand.vmem [shape: f32[1,256], index: 9, kind: input, shape index: {}]
  %s10 = inlined_call_operand.vmem [shape: f32[1,256], index: 10, kind: input, shape index: {}]
  %s11 = inlined_call_operand.vmem [shape: f32[1,256], index: 11, kind: input, shape index: {}]
  %s12 = inlined_call_operand.vmem [shape: f32[1,256], index: 12, kind: input, shape index: {}]
  %s13 = inlined_call_operand.hbm [shape: bf16[2,16,256], index: 13, kind: output, shape index: {}]
  %s14 = sld [smem:[#allocation0]]
  $region109: #{tpu_custom_call.1} parent=0
    _
  %s16 = ssub.s32 1, %s14
  %s17 = scalar_select 0, %s16, %s14
  $region1: #{tpu_custom_call.1} parent=0
    #allocation2 [shape = 'u8[16384]{0}', space=vmem, size = 0x4000, scoped, tag = 'input window, operand 0']
    #allocation3 [shape = 's32[2]{0}', space=sflag, size = 0x8, scoped, tag = 'scoped memory for tpu_custom_call.1']
    #allocation4 [shape = 's32[2]{0}', space=sflag, size = 0x8, scoped, tag = 'scoped memory for tpu_custom_call.1']
    #allocation5 [shape = 'u8[393216]{0}', space=vmem, size = 0x60000, scoped, tag = 'input window, operand 1, single buffered']
    #allocation6 [shape = 's32[1]{0}', space=sflag, size = 0x4, scoped, tag = 'scoped memory for tpu_custom_call.1']
    #allocation7 [shape = 'u8[131072]{0}', space=vmem, size = 0x20000, scoped, tag = 'input window, operand 3, single buffered']
    #allocation8 [shape = 'u8[1024]{0}', space=vmem, size = 0x400, scoped, tag = 'input window, operand 4, single buffered']
    #allocation9 [shape = 's32[1]{0}', space=sflag, size = 0x4, scoped, tag = 'scoped memory for tpu_custom_call.1']
    #allocation10 [shape = 'u8[524288]{0}', space=vmem, size = 0x80000, scoped, tag = 'input window, operand 5, single buffered']
    #allocation11 [shape = 'u8[524288]{0}', space=vmem, size = 0x80000, scoped, tag = 'input window, operand 7, single buffered']
    #allocation12 [shape = 's32[1]{0}', space=sflag, size = 0x4, scoped, tag = 'scoped memory for tpu_custom_call.1']
    #allocation13 [shape = 'u8[16384]{0}', space=vmem, size = 0x4000, scoped, tag = 'output window, operand 0']
    %18 = vsyncpa [#allocation3], 0
    %s19 = scalar_lea.sflag [#allocation3], 1
    %20 = vsyncpa %s19, 0
    %21 = vsyncpa [#allocation6], 0
    %22 = vsyncpa [#allocation9], 0
    %23 = vsyncpa [#allocation12], 0
    %24 = vsyncpa [#allocation4], 0
    %s25 = scalar_lea.sflag [#allocation4], 1
    %26 = vsyncpa %s25, 0
    loop: start=0, step=1, limit=4
    $region2: #{tpu_custom_call.1} parent=1 // loop_pre_header
      _
    $region3: #{tpu_custom_call.1} parent=1 // loop_header
      %s28 = sphi 0, %s32
      %p29 = scmp.ge.s32.totalorder %s28, 4
      %s38 = sphi 0, %s40
      %s41 = sphi 0, %s38
      %s42 = sphi 0, %s41
      %s58 = sphi 0, %s42
      %s62 = sphi 0, %s62
      %s64 = sphi 0, %s62
      %s65 = sphi 0, %s64
      %s79 = sphi 0, %s65
      %s83 = sphi 0, %s83
      %s85 = sphi 0, %s83
      %s86 = sphi 0, %s85
      %s100 = sphi 0, %s86
      %s104 = sphi 0, %s104
      %s106 = sphi 0, %s104
      %s107 = sphi 0, %s106
      %s121 = sphi 0, %s107
      %s125 = sphi 0, %s125
      %s127 = sphi 0, %s125
      %s128 = sphi 0, %s127
      %s142 = sphi 0, %s128
      %s146 = sphi 0, %s146
      %s148 = sphi 0, %s146
      %s149 = sphi 0, %s148
      %s163 = sphi 0, %s149
      %s167 = sphi 0, %s167
      %s169 = sphi 0, %s167
      %s170 = sphi 0, %s169
      %s184 = sphi 0, %s170
      %s188 = sphi 0, %s188
      %s190 = sphi 0, %s188
      %s191 = sphi 0, %s190
      %s205 = sphi 0, %s191
      %s209 = sphi 0, %s209
      %s211 = sphi 0, %s209
      %s212 = sphi 0, %s211
      %s226 = sphi 0, %s212
      %s230 = sphi 0, %s230
      %s232 = sphi 0, %s230
      %s233 = sphi 0, %s232
      %s247 = sphi 0, %s233
      %s251 = sphi 0, %s251
      %s253 = sphi 0, %s251
      %s254 = sphi 0, %s253
      %s268 = sphi 0, %s254
      %s272 = sphi 0, %s272
      %s274 = sphi 0, %s272
      %s275 = sphi 0, %s274
      %s289 = sphi 0, %s275
      %s293 = sphi 0, %s293
      %s295 = sphi 0, %s293
      %s296 = sphi 0, %s295
      %s310 = sphi 0, %s296
      %s316 = sphi 0, %s318
      %s319 = sphi 0, %s316
      %s320 = sphi 0, %s319
      %s336 = sphi 0, %s320
    $region4: #{tpu_custom_call.1} parent=1 // loop_header_branch
      %31 = sbr.rel (%p29) target = $region8
    $region5: #{tpu_custom_call.1} parent=1 // loop_body
      %s33 = ssub.s32 %s28, 1
      %s34 = ssub.s32 %s28, 2
      %s35 = sadd.s32 %s28, 1
      %s36 = ssub.s32 %s28, %s35
      %p37 = scmp.eq.s32.totalorder %s36, 0
      %s39 = sadd.s32 %s38, 1
      %s40 = scalar_select %p37, %s38, %s39
      %p43 = pneg %p37
      %p44 = scmp.eq.s32.totalorder %s28, 1
      %p45 = por %p43, %p44
      %p46 = scmp.ne.s32.totalorder %s38, %s41
      %p47 = scmp.eq.s32.totalorder %s28, 0
      %p48 = por %p46, %p47
      %p49 = scmp.ne.s32.totalorder %s38, %s41
      %p50 = scmp.eq.s32.totalorder %s33, 1
      %p51 = por %p49, %p50
      %p52 = scmp.ne.s32.totalorder %s41, %s42
      %p53 = scmp.eq.s32.totalorder %s33, 0
      %p54 = por %p52, %p53
      %p55 = scmp.ne.s32.totalorder %s41, %s42
      %p56 = scmp.eq.s32.totalorder %s34, 1
      %p57 = por %p55, %p56
      %p59 = scmp.ne.s32.totalorder %s42, %s58
      %p60 = scmp.eq.s32.totalorder %s34, 0
      %p61 = por %p59, %p60
      %s63 = sadd.s32 %s62, 1
      %p66 = scmp.eq.s32.totalorder %s28, 1
      %p67 = scmp.ne.s32.totalorder %s62, %s64
      %p68 = scmp.eq.s32.totalorder %s28, 0
      %p69 = por %p67, %p68
      %p70 = scmp.ne.s32.totalorder %s62, %s64
      %p71 = scmp.eq.s32.totalorder %s33, 1
      %p72 = por %p70, %p71
      %p73 = scmp.ne.s32.totalorder %s64, %s65
      %p74 = scmp.eq.s32.totalorder %s33, 0
      %p75 = por %p73, %p74
      %p76 = scmp.ne.s32.totalorder %s64, %s65
      %p77 = scmp.eq.s32.totalorder %s34, 1
      %p78 = por %p76, %p77
      %p80 = scmp.ne.s32.totalorder %s65, %s79
      %p81 = scmp.eq.s32.totalorder %s34, 0
      %p82 = por %p80, %p81
      %s84 = sadd.s32 %s83, 1
      %p87 = scmp.eq.s32.totalorder %s28, 1
      %p88 = scmp.ne.s32.totalorder %s83, %s85
      %p89 = scmp.eq.s32.totalorder %s28, 0
      %p90 = por %p88, %p89
      %p91 = scmp.ne.s32.totalorder %s83, %s85
      %p92 = scmp.eq.s32.totalorder %s33, 1
      %p93 = por %p91, %p92
      %p94 = scmp.ne.s32.totalorder %s85, %s86
      %p95 = scmp.eq.s32.totalorder %s33, 0
      %p96 = por %p94, %p95
      %p97 = scmp.ne.s32.totalorder %s85, %s86
      %p98 = scmp.eq.s32.totalorder %s34, 1
      %p99 = por %p97, %p98
      %p101 = scmp.ne.s32.totalorder %s86, %s100
      %p102 = scmp.eq.s32.totalorder %s34, 0
      %p103 = por %p101, %p102
      %s105 = sadd.s32 %s104, 1
      %p108 = scmp.eq.s32.totalorder %s28, 1
      %p109 = scmp.ne.s32.totalorder %s104, %s106
      %p110 = scmp.eq.s32.totalorder %s28, 0
      %p111 = por %p109, %p110
      %p112 = scmp.ne.s32.totalorder %s104, %s106
      %p113 = scmp.eq.s32.totalorder %s33, 1
      %p114 = por %p112, %p113
      %p115 = scmp.ne.s32.totalorder %s106, %s107
      %p116 = scmp.eq.s32.totalorder %s33, 0
      %p117 = por %p115, %p116
      %p118 = scmp.ne.s32.totalorder %s106, %s107
      %p119 = scmp.eq.s32.totalorder %s34, 1
      %p120 = por %p118, %p119
      %p122 = scmp.ne.s32.totalorder %s107, %s121
      %p123 = scmp.eq.s32.totalorder %s34, 0
      %p124 = por %p122, %p123
      %s126 = sadd.s32 %s125, 1
      %p129 = scmp.eq.s32.totalorder %s28, 1
      %p130 = scmp.ne.s32.totalorder %s125, %s127
      %p131 = scmp.eq.s32.totalorder %s28, 0
      %p132 = por %p130, %p131
      %p133 = scmp.ne.s32.totalorder %s125, %s127
      %p134 = scmp.eq.s32.totalorder %s33, 1
      %p135 = por %p133, %p134
      %p136 = scmp.ne.s32.totalorder %s127, %s128
      %p137 = scmp.eq.s32.totalorder %s33, 0
      %p138 = por %p136, %p137
      %p139 = scmp.ne.s32.totalorder %s127, %s128
      %p140 = scmp.eq.s32.totalorder %s34, 1
      %p141 = por %p139, %p140
      %p143 = scmp.ne.s32.totalorder %s128, %s142
      %p144 = scmp.eq.s32.totalorder %s34, 0
      %p145 = por %p143, %p144
      %s147 = sadd.s32 %s146, 1
      %p150 = scmp.eq.s32.totalorder %s28, 1
      %p151 = scmp.ne.s32.totalorder %s146, %s148
      %p152 = scmp.eq.s32.totalorder %s28, 0
      %p153 = por %p151, %p152
      %p154 = scmp.ne.s32.totalorder %s146, %s148
      %p155 = scmp.eq.s32.totalorder %s33, 1
      %p156 = por %p154, %p155
      %p157 = scmp.ne.s32.totalorder %s148, %s149
      %p158 = scmp.eq.s32.totalorder %s33, 0
      %p159 = por %p157, %p158
      %p160 = scmp.ne.s32.totalorder %s148, %s149
      %p161 = scmp.eq.s32.totalorder %s34, 1
      %p162 = por %p160, %p161
      %p164 = scmp.ne.s32.totalorder %s149, %s163
      %p165 = scmp.eq.s32.totalorder %s34, 0
      %p166 = por %p164, %p165
      %s168 = sadd.s32 %s167, 1
      %p171 = scmp.eq.s32.totalorder %s28, 1
      %p172 = scmp.ne.s32.totalorder %s167, %s169
      %p173 = scmp.eq.s32.totalorder %s28, 0
      %p174 = por %p172, %p173
      %p175 = scmp.ne.s32.totalorder %s167, %s169
      %p176 = scmp.eq.s32.totalorder %s33, 1
      %p177 = por %p175, %p176
      %p178 = scmp.ne.s32.totalorder %s169, %s170
      %p179 = scmp.eq.s32.totalorder %s33, 0
      %p180 = por %p178, %p179
      %p181 = scmp.ne.s32.totalorder %s169, %s170
      %p182 = scmp.eq.s32.totalorder %s34, 1
      %p183 = por %p181, %p182
      %p185 = scmp.ne.s32.totalorder %s170, %s184
      %p186 = scmp.eq.s32.totalorder %s34, 0
      %p187 = por %p185, %p186
      %s189 = sadd.s32 %s188, 1
      %p192 = scmp.eq.s32.totalorder %s28, 1
      %p193 = scmp.ne.s32.totalorder %s188, %s190
      %p194 = scmp.eq.s32.totalorder %s28, 0
      %p195 = por %p193, %p194
      %p196 = scmp.ne.s32.totalorder %s188, %s190
      %p197 = scmp.eq.s32.totalorder %s33, 1
      %p198 = por %p196, %p197
      %p199 = scmp.ne.s32.totalorder %s190, %s191
      %p200 = scmp.eq.s32.totalorder %s33, 0
      %p201 = por %p199, %p200
      %p202 = scmp.ne.s32.totalorder %s190, %s191
      %p203 = scmp.eq.s32.totalorder %s34, 1
      %p204 = por %p202, %p203
      %p206 = scmp.ne.s32.totalorder %s191, %s205
      %p207 = scmp.eq.s32.totalorder %s34, 0
      %p208 = por %p206, %p207
      %s210 = sadd.s32 %s209, 1
      %p213 = scmp.eq.s32.totalorder %s28, 1
      %p214 = scmp.ne.s32.totalorder %s209, %s211
      %p215 = scmp.eq.s32.totalorder %s28, 0
      %p216 = por %p214, %p215
      %p217 = scmp.ne.s32.totalorder %s209, %s211
      %p218 = scmp.eq.s32.totalorder %s33, 1
      %p219 = por %p217, %p218
      %p220 = scmp.ne.s32.totalorder %s211, %s212
      %p221 = scmp.eq.s32.totalorder %s33, 0
      %p222 = por %p220, %p221
      %p223 = scmp.ne.s32.totalorder %s211, %s212
      %p224 = scmp.eq.s32.totalorder %s34, 1
      %p225 = por %p223, %p224
      %p227 = scmp.ne.s32.totalorder %s212, %s226
      %p228 = scmp.eq.s32.totalorder %s34, 0
      %p229 = por %p227, %p228
      %s231 = sadd.s32 %s230, 1
      %p234 = scmp.eq.s32.totalorder %s28, 1
      %p235 = scmp.ne.s32.totalorder %s230, %s232
      %p236 = scmp.eq.s32.totalorder %s28, 0
      %p237 = por %p235, %p236
      %p238 = scmp.ne.s32.totalorder %s230, %s232
      %p239 = scmp.eq.s32.totalorder %s33, 1
      %p240 = por %p238, %p239
      %p241 = scmp.ne.s32.totalorder %s232, %s233
      %p242 = scmp.eq.s32.totalorder %s33, 0
      %p243 = por %p241, %p242
      %p244 = scmp.ne.s32.totalorder %s232, %s233
      %p245 = scmp.eq.s32.totalorder %s34, 1
      %p246 = por %p244, %p245
      %p248 = scmp.ne.s32.totalorder %s233, %s247
      %p249 = scmp.eq.s32.totalorder %s34, 0
      %p250 = por %p248, %p249
      %s252 = sadd.s32 %s251, 1
      %p255 = scmp.eq.s32.totalorder %s28, 1
      %p256 = scmp.ne.s32.totalorder %s251, %s253
      %p257 = scmp.eq.s32.totalorder %s28, 0
      %p258 = por %p256, %p257
      %p259 = scmp.ne.s32.totalorder %s251, %s253
      %p260 = scmp.eq.s32.totalorder %s33, 1
      %p261 = por %p259, %p260
      %p262 = scmp.ne.s32.totalorder %s253, %s254
      %p263 = scmp.eq.s32.totalorder %s33, 0
      %p264 = por %p262, %p263
      %p265 = scmp.ne.s32.totalorder %s253, %s254
      %p266 = scmp.eq.s32.totalorder %s34, 1
      %p267 = por %p265, %p266
      %p269 = scmp.ne.s32.totalorder %s254, %s268
      %p270 = scmp.eq.s32.totalorder %s34, 0
      %p271 = por %p269, %p270
      %s273 = sadd.s32 %s272, 1
      %p276 = scmp.eq.s32.totalorder %s28, 1
      %p277 = scmp.ne.s32.totalorder %s272, %s274
      %p278 = scmp.eq.s32.totalorder %s28, 0
      %p279 = por %p277, %p278
      %p280 = scmp.ne.s32.totalorder %s272, %s274
      %p281 = scmp.eq.s32.totalorder %s33, 1
      %p282 = por %p280, %p281
      %p283 = scmp.ne.s32.totalorder %s274, %s275
      %p284 = scmp.eq.s32.totalorder %s33, 0
      %p285 = por %p283, %p284
      %p286 = scmp.ne.s32.totalorder %s274, %s275
      %p287 = scmp.eq.s32.totalorder %s34, 1
      %p288 = por %p286, %p287
      %p290 = scmp.ne.s32.totalorder %s275, %s289
      %p291 = scmp.eq.s32.totalorder %s34, 0
      %p292 = por %p290, %p291
      %s294 = sadd.s32 %s293, 1
      %p297 = scmp.eq.s32.totalorder %s28, 1
      %p298 = scmp.ne.s32.totalorder %s293, %s295
      %p299 = scmp.eq.s32.totalorder %s28, 0
      %p300 = por %p298, %p299
      %p301 = scmp.ne.s32.totalorder %s293, %s295
      %p302 = scmp.eq.s32.totalorder %s33, 1
      %p303 = por %p301, %p302
      %p304 = scmp.ne.s32.totalorder %s295, %s296
      %p305 = scmp.eq.s32.totalorder %s33, 0
      %p306 = por %p304, %p305
      %p307 = scmp.ne.s32.totalorder %s295, %s296
      %p308 = scmp.eq.s32.totalorder %s34, 1
      %p309 = por %p307, %p308
      %p311 = scmp.ne.s32.totalorder %s296, %s310
      %p312 = scmp.eq.s32.totalorder %s34, 0
      %p313 = por %p311, %p312
      %s314 = ssub.s32 %s28, %s35
      %p315 = scmp.eq.s32.totalorder %s314, 0
      %s317 = sadd.s32 %s316, 1
      %s318 = scalar_select %p315, %s316, %s317
      %p321 = pneg %p315
      %p322 = scmp.eq.s32.totalorder %s28, 1
      %p323 = por %p321, %p322
      %p324 = scmp.ne.s32.totalorder %s316, %s319
      %p325 = scmp.eq.s32.totalorder %s28, 0
      %p326 = por %p324, %p325
      %p327 = scmp.ne.s32.totalorder %s316, %s319
      %p328 = scmp.eq.s32.totalorder %s33, 1
      %p329 = por %p327, %p328
      %p330 = scmp.ne.s32.totalorder %s319, %s320
      %p331 = scmp.eq.s32.totalorder %s33, 0
      %p332 = por %p330, %p331
      %p333 = scmp.ne.s32.totalorder %s319, %s320
      %p334 = scmp.eq.s32.totalorder %s34, 1
      %p335 = por %p333, %p334
      %p337 = scmp.ne.s32.totalorder %s320, %s336
      %p338 = scmp.eq.s32.totalorder %s34, 0
      %p339 = por %p337, %p338
      %p340 = scmp.le.s32.totalorder 1, %s28
      %p341 = scmp.lt.s32.totalorder %s28, 3
      %p342 = pnand %p340, %p341
      %p343 = pneg %p342
      // Predicated region
      $region9: #{tpu_custom_call.1} parent=5 // pred_check
        _
      $region10: #{tpu_custom_call.1} parent=5 // pred_check_branch
        %345 = sbr.rel (%p342) target = $region12
      $region11: #{tpu_custom_call.1} parent=5 // pred_region
        %s346 = ssub.s32 %s28, 1
        // Predicated region
        $region13: #{tpu_custom_call.1} parent=11 // pred_check
          %p347 = pneg %p75
        $region14: #{tpu_custom_call.1} parent=11 // pred_check_branch
          %349 = sbr.rel (%p347) target = $region16
        $region15: #{tpu_custom_call.1} parent=11 // pred_region
          %s351 = ssub.s32 12288, 12288
          %352 = vsyncadd [#allocation6], %s351
          %s353 = sshll.u32 [#allocation5], 4
          %s354 = int_to_ptr.vmem [resolvable:$true] %s353
          %359 = dma.hbm_to_vmem [thread:$0]  %s1, 12288, %s354, [#allocation6], 384, 384, 24
        $region16: #{tpu_custom_call.1} parent=11 // pred_fallthru
          _
        // Predicated region
        $region17: #{tpu_custom_call.1} parent=11 // pred_check
          %p360 = pneg %p96
        $region18: #{tpu_custom_call.1} parent=11 // pred_check_branch
          %362 = sbr.rel (%p360) target = $region20
        $region19: #{tpu_custom_call.1} parent=11 // pred_region
          _
        $region20: #{tpu_custom_call.1} parent=11 // pred_fallthru
          _
        // Predicated region
        $region21: #{tpu_custom_call.1} parent=11 // pred_check
          %p363 = pneg %p117
        $region22: #{tpu_custom_call.1} parent=11 // pred_check_branch
          %365 = sbr.rel (%p363) target = $region24
        $region23: #{tpu_custom_call.1} parent=11 // pred_region
          %s367 = ssub.s32 4096, 4096
          %368 = vsyncadd [#allocation6], %s367
          %s369 = sshll.u32 [#allocation7], 4
          %s370 = int_to_ptr.vmem [resolvable:$true] %s369
          %375 = dma.hbm_to_vmem [thread:$0]  %s3, 4096, %s370, [#allocation6], 128, 128, 8
        $region24: #{tpu_custom_call.1} parent=11 // pred_fallthru
          _
        // Predicated region
        $region25: #{tpu_custom_call.1} parent=11 // pred_check
          %p376 = pneg %p138
        $region26: #{tpu_custom_call.1} parent=11 // pred_check_branch
          %378 = sbr.rel (%p376) target = $region28
        $region27: #{tpu_custom_call.1} parent=11 // pred_region
          %s380 = ssub.s32 32, 32
          %381 = vsyncadd [#allocation9], %s380
          %s383 = sshll.u32 [#allocation8], 4
          %s384 = int_to_ptr.vmem [resolvable:$true] %s383
          %386 = dma.hbm_to_vmem [thread:$0]  %s4, 32, %s384, [#allocation9]
        $region28: #{tpu_custom_call.1} parent=11 // pred_fallthru
          _
        // Predicated region
        $region29: #{tpu_custom_call.1} parent=11 // pred_check
          %p387 = pneg %p159
        $region30: #{tpu_custom_call.1} parent=11 // pred_check_branch
          %389 = sbr.rel (%p387) target = $region32
        $region31: #{tpu_custom_call.1} parent=11 // pred_region
          %s391 = ssub.s32 16384, 16384
          %392 = vsyncadd [#allocation9], %s391
          %s393 = sshll.u32 [#allocation10], 4
          %s394 = int_to_ptr.vmem [resolvable:$true] %s393
          %399 = dma.hbm_to_vmem [thread:$0]  %s5, 16384, %s394, [#allocation9], 512, 512, 32
        $region32: #{tpu_custom_call.1} parent=11 // pred_fallthru
          _
        // Predicated region
        $region33: #{tpu_custom_call.1} parent=11 // pred_check
          %p400 = pneg %p180
        $region34: #{tpu_custom_call.1} parent=11 // pred_check_branch
          %402 = sbr.rel (%p400) target = $region36
        $region35: #{tpu_custom_call.1} parent=11 // pred_region
          _
        $region36: #{tpu_custom_call.1} parent=11 // pred_fallthru
          _
        // Predicated region
        $region37: #{tpu_custom_call.1} parent=11 // pred_check
          %p403 = pneg %p201
        $region38: #{tpu_custom_call.1} parent=11 // pred_check_branch
          %405 = sbr.rel (%p403) target = $region40
        $region39: #{tpu_custom_call.1} parent=11 // pred_region
          %s407 = ssub.s32 16384, 16384
          %408 = vsyncadd [#allocation12], %s407
          %s409 = sshll.u32 [#allocation11], 4
          %s410 = int_to_ptr.vmem [resolvable:$true] %s409
          %415 = dma.hbm_to_vmem [thread:$0]  %s7, 16384, %s410, [#allocation12], 128, 128, 8
        $region40: #{tpu_custom_call.1} parent=11 // pred_fallthru
          _
        // Predicated region
        $region41: #{tpu_custom_call.1} parent=11 // pred_check
          %p416 = pneg %p222
        $region42: #{tpu_custom_call.1} parent=11 // pred_check_branch
          %418 = sbr.rel (%p416) target = $region44
        $region43: #{tpu_custom_call.1} parent=11 // pred_region
          _
        $region44: #{tpu_custom_call.1} parent=11 // pred_fallthru
          _
        // Predicated region
        $region45: #{tpu_custom_call.1} parent=11 // pred_check
          %p419 = pneg %p243
        $region46: #{tpu_custom_call.1} parent=11 // pred_check_branch
          %421 = sbr.rel (%p419) target = $region48
        $region47: #{tpu_custom_call.1} parent=11 // pred_region
          _
        $region48: #{tpu_custom_call.1} parent=11 // pred_fallthru
          _
        // Predicated region
        $region49: #{tpu_custom_call.1} parent=11 // pred_check
          %p422 = pneg %p264
        $region50: #{tpu_custom_call.1} parent=11 // pred_check_branch
          %424 = sbr.rel (%p422) target = $region52
        $region51: #{tpu_custom_call.1} parent=11 // pred_region
          _
        $region52: #{tpu_custom_call.1} parent=11 // pred_fallthru
          _
        // Predicated region
        $region53: #{tpu_custom_call.1} parent=11 // pred_check
          %p425 = pneg %p285
        $region54: #{tpu_custom_call.1} parent=11 // pred_check_branch
          %427 = sbr.rel (%p425) target = $region56
        $region55: #{tpu_custom_call.1} parent=11 // pred_region
          _
        $region56: #{tpu_custom_call.1} parent=11 // pred_fallthru
          _
        // Predicated region
        $region57: #{tpu_custom_call.1} parent=11 // pred_check
          %p428 = pneg %p306
        $region58: #{tpu_custom_call.1} parent=11 // pred_check_branch
          %430 = sbr.rel (%p428) target = $region60
        $region59: #{tpu_custom_call.1} parent=11 // pred_region
          _
        $region60: #{tpu_custom_call.1} parent=11 // pred_fallthru
          _
      $region12: #{tpu_custom_call.1} parent=5 // pred_fallthru
        _
      %p431 = scmp.lt.s32.totalorder %s28, 2
      // Predicated region
      $region61: #{tpu_custom_call.1} parent=5 // pred_check
        %p432 = pneg %p431
      $region62: #{tpu_custom_call.1} parent=5 // pred_check_branch
        %434 = sbr.rel (%p432) target = $region64
      $region63: #{tpu_custom_call.1} parent=5 // pred_region
        // Predicated region
        $region65: #{tpu_custom_call.1} parent=63 // pred_check
          %p435 = pneg %p48
        $region66: #{tpu_custom_call.1} parent=63 // pred_check_branch
          %437 = sbr.rel (%p435) target = $region68
        $region67: #{tpu_custom_call.1} parent=63 // pred_region
          %s438 = sand.u32 %s38, 1
          %s439 = scalar_lea.sflag [#allocation3], %s438
          %s440 = sand.u32 %s38, 1
          %s441 = smul.addr %s440, 16
          %s442 = scalar_lea.vmem [#allocation2], %s441
          %s444 = ssub.s32 256, 256
          %445 = vsyncadd %s439, %s444
          %s446 = smul.addr %s28, 4
          %s447 = smul.addr %s446, 64
          %s448 = scalar_lea.hbm %s0, %s447
          %s449 = sshll.u32 %s442, 4
          %s450 = int_to_ptr.vmem [resolvable:$true] %s449
          %455 = dma.hbm_to_vmem [thread:$0]  %s448, 256, %s450, %s439, 128, 128, 8
        $region68: #{tpu_custom_call.1} parent=63 // pred_fallthru
          _
      $region64: #{tpu_custom_call.1} parent=5 // pred_fallthru
        _
      %p456 = scmp.le.s32.totalorder 1, %s28
      %p457 = scmp.lt.s32.totalorder %s28, 3
      %p458 = pnand %p456, %p457
      %p459 = pneg %p458
      // Predicated region
      $region69: #{tpu_custom_call.1} parent=5 // pred_check
        _
      $region70: #{tpu_custom_call.1} parent=5 // pred_check_branch
        %461 = sbr.rel (%p458) target = $region72
      $region71: #{tpu_custom_call.1} parent=5 // pred_region
        %s462 = ssub.s32 %s28, 1
        %s463 = sand.u32 %s41, 1
        %s464 = scalar_lea.sflag [#allocation3], %s463
        %s465 = sand.u32 %s41, 1
        %s466 = smul.addr %s465, 16
        %s467 = scalar_lea.vmem [#allocation2], %s466
        // Predicated region
        $region73: #{tpu_custom_call.1} parent=71 // pred_check
          %p468 = pneg %p54
        $region74: #{tpu_custom_call.1} parent=71 // pred_check_branch
          %470 = sbr.rel (%p468) target = $region76
        $region75: #{tpu_custom_call.1} parent=71 // pred_region
          %471 = dma.done %s464, 256
        $region76: #{tpu_custom_call.1} parent=71 // pred_fallthru
          _
        // Predicated region
        $region77: #{tpu_custom_call.1} parent=71 // pred_check
          %p472 = pneg %p75
        $region78: #{tpu_custom_call.1} parent=71 // pred_check_branch
          %474 = sbr.rel (%p472) target = $region80
        $region79: #{tpu_custom_call.1} parent=71 // pred_region
          %475 = dma.done [#allocation6], 12288
        $region80: #{tpu_custom_call.1} parent=71 // pred_fallthru
          _
        // Predicated region
        $region81: #{tpu_custom_call.1} parent=71 // pred_check
          %p476 = pneg %p117
        $region82: #{tpu_custom_call.1} parent=71 // pred_check_branch
          %478 = sbr.rel (%p476) target = $region84
        $region83: #{tpu_custom_call.1} parent=71 // pred_region
          %479 = dma.done [#allocation6], 4096
        $region84: #{tpu_custom_call.1} parent=71 // pred_fallthru
          _
        // Predicated region
        $region85: #{tpu_custom_call.1} parent=71 // pred_check
          %p480 = pneg %p138
        $region86: #{tpu_custom_call.1} parent=71 // pred_check_branch
          %482 = sbr.rel (%p480) target = $region88
        $region87: #{tpu_custom_call.1} parent=71 // pred_region
          %483 = dma.done [#allocation9], 32
        $region88: #{tpu_custom_call.1} parent=71 // pred_fallthru
          _
        // Predicated region
        $region89: #{tpu_custom_call.1} parent=71 // pred_check
          %p484 = pneg %p159
        $region90: #{tpu_custom_call.1} parent=71 // pred_check_branch
          %486 = sbr.rel (%p484) target = $region92
        $region91: #{tpu_custom_call.1} parent=71 // pred_region
          %487 = dma.done [#allocation9], 16384
        $region92: #{tpu_custom_call.1} parent=71 // pred_fallthru
          _
        // Predicated region
        $region93: #{tpu_custom_call.1} parent=71 // pred_check
          %p488 = pneg %p201
        $region94: #{tpu_custom_call.1} parent=71 // pred_check_branch
          %490 = sbr.rel (%p488) target = $region96
        $region95: #{tpu_custom_call.1} parent=71 // pred_region
          %491 = dma.done [#allocation12], 16384
        $region96: #{tpu_custom_call.1} parent=71 // pred_fallthru
          _
        %s492 = sand.u32 %s41, 1
        %s493 = scalar_lea.sflag [#allocation3], %s492
        %s494 = sand.u32 %s41, 1
        %s495 = smul.addr %s494, 16
        %s496 = scalar_lea.vmem [#allocation2], %s495
        %p497 = pneg %p54
        %p498 = pneg %p51
        %p499 = pneg %p75
        %p500 = pneg %p72
        %p501 = pneg %p96
        %p502 = pneg %p93
        %p503 = pneg %p117
        %p504 = pneg %p114
        %p505 = pneg %p138
        %p506 = pneg %p135
        %p507 = pneg %p159
        %p508 = pneg %p156
        %p509 = pneg %p180
        %p510 = pneg %p177
        %p511 = pneg %p201
        %p512 = pneg %p198
        %p513 = pneg %p222
        %p514 = pneg %p219
        %p515 = pneg %p243
        %p516 = pneg %p240
        %p517 = pneg %p264
        %p518 = pneg %p261
        %p519 = pneg %p285
        %p520 = pneg %p282
        %p521 = pneg %p306
        %p522 = pneg %p303
        %p523 = pneg %p332
        %p524 = pneg %p329
        %s525 = sand.u32 %s319, 1
        %s526 = scalar_lea.sflag [#allocation4], %s525
        %s527 = sand.u32 %s319, 1
        %s528 = smul.addr %s527, 16
        %s529 = scalar_lea.vmem [#allocation13], %s528
        %v531 = vld [vmem:[%s467] sm:$0xff]
        %v532 = vld [vmem:[%s467 + $0x8] sm:$0xff]
        %v533 = vunpack.c.l.bf16 %v531
        %v534 = vunpack.c.h.bf16 %v531
        %v535 = vunpack.c.l.bf16 %v532
        %v536 = vunpack.c.h.bf16 %v532
        %v537 = vld [vmem:[#allocation5] sm:$0xff]
        %v538 = vld [vmem:[#allocation5 + $0x8] sm:$0xff]
        %v539 = vld [vmem:[#allocation5 + $0x10] sm:$0xff]
        %v540 = vld [vmem:[#allocation5 + $0x18] sm:$0xff]
        %v541 = vld [vmem:[#allocation5 + $0x20] sm:$0xff]
        %v542 = vld [vmem:[#allocation5 + $0x28] sm:$0xff]
        %v543 = vld [vmem:[#allocation5 + $0x30] sm:$0xff]
        %v544 = vld [vmem:[#allocation5 + $0x38] sm:$0xff]
        %v545 = vld [vmem:[#allocation5 + $0x40] sm:$0xff]
        %v546 = vld [vmem:[#allocation5 + $0x48] sm:$0xff]
        %v547 = vld [vmem:[#allocation5 + $0x50] sm:$0xff]
        %v548 = vld [vmem:[#allocation5 + $0x58] sm:$0xff]
        %v549 = vld [vmem:[#allocation5 + $0x60] sm:$0xff]
        %v550 = vld [vmem:[#allocation5 + $0x68] sm:$0xff]
        %v551 = vld [vmem:[#allocation5 + $0x70] sm:$0xff]
        %v552 = vld [vmem:[#allocation5 + $0x78] sm:$0xff]
        %v553 = vld [vmem:[#allocation5 + $0x80] sm:$0xff]
        %v554 = vld [vmem:[#allocation5 + $0x88] sm:$0xff]
        %v555 = vld [vmem:[#allocation5 + $0x90] sm:$0xff]
        %v556 = vld [vmem:[#allocation5 + $0x98] sm:$0xff]
        %v557 = vld [vmem:[#allocation5 + $0xa0] sm:$0xff]
        %v558 = vld [vmem:[#allocation5 + $0xa8] sm:$0xff]
        %v559 = vld [vmem:[#allocation5 + $0xb0] sm:$0xff]
        %v560 = vld [vmem:[#allocation5 + $0xb8] sm:$0xff]
        %v561 = vld [vmem:[#allocation5 + $0xc0] sm:$0xff]
        %v562 = vld [vmem:[#allocation5 + $0xc8] sm:$0xff]
        %v563 = vld [vmem:[#allocation5 + $0xd0] sm:$0xff]
        %v564 = vld [vmem:[#allocation5 + $0xd8] sm:$0xff]
        %v565 = vld [vmem:[#allocation5 + $0xe0] sm:$0xff]
        %v566 = vld [vmem:[#allocation5 + $0xe8] sm:$0xff]
        %v567 = vld [vmem:[#allocation5 + $0xf0] sm:$0xff]
        %v568 = vld [vmem:[#allocation5 + $0xf8] sm:$0xff]
        %v569 = vld [vmem:[#allocation5 + $0x100] sm:$0xff]
        %v570 = vld [vmem:[#allocation5 + $0x108] sm:$0xff]
        %v571 = vld [vmem:[#allocation5 + $0x110] sm:$0xff]
        %v572 = vld [vmem:[#allocation5 + $0x118] sm:$0xff]
        %v573 = vld [vmem:[#allocation5 + $0x120] sm:$0xff]
        %v574 = vld [vmem:[#allocation5 + $0x128] sm:$0xff]
        %v575 = vld [vmem:[#allocation5 + $0x130] sm:$0xff]
        %v576 = vld [vmem:[#allocation5 + $0x138] sm:$0xff]
        %v577 = vld [vmem:[#allocation5 + $0x140] sm:$0xff]
        %v578 = vld [vmem:[#allocation5 + $0x148] sm:$0xff]
        %v579 = vld [vmem:[#allocation5 + $0x150] sm:$0xff]
        %v580 = vld [vmem:[#allocation5 + $0x158] sm:$0xff]
        %v581 = vld [vmem:[#allocation5 + $0x160] sm:$0xff]
        %v582 = vld [vmem:[#allocation5 + $0x168] sm:$0xff]
        %v583 = vld [vmem:[#allocation5 + $0x170] sm:$0xff]
        %v584 = vld [vmem:[#allocation5 + $0x178] sm:$0xff]
        %v585 = vld [vmem:[#allocation5 + $0x180] sm:$0xff]
        %v586 = vld [vmem:[#allocation5 + $0x188] sm:$0xff]
        %v587 = vld [vmem:[#allocation5 + $0x190] sm:$0xff]
        %v588 = vld [vmem:[#allocation5 + $0x198] sm:$0xff]
        %v589 = vld [vmem:[#allocation5 + $0x1a0] sm:$0xff]
        %v590 = vld [vmem:[#allocation5 + $0x1a8] sm:$0xff]
        %v591 = vld [vmem:[#allocation5 + $0x1b0] sm:$0xff]
        %v592 = vld [vmem:[#allocation5 + $0x1b8] sm:$0xff]
        %v593 = vld [vmem:[#allocation5 + $0x1c0] sm:$0xff]
        %v594 = vld [vmem:[#allocation5 + $0x1c8] sm:$0xff]
        %v595 = vld [vmem:[#allocation5 + $0x1d0] sm:$0xff]
        %v596 = vld [vmem:[#allocation5 + $0x1d8] sm:$0xff]
        %v597 = vld [vmem:[#allocation5 + $0x1e0] sm:$0xff]
        %v598 = vld [vmem:[#allocation5 + $0x1e8] sm:$0xff]
        %v599 = vld [vmem:[#allocation5 + $0x1f0] sm:$0xff]
        %v600 = vld [vmem:[#allocation5 + $0x1f8] sm:$0xff]
        %v601 = vld [vmem:[#allocation5 + $0x200] sm:$0xff]
        %v602 = vld [vmem:[#allocation5 + $0x208] sm:$0xff]
        %v603 = vld [vmem:[#allocation5 + $0x210] sm:$0xff]
        %v604 = vld [vmem:[#allocation5 + $0x218] sm:$0xff]
        %v605 = vld [vmem:[#allocation5 + $0x220] sm:$0xff]
        %v606 = vld [vmem:[#allocation5 + $0x228] sm:$0xff]
        %v607 = vld [vmem:[#allocation5 + $0x230] sm:$0xff]
        %v608 = vld [vmem:[#allocation5 + $0x238] sm:$0xff]
        %v609 = vld [vmem:[#allocation5 + $0x240] sm:$0xff]
        %v610 = vld [vmem:[#allocation5 + $0x248] sm:$0xff]
        %v611 = vld [vmem:[#allocation5 + $0x250] sm:$0xff]
        %v612 = vld [vmem:[#allocation5 + $0x258] sm:$0xff]
        %v613 = vld [vmem:[#allocation5 + $0x260] sm:$0xff]
        %v614 = vld [vmem:[#allocation5 + $0x268] sm:$0xff]
        %v615 = vld [vmem:[#allocation5 + $0x270] sm:$0xff]
        %v616 = vld [vmem:[#allocation5 + $0x278] sm:$0xff]
        %v617 = vld [vmem:[#allocation5 + $0x280] sm:$0xff]
        %v618 = vld [vmem:[#allocation5 + $0x288] sm:$0xff]
        %v619 = vld [vmem:[#allocation5 + $0x290] sm:$0xff]
        %v620 = vld [vmem:[#allocation5 + $0x298] sm:$0xff]
        %v621 = vld [vmem:[#allocation5 + $0x2a0] sm:$0xff]
        %v622 = vld [vmem:[#allocation5 + $0x2a8] sm:$0xff]
        %v623 = vld [vmem:[#allocation5 + $0x2b0] sm:$0xff]
        %v624 = vld [vmem:[#allocation5 + $0x2b8] sm:$0xff]
        %v625 = vld [vmem:[#allocation5 + $0x2c0] sm:$0xff]
        %v626 = vld [vmem:[#allocation5 + $0x2c8] sm:$0xff]
        %v627 = vld [vmem:[#allocation5 + $0x2d0] sm:$0xff]
        %v628 = vld [vmem:[#allocation5 + $0x2d8] sm:$0xff]
        %v629 = vld [vmem:[#allocation5 + $0x2e0] sm:$0xff]
        %v630 = vld [vmem:[#allocation5 + $0x2e8] sm:$0xff]
        %v631 = vld [vmem:[#allocation5 + $0x2f0] sm:$0xff]
        %v632 = vld [vmem:[#allocation5 + $0x2f8] sm:$0xff]
        %v633 = vld [vmem:[%s2] sm:$0x3f]
        %v635 = vlaneseq
        %v636 = vshrl.u32 %v635, 7
        %v637 = vsub.s32 0, %v636
        %v638 = vrot.slane %v633, %v637
        %v639 = vlaneseq
        %v640 = vshrl.u32 %v639, 7
        %v641 = vsub.s32 1, %v640
        %v642 = vrot.slane %v633, %v641
        %v643 = vlaneseq
        %v644 = vshrl.u32 %v643, 7
        %v645 = vsub.s32 2, %v644
        %v646 = vrot.slane %v633, %v645
        %v647 = vlaneseq
        %v648 = vshrl.u32 %v647, 7
        %v649 = vsub.s32 3, %v648
        %v650 = vrot.slane %v633, %v649
        %v651 = vlaneseq
        %v652 = vshrl.u32 %v651, 7
        %v653 = vsub.s32 4, %v652
        %v654 = vrot.slane %v633, %v653
        %v655 = vlaneseq
        %v656 = vshrl.u32 %v655, 7
        %v657 = vsub.s32 5, %v656
        %v658 = vrot.slane %v633, %v657
        %v667 = vunpack.c.l.b16 %v531
        %v668 = vunpack.c.h.b16 %v531
        %v669 = vunpack.c.l.b16 %v532
        %v670 = vunpack.c.h.b16 %v532
        %v671 = vpack.c.b16 %v669, %v667
        %v672 = vpack.c.b16 %v670, %v668
        %v771 = vunpack.c.l.b16 %v537
        %v772 = vunpack.c.h.b16 %v537
        %v773 = vunpack.c.l.b16 %v538
        %v774 = vunpack.c.h.b16 %v538
        %v775 = vunpack.c.l.b16 %v539
        %v776 = vunpack.c.h.b16 %v539
        %v777 = vunpack.c.l.b16 %v540
        %v778 = vunpack.c.h.b16 %v540
        %v779 = vunpack.c.l.b16 %v541
        %v780 = vunpack.c.h.b16 %v541
        %v781 = vunpack.c.l.b16 %v542
        %v782 = vunpack.c.h.b16 %v542
        %v783 = vunpack.c.l.b16 %v543
        %v784 = vunpack.c.h.b16 %v543
        %v785 = vunpack.c.l.b16 %v544
        %v786 = vunpack.c.h.b16 %v544
        %v787 = vunpack.c.l.b16 %v545
        %v788 = vunpack.c.h.b16 %v545
        %v789 = vunpack.c.l.b16 %v546
        %v790 = vunpack.c.h.b16 %v546
        %v791 = vunpack.c.l.b16 %v547
        %v792 = vunpack.c.h.b16 %v547
        %v793 = vunpack.c.l.b16 %v548
        %v794 = vunpack.c.h.b16 %v548
        %v795 = vunpack.c.l.b16 %v549
        %v796 = vunpack.c.h.b16 %v549
        %v797 = vunpack.c.l.b16 %v550
        %v798 = vunpack.c.h.b16 %v550
        %v799 = vunpack.c.l.b16 %v551
        %v800 = vunpack.c.h.b16 %v551
        %v801 = vunpack.c.l.b16 %v552
        %v802 = vunpack.c.h.b16 %v552
        %v803 = vunpack.c.l.b16 %v553
        %v804 = vunpack.c.h.b16 %v553
        %v805 = vunpack.c.l.b16 %v554
        %v806 = vunpack.c.h.b16 %v554
        %v807 = vunpack.c.l.b16 %v555
        %v808 = vunpack.c.h.b16 %v555
        %v809 = vunpack.c.l.b16 %v556
        %v810 = vunpack.c.h.b16 %v556
        %v811 = vunpack.c.l.b16 %v557
        %v812 = vunpack.c.h.b16 %v557
        %v813 = vunpack.c.l.b16 %v558
        %v814 = vunpack.c.h.b16 %v558
        %v815 = vunpack.c.l.b16 %v559
        %v816 = vunpack.c.h.b16 %v559
        %v817 = vunpack.c.l.b16 %v560
        %v818 = vunpack.c.h.b16 %v560
        %v819 = vunpack.c.l.b16 %v561
        %v820 = vunpack.c.h.b16 %v561
        %v821 = vunpack.c.l.b16 %v562
        %v822 = vunpack.c.h.b16 %v562
        %v823 = vunpack.c.l.b16 %v563
        %v824 = vunpack.c.h.b16 %v563
        %v825 = vunpack.c.l.b16 %v564
        %v826 = vunpack.c.h.b16 %v564
        %v827 = vunpack.c.l.b16 %v565
        %v828 = vunpack.c.h.b16 %v565
        %v829 = vunpack.c.l.b16 %v566
        %v830 = vunpack.c.h.b16 %v566
        %v831 = vunpack.c.l.b16 %v567
        %v832 = vunpack.c.h.b16 %v567
        %v833 = vunpack.c.l.b16 %v568
        %v834 = vunpack.c.h.b16 %v568
        %v835 = vunpack.c.l.b16 %v569
        %v836 = vunpack.c.h.b16 %v569
        %v837 = vunpack.c.l.b16 %v570
        %v838 = vunpack.c.h.b16 %v570
        %v839 = vunpack.c.l.b16 %v571
        %v840 = vunpack.c.h.b16 %v571
        %v841 = vunpack.c.l.b16 %v572
        %v842 = vunpack.c.h.b16 %v572
        %v843 = vunpack.c.l.b16 %v573
        %v844 = vunpack.c.h.b16 %v573
        %v845 = vunpack.c.l.b16 %v574
        %v846 = vunpack.c.h.b16 %v574
        %v847 = vunpack.c.l.b16 %v575
        %v848 = vunpack.c.h.b16 %v575
        %v849 = vunpack.c.l.b16 %v576
        %v850 = vunpack.c.h.b16 %v576
        %v851 = vunpack.c.l.b16 %v577
        %v852 = vunpack.c.h.b16 %v577
        %v853 = vunpack.c.l.b16 %v578
        %v854 = vunpack.c.h.b16 %v578
        %v855 = vunpack.c.l.b16 %v579
        %v856 = vunpack.c.h.b16 %v579
        %v857 = vunpack.c.l.b16 %v580
        %v858 = vunpack.c.h.b16 %v580
        %v859 = vunpack.c.l.b16 %v581
        %v860 = vunpack.c.h.b16 %v581
        %v861 = vunpack.c.l.b16 %v582
        %v862 = vunpack.c.h.b16 %v582
        %v863 = vunpack.c.l.b16 %v583
        %v864 = vunpack.c.h.b16 %v583
        %v865 = vunpack.c.l.b16 %v584
        %v866 = vunpack.c.h.b16 %v584
        %v867 = vunpack.c.l.b16 %v585
        %v868 = vunpack.c.h.b16 %v585
        %v869 = vunpack.c.l.b16 %v586
        %v870 = vunpack.c.h.b16 %v586
        %v871 = vunpack.c.l.b16 %v587
        %v872 = vunpack.c.h.b16 %v587
        %v873 = vunpack.c.l.b16 %v588
        %v874 = vunpack.c.h.b16 %v588
        %v875 = vunpack.c.l.b16 %v589
        %v876 = vunpack.c.h.b16 %v589
        %v877 = vunpack.c.l.b16 %v590
        %v878 = vunpack.c.h.b16 %v590
        %v879 = vunpack.c.l.b16 %v591
        %v880 = vunpack.c.h.b16 %v591
        %v881 = vunpack.c.l.b16 %v592
        %v882 = vunpack.c.h.b16 %v592
        %v883 = vunpack.c.l.b16 %v593
        %v884 = vunpack.c.h.b16 %v593
        %v885 = vunpack.c.l.b16 %v594
        %v886 = vunpack.c.h.b16 %v594
        %v887 = vunpack.c.l.b16 %v595
        %v888 = vunpack.c.h.b16 %v595
        %v889 = vunpack.c.l.b16 %v596
        %v890 = vunpack.c.h.b16 %v596
        %v891 = vunpack.c.l.b16 %v597
        %v892 = vunpack.c.h.b16 %v597
        %v893 = vunpack.c.l.b16 %v598
        %v894 = vunpack.c.h.b16 %v598
        %v895 = vunpack.c.l.b16 %v599
        %v896 = vunpack.c.h.b16 %v599
        %v897 = vunpack.c.l.b16 %v600
        %v898 = vunpack.c.h.b16 %v600
        %v899 = vunpack.c.l.b16 %v601
        %v900 = vunpack.c.h.b16 %v601
        %v901 = vunpack.c.l.b16 %v602
        %v902 = vunpack.c.h.b16 %v602
        %v903 = vunpack.c.l.b16 %v603
        %v904 = vunpack.c.h.b16 %v603
        %v905 = vunpack.c.l.b16 %v604
        %v906 = vunpack.c.h.b16 %v604
        %v907 = vunpack.c.l.b16 %v605
        %v908 = vunpack.c.h.b16 %v605
        %v909 = vunpack.c.l.b16 %v606
        %v910 = vunpack.c.h.b16 %v606
        %v911 = vunpack.c.l.b16 %v607
        %v912 = vunpack.c.h.b16 %v607
        %v913 = vunpack.c.l.b16 %v608
        %v914 = vunpack.c.h.b16 %v608
        %v915 = vunpack.c.l.b16 %v609
        %v916 = vunpack.c.h.b16 %v609
        %v917 = vunpack.c.l.b16 %v610
        %v918 = vunpack.c.h.b16 %v610
        %v919 = vunpack.c.l.b16 %v611
        %v920 = vunpack.c.h.b16 %v611
        %v921 = vunpack.c.l.b16 %v612
        %v922 = vunpack.c.h.b16 %v612
        %v923 = vunpack.c.l.b16 %v613
        %v924 = vunpack.c.h.b16 %v613
        %v925 = vunpack.c.l.b16 %v614
        %v926 = vunpack.c.h.b16 %v614
        %v927 = vunpack.c.l.b16 %v615
        %v928 = vunpack.c.h.b16 %v615
        %v929 = vunpack.c.l.b16 %v616
        %v930 = vunpack.c.h.b16 %v616
        %v931 = vunpack.c.l.b16 %v617
        %v932 = vunpack.c.h.b16 %v617
        %v933 = vunpack.c.l.b16 %v618
        %v934 = vunpack.c.h.b16 %v618
        %v935 = vunpack.c.l.b16 %v619
        %v936 = vunpack.c.h.b16 %v619
        %v937 = vunpack.c.l.b16 %v620
        %v938 = vunpack.c.h.b16 %v620
        %v939 = vunpack.c.l.b16 %v621
        %v940 = vunpack.c.h.b16 %v621
        %v941 = vunpack.c.l.b16 %v622
        %v942 = vunpack.c.h.b16 %v622
        %v943 = vunpack.c.l.b16 %v623
        %v944 = vunpack.c.h.b16 %v623
        %v945 = vunpack.c.l.b16 %v624
        %v946 = vunpack.c.h.b16 %v624
        %v947 = vunpack.c.l.b16 %v625
        %v948 = vunpack.c.h.b16 %v625
        %v949 = vunpack.c.l.b16 %v626
        %v950 = vunpack.c.h.b16 %v626
        %v951 = vunpack.c.l.b16 %v627
        %v952 = vunpack.c.h.b16 %v627
        %v953 = vunpack.c.l.b16 %v628
        %v954 = vunpack.c.h.b16 %v628
        %v955 = vunpack.c.l.b16 %v629
        %v956 = vunpack.c.h.b16 %v629
        %v957 = vunpack.c.l.b16 %v630
        %v958 = vunpack.c.h.b16 %v630
        %v959 = vunpack.c.l.b16 %v631
        %v960 = vunpack.c.h.b16 %v631
        %v961 = vunpack.c.l.b16 %v632
        %v962 = vunpack.c.h.b16 %v632
        %v963 = vpack.c.b16 %v777, %v771
        %v964 = vpack.c.b16 %v778, %v772
        %v965 = vpack.c.b16 %v779, %v773
        %v966 = vpack.c.b16 %v780, %v774
        %v967 = vpack.c.b16 %v781, %v775
        %v968 = vpack.c.b16 %v782, %v776
        %v969 = vpack.c.b16 %v789, %v783
        %v970 = vpack.c.b16 %v790, %v784
        %v971 = vpack.c.b16 %v791, %v785
        %v972 = vpack.c.b16 %v792, %v786
        %v973 = vpack.c.b16 %v793, %v787
        %v974 = vpack.c.b16 %v794, %v788
        %v975 = vpack.c.b16 %v801, %v795
        %v976 = vpack.c.b16 %v802, %v796
        %v977 = vpack.c.b16 %v803, %v797
        %v978 = vpack.c.b16 %v804, %v798
        %v979 = vpack.c.b16 %v805, %v799
        %v980 = vpack.c.b16 %v806, %v800
        %v981 = vpack.c.b16 %v813, %v807
        %v982 = vpack.c.b16 %v814, %v808
        %v983 = vpack.c.b16 %v815, %v809
        %v984 = vpack.c.b16 %v816, %v810
        %v985 = vpack.c.b16 %v817, %v811
        %v986 = vpack.c.b16 %v818, %v812
        %v987 = vpack.c.b16 %v825, %v819
        %v988 = vpack.c.b16 %v826, %v820
        %v989 = vpack.c.b16 %v827, %v821
        %v990 = vpack.c.b16 %v828, %v822
        %v991 = vpack.c.b16 %v829, %v823
        %v992 = vpack.c.b16 %v830, %v824
        %v993 = vpack.c.b16 %v837, %v831
        %v994 = vpack.c.b16 %v838, %v832
        %v995 = vpack.c.b16 %v839, %v833
        %v996 = vpack.c.b16 %v840, %v834
        %v997 = vpack.c.b16 %v841, %v835
        %v998 = vpack.c.b16 %v842, %v836
        %v999 = vpack.c.b16 %v849, %v843
        %v1000 = vpack.c.b16 %v850, %v844
        %v1001 = vpack.c.b16 %v851, %v845
        %v1002 = vpack.c.b16 %v852, %v846
        %v1003 = vpack.c.b16 %v853, %v847
        %v1004 = vpack.c.b16 %v854, %v848
        %v1005 = vpack.c.b16 %v861, %v855
        %v1006 = vpack.c.b16 %v862, %v856
        %v1007 = vpack.c.b16 %v863, %v857
        %v1008 = vpack.c.b16 %v864, %v858
        %v1009 = vpack.c.b16 %v865, %v859
        %v1010 = vpack.c.b16 %v866, %v860
        %v1011 = vpack.c.b16 %v873, %v867
        %v1012 = vpack.c.b16 %v874, %v868
        %v1013 = vpack.c.b16 %v875, %v869
        %v1014 = vpack.c.b16 %v876, %v870
        %v1015 = vpack.c.b16 %v877, %v871
        %v1016 = vpack.c.b16 %v878, %v872
        %v1017 = vpack.c.b16 %v885, %v879
        %v1018 = vpack.c.b16 %v886, %v880
        %v1019 = vpack.c.b16 %v887, %v881
        %v1020 = vpack.c.b16 %v888, %v882
        %v1021 = vpack.c.b16 %v889, %v883
        %v1022 = vpack.c.b16 %v890, %v884
        %v1023 = vpack.c.b16 %v897, %v891
        %v1024 = vpack.c.b16 %v898, %v892
        %v1025 = vpack.c.b16 %v899, %v893
        %v1026 = vpack.c.b16 %v900, %v894
        %v1027 = vpack.c.b16 %v901, %v895
        %v1028 = vpack.c.b16 %v902, %v896
        %v1029 = vpack.c.b16 %v909, %v903
        %v1030 = vpack.c.b16 %v910, %v904
        %v1031 = vpack.c.b16 %v911, %v905
        %v1032 = vpack.c.b16 %v912, %v906
        %v1033 = vpack.c.b16 %v913, %v907
        %v1034 = vpack.c.b16 %v914, %v908
        %v1035 = vpack.c.b16 %v921, %v915
        %v1036 = vpack.c.b16 %v922, %v916
        %v1037 = vpack.c.b16 %v923, %v917
        %v1038 = vpack.c.b16 %v924, %v918
        %v1039 = vpack.c.b16 %v925, %v919
        %v1040 = vpack.c.b16 %v926, %v920
        %v1041 = vpack.c.b16 %v933, %v927
        %v1042 = vpack.c.b16 %v934, %v928
        %v1043 = vpack.c.b16 %v935, %v929
        %v1044 = vpack.c.b16 %v936, %v930
        %v1045 = vpack.c.b16 %v937, %v931
        %v1046 = vpack.c.b16 %v938, %v932
        %v1047 = vpack.c.b16 %v945, %v939
        %v1048 = vpack.c.b16 %v946, %v940
        %v1049 = vpack.c.b16 %v947, %v941
        %v1050 = vpack.c.b16 %v948, %v942
        %v1051 = vpack.c.b16 %v949, %v943
        %v1052 = vpack.c.b16 %v950, %v944
        %v1053 = vpack.c.b16 %v957, %v951
        %v1054 = vpack.c.b16 %v958, %v952
        %v1055 = vpack.c.b16 %v959, %v953
        %v1056 = vpack.c.b16 %v960, %v954
        %v1057 = vpack.c.b16 %v961, %v955
        %v1058 = vpack.c.b16 %v962, %v956
        %1155 = vmatprep.subr.bf16.mxu0 %v964
        %1156 = vmatpush1.bf16.msra.mxu0 %v963
        %1157 = vmatprep.subr.bf16.mxu0 %v970
        %1158 = vmatpush1.bf16.msra.mxu0 %v969
        %1159 = vmatprep.subr.bf16.mxu0 %v976
        %1160 = vmatpush1.bf16.msra.mxu0 %v975
        %1161 = vmatprep.subr.bf16.mxu0 %v982
        %1162 = vmatpush1.bf16.msra.mxu0 %v981
        %1163 = vmatprep.subr.bf16.mxu0 %v988
        %1164 = vmatpush1.bf16.msra.mxu0 %v987
        %1165 = vmatprep.subr.bf16.mxu0 %v994
        %1166 = vmatpush1.bf16.msra.mxu0 %v993
        %1167 = vmatprep.subr.bf16.mxu0 %v1000
        %1168 = vmatpush1.bf16.msra.mxu0 %v999
        %1169 = vmatprep.subr.bf16.mxu0 %v1006
        %1170 = vmatpush1.bf16.msra.mxu0 %v1005
        %1171 = vmatprep.subr.bf16.mxu0 %v1012
        %1172 = vmatpush1.bf16.msra.mxu0 %v1011
        %1173 = vmatprep.subr.bf16.mxu0 %v1018
        %1174 = vmatpush1.bf16.msra.mxu0 %v1017
        %1175 = vmatprep.subr.bf16.mxu0 %v1024
        %1176 = vmatpush1.bf16.msra.mxu0 %v1023
        %1177 = vmatprep.subr.bf16.mxu0 %v1030
        %1178 = vmatpush1.bf16.msra.mxu0 %v1029
        %1179 = vmatprep.subr.bf16.mxu0 %v1036
        %1180 = vmatpush1.bf16.msra.mxu0 %v1035
        %1181 = vmatprep.subr.bf16.mxu0 %v1042
        %1182 = vmatpush1.bf16.msra.mxu0 %v1041
        %1183 = vmatprep.subr.bf16.mxu0 %v1048
        %1184 = vmatpush1.bf16.msra.mxu0 %v1047
        %1185 = vmatprep.subr.bf16.mxu0 %v1054
        %1186 = vmatpush1.bf16.msra.mxu0 %v1053
        %1187 = vmatprep.mubr.bf16.mxu0 %v672
        %1188 = vmatmul.mubr.bf16.gmra.mrb[0].mxu0 %v671
        %v1189 = vpop.f32.mrb[0].mxu0
        %v1190 = vadd.f32 %v638, %v1189
        %v1191 = vpop.f32.mrb[0].mxu0
        %v1192 = vadd.f32 %v642, %v1191
        %v1193 = vpop.f32.mrb[0].mxu0
        %v1194 = vadd.f32 %v638, %v1193
        %v1195 = vpop.f32.mrb[0].mxu0
        %v1196 = vadd.f32 %v642, %v1195
        %1197 = vdwg.mxu0
        %1198 = vmatprep.subr.bf16.mxu0 %v966
        %1199 = vmatpush1.bf16.msra.mxu0 %v965
        %1200 = vmatprep.subr.bf16.mxu0 %v972
        %1201 = vmatpush1.bf16.msra.mxu0 %v971
        %1202 = vmatprep.subr.bf16.mxu0 %v978
        %1203 = vmatpush1.bf16.msra.mxu0 %v977
        %1204 = vmatprep.subr.bf16.mxu0 %v984
        %1205 = vmatpush1.bf16.msra.mxu0 %v983
        %1206 = vmatprep.subr.bf16.mxu0 %v990
        %1207 = vmatpush1.bf16.msra.mxu0 %v989
        %1208 = vmatprep.subr.bf16.mxu0 %v996
        %1209 = vmatpush1.bf16.msra.mxu0 %v995
        %1210 = vmatprep.subr.bf16.mxu0 %v1002
        %1211 = vmatpush1.bf16.msra.mxu0 %v1001
        %1212 = vmatprep.subr.bf16.mxu0 %v1008
        %1213 = vmatpush1.bf16.msra.mxu0 %v1007
        %1214 = vmatprep.subr.bf16.mxu0 %v1014
        %1215 = vmatpush1.bf16.msra.mxu0 %v1013
        %1216 = vmatprep.subr.bf16.mxu0 %v1020
        %1217 = vmatpush1.bf16.msra.mxu0 %v1019
        %1218 = vmatprep.subr.bf16.mxu0 %v1026
        %1219 = vmatpush1.bf16.msra.mxu0 %v1025
        %1220 = vmatprep.subr.bf16.mxu0 %v1032
        %1221 = vmatpush1.bf16.msra.mxu0 %v1031
        %1222 = vmatprep.subr.bf16.mxu0 %v1038
        %1223 = vmatpush1.bf16.msra.mxu0 %v1037
        %1224 = vmatprep.subr.bf16.mxu0 %v1044
        %1225 = vmatpush1.bf16.msra.mxu0 %v1043
        %1226 = vmatprep.subr.bf16.mxu0 %v1050
        %1227 = vmatpush1.bf16.msra.mxu0 %v1049
        %1228 = vmatprep.subr.bf16.mxu0 %v1056
        %1229 = vmatpush1.bf16.msra.mxu0 %v1055
        %1230 = vmatprep.mubr.bf16.mxu0 %v672
        %1231 = vmatmul.mubr.bf16.gmra.mrb[0].mxu0 %v671
        %v1232 = vpop.f32.mrb[0].mxu0
        %v1233 = vadd.f32 %v646, %v1232
        %v1234 = vpop.f32.mrb[0].mxu0
        %v1235 = vadd.f32 %v650, %v1234
        %v1236 = vpop.f32.mrb[0].mxu0
        %v1237 = vadd.f32 %v646, %v1236
        %v1238 = vpop.f32.mrb[0].mxu0
        %v1239 = vadd.f32 %v650, %v1238
        %1240 = vdwg.mxu0
        %1241 = vmatprep.subr.bf16.mxu0 %v968
        %1242 = vmatpush1.bf16.msra.mxu0 %v967
        %1243 = vmatprep.subr.bf16.mxu0 %v974
        %1244 = vmatpush1.bf16.msra.mxu0 %v973
        %1245 = vmatprep.subr.bf16.mxu0 %v980
        %1246 = vmatpush1.bf16.msra.mxu0 %v979
        %1247 = vmatprep.subr.bf16.mxu0 %v986
        %1248 = vmatpush1.bf16.msra.mxu0 %v985
        %1249 = vmatprep.subr.bf16.mxu0 %v992
        %1250 = vmatpush1.bf16.msra.mxu0 %v991
        %1251 = vmatprep.subr.bf16.mxu0 %v998
        %1252 = vmatpush1.bf16.msra.mxu0 %v997
        %1253 = vmatprep.subr.bf16.mxu0 %v1004
        %1254 = vmatpush1.bf16.msra.mxu0 %v1003
        %1255 = vmatprep.subr.bf16.mxu0 %v1010
        %1256 = vmatpush1.bf16.msra.mxu0 %v1009
        %1257 = vmatprep.subr.bf16.mxu0 %v1016
        %1258 = vmatpush1.bf16.msra.mxu0 %v1015
        %1259 = vmatprep.subr.bf16.mxu0 %v1022
        %1260 = vmatpush1.bf16.msra.mxu0 %v1021
        %1261 = vmatprep.subr.bf16.mxu0 %v1028
        %1262 = vmatpush1.bf16.msra.mxu0 %v1027
        %1263 = vmatprep.subr.bf16.mxu0 %v1034
        %1264 = vmatpush1.bf16.msra.mxu0 %v1033
        %1265 = vmatprep.subr.bf16.mxu0 %v1040
        %1266 = vmatpush1.bf16.msra.mxu0 %v1039
        %1267 = vmatprep.subr.bf16.mxu0 %v1046
        %1268 = vmatpush1.bf16.msra.mxu0 %v1045
        %1269 = vmatprep.subr.bf16.mxu0 %v1052
        %1270 = vmatpush1.bf16.msra.mxu0 %v1051
        %1271 = vmatprep.subr.bf16.mxu0 %v1058
        %1272 = vmatpush1.bf16.msra.mxu0 %v1057
        %1273 = vmatprep.mubr.bf16.mxu0 %v672
        %1274 = vmatmul.mubr.bf16.gmra.mrb[0].mxu0 %v671
        %v1275 = vpop.f32.mrb[0].mxu0
        %v1276 = vadd.f32 %v654, %v1275
        %v1277 = vpop.f32.mrb[0].mxu0
        %v1278 = vadd.f32 %v658, %v1277
        %v1279 = vpop.f32.mrb[0].mxu0
        %v1280 = vadd.f32 %v654, %v1279
        %v1281 = vpop.f32.mrb[0].mxu0
        %v1282 = vadd.f32 %v658, %v1281
        %1283 = vdwg.mxu0
        %v1284 = vpack.c.bf16 %v1194, %v1190
        %v1285 = vpack.c.bf16 %v1237, %v1233
        %v1286 = vpack.c.bf16 %v1280, %v1276
        %1287 = vmatprep.subr.bf16.mxu0 0
        %1288 = vmatpush1.bf16.xpose.msra.mxu0 %v1285
        %1289 = vmatprep.subr.bf16.mxu0 0
        %1290 = vmatpush1.bf16.xpose.msra.mxu0 0
        %1291 = vmatprep.subr.bf16.mxu0 0
        %1292 = vmatpush1.bf16.xpose.msra.mxu0 0
        %1293 = vmatprep.subr.bf16.mxu0 0
        %1294 = vmatpush1.bf16.xpose.msra.mxu0 0
        %1295 = vmatprep.subr.bf16.mxu0 0
        %1296 = vmatpush1.bf16.xpose.msra.mxu0 0
        %1297 = vmatprep.subr.bf16.mxu0 0
        %1298 = vmatpush1.bf16.xpose.msra.mxu0 0
        %1299 = vmatprep.subr.bf16.mxu0 0
        %1300 = vmatpush1.bf16.xpose.msra.mxu0 0
        %1301 = vmatprep.subr.bf16.mxu0 0
        %1302 = vmatpush1.bf16.xpose.msra.mxu0 0
        %1303 = vmatprep.subr.bf16.mxu0 0
        %1304 = vmatpush1.bf16.xpose.msra.mxu0 0
        %1305 = vmatprep.subr.bf16.mxu0 0
        %1306 = vmatpush1.bf16.xpose.msra.mxu0 0
        %1307 = vmatprep.subr.bf16.mxu0 0
        %1308 = vmatpush1.bf16.xpose.msra.mxu0 0
        %1309 = vmatprep.subr.bf16.mxu0 0
        %1310 = vmatpush1.bf16.xpose.msra.mxu0 0
        %1311 = vmatprep.subr.bf16.mxu0 0
        %1312 = vmatpush1.bf16.xpose.msra.mxu0 0
        %1313 = vmatprep.subr.bf16.mxu0 0
        %1314 = vmatpush1.bf16.xpose.msra.mxu0 0
        %1315 = vmatprep.subr.bf16.mxu0 0
        %1316 = vmatpush1.bf16.xpose.msra.mxu0 0
        %1317 = vmatprep.subr.bf16.mxu0 0
        %1318 = vmatpush1.bf16.xpose.msra.mxu0 0
        %1319 = vmatprep.mubr.bf16.mxu0 0
        %1320 = vmatmul.mubr.bf16.gmra.mrb[0].mxu0 %v1284
        %v1321 = vpop.f32.mrb[0].mxu0
        %v1322 = vadd.f32 0.0, %v1321
        %v1323 = vpop.f32.mrb[0].mxu0
        %v1324 = vpop.f32.mrb[0].mxu0
        %v1325 = vadd.f32 0.0, %v1324
        %v1326 = vpop.f32.mrb[0].mxu0
        %1327 = vdwg.mxu0
        %vm1328 = vcmask 130048
        %v1329 = vsel %vm1328, %v1322, -inf
        %1330 = vmax.xlane.f32.xlu0 %v1329
        %v1331 = vpop.xlane.xlu0 %1330
        %v1332 = vsel %vm1328, %v1325, -inf
        %1333 = vmax.xlane.f32.xlu0 %v1332
        %v1334 = vpop.xlane.xlu0 %1333
        %v1335 = vsub.f32 %v1322, %v1331
        %v1336 = vsub.f32 %v1325, %v1334
        %v1337 = vmul.f32 %v1335, 1.442695
        %v1338 = vpow.pop %v1337
        %v1339 = vmul.f32 %v1336, 1.442695
        %v1340 = vpow.pop %v1339
        %v1341 = vsel %vm1328, %v1338, 0.0
        %1342 = vadd.xlane.f32.xlu0 %v1341
        %v1343 = vpop.xlane.xlu0 %1342
        %v1344 = vsel %vm1328, %v1340, 0.0
        %1345 = vadd.xlane.f32.xlu0 %v1344
        %v1346 = vpop.xlane.xlu0 %1345
        %v1347 = vrcp.pop %v1343
        %v1348 = vrcp.pop %v1346
        %v1349 = vmul.f32 %v1338, %v1347
        %v1350 = vmul.f32 %v1340, %v1348
        %v1351 = vpack.c.bf16 %v1350, %v1349
        %v1353 = vsel %vm1328, %v1351, 0
        %1355 = vmatprep.subr.bf16.mxu0 0
        %1356 = vmatpush1.bf16.msra.mxu0 %v1286
        %1357 = vmatprep.subr.bf16.mxu0 0
        %1358 = vmatpush1.bf16.msra.mxu0 0
        %1359 = vmatprep.subr.bf16.mxu0 0
        %1360 = vmatpush1.bf16.msra.mxu0 0
        %1361 = vmatprep.subr.bf16.mxu0 0
        %1362 = vmatpush1.bf16.msra.mxu0 0
        %1363 = vmatprep.subr.bf16.mxu0 0
        %1364 = vmatpush1.bf16.msra.mxu0 0
        %1365 = vmatprep.subr.bf16.mxu0 0
        %1366 = vmatpush1.bf16.msra.mxu0 0
        %1367 = vmatprep.subr.bf16.mxu0 0
        %1368 = vmatpush1.bf16.msra.mxu0 0
        %1369 = vmatprep.subr.bf16.mxu0 0
        %1370 = vmatpush1.bf16.msra.mxu0 0
        %1371 = vmatprep.subr.bf16.mxu0 0
        %1372 = vmatpush1.bf16.msra.mxu0 0
        %1373 = vmatprep.subr.bf16.mxu0 0
        %1374 = vmatpush1.bf16.msra.mxu0 0
        %1375 = vmatprep.subr.bf16.mxu0 0
        %1376 = vmatpush1.bf16.msra.mxu0 0
        %1377 = vmatprep.subr.bf16.mxu0 0
        %1378 = vmatpush1.bf16.msra.mxu0 0
        %1379 = vmatprep.subr.bf16.mxu0 0
        %1380 = vmatpush1.bf16.msra.mxu0 0
        %1381 = vmatprep.subr.bf16.mxu0 0
        %1382 = vmatpush1.bf16.msra.mxu0 0
        %1383 = vmatprep.subr.bf16.mxu0 0
        %1384 = vmatpush1.bf16.msra.mxu0 0
        %1385 = vmatprep.subr.bf16.mxu0 0
        %1386 = vmatpush1.bf16.msra.mxu0 0
        %1387 = vmatprep.mubr.bf16.mxu0 0
        %1388 = vmatmul.mubr.bf16.gmra.mrb[0].mxu0 %v1353
        %v1389 = vpop.f32.mrb[0].mxu0
        %v1390 = vadd.f32 0.0, %v1389
        %v1391 = vpop.f32.mrb[0].mxu0
        %v1392 = vpop.f32.mrb[0].mxu0
        %v1393 = vadd.f32 0.0, %v1392
        %v1394 = vpop.f32.mrb[0].mxu0
        %1395 = vdwg.mxu0
        %v1396 = vpack.c.bf16 %v1393, %v1390
        %v1397 = vld [vmem:[#allocation7] sm:$0xff]
        %v1398 = vld [vmem:[#allocation7 + $0x8] sm:$0xff]
        %v1399 = vld [vmem:[#allocation7 + $0x10] sm:$0xff]
        %v1400 = vld [vmem:[#allocation7 + $0x18] sm:$0xff]
        %v1401 = vld [vmem:[#allocation7 + $0x20] sm:$0xff]
        %v1402 = vld [vmem:[#allocation7 + $0x28] sm:$0xff]
        %v1403 = vld [vmem:[#allocation7 + $0x30] sm:$0xff]
        %v1404 = vld [vmem:[#allocation7 + $0x38] sm:$0xff]
        %v1405 = vld [vmem:[#allocation7 + $0x40] sm:$0xff]
        %v1406 = vld [vmem:[#allocation7 + $0x48] sm:$0xff]
        %v1407 = vld [vmem:[#allocation7 + $0x50] sm:$0xff]
        %v1408 = vld [vmem:[#allocation7 + $0x58] sm:$0xff]
        %v1409 = vld [vmem:[#allocation7 + $0x60] sm:$0xff]
        %v1410 = vld [vmem:[#allocation7 + $0x68] sm:$0xff]
        %v1411 = vld [vmem:[#allocation7 + $0x70] sm:$0xff]
        %v1412 = vld [vmem:[#allocation7 + $0x78] sm:$0xff]
        %v1413 = vpack.c.bf16 %v1196, %v1192
        %v1414 = vpack.c.bf16 %v1239, %v1235
        %v1415 = vpack.c.bf16 %v1282, %v1278
        %1416 = vmatprep.subr.bf16.mxu0 0
        %1417 = vmatpush1.bf16.xpose.msra.mxu0 %v1414
        %1418 = vmatprep.subr.bf16.mxu0 0
        %1419 = vmatpush1.bf16.xpose.msra.mxu0 0
        %1420 = vmatprep.subr.bf16.mxu0 0
        %1421 = vmatpush1.bf16.xpose.msra.mxu0 0
        %1422 = vmatprep.subr.bf16.mxu0 0
        %1423 = vmatpush1.bf16.xpose.msra.mxu0 0
        %1424 = vmatprep.subr.bf16.mxu0 0
        %1425 = vmatpush1.bf16.xpose.msra.mxu0 0
        %1426 = vmatprep.subr.bf16.mxu0 0
        %1427 = vmatpush1.bf16.xpose.msra.mxu0 0
        %1428 = vmatprep.subr.bf16.mxu0 0
        %1429 = vmatpush1.bf16.xpose.msra.mxu0 0
        %1430 = vmatprep.subr.bf16.mxu0 0
        %1431 = vmatpush1.bf16.xpose.msra.mxu0 0
        %1432 = vmatprep.subr.bf16.mxu0 0
        %1433 = vmatpush1.bf16.xpose.msra.mxu0 0
        %1434 = vmatprep.subr.bf16.mxu0 0
        %1435 = vmatpush1.bf16.xpose.msra.mxu0 0
        %1436 = vmatprep.subr.bf16.mxu0 0
        %1437 = vmatpush1.bf16.xpose.msra.mxu0 0
        %1438 = vmatprep.subr.bf16.mxu0 0
        %1439 = vmatpush1.bf16.xpose.msra.mxu0 0
        %1440 = vmatprep.subr.bf16.mxu0 0
        %1441 = vmatpush1.bf16.xpose.msra.mxu0 0
        %1442 = vmatprep.subr.bf16.mxu0 0
        %1443 = vmatpush1.bf16.xpose.msra.mxu0 0
        %1444 = vmatprep.subr.bf16.mxu0 0
        %1445 = vmatpush1.bf16.xpose.msra.mxu0 0
        %1446 = vmatprep.subr.bf16.mxu0 0
        %1447 = vmatpush1.bf16.xpose.msra.mxu0 0
        %1448 = vmatprep.mubr.bf16.mxu0 0
        %1449 = vmatmul.mubr.bf16.gmra.mrb[0].mxu0 %v1413
        %v1450 = vpop.f32.mrb[0].mxu0
        %v1451 = vadd.f32 0.0, %v1450
        %v1452 = vpop.f32.mrb[0].mxu0
        %v1453 = vpop.f32.mrb[0].mxu0
        %v1454 = vadd.f32 0.0, %v1453
        %v1455 = vpop.f32.mrb[0].mxu0
        %1456 = vdwg.mxu0
        %v1457 = vsel %vm1328, %v1451, -inf
        %1458 = vmax.xlane.f32.xlu0 %v1457
        %v1459 = vpop.xlane.xlu0 %1458
        %v1460 = vsel %vm1328, %v1454, -inf
        %1461 = vmax.xlane.f32.xlu0 %v1460
        %v1462 = vpop.xlane.xlu0 %1461
        %v1463 = vsub.f32 %v1451, %v1459
        %v1464 = vsub.f32 %v1454, %v1462
        %v1465 = vmul.f32 %v1463, 1.442695
        %v1466 = vpow.pop %v1465
        %v1467 = vmul.f32 %v1464, 1.442695
        %v1468 = vpow.pop %v1467
        %v1469 = vsel %vm1328, %v1466, 0.0
        %1470 = vadd.xlane.f32.xlu0 %v1469
        %v1471 = vpop.xlane.xlu0 %1470
        %v1472 = vsel %vm1328, %v1468, 0.0
        %1473 = vadd.xlane.f32.xlu0 %v1472
        %v1474 = vpop.xlane.xlu0 %1473
        %v1475 = vrcp.pop %v1471
        %v1476 = vrcp.pop %v1474
        %v1477 = vmul.f32 %v1466, %v1475
        %v1478 = vmul.f32 %v1468, %v1476
        %v1479 = vpack.c.bf16 %v1478, %v1477
        %v1481 = vsel %vm1328, %v1479, 0
        %1483 = vmatprep.subr.bf16.mxu0 0
        %1484 = vmatpush1.bf16.msra.mxu0 %v1415
        %1485 = vmatprep.subr.bf16.mxu0 0
        %1486 = vmatpush1.bf16.msra.mxu0 0
        %1487 = vmatprep.subr.bf16.mxu0 0
        %1488 = vmatpush1.bf16.msra.mxu0 0
        %1489 = vmatprep.subr.bf16.mxu0 0
        %1490 = vmatpush1.bf16.msra.mxu0 0
        %1491 = vmatprep.subr.bf16.mxu0 0
        %1492 = vmatpush1.bf16.msra.mxu0 0
        %1493 = vmatprep.subr.bf16.mxu0 0
        %1494 = vmatpush1.bf16.msra.mxu0 0
        %1495 = vmatprep.subr.bf16.mxu0 0
        %1496 = vmatpush1.bf16.msra.mxu0 0
        %1497 = vmatprep.subr.bf16.mxu0 0
        %1498 = vmatpush1.bf16.msra.mxu0 0
        %1499 = vmatprep.subr.bf16.mxu0 0
        %1500 = vmatpush1.bf16.msra.mxu0 0
        %1501 = vmatprep.subr.bf16.mxu0 0
        %1502 = vmatpush1.bf16.msra.mxu0 0
        %1503 = vmatprep.subr.bf16.mxu0 0
        %1504 = vmatpush1.bf16.msra.mxu0 0
        %1505 = vmatprep.subr.bf16.mxu0 0
        %1506 = vmatpush1.bf16.msra.mxu0 0
        %1507 = vmatprep.subr.bf16.mxu0 0
        %1508 = vmatpush1.bf16.msra.mxu0 0
        %1509 = vmatprep.subr.bf16.mxu0 0
        %1510 = vmatpush1.bf16.msra.mxu0 0
        %1511 = vmatprep.subr.bf16.mxu0 0
        %1512 = vmatpush1.bf16.msra.mxu0 0
        %1513 = vmatprep.subr.bf16.mxu0 0
        %1514 = vmatpush1.bf16.msra.mxu0 0
        %1515 = vmatprep.mubr.bf16.mxu0 0
        %1516 = vmatmul.mubr.bf16.gmra.mrb[0].mxu0 %v1481
        %v1517 = vpop.f32.mrb[0].mxu0
        %v1518 = vadd.f32 0.0, %v1517
        %v1519 = vpop.f32.mrb[0].mxu0
        %v1520 = vpop.f32.mrb[0].mxu0
        %v1521 = vadd.f32 0.0, %v1520
        %v1522 = vpop.f32.mrb[0].mxu0
        %1523 = vdwg.mxu0
        %v1524 = vpack.c.bf16 %v1521, %v1518
        %v1525 = vld [vmem:[#allocation7 + $0x80] sm:$0xff]
        %v1526 = vld [vmem:[#allocation7 + $0x88] sm:$0xff]
        %v1527 = vld [vmem:[#allocation7 + $0x90] sm:$0xff]
        %v1528 = vld [vmem:[#allocation7 + $0x98] sm:$0xff]
        %v1529 = vld [vmem:[#allocation7 + $0xa0] sm:$0xff]
        %v1530 = vld [vmem:[#allocation7 + $0xa8] sm:$0xff]
        %v1531 = vld [vmem:[#allocation7 + $0xb0] sm:$0xff]
        %v1532 = vld [vmem:[#allocation7 + $0xb8] sm:$0xff]
        %v1533 = vld [vmem:[#allocation7 + $0xc0] sm:$0xff]
        %v1534 = vld [vmem:[#allocation7 + $0xc8] sm:$0xff]
        %v1535 = vld [vmem:[#allocation7 + $0xd0] sm:$0xff]
        %v1536 = vld [vmem:[#allocation7 + $0xd8] sm:$0xff]
        %v1537 = vld [vmem:[#allocation7 + $0xe0] sm:$0xff]
        %v1538 = vld [vmem:[#allocation7 + $0xe8] sm:$0xff]
        %v1539 = vld [vmem:[#allocation7 + $0xf0] sm:$0xff]
        %v1540 = vld [vmem:[#allocation7 + $0xf8] sm:$0xff]
        %v1557 = vunpack.c.l.b16 %v1525
        %v1558 = vunpack.c.h.b16 %v1525
        %v1559 = vunpack.c.l.b16 %v1526
        %v1560 = vunpack.c.h.b16 %v1526
        %v1561 = vunpack.c.l.b16 %v1527
        %v1562 = vunpack.c.h.b16 %v1527
        %v1563 = vunpack.c.l.b16 %v1528
        %v1564 = vunpack.c.h.b16 %v1528
        %v1565 = vunpack.c.l.b16 %v1529
        %v1566 = vunpack.c.h.b16 %v1529
        %v1567 = vunpack.c.l.b16 %v1530
        %v1568 = vunpack.c.h.b16 %v1530
        %v1569 = vunpack.c.l.b16 %v1531
        %v1570 = vunpack.c.h.b16 %v1531
        %v1571 = vunpack.c.l.b16 %v1532
        %v1572 = vunpack.c.h.b16 %v1532
        %v1573 = vunpack.c.l.b16 %v1533
        %v1574 = vunpack.c.h.b16 %v1533
        %v1575 = vunpack.c.l.b16 %v1534
        %v1576 = vunpack.c.h.b16 %v1534
        %v1577 = vunpack.c.l.b16 %v1535
        %v1578 = vunpack.c.h.b16 %v1535
        %v1579 = vunpack.c.l.b16 %v1536
        %v1580 = vunpack.c.h.b16 %v1536
        %v1581 = vunpack.c.l.b16 %v1537
        %v1582 = vunpack.c.h.b16 %v1537
        %v1583 = vunpack.c.l.b16 %v1538
        %v1584 = vunpack.c.h.b16 %v1538
        %v1585 = vunpack.c.l.b16 %v1539
        %v1586 = vunpack.c.h.b16 %v1539
        %v1587 = vunpack.c.l.b16 %v1540
        %v1588 = vunpack.c.h.b16 %v1540
        %v1589 = vpack.c.b16 %v1559, %v1557
        %v1590 = vpack.c.b16 %v1560, %v1558
        %v1591 = vpack.c.b16 %v1563, %v1561
        %v1592 = vpack.c.b16 %v1564, %v1562
        %v1593 = vpack.c.b16 %v1567, %v1565
        %v1594 = vpack.c.b16 %v1568, %v1566
        %v1595 = vpack.c.b16 %v1571, %v1569
        %v1596 = vpack.c.b16 %v1572, %v1570
        %v1597 = vpack.c.b16 %v1575, %v1573
        %v1598 = vpack.c.b16 %v1576, %v1574
        %v1599 = vpack.c.b16 %v1579, %v1577
        %v1600 = vpack.c.b16 %v1580, %v1578
        %v1601 = vpack.c.b16 %v1583, %v1581
        %v1602 = vpack.c.b16 %v1584, %v1582
        %v1603 = vpack.c.b16 %v1587, %v1585
        %v1604 = vpack.c.b16 %v1588, %v1586
        %1621 = vmatprep.subr.bf16.mxu0 %v1590
        %1622 = vmatpush1.bf16.msra.mxu0 %v1589
        %1623 = vmatprep.subr.bf16.mxu0 %v1592
        %1624 = vmatpush1.bf16.msra.mxu0 %v1591
        %1625 = vmatprep.subr.bf16.mxu0 %v1594
        %1626 = vmatpush1.bf16.msra.mxu0 %v1593
        %1627 = vmatprep.subr.bf16.mxu0 %v1596
        %1628 = vmatpush1.bf16.msra.mxu0 %v1595
        %1629 = vmatprep.subr.bf16.mxu0 %v1598
        %1630 = vmatpush1.bf16.msra.mxu0 %v1597
        %1631 = vmatprep.subr.bf16.mxu0 %v1600
        %1632 = vmatpush1.bf16.msra.mxu0 %v1599
        %1633 = vmatprep.subr.bf16.mxu0 %v1602
        %1634 = vmatpush1.bf16.msra.mxu0 %v1601
        %1635 = vmatprep.subr.bf16.mxu0 %v1604
        %1636 = vmatpush1.bf16.msra.mxu0 %v1603
        %1637 = vmatprep.subr.bf16.mxu0 0
        %1638 = vmatpush1.bf16.msra.mxu0 0
        %1639 = vmatprep.subr.bf16.mxu0 0
        %1640 = vmatpush1.bf16.msra.mxu0 0
        %1641 = vmatprep.subr.bf16.mxu0 0
        %1642 = vmatpush1.bf16.msra.mxu0 0
        %1643 = vmatprep.subr.bf16.mxu0 0
        %1644 = vmatpush1.bf16.msra.mxu0 0
        %1645 = vmatprep.subr.bf16.mxu0 0
        %1646 = vmatpush1.bf16.msra.mxu0 0
        %1647 = vmatprep.subr.bf16.mxu0 0
        %1648 = vmatpush1.bf16.msra.mxu0 0
        %1649 = vmatprep.subr.bf16.mxu0 0
        %1650 = vmatpush1.bf16.msra.mxu0 0
        %1651 = vmatprep.subr.bf16.mxu0 0
        %1652 = vmatpush1.bf16.msra.mxu0 0
        %1653 = vmatprep.mubr.bf16.mxu0 0
        %1654 = vmatmul.mubr.bf16.gmra.mrb[0].mxu0 %v1524
        %v1655 = vpop.f32.mrb[0].mxu0
        %v1656 = vadd.f32 0.0, %v1655
        %v1657 = vpop.f32.mrb[0].mxu0
        %v1658 = vadd.f32 0.0, %v1657
        %v1659 = vpop.f32.mrb[0].mxu0
        %v1660 = vadd.f32 0.0, %v1659
        %v1661 = vpop.f32.mrb[0].mxu0
        %v1662 = vadd.f32 0.0, %v1661
        %1663 = vdwg.mxu0
        %v1680 = vunpack.c.l.b16 %v1397
        %v1681 = vunpack.c.h.b16 %v1397
        %v1682 = vunpack.c.l.b16 %v1398
        %v1683 = vunpack.c.h.b16 %v1398
        %v1684 = vunpack.c.l.b16 %v1399
        %v1685 = vunpack.c.h.b16 %v1399
        %v1686 = vunpack.c.l.b16 %v1400
        %v1687 = vunpack.c.h.b16 %v1400
        %v1688 = vunpack.c.l.b16 %v1401
        %v1689 = vunpack.c.h.b16 %v1401
        %v1690 = vunpack.c.l.b16 %v1402
        %v1691 = vunpack.c.h.b16 %v1402
        %v1692 = vunpack.c.l.b16 %v1403
        %v1693 = vunpack.c.h.b16 %v1403
        %v1694 = vunpack.c.l.b16 %v1404
        %v1695 = vunpack.c.h.b16 %v1404
        %v1696 = vunpack.c.l.b16 %v1405
        %v1697 = vunpack.c.h.b16 %v1405
        %v1698 = vunpack.c.l.b16 %v1406
        %v1699 = vunpack.c.h.b16 %v1406
        %v1700 = vunpack.c.l.b16 %v1407
        %v1701 = vunpack.c.h.b16 %v1407
        %v1702 = vunpack.c.l.b16 %v1408
        %v1703 = vunpack.c.h.b16 %v1408
        %v1704 = vunpack.c.l.b16 %v1409
        %v1705 = vunpack.c.h.b16 %v1409
        %v1706 = vunpack.c.l.b16 %v1410
        %v1707 = vunpack.c.h.b16 %v1410
        %v1708 = vunpack.c.l.b16 %v1411
        %v1709 = vunpack.c.h.b16 %v1411
        %v1710 = vunpack.c.l.b16 %v1412
        %v1711 = vunpack.c.h.b16 %v1412
        %v1712 = vpack.c.b16 %v1682, %v1680
        %v1713 = vpack.c.b16 %v1683, %v1681
        %v1714 = vpack.c.b16 %v1686, %v1684
        %v1715 = vpack.c.b16 %v1687, %v1685
        %v1716 = vpack.c.b16 %v1690, %v1688
        %v1717 = vpack.c.b16 %v1691, %v1689
        %v1718 = vpack.c.b16 %v1694, %v1692
        %v1719 = vpack.c.b16 %v1695, %v1693
        %v1720 = vpack.c.b16 %v1698, %v1696
        %v1721 = vpack.c.b16 %v1699, %v1697
        %v1722 = vpack.c.b16 %v1702, %v1700
        %v1723 = vpack.c.b16 %v1703, %v1701
        %v1724 = vpack.c.b16 %v1706, %v1704
        %v1725 = vpack.c.b16 %v1707, %v1705
        %v1726 = vpack.c.b16 %v1710, %v1708
        %v1727 = vpack.c.b16 %v1711, %v1709
        %1744 = vmatprep.subr.bf16.mxu0 %v1713
        %1745 = vmatpush1.bf16.msra.mxu0 %v1712
        %1746 = vmatprep.subr.bf16.mxu0 %v1715
        %1747 = vmatpush1.bf16.msra.mxu0 %v1714
        %1748 = vmatprep.subr.bf16.mxu0 %v1717
        %1749 = vmatpush1.bf16.msra.mxu0 %v1716
        %1750 = vmatprep.subr.bf16.mxu0 %v1719
        %1751 = vmatpush1.bf16.msra.mxu0 %v1718
        %1752 = vmatprep.subr.bf16.mxu0 %v1721
        %1753 = vmatpush1.bf16.msra.mxu0 %v1720
        %1754 = vmatprep.subr.bf16.mxu0 %v1723
        %1755 = vmatpush1.bf16.msra.mxu0 %v1722
        %1756 = vmatprep.subr.bf16.mxu0 %v1725
        %1757 = vmatpush1.bf16.msra.mxu0 %v1724
        %1758 = vmatprep.subr.bf16.mxu0 %v1727
        %1759 = vmatpush1.bf16.msra.mxu0 %v1726
        %1760 = vmatprep.subr.bf16.mxu0 0
        %1761 = vmatpush1.bf16.msra.mxu0 0
        %1762 = vmatprep.subr.bf16.mxu0 0
        %1763 = vmatpush1.bf16.msra.mxu0 0
        %1764 = vmatprep.subr.bf16.mxu0 0
        %1765 = vmatpush1.bf16.msra.mxu0 0
        %1766 = vmatprep.subr.bf16.mxu0 0
        %1767 = vmatpush1.bf16.msra.mxu0 0
        %1768 = vmatprep.subr.bf16.mxu0 0
        %1769 = vmatpush1.bf16.msra.mxu0 0
        %1770 = vmatprep.subr.bf16.mxu0 0
        %1771 = vmatpush1.bf16.msra.mxu0 0
        %1772 = vmatprep.subr.bf16.mxu0 0
        %1773 = vmatpush1.bf16.msra.mxu0 0
        %1774 = vmatprep.subr.bf16.mxu0 0
        %1775 = vmatpush1.bf16.msra.mxu0 0
        %1776 = vmatprep.mubr.bf16.mxu0 0
        %1777 = vmatmul.mubr.bf16.gmra.mrb[0].mxu0 %v1396
        %v1778 = vpop.f32.mrb[0].mxu0
        %v1779 = vadd.f32 %v1656, %v1778
        %v1780 = vpop.f32.mrb[0].mxu0
        %v1781 = vadd.f32 %v1658, %v1780
        %v1782 = vpop.f32.mrb[0].mxu0
        %v1783 = vadd.f32 %v1660, %v1782
        %v1784 = vpop.f32.mrb[0].mxu0
        %v1785 = vadd.f32 %v1662, %v1784
        %1786 = vdwg.mxu0
        %v1787 = vld [vmem:[#allocation8] sm:$0x3]
        %v1789 = vlaneseq
        %v1790 = vshrl.u32 %v1789, 7
        %v1791 = vsub.s32 0, %v1790
        %v1792 = vrot.slane %v1787, %v1791
        %v1793 = vlaneseq
        %v1794 = vshrl.u32 %v1793, 7
        %v1795 = vsub.s32 1, %v1794
        %v1796 = vrot.slane %v1787, %v1795
        %v1799 = vadd.f32 %v1779, %v1792
        %v1800 = vadd.f32 %v1781, %v1796
        %v1801 = vadd.f32 %v1783, %v1792
        %v1802 = vadd.f32 %v1785, %v1796
        %v1803 = vadd.f32 %v533, %v1799
        %v1804 = vadd.f32 %v534, %v1800
        %v1805 = vadd.f32 %v535, %v1801
        %v1806 = vadd.f32 %v536, %v1802
        %v1807 = vld [vmem:[%s9] sm:$0x3]
        %v1808 = vld [vmem:[%s10] sm:$0x3]
        %v1809 = vadd.f32 %v1803, %v1804
        %1810 = vadd.xlane.f32.xlu0 %v1809
        %v1811 = vpop.xlane.xlu0 %1810
        %v1812 = vadd.f32 %v1805, %v1806
        %1813 = vadd.xlane.f32.xlu0 %v1812
        %v1814 = vpop.xlane.xlu0 %1813
        %v1815 = vrcp.pop 256.0
        %v1816 = vmul.f32 %v1811, %v1815
        %v1817 = vmul.f32 %v1814, %v1815
        %v1818 = vsub.f32 %v1803, %v1816
        %v1819 = vsub.f32 %v1804, %v1816
        %v1820 = vsub.f32 %v1805, %v1817
        %v1821 = vsub.f32 %v1806, %v1817
        %v1822 = vmul.f32 %v1818, %v1818
        %v1823 = vmul.f32 %v1819, %v1819
        %v1824 = vmul.f32 %v1820, %v1820
        %v1825 = vmul.f32 %v1821, %v1821
        %v1826 = vadd.f32 %v1822, %v1823
        %1827 = vadd.xlane.f32.xlu0 %v1826
        %v1828 = vpop.xlane.xlu0 %1827
        %v1829 = vadd.f32 %v1824, %v1825
        %1830 = vadd.xlane.f32.xlu0 %v1829
        %v1831 = vpop.xlane.xlu0 %1830
        %v1832 = vmul.f32 %v1828, %v1815
        %v1833 = vmul.f32 %v1831, %v1815
        %v1834 = vadd.f32 %v1832, 1e-05
        %v1835 = vadd.f32 %v1833, 1e-05
        %v1836 = vrsqrt.pop %v1834
        %v1837 = vrsqrt.pop %v1835
        %v1838 = vmul.f32 %v1818, %v1836
        %v1839 = vmul.f32 %v1819, %v1836
        %v1840 = vmul.f32 %v1820, %v1837
        %v1841 = vmul.f32 %v1821, %v1837
        %v1843 = vlaneseq
        %v1844 = vshrl.u32 %v1843, 7
        %v1845 = vsub.s32 0, %v1844
        %v1846 = vrot.slane %v1807, %v1845
        %v1847 = vlaneseq
        %v1848 = vshrl.u32 %v1847, 7
        %v1849 = vsub.s32 1, %v1848
        %v1850 = vrot.slane %v1807, %v1849
        %v1853 = vmul.f32 %v1838, %v1846
        %v1854 = vmul.f32 %v1839, %v1850
        %v1855 = vmul.f32 %v1840, %v1846
        %v1856 = vmul.f32 %v1841, %v1850
        %v1858 = vlaneseq
        %v1859 = vshrl.u32 %v1858, 7
        %v1860 = vsub.s32 0, %v1859
        %v1861 = vrot.slane %v1808, %v1860
        %v1862 = vlaneseq
        %v1863 = vshrl.u32 %v1862, 7
        %v1864 = vsub.s32 1, %v1863
        %v1865 = vrot.slane %v1808, %v1864
        %v1868 = vadd.f32 %v1853, %v1861
        %v1869 = vadd.f32 %v1854, %v1865
        %v1870 = vadd.f32 %v1855, %v1861
        %v1871 = vadd.f32 %v1856, %v1865
        %v1872 = vpack.c.bf16 %v1870, %v1868
        %v1873 = vpack.c.bf16 %v1871, %v1869
        %v1874 = vld [vmem:[#allocation10] sm:$0xff]
        %v1875 = vld [vmem:[#allocation10 + $0x8] sm:$0xff]
        %v1876 = vld [vmem:[#allocation10 + $0x10] sm:$0xff]
        %v1877 = vld [vmem:[#allocation10 + $0x18] sm:$0xff]
        %v1878 = vld [vmem:[#allocation10 + $0x20] sm:$0xff]
        %v1879 = vld [vmem:[#allocation10 + $0x28] sm:$0xff]
        %v1880 = vld [vmem:[#allocation10 + $0x30] sm:$0xff]
        %v1881 = vld [vmem:[#allocation10 + $0x38] sm:$0xff]
        %v1882 = vld [vmem:[#allocation10 + $0x40] sm:$0xff]
        %v1883 = vld [vmem:[#allocation10 + $0x48] sm:$0xff]
        %v1884 = vld [vmem:[#allocation10 + $0x50] sm:$0xff]
        %v1885 = vld [vmem:[#allocation10 + $0x58] sm:$0xff]
        %v1886 = vld [vmem:[#allocation10 + $0x60] sm:$0xff]
        %v1887 = vld [vmem:[#allocation10 + $0x68] sm:$0xff]
        %v1888 = vld [vmem:[#allocation10 + $0x70] sm:$0xff]
        %v1889 = vld [vmem:[#allocation10 + $0x78] sm:$0xff]
        %v1890 = vld [vmem:[#allocation10 + $0x80] sm:$0xff]
        %v1891 = vld [vmem:[#allocation10 + $0x88] sm:$0xff]
        %v1892 = vld [vmem:[#allocation10 + $0x90] sm:$0xff]
        %v1893 = vld [vmem:[#allocation10 + $0x98] sm:$0xff]
        %v1894 = vld [vmem:[#allocation10 + $0xa0] sm:$0xff]
        %v1895 = vld [vmem:[#allocation10 + $0xa8] sm:$0xff]
        %v1896 = vld [vmem:[#allocation10 + $0xb0] sm:$0xff]
        %v1897 = vld [vmem:[#allocation10 + $0xb8] sm:$0xff]
        %v1898 = vld [vmem:[#allocation10 + $0xc0] sm:$0xff]
        %v1899 = vld [vmem:[#allocation10 + $0xc8] sm:$0xff]
        %v1900 = vld [vmem:[#allocation10 + $0xd0] sm:$0xff]
        %v1901 = vld [vmem:[#allocation10 + $0xd8] sm:$0xff]
        %v1902 = vld [vmem:[#allocation10 + $0xe0] sm:$0xff]
        %v1903 = vld [vmem:[#allocation10 + $0xe8] sm:$0xff]
        %v1904 = vld [vmem:[#allocation10 + $0xf0] sm:$0xff]
        %v1905 = vld [vmem:[#allocation10 + $0xf8] sm:$0xff]
        %v1906 = vld [vmem:[#allocation10 + $0x100] sm:$0xff]
        %v1907 = vld [vmem:[#allocation10 + $0x108] sm:$0xff]
        %v1908 = vld [vmem:[#allocation10 + $0x110] sm:$0xff]
        %v1909 = vld [vmem:[#allocation10 + $0x118] sm:$0xff]
        %v1910 = vld [vmem:[#allocation10 + $0x120] sm:$0xff]
        %v1911 = vld [vmem:[#allocation10 + $0x128] sm:$0xff]
        %v1912 = vld [vmem:[#allocation10 + $0x130] sm:$0xff]
        %v1913 = vld [vmem:[#allocation10 + $0x138] sm:$0xff]
        %v1914 = vld [vmem:[#allocation10 + $0x140] sm:$0xff]
        %v1915 = vld [vmem:[#allocation10 + $0x148] sm:$0xff]
        %v1916 = vld [vmem:[#allocation10 + $0x150] sm:$0xff]
        %v1917 = vld [vmem:[#allocation10 + $0x158] sm:$0xff]
        %v1918 = vld [vmem:[#allocation10 + $0x160] sm:$0xff]
        %v1919 = vld [vmem:[#allocation10 + $0x168] sm:$0xff]
        %v1920 = vld [vmem:[#allocation10 + $0x170] sm:$0xff]
        %v1921 = vld [vmem:[#allocation10 + $0x178] sm:$0xff]
        %v1922 = vld [vmem:[#allocation10 + $0x180] sm:$0xff]
        %v1923 = vld [vmem:[#allocation10 + $0x188] sm:$0xff]
        %v1924 = vld [vmem:[#allocation10 + $0x190] sm:$0xff]
        %v1925 = vld [vmem:[#allocation10 + $0x198] sm:$0xff]
        %v1926 = vld [vmem:[#allocation10 + $0x1a0] sm:$0xff]
        %v1927 = vld [vmem:[#allocation10 + $0x1a8] sm:$0xff]
        %v1928 = vld [vmem:[#allocation10 + $0x1b0] sm:$0xff]
        %v1929 = vld [vmem:[#allocation10 + $0x1b8] sm:$0xff]
        %v1930 = vld [vmem:[#allocation10 + $0x1c0] sm:$0xff]
        %v1931 = vld [vmem:[#allocation10 + $0x1c8] sm:$0xff]
        %v1932 = vld [vmem:[#allocation10 + $0x1d0] sm:$0xff]
        %v1933 = vld [vmem:[#allocation10 + $0x1d8] sm:$0xff]
        %v1934 = vld [vmem:[#allocation10 + $0x1e0] sm:$0xff]
        %v1935 = vld [vmem:[#allocation10 + $0x1e8] sm:$0xff]
        %v1936 = vld [vmem:[#allocation10 + $0x1f0] sm:$0xff]
        %v1937 = vld [vmem:[#allocation10 + $0x1f8] sm:$0xff]
        %v1938 = vld [vmem:[#allocation10 + $0x200] sm:$0xff]
        %v1939 = vld [vmem:[#allocation10 + $0x208] sm:$0xff]
        %v1940 = vld [vmem:[#allocation10 + $0x210] sm:$0xff]
        %v1941 = vld [vmem:[#allocation10 + $0x218] sm:$0xff]
        %v1942 = vld [vmem:[#allocation10 + $0x220] sm:$0xff]
        %v1943 = vld [vmem:[#allocation10 + $0x228] sm:$0xff]
        %v1944 = vld [vmem:[#allocation10 + $0x230] sm:$0xff]
        %v1945 = vld [vmem:[#allocation10 + $0x238] sm:$0xff]
        %v1946 = vld [vmem:[#allocation10 + $0x240] sm:$0xff]
        %v1947 = vld [vmem:[#allocation10 + $0x248] sm:$0xff]
        %v1948 = vld [vmem:[#allocation10 + $0x250] sm:$0xff]
        %v1949 = vld [vmem:[#allocation10 + $0x258] sm:$0xff]
        %v1950 = vld [vmem:[#allocation10 + $0x260] sm:$0xff]
        %v1951 = vld [vmem:[#allocation10 + $0x268] sm:$0xff]
        %v1952 = vld [vmem:[#allocation10 + $0x270] sm:$0xff]
        %v1953 = vld [vmem:[#allocation10 + $0x278] sm:$0xff]
        %v1954 = vld [vmem:[#allocation10 + $0x280] sm:$0xff]
        %v1955 = vld [vmem:[#allocation10 + $0x288] sm:$0xff]
        %v1956 = vld [vmem:[#allocation10 + $0x290] sm:$0xff]
        %v1957 = vld [vmem:[#allocation10 + $0x298] sm:$0xff]
        %v1958 = vld [vmem:[#allocation10 + $0x2a0] sm:$0xff]
        %v1959 = vld [vmem:[#allocation10 + $0x2a8] sm:$0xff]
        %v1960 = vld [vmem:[#allocation10 + $0x2b0] sm:$0xff]
        %v1961 = vld [vmem:[#allocation10 + $0x2b8] sm:$0xff]
        %v1962 = vld [vmem:[#allocation10 + $0x2c0] sm:$0xff]
        %v1963 = vld [vmem:[#allocation10 + $0x2c8] sm:$0xff]
        %v1964 = vld [vmem:[#allocation10 + $0x2d0] sm:$0xff]
        %v1965 = vld [vmem:[#allocation10 + $0x2d8] sm:$0xff]
        %v1966 = vld [vmem:[#allocation10 + $0x2e0] sm:$0xff]
        %v1967 = vld [vmem:[#allocation10 + $0x2e8] sm:$0xff]
        %v1968 = vld [vmem:[#allocation10 + $0x2f0] sm:$0xff]
        %v1969 = vld [vmem:[#allocation10 + $0x2f8] sm:$0xff]
        %v1970 = vld [vmem:[#allocation10 + $0x300] sm:$0xff]
        %v1971 = vld [vmem:[#allocation10 + $0x308] sm:$0xff]
        %v1972 = vld [vmem:[#allocation10 + $0x310] sm:$0xff]
        %v1973 = vld [vmem:[#allocation10 + $0x318] sm:$0xff]
        %v1974 = vld [vmem:[#allocation10 + $0x320] sm:$0xff]
        %v1975 = vld [vmem:[#allocation10 + $0x328] sm:$0xff]
        %v1976 = vld [vmem:[#allocation10 + $0x330] sm:$0xff]
        %v1977 = vld [vmem:[#allocation10 + $0x338] sm:$0xff]
        %v1978 = vld [vmem:[#allocation10 + $0x340] sm:$0xff]
        %v1979 = vld [vmem:[#allocation10 + $0x348] sm:$0xff]
        %v1980 = vld [vmem:[#allocation10 + $0x350] sm:$0xff]
        %v1981 = vld [vmem:[#allocation10 + $0x358] sm:$0xff]
        %v1982 = vld [vmem:[#allocation10 + $0x360] sm:$0xff]
        %v1983 = vld [vmem:[#allocation10 + $0x368] sm:$0xff]
        %v1984 = vld [vmem:[#allocation10 + $0x370] sm:$0xff]
        %v1985 = vld [vmem:[#allocation10 + $0x378] sm:$0xff]
        %v1986 = vld [vmem:[#allocation10 + $0x380] sm:$0xff]
        %v1987 = vld [vmem:[#allocation10 + $0x388] sm:$0xff]
        %v1988 = vld [vmem:[#allocation10 + $0x390] sm:$0xff]
        %v1989 = vld [vmem:[#allocation10 + $0x398] sm:$0xff]
        %v1990 = vld [vmem:[#allocation10 + $0x3a0] sm:$0xff]
        %v1991 = vld [vmem:[#allocation10 + $0x3a8] sm:$0xff]
        %v1992 = vld [vmem:[#allocation10 + $0x3b0] sm:$0xff]
        %v1993 = vld [vmem:[#allocation10 + $0x3b8] sm:$0xff]
        %v1994 = vld [vmem:[#allocation10 + $0x3c0] sm:$0xff]
        %v1995 = vld [vmem:[#allocation10 + $0x3c8] sm:$0xff]
        %v1996 = vld [vmem:[#allocation10 + $0x3d0] sm:$0xff]
        %v1997 = vld [vmem:[#allocation10 + $0x3d8] sm:$0xff]
        %v1998 = vld [vmem:[#allocation10 + $0x3e0] sm:$0xff]
        %v1999 = vld [vmem:[#allocation10 + $0x3e8] sm:$0xff]
        %v2000 = vld [vmem:[#allocation10 + $0x3f0] sm:$0xff]
        %v2001 = vld [vmem:[#allocation10 + $0x3f8] sm:$0xff]
        %v2002 = vld [vmem:[%s6] sm:$0xff]
        %v2004 = vlaneseq
        %v2005 = vshrl.u32 %v2004, 7
        %v2006 = vsub.s32 0, %v2005
        %v2007 = vrot.slane %v2002, %v2006
        %v2008 = vlaneseq
        %v2009 = vshrl.u32 %v2008, 7
        %v2010 = vsub.s32 1, %v2009
        %v2011 = vrot.slane %v2002, %v2010
        %v2012 = vlaneseq
        %v2013 = vshrl.u32 %v2012, 7
        %v2014 = vsub.s32 2, %v2013
        %v2015 = vrot.slane %v2002, %v2014
        %v2016 = vlaneseq
        %v2017 = vshrl.u32 %v2016, 7
        %v2018 = vsub.s32 3, %v2017
        %v2019 = vrot.slane %v2002, %v2018
        %v2020 = vlaneseq
        %v2021 = vshrl.u32 %v2020, 7
        %v2022 = vsub.s32 4, %v2021
        %v2023 = vrot.slane %v2002, %v2022
        %v2024 = vlaneseq
        %v2025 = vshrl.u32 %v2024, 7
        %v2026 = vsub.s32 5, %v2025
        %v2027 = vrot.slane %v2002, %v2026
        %v2028 = vlaneseq
        %v2029 = vshrl.u32 %v2028, 7
        %v2030 = vsub.s32 6, %v2029
        %v2031 = vrot.slane %v2002, %v2030
        %v2032 = vlaneseq
        %v2033 = vshrl.u32 %v2032, 7
        %v2034 = vsub.s32 7, %v2033
        %v2035 = vrot.slane %v2002, %v2034
        %v2172 = vunpack.c.l.b16 %v1874
        %v2173 = vunpack.c.h.b16 %v1874
        %v2174 = vunpack.c.l.b16 %v1875
        %v2175 = vunpack.c.h.b16 %v1875
        %v2176 = vunpack.c.l.b16 %v1876
        %v2177 = vunpack.c.h.b16 %v1876
        %v2178 = vunpack.c.l.b16 %v1877
        %v2179 = vunpack.c.h.b16 %v1877
        %v2180 = vunpack.c.l.b16 %v1878
        %v2181 = vunpack.c.h.b16 %v1878
        %v2182 = vunpack.c.l.b16 %v1879
        %v2183 = vunpack.c.h.b16 %v1879
        %v2184 = vunpack.c.l.b16 %v1880
        %v2185 = vunpack.c.h.b16 %v1880
        %v2186 = vunpack.c.l.b16 %v1881
        %v2187 = vunpack.c.h.b16 %v1881
        %v2188 = vunpack.c.l.b16 %v1882
        %v2189 = vunpack.c.h.b16 %v1882
        %v2190 = vunpack.c.l.b16 %v1883
        %v2191 = vunpack.c.h.b16 %v1883
        %v2192 = vunpack.c.l.b16 %v1884
        %v2193 = vunpack.c.h.b16 %v1884
        %v2194 = vunpack.c.l.b16 %v1885
        %v2195 = vunpack.c.h.b16 %v1885
        %v2196 = vunpack.c.l.b16 %v1886
        %v2197 = vunpack.c.h.b16 %v1886
        %v2198 = vunpack.c.l.b16 %v1887
        %v2199 = vunpack.c.h.b16 %v1887
        %v2200 = vunpack.c.l.b16 %v1888
        %v2201 = vunpack.c.h.b16 %v1888
        %v2202 = vunpack.c.l.b16 %v1889
        %v2203 = vunpack.c.h.b16 %v1889
        %v2204 = vunpack.c.l.b16 %v1890
        %v2205 = vunpack.c.h.b16 %v1890
        %v2206 = vunpack.c.l.b16 %v1891
        %v2207 = vunpack.c.h.b16 %v1891
        %v2208 = vunpack.c.l.b16 %v1892
        %v2209 = vunpack.c.h.b16 %v1892
        %v2210 = vunpack.c.l.b16 %v1893
        %v2211 = vunpack.c.h.b16 %v1893
        %v2212 = vunpack.c.l.b16 %v1894
        %v2213 = vunpack.c.h.b16 %v1894
        %v2214 = vunpack.c.l.b16 %v1895
        %v2215 = vunpack.c.h.b16 %v1895
        %v2216 = vunpack.c.l.b16 %v1896
        %v2217 = vunpack.c.h.b16 %v1896
        %v2218 = vunpack.c.l.b16 %v1897
        %v2219 = vunpack.c.h.b16 %v1897
        %v2220 = vunpack.c.l.b16 %v1898
        %v2221 = vunpack.c.h.b16 %v1898
        %v2222 = vunpack.c.l.b16 %v1899
        %v2223 = vunpack.c.h.b16 %v1899
        %v2224 = vunpack.c.l.b16 %v1900
        %v2225 = vunpack.c.h.b16 %v1900
        %v2226 = vunpack.c.l.b16 %v1901
        %v2227 = vunpack.c.h.b16 %v1901
        %v2228 = vunpack.c.l.b16 %v1902
        %v2229 = vunpack.c.h.b16 %v1902
        %v2230 = vunpack.c.l.b16 %v1903
        %v2231 = vunpack.c.h.b16 %v1903
        %v2232 = vunpack.c.l.b16 %v1904
        %v2233 = vunpack.c.h.b16 %v1904
        %v2234 = vunpack.c.l.b16 %v1905
        %v2235 = vunpack.c.h.b16 %v1905
        %v2236 = vunpack.c.l.b16 %v1906
        %v2237 = vunpack.c.h.b16 %v1906
        %v2238 = vunpack.c.l.b16 %v1907
        %v2239 = vunpack.c.h.b16 %v1907
        %v2240 = vunpack.c.l.b16 %v1908
        %v2241 = vunpack.c.h.b16 %v1908
        %v2242 = vunpack.c.l.b16 %v1909
        %v2243 = vunpack.c.h.b16 %v1909
        %v2244 = vunpack.c.l.b16 %v1910
        %v2245 = vunpack.c.h.b16 %v1910
        %v2246 = vunpack.c.l.b16 %v1911
        %v2247 = vunpack.c.h.b16 %v1911
        %v2248 = vunpack.c.l.b16 %v1912
        %v2249 = vunpack.c.h.b16 %v1912
        %v2250 = vunpack.c.l.b16 %v1913
        %v2251 = vunpack.c.h.b16 %v1913
        %v2252 = vunpack.c.l.b16 %v1914
        %v2253 = vunpack.c.h.b16 %v1914
        %v2254 = vunpack.c.l.b16 %v1915
        %v2255 = vunpack.c.h.b16 %v1915
        %v2256 = vunpack.c.l.b16 %v1916
        %v2257 = vunpack.c.h.b16 %v1916
        %v2258 = vunpack.c.l.b16 %v1917
        %v2259 = vunpack.c.h.b16 %v1917
        %v2260 = vunpack.c.l.b16 %v1918
        %v2261 = vunpack.c.h.b16 %v1918
        %v2262 = vunpack.c.l.b16 %v1919
        %v2263 = vunpack.c.h.b16 %v1919
        %v2264 = vunpack.c.l.b16 %v1920
        %v2265 = vunpack.c.h.b16 %v1920
        %v2266 = vunpack.c.l.b16 %v1921
        %v2267 = vunpack.c.h.b16 %v1921
        %v2268 = vunpack.c.l.b16 %v1922
        %v2269 = vunpack.c.h.b16 %v1922
        %v2270 = vunpack.c.l.b16 %v1923
        %v2271 = vunpack.c.h.b16 %v1923
        %v2272 = vunpack.c.l.b16 %v1924
        %v2273 = vunpack.c.h.b16 %v1924
        %v2274 = vunpack.c.l.b16 %v1925
        %v2275 = vunpack.c.h.b16 %v1925
        %v2276 = vunpack.c.l.b16 %v1926
        %v2277 = vunpack.c.h.b16 %v1926
        %v2278 = vunpack.c.l.b16 %v1927
        %v2279 = vunpack.c.h.b16 %v1927
        %v2280 = vunpack.c.l.b16 %v1928
        %v2281 = vunpack.c.h.b16 %v1928
        %v2282 = vunpack.c.l.b16 %v1929
        %v2283 = vunpack.c.h.b16 %v1929
        %v2284 = vunpack.c.l.b16 %v1930
        %v2285 = vunpack.c.h.b16 %v1930
        %v2286 = vunpack.c.l.b16 %v1931
        %v2287 = vunpack.c.h.b16 %v1931
        %v2288 = vunpack.c.l.b16 %v1932
        %v2289 = vunpack.c.h.b16 %v1932
        %v2290 = vunpack.c.l.b16 %v1933
        %v2291 = vunpack.c.h.b16 %v1933
        %v2292 = vunpack.c.l.b16 %v1934
        %v2293 = vunpack.c.h.b16 %v1934
        %v2294 = vunpack.c.l.b16 %v1935
        %v2295 = vunpack.c.h.b16 %v1935
        %v2296 = vunpack.c.l.b16 %v1936
        %v2297 = vunpack.c.h.b16 %v1936
        %v2298 = vunpack.c.l.b16 %v1937
        %v2299 = vunpack.c.h.b16 %v1937
        %v2300 = vunpack.c.l.b16 %v1938
        %v2301 = vunpack.c.h.b16 %v1938
        %v2302 = vunpack.c.l.b16 %v1939
        %v2303 = vunpack.c.h.b16 %v1939
        %v2304 = vunpack.c.l.b16 %v1940
        %v2305 = vunpack.c.h.b16 %v1940
        %v2306 = vunpack.c.l.b16 %v1941
        %v2307 = vunpack.c.h.b16 %v1941
        %v2308 = vunpack.c.l.b16 %v1942
        %v2309 = vunpack.c.h.b16 %v1942
        %v2310 = vunpack.c.l.b16 %v1943
        %v2311 = vunpack.c.h.b16 %v1943
        %v2312 = vunpack.c.l.b16 %v1944
        %v2313 = vunpack.c.h.b16 %v1944
        %v2314 = vunpack.c.l.b16 %v1945
        %v2315 = vunpack.c.h.b16 %v1945
        %v2316 = vunpack.c.l.b16 %v1946
        %v2317 = vunpack.c.h.b16 %v1946
        %v2318 = vunpack.c.l.b16 %v1947
        %v2319 = vunpack.c.h.b16 %v1947
        %v2320 = vunpack.c.l.b16 %v1948
        %v2321 = vunpack.c.h.b16 %v1948
        %v2322 = vunpack.c.l.b16 %v1949
        %v2323 = vunpack.c.h.b16 %v1949
        %v2324 = vunpack.c.l.b16 %v1950
        %v2325 = vunpack.c.h.b16 %v1950
        %v2326 = vunpack.c.l.b16 %v1951
        %v2327 = vunpack.c.h.b16 %v1951
        %v2328 = vunpack.c.l.b16 %v1952
        %v2329 = vunpack.c.h.b16 %v1952
        %v2330 = vunpack.c.l.b16 %v1953
        %v2331 = vunpack.c.h.b16 %v1953
        %v2332 = vunpack.c.l.b16 %v1954
        %v2333 = vunpack.c.h.b16 %v1954
        %v2334 = vunpack.c.l.b16 %v1955
        %v2335 = vunpack.c.h.b16 %v1955
        %v2336 = vunpack.c.l.b16 %v1956
        %v2337 = vunpack.c.h.b16 %v1956
        %v2338 = vunpack.c.l.b16 %v1957
        %v2339 = vunpack.c.h.b16 %v1957
        %v2340 = vunpack.c.l.b16 %v1958
        %v2341 = vunpack.c.h.b16 %v1958
        %v2342 = vunpack.c.l.b16 %v1959
        %v2343 = vunpack.c.h.b16 %v1959
        %v2344 = vunpack.c.l.b16 %v1960
        %v2345 = vunpack.c.h.b16 %v1960
        %v2346 = vunpack.c.l.b16 %v1961
        %v2347 = vunpack.c.h.b16 %v1961
        %v2348 = vunpack.c.l.b16 %v1962
        %v2349 = vunpack.c.h.b16 %v1962
        %v2350 = vunpack.c.l.b16 %v1963
        %v2351 = vunpack.c.h.b16 %v1963
        %v2352 = vunpack.c.l.b16 %v1964
        %v2353 = vunpack.c.h.b16 %v1964
        %v2354 = vunpack.c.l.b16 %v1965
        %v2355 = vunpack.c.h.b16 %v1965
        %v2356 = vunpack.c.l.b16 %v1966
        %v2357 = vunpack.c.h.b16 %v1966
        %v2358 = vunpack.c.l.b16 %v1967
        %v2359 = vunpack.c.h.b16 %v1967
        %v2360 = vunpack.c.l.b16 %v1968
        %v2361 = vunpack.c.h.b16 %v1968
        %v2362 = vunpack.c.l.b16 %v1969
        %v2363 = vunpack.c.h.b16 %v1969
        %v2364 = vunpack.c.l.b16 %v1970
        %v2365 = vunpack.c.h.b16 %v1970
        %v2366 = vunpack.c.l.b16 %v1971
        %v2367 = vunpack.c.h.b16 %v1971
        %v2368 = vunpack.c.l.b16 %v1972
        %v2369 = vunpack.c.h.b16 %v1972
        %v2370 = vunpack.c.l.b16 %v1973
        %v2371 = vunpack.c.h.b16 %v1973
        %v2372 = vunpack.c.l.b16 %v1974
        %v2373 = vunpack.c.h.b16 %v1974
        %v2374 = vunpack.c.l.b16 %v1975
        %v2375 = vunpack.c.h.b16 %v1975
        %v2376 = vunpack.c.l.b16 %v1976
        %v2377 = vunpack.c.h.b16 %v1976
        %v2378 = vunpack.c.l.b16 %v1977
        %v2379 = vunpack.c.h.b16 %v1977
        %v2380 = vunpack.c.l.b16 %v1978
        %v2381 = vunpack.c.h.b16 %v1978
        %v2382 = vunpack.c.l.b16 %v1979
        %v2383 = vunpack.c.h.b16 %v1979
        %v2384 = vunpack.c.l.b16 %v1980
        %v2385 = vunpack.c.h.b16 %v1980
        %v2386 = vunpack.c.l.b16 %v1981
        %v2387 = vunpack.c.h.b16 %v1981
        %v2388 = vunpack.c.l.b16 %v1982
        %v2389 = vunpack.c.h.b16 %v1982
        %v2390 = vunpack.c.l.b16 %v1983
        %v2391 = vunpack.c.h.b16 %v1983
        %v2392 = vunpack.c.l.b16 %v1984
        %v2393 = vunpack.c.h.b16 %v1984
        %v2394 = vunpack.c.l.b16 %v1985
        %v2395 = vunpack.c.h.b16 %v1985
        %v2396 = vunpack.c.l.b16 %v1986
        %v2397 = vunpack.c.h.b16 %v1986
        %v2398 = vunpack.c.l.b16 %v1987
        %v2399 = vunpack.c.h.b16 %v1987
        %v2400 = vunpack.c.l.b16 %v1988
        %v2401 = vunpack.c.h.b16 %v1988
        %v2402 = vunpack.c.l.b16 %v1989
        %v2403 = vunpack.c.h.b16 %v1989
        %v2404 = vunpack.c.l.b16 %v1990
        %v2405 = vunpack.c.h.b16 %v1990
        %v2406 = vunpack.c.l.b16 %v1991
        %v2407 = vunpack.c.h.b16 %v1991
        %v2408 = vunpack.c.l.b16 %v1992
        %v2409 = vunpack.c.h.b16 %v1992
        %v2410 = vunpack.c.l.b16 %v1993
        %v2411 = vunpack.c.h.b16 %v1993
        %v2412 = vunpack.c.l.b16 %v1994
        %v2413 = vunpack.c.h.b16 %v1994
        %v2414 = vunpack.c.l.b16 %v1995
        %v2415 = vunpack.c.h.b16 %v1995
        %v2416 = vunpack.c.l.b16 %v1996
        %v2417 = vunpack.c.h.b16 %v1996
        %v2418 = vunpack.c.l.b16 %v1997
        %v2419 = vunpack.c.h.b16 %v1997
        %v2420 = vunpack.c.l.b16 %v1998
        %v2421 = vunpack.c.h.b16 %v1998
        %v2422 = vunpack.c.l.b16 %v1999
        %v2423 = vunpack.c.h.b16 %v1999
        %v2424 = vunpack.c.l.b16 %v2000
        %v2425 = vunpack.c.h.b16 %v2000
        %v2426 = vunpack.c.l.b16 %v2001
        %v2427 = vunpack.c.h.b16 %v2001
        %v2428 = vpack.c.b16 %v2180, %v2172
        %v2429 = vpack.c.b16 %v2181, %v2173
        %v2430 = vpack.c.b16 %v2182, %v2174
        %v2431 = vpack.c.b16 %v2183, %v2175
        %v2432 = vpack.c.b16 %v2184, %v2176
        %v2433 = vpack.c.b16 %v2185, %v2177
        %v2434 = vpack.c.b16 %v2186, %v2178
        %v2435 = vpack.c.b16 %v2187, %v2179
        %v2436 = vpack.c.b16 %v2196, %v2188
        %v2437 = vpack.c.b16 %v2197, %v2189
        %v2438 = vpack.c.b16 %v2198, %v2190
        %v2439 = vpack.c.b16 %v2199, %v2191
        %v2440 = vpack.c.b16 %v2200, %v2192
        %v2441 = vpack.c.b16 %v2201, %v2193
        %v2442 = vpack.c.b16 %v2202, %v2194
        %v2443 = vpack.c.b16 %v2203, %v2195
        %v2444 = vpack.c.b16 %v2212, %v2204
        %v2445 = vpack.c.b16 %v2213, %v2205
        %v2446 = vpack.c.b16 %v2214, %v2206
        %v2447 = vpack.c.b16 %v2215, %v2207
        %v2448 = vpack.c.b16 %v2216, %v2208
        %v2449 = vpack.c.b16 %v2217, %v2209
        %v2450 = vpack.c.b16 %v2218, %v2210
        %v2451 = vpack.c.b16 %v2219, %v2211
        %v2452 = vpack.c.b16 %v2228, %v2220
        %v2453 = vpack.c.b16 %v2229, %v2221
        %v2454 = vpack.c.b16 %v2230, %v2222
        %v2455 = vpack.c.b16 %v2231, %v2223
        %v2456 = vpack.c.b16 %v2232, %v2224
        %v2457 = vpack.c.b16 %v2233, %v2225
        %v2458 = vpack.c.b16 %v2234, %v2226
        %v2459 = vpack.c.b16 %v2235, %v2227
        %v2460 = vpack.c.b16 %v2244, %v2236
        %v2461 = vpack.c.b16 %v2245, %v2237
        %v2462 = vpack.c.b16 %v2246, %v2238
        %v2463 = vpack.c.b16 %v2247, %v2239
        %v2464 = vpack.c.b16 %v2248, %v2240
        %v2465 = vpack.c.b16 %v2249, %v2241
        %v2466 = vpack.c.b16 %v2250, %v2242
        %v2467 = vpack.c.b16 %v2251, %v2243
        %v2468 = vpack.c.b16 %v2260, %v2252
        %v2469 = vpack.c.b16 %v2261, %v2253
        %v2470 = vpack.c.b16 %v2262, %v2254
        %v2471 = vpack.c.b16 %v2263, %v2255
        %v2472 = vpack.c.b16 %v2264, %v2256
        %v2473 = vpack.c.b16 %v2265, %v2257
        %v2474 = vpack.c.b16 %v2266, %v2258
        %v2475 = vpack.c.b16 %v2267, %v2259
        %v2476 = vpack.c.b16 %v2276, %v2268
        %v2477 = vpack.c.b16 %v2277, %v2269
        %v2478 = vpack.c.b16 %v2278, %v2270
        %v2479 = vpack.c.b16 %v2279, %v2271
        %v2480 = vpack.c.b16 %v2280, %v2272
        %v2481 = vpack.c.b16 %v2281, %v2273
        %v2482 = vpack.c.b16 %v2282, %v2274
        %v2483 = vpack.c.b16 %v2283, %v2275
        %v2484 = vpack.c.b16 %v2292, %v2284
        %v2485 = vpack.c.b16 %v2293, %v2285
        %v2486 = vpack.c.b16 %v2294, %v2286
        %v2487 = vpack.c.b16 %v2295, %v2287
        %v2488 = vpack.c.b16 %v2296, %v2288
        %v2489 = vpack.c.b16 %v2297, %v2289
        %v2490 = vpack.c.b16 %v2298, %v2290
        %v2491 = vpack.c.b16 %v2299, %v2291
        %v2492 = vpack.c.b16 %v2308, %v2300
        %v2493 = vpack.c.b16 %v2309, %v2301
        %v2494 = vpack.c.b16 %v2310, %v2302
        %v2495 = vpack.c.b16 %v2311, %v2303
        %v2496 = vpack.c.b16 %v2312, %v2304
        %v2497 = vpack.c.b16 %v2313, %v2305
        %v2498 = vpack.c.b16 %v2314, %v2306
        %v2499 = vpack.c.b16 %v2315, %v2307
        %v2500 = vpack.c.b16 %v2324, %v2316
        %v2501 = vpack.c.b16 %v2325, %v2317
        %v2502 = vpack.c.b16 %v2326, %v2318
        %v2503 = vpack.c.b16 %v2327, %v2319
        %v2504 = vpack.c.b16 %v2328, %v2320
        %v2505 = vpack.c.b16 %v2329, %v2321
        %v2506 = vpack.c.b16 %v2330, %v2322
        %v2507 = vpack.c.b16 %v2331, %v2323
        %v2508 = vpack.c.b16 %v2340, %v2332
        %v2509 = vpack.c.b16 %v2341, %v2333
        %v2510 = vpack.c.b16 %v2342, %v2334
        %v2511 = vpack.c.b16 %v2343, %v2335
        %v2512 = vpack.c.b16 %v2344, %v2336
        %v2513 = vpack.c.b16 %v2345, %v2337
        %v2514 = vpack.c.b16 %v2346, %v2338
        %v2515 = vpack.c.b16 %v2347, %v2339
        %v2516 = vpack.c.b16 %v2356, %v2348
        %v2517 = vpack.c.b16 %v2357, %v2349
        %v2518 = vpack.c.b16 %v2358, %v2350
        %v2519 = vpack.c.b16 %v2359, %v2351
        %v2520 = vpack.c.b16 %v2360, %v2352
        %v2521 = vpack.c.b16 %v2361, %v2353
        %v2522 = vpack.c.b16 %v2362, %v2354
        %v2523 = vpack.c.b16 %v2363, %v2355
        %v2524 = vpack.c.b16 %v2372, %v2364
        %v2525 = vpack.c.b16 %v2373, %v2365
        %v2526 = vpack.c.b16 %v2374, %v2366
        %v2527 = vpack.c.b16 %v2375, %v2367
        %v2528 = vpack.c.b16 %v2376, %v2368
        %v2529 = vpack.c.b16 %v2377, %v2369
        %v2530 = vpack.c.b16 %v2378, %v2370
        %v2531 = vpack.c.b16 %v2379, %v2371
        %v2532 = vpack.c.b16 %v2388, %v2380
        %v2533 = vpack.c.b16 %v2389, %v2381
        %v2534 = vpack.c.b16 %v2390, %v2382
        %v2535 = vpack.c.b16 %v2391, %v2383
        %v2536 = vpack.c.b16 %v2392, %v2384
        %v2537 = vpack.c.b16 %v2393, %v2385
        %v2538 = vpack.c.b16 %v2394, %v2386
        %v2539 = vpack.c.b16 %v2395, %v2387
        %v2540 = vpack.c.b16 %v2404, %v2396
        %v2541 = vpack.c.b16 %v2405, %v2397
        %v2542 = vpack.c.b16 %v2406, %v2398
        %v2543 = vpack.c.b16 %v2407, %v2399
        %v2544 = vpack.c.b16 %v2408, %v2400
        %v2545 = vpack.c.b16 %v2409, %v2401
        %v2546 = vpack.c.b16 %v2410, %v2402
        %v2547 = vpack.c.b16 %v2411, %v2403
        %v2548 = vpack.c.b16 %v2420, %v2412
        %v2549 = vpack.c.b16 %v2421, %v2413
        %v2550 = vpack.c.b16 %v2422, %v2414
        %v2551 = vpack.c.b16 %v2423, %v2415
        %v2552 = vpack.c.b16 %v2424, %v2416
        %v2553 = vpack.c.b16 %v2425, %v2417
        %v2554 = vpack.c.b16 %v2426, %v2418
        %v2555 = vpack.c.b16 %v2427, %v2419
        %2684 = vmatprep.subr.bf16.mxu0 %v2429
        %2685 = vmatpush1.bf16.msra.mxu0 %v2428
        %2686 = vmatprep.subr.bf16.mxu0 %v2437
        %2687 = vmatpush1.bf16.msra.mxu0 %v2436
        %2688 = vmatprep.subr.bf16.mxu0 %v2445
        %2689 = vmatpush1.bf16.msra.mxu0 %v2444
        %2690 = vmatprep.subr.bf16.mxu0 %v2453
        %2691 = vmatpush1.bf16.msra.mxu0 %v2452
        %2692 = vmatprep.subr.bf16.mxu0 %v2461
        %2693 = vmatpush1.bf16.msra.mxu0 %v2460
        %2694 = vmatprep.subr.bf16.mxu0 %v2469
        %2695 = vmatpush1.bf16.msra.mxu0 %v2468
        %2696 = vmatprep.subr.bf16.mxu0 %v2477
        %2697 = vmatpush1.bf16.msra.mxu0 %v2476
        %2698 = vmatprep.subr.bf16.mxu0 %v2485
        %2699 = vmatpush1.bf16.msra.mxu0 %v2484
        %2700 = vmatprep.subr.bf16.mxu0 %v2493
        %2701 = vmatpush1.bf16.msra.mxu0 %v2492
        %2702 = vmatprep.subr.bf16.mxu0 %v2501
        %2703 = vmatpush1.bf16.msra.mxu0 %v2500
        %2704 = vmatprep.subr.bf16.mxu0 %v2509
        %2705 = vmatpush1.bf16.msra.mxu0 %v2508
        %2706 = vmatprep.subr.bf16.mxu0 %v2517
        %2707 = vmatpush1.bf16.msra.mxu0 %v2516
        %2708 = vmatprep.subr.bf16.mxu0 %v2525
        %2709 = vmatpush1.bf16.msra.mxu0 %v2524
        %2710 = vmatprep.subr.bf16.mxu0 %v2533
        %2711 = vmatpush1.bf16.msra.mxu0 %v2532
        %2712 = vmatprep.subr.bf16.mxu0 %v2541
        %2713 = vmatpush1.bf16.msra.mxu0 %v2540
        %2714 = vmatprep.subr.bf16.mxu0 %v2549
        %2715 = vmatpush1.bf16.msra.mxu0 %v2548
        %2716 = vmatprep.mubr.bf16.mxu0 %v1873
        %2717 = vmatmul.mubr.bf16.gmra.mrb[0].mxu0 %v1872
        %v2718 = vpop.f32.mrb[0].mxu0
        %v2719 = vadd.f32 %v2007, %v2718
        %v2720 = vpop.f32.mrb[0].mxu0
        %v2721 = vadd.f32 %v2011, %v2720
        %v2722 = vpop.f32.mrb[0].mxu0
        %v2723 = vadd.f32 %v2007, %v2722
        %v2724 = vpop.f32.mrb[0].mxu0
        %v2725 = vadd.f32 %v2011, %v2724
        %2726 = vdwg.mxu0
        %2727 = vmatprep.subr.bf16.mxu0 %v2431
        %2728 = vmatpush1.bf16.msra.mxu0 %v2430
        %2729 = vmatprep.subr.bf16.mxu0 %v2439
        %2730 = vmatpush1.bf16.msra.mxu0 %v2438
        %2731 = vmatprep.subr.bf16.mxu0 %v2447
        %2732 = vmatpush1.bf16.msra.mxu0 %v2446
        %2733 = vmatprep.subr.bf16.mxu0 %v2455
        %2734 = vmatpush1.bf16.msra.mxu0 %v2454
        %2735 = vmatprep.subr.bf16.mxu0 %v2463
        %2736 = vmatpush1.bf16.msra.mxu0 %v2462
        %2737 = vmatprep.subr.bf16.mxu0 %v2471
        %2738 = vmatpush1.bf16.msra.mxu0 %v2470
        %2739 = vmatprep.subr.bf16.mxu0 %v2479
        %2740 = vmatpush1.bf16.msra.mxu0 %v2478
        %2741 = vmatprep.subr.bf16.mxu0 %v2487
        %2742 = vmatpush1.bf16.msra.mxu0 %v2486
        %2743 = vmatprep.subr.bf16.mxu0 %v2495
        %2744 = vmatpush1.bf16.msra.mxu0 %v2494
        %2745 = vmatprep.subr.bf16.mxu0 %v2503
        %2746 = vmatpush1.bf16.msra.mxu0 %v2502
        %2747 = vmatprep.subr.bf16.mxu0 %v2511
        %2748 = vmatpush1.bf16.msra.mxu0 %v2510
        %2749 = vmatprep.subr.bf16.mxu0 %v2519
        %2750 = vmatpush1.bf16.msra.mxu0 %v2518
        %2751 = vmatprep.subr.bf16.mxu0 %v2527
        %2752 = vmatpush1.bf16.msra.mxu0 %v2526
        %2753 = vmatprep.subr.bf16.mxu0 %v2535
        %2754 = vmatpush1.bf16.msra.mxu0 %v2534
        %2755 = vmatprep.subr.bf16.mxu0 %v2543
        %2756 = vmatpush1.bf16.msra.mxu0 %v2542
        %2757 = vmatprep.subr.bf16.mxu0 %v2551
        %2758 = vmatpush1.bf16.msra.mxu0 %v2550
        %2759 = vmatprep.mubr.bf16.mxu0 %v1873
        %2760 = vmatmul.mubr.bf16.gmra.mrb[0].mxu0 %v1872
        %v2761 = vpop.f32.mrb[0].mxu0
        %v2762 = vadd.f32 %v2015, %v2761
        %v2763 = vpop.f32.mrb[0].mxu0
        %v2764 = vadd.f32 %v2019, %v2763
        %v2765 = vpop.f32.mrb[0].mxu0
        %v2766 = vadd.f32 %v2015, %v2765
        %v2767 = vpop.f32.mrb[0].mxu0
        %v2768 = vadd.f32 %v2019, %v2767
        %2769 = vdwg.mxu0
        %2770 = vmatprep.subr.bf16.mxu0 %v2433
        %2771 = vmatpush1.bf16.msra.mxu0 %v2432
        %2772 = vmatprep.subr.bf16.mxu0 %v2441
        %2773 = vmatpush1.bf16.msra.mxu0 %v2440
        %2774 = vmatprep.subr.bf16.mxu0 %v2449
        %2775 = vmatpush1.bf16.msra.mxu0 %v2448
        %2776 = vmatprep.subr.bf16.mxu0 %v2457
        %2777 = vmatpush1.bf16.msra.mxu0 %v2456
        %2778 = vmatprep.subr.bf16.mxu0 %v2465
        %2779 = vmatpush1.bf16.msra.mxu0 %v2464
        %2780 = vmatprep.subr.bf16.mxu0 %v2473
        %2781 = vmatpush1.bf16.msra.mxu0 %v2472
        %2782 = vmatprep.subr.bf16.mxu0 %v2481
        %2783 = vmatpush1.bf16.msra.mxu0 %v2480
        %2784 = vmatprep.subr.bf16.mxu0 %v2489
        %2785 = vmatpush1.bf16.msra.mxu0 %v2488
        %2786 = vmatprep.subr.bf16.mxu0 %v2497
        %2787 = vmatpush1.bf16.msra.mxu0 %v2496
        %2788 = vmatprep.subr.bf16.mxu0 %v2505
        %2789 = vmatpush1.bf16.msra.mxu0 %v2504
        %2790 = vmatprep.subr.bf16.mxu0 %v2513
        %2791 = vmatpush1.bf16.msra.mxu0 %v2512
        %2792 = vmatprep.subr.bf16.mxu0 %v2521
        %2793 = vmatpush1.bf16.msra.mxu0 %v2520
        %2794 = vmatprep.subr.bf16.mxu0 %v2529
        %2795 = vmatpush1.bf16.msra.mxu0 %v2528
        %2796 = vmatprep.subr.bf16.mxu0 %v2537
        %2797 = vmatpush1.bf16.msra.mxu0 %v2536
        %2798 = vmatprep.subr.bf16.mxu0 %v2545
        %2799 = vmatpush1.bf16.msra.mxu0 %v2544
        %2800 = vmatprep.subr.bf16.mxu0 %v2553
        %2801 = vmatpush1.bf16.msra.mxu0 %v2552
        %2802 = vmatprep.mubr.bf16.mxu0 %v1873
        %2803 = vmatmul.mubr.bf16.gmra.mrb[0].mxu0 %v1872
        %v2804 = vpop.f32.mrb[0].mxu0
        %v2805 = vadd.f32 %v2023, %v2804
        %v2806 = vpop.f32.mrb[0].mxu0
        %v2807 = vadd.f32 %v2027, %v2806
        %v2808 = vpop.f32.mrb[0].mxu0
        %v2809 = vadd.f32 %v2023, %v2808
        %v2810 = vpop.f32.mrb[0].mxu0
        %v2811 = vadd.f32 %v2027, %v2810
        %2812 = vdwg.mxu0
        %2813 = vmatprep.subr.bf16.mxu0 %v2435
        %2814 = vmatpush1.bf16.msra.mxu0 %v2434
        %2815 = vmatprep.subr.bf16.mxu0 %v2443
        %2816 = vmatpush1.bf16.msra.mxu0 %v2442
        %2817 = vmatprep.subr.bf16.mxu0 %v2451
        %2818 = vmatpush1.bf16.msra.mxu0 %v2450
        %2819 = vmatprep.subr.bf16.mxu0 %v2459
        %2820 = vmatpush1.bf16.msra.mxu0 %v2458
        %2821 = vmatprep.subr.bf16.mxu0 %v2467
        %2822 = vmatpush1.bf16.msra.mxu0 %v2466
        %2823 = vmatprep.subr.bf16.mxu0 %v2475
        %2824 = vmatpush1.bf16.msra.mxu0 %v2474
        %2825 = vmatprep.subr.bf16.mxu0 %v2483
        %2826 = vmatpush1.bf16.msra.mxu0 %v2482
        %2827 = vmatprep.subr.bf16.mxu0 %v2491
        %2828 = vmatpush1.bf16.msra.mxu0 %v2490
        %2829 = vmatprep.subr.bf16.mxu0 %v2499
        %2830 = vmatpush1.bf16.msra.mxu0 %v2498
        %2831 = vmatprep.subr.bf16.mxu0 %v2507
        %2832 = vmatpush1.bf16.msra.mxu0 %v2506
        %2833 = vmatprep.subr.bf16.mxu0 %v2515
        %2834 = vmatpush1.bf16.msra.mxu0 %v2514
        %2835 = vmatprep.subr.bf16.mxu0 %v2523
        %2836 = vmatpush1.bf16.msra.mxu0 %v2522
        %2837 = vmatprep.subr.bf16.mxu0 %v2531
        %2838 = vmatpush1.bf16.msra.mxu0 %v2530
        %2839 = vmatprep.subr.bf16.mxu0 %v2539
        %2840 = vmatpush1.bf16.msra.mxu0 %v2538
        %2841 = vmatprep.subr.bf16.mxu0 %v2547
        %2842 = vmatpush1.bf16.msra.mxu0 %v2546
        %2843 = vmatprep.subr.bf16.mxu0 %v2555
        %2844 = vmatpush1.bf16.msra.mxu0 %v2554
        %2845 = vmatprep.mubr.bf16.mxu0 %v1873
        %2846 = vmatmul.mubr.bf16.gmra.mrb[0].mxu0 %v1872
        %v2847 = vpop.f32.mrb[0].mxu0
        %v2848 = vadd.f32 %v2031, %v2847
        %v2849 = vpop.f32.mrb[0].mxu0
        %v2850 = vadd.f32 %v2035, %v2849
        %v2851 = vpop.f32.mrb[0].mxu0
        %v2852 = vadd.f32 %v2031, %v2851
        %v2853 = vpop.f32.mrb[0].mxu0
        %v2854 = vadd.f32 %v2035, %v2853
        %2855 = vdwg.mxu0
        %v2856 = vmax.f32 %v2719, 0.0
        %v2857 = vmax.f32 %v2721, 0.0
        %v2858 = vmax.f32 %v2762, 0.0
        %v2859 = vmax.f32 %v2764, 0.0
        %v2860 = vmax.f32 %v2805, 0.0
        %v2861 = vmax.f32 %v2807, 0.0
        %v2862 = vmax.f32 %v2848, 0.0
        %v2863 = vmax.f32 %v2850, 0.0
        %v2864 = vmax.f32 %v2723, 0.0
        %v2865 = vmax.f32 %v2725, 0.0
        %v2866 = vmax.f32 %v2766, 0.0
        %v2867 = vmax.f32 %v2768, 0.0
        %v2868 = vmax.f32 %v2809, 0.0
        %v2869 = vmax.f32 %v2811, 0.0
        %v2870 = vmax.f32 %v2852, 0.0
        %v2871 = vmax.f32 %v2854, 0.0
        %v2872 = vpack.c.bf16 %v2864, %v2856
        %v2873 = vpack.c.bf16 %v2865, %v2857
        %v2874 = vpack.c.bf16 %v2866, %v2858
        %v2875 = vpack.c.bf16 %v2867, %v2859
        %v2876 = vpack.c.bf16 %v2868, %v2860
        %v2877 = vpack.c.bf16 %v2869, %v2861
        %v2878 = vpack.c.bf16 %v2870, %v2862
        %v2879 = vpack.c.bf16 %v2871, %v2863
        %v2880 = vld [vmem:[#allocation11] sm:$0xff]
        %v2881 = vld [vmem:[#allocation11 + $0x8] sm:$0xff]
        %v2882 = vld [vmem:[#allocation11 + $0x10] sm:$0xff]
        %v2883 = vld [vmem:[#allocation11 + $0x18] sm:$0xff]
        %v2884 = vld [vmem:[#allocation11 + $0x20] sm:$0xff]
        %v2885 = vld [vmem:[#allocation11 + $0x28] sm:$0xff]
        %v2886 = vld [vmem:[#allocation11 + $0x30] sm:$0xff]
        %v2887 = vld [vmem:[#allocation11 + $0x38] sm:$0xff]
        %v2888 = vld [vmem:[#allocation11 + $0x40] sm:$0xff]
        %v2889 = vld [vmem:[#allocation11 + $0x48] sm:$0xff]
        %v2890 = vld [vmem:[#allocation11 + $0x50] sm:$0xff]
        %v2891 = vld [vmem:[#allocation11 + $0x58] sm:$0xff]
        %v2892 = vld [vmem:[#allocation11 + $0x60] sm:$0xff]
        %v2893 = vld [vmem:[#allocation11 + $0x68] sm:$0xff]
        %v2894 = vld [vmem:[#allocation11 + $0x70] sm:$0xff]
        %v2895 = vld [vmem:[#allocation11 + $0x78] sm:$0xff]
        %v2896 = vld [vmem:[#allocation11 + $0x80] sm:$0xff]
        %v2897 = vld [vmem:[#allocation11 + $0x88] sm:$0xff]
        %v2898 = vld [vmem:[#allocation11 + $0x90] sm:$0xff]
        %v2899 = vld [vmem:[#allocation11 + $0x98] sm:$0xff]
        %v2900 = vld [vmem:[#allocation11 + $0xa0] sm:$0xff]
        %v2901 = vld [vmem:[#allocation11 + $0xa8] sm:$0xff]
        %v2902 = vld [vmem:[#allocation11 + $0xb0] sm:$0xff]
        %v2903 = vld [vmem:[#allocation11 + $0xb8] sm:$0xff]
        %v2904 = vld [vmem:[#allocation11 + $0xc0] sm:$0xff]
        %v2905 = vld [vmem:[#allocation11 + $0xc8] sm:$0xff]
        %v2906 = vld [vmem:[#allocation11 + $0xd0] sm:$0xff]
        %v2907 = vld [vmem:[#allocation11 + $0xd8] sm:$0xff]
        %v2908 = vld [vmem:[#allocation11 + $0xe0] sm:$0xff]
        %v2909 = vld [vmem:[#allocation11 + $0xe8] sm:$0xff]
        %v2910 = vld [vmem:[#allocation11 + $0xf0] sm:$0xff]
        %v2911 = vld [vmem:[#allocation11 + $0xf8] sm:$0xff]
        %v2912 = vld [vmem:[#allocation11 + $0x100] sm:$0xff]
        %v2913 = vld [vmem:[#allocation11 + $0x108] sm:$0xff]
        %v2914 = vld [vmem:[#allocation11 + $0x110] sm:$0xff]
        %v2915 = vld [vmem:[#allocation11 + $0x118] sm:$0xff]
        %v2916 = vld [vmem:[#allocation11 + $0x120] sm:$0xff]
        %v2917 = vld [vmem:[#allocation11 + $0x128] sm:$0xff]
        %v2918 = vld [vmem:[#allocation11 + $0x130] sm:$0xff]
        %v2919 = vld [vmem:[#allocation11 + $0x138] sm:$0xff]
        %v2920 = vld [vmem:[#allocation11 + $0x140] sm:$0xff]
        %v2921 = vld [vmem:[#allocation11 + $0x148] sm:$0xff]
        %v2922 = vld [vmem:[#allocation11 + $0x150] sm:$0xff]
        %v2923 = vld [vmem:[#allocation11 + $0x158] sm:$0xff]
        %v2924 = vld [vmem:[#allocation11 + $0x160] sm:$0xff]
        %v2925 = vld [vmem:[#allocation11 + $0x168] sm:$0xff]
        %v2926 = vld [vmem:[#allocation11 + $0x170] sm:$0xff]
        %v2927 = vld [vmem:[#allocation11 + $0x178] sm:$0xff]
        %v2928 = vld [vmem:[#allocation11 + $0x180] sm:$0xff]
        %v2929 = vld [vmem:[#allocation11 + $0x188] sm:$0xff]
        %v2930 = vld [vmem:[#allocation11 + $0x190] sm:$0xff]
        %v2931 = vld [vmem:[#allocation11 + $0x198] sm:$0xff]
        %v2932 = vld [vmem:[#allocation11 + $0x1a0] sm:$0xff]
        %v2933 = vld [vmem:[#allocation11 + $0x1a8] sm:$0xff]
        %v2934 = vld [vmem:[#allocation11 + $0x1b0] sm:$0xff]
        %v2935 = vld [vmem:[#allocation11 + $0x1b8] sm:$0xff]
        %v2936 = vld [vmem:[#allocation11 + $0x1c0] sm:$0xff]
        %v2937 = vld [vmem:[#allocation11 + $0x1c8] sm:$0xff]
        %v2938 = vld [vmem:[#allocation11 + $0x1d0] sm:$0xff]
        %v2939 = vld [vmem:[#allocation11 + $0x1d8] sm:$0xff]
        %v2940 = vld [vmem:[#allocation11 + $0x1e0] sm:$0xff]
        %v2941 = vld [vmem:[#allocation11 + $0x1e8] sm:$0xff]
        %v2942 = vld [vmem:[#allocation11 + $0x1f0] sm:$0xff]
        %v2943 = vld [vmem:[#allocation11 + $0x1f8] sm:$0xff]
        %v2944 = vld [vmem:[#allocation11 + $0x200] sm:$0xff]
        %v2945 = vld [vmem:[#allocation11 + $0x208] sm:$0xff]
        %v2946 = vld [vmem:[#allocation11 + $0x210] sm:$0xff]
        %v2947 = vld [vmem:[#allocation11 + $0x218] sm:$0xff]
        %v2948 = vld [vmem:[#allocation11 + $0x220] sm:$0xff]
        %v2949 = vld [vmem:[#allocation11 + $0x228] sm:$0xff]
        %v2950 = vld [vmem:[#allocation11 + $0x230] sm:$0xff]
        %v2951 = vld [vmem:[#allocation11 + $0x238] sm:$0xff]
        %v2952 = vld [vmem:[#allocation11 + $0x240] sm:$0xff]
        %v2953 = vld [vmem:[#allocation11 + $0x248] sm:$0xff]
        %v2954 = vld [vmem:[#allocation11 + $0x250] sm:$0xff]
        %v2955 = vld [vmem:[#allocation11 + $0x258] sm:$0xff]
        %v2956 = vld [vmem:[#allocation11 + $0x260] sm:$0xff]
        %v2957 = vld [vmem:[#allocation11 + $0x268] sm:$0xff]
        %v2958 = vld [vmem:[#allocation11 + $0x270] sm:$0xff]
        %v2959 = vld [vmem:[#allocation11 + $0x278] sm:$0xff]
        %v2960 = vld [vmem:[#allocation11 + $0x280] sm:$0xff]
        %v2961 = vld [vmem:[#allocation11 + $0x288] sm:$0xff]
        %v2962 = vld [vmem:[#allocation11 + $0x290] sm:$0xff]
        %v2963 = vld [vmem:[#allocation11 + $0x298] sm:$0xff]
        %v2964 = vld [vmem:[#allocation11 + $0x2a0] sm:$0xff]
        %v2965 = vld [vmem:[#allocation11 + $0x2a8] sm:$0xff]
        %v2966 = vld [vmem:[#allocation11 + $0x2b0] sm:$0xff]
        %v2967 = vld [vmem:[#allocation11 + $0x2b8] sm:$0xff]
        %v2968 = vld [vmem:[#allocation11 + $0x2c0] sm:$0xff]
        %v2969 = vld [vmem:[#allocation11 + $0x2c8] sm:$0xff]
        %v2970 = vld [vmem:[#allocation11 + $0x2d0] sm:$0xff]
        %v2971 = vld [vmem:[#allocation11 + $0x2d8] sm:$0xff]
        %v2972 = vld [vmem:[#allocation11 + $0x2e0] sm:$0xff]
        %v2973 = vld [vmem:[#allocation11 + $0x2e8] sm:$0xff]
        %v2974 = vld [vmem:[#allocation11 + $0x2f0] sm:$0xff]
        %v2975 = vld [vmem:[#allocation11 + $0x2f8] sm:$0xff]
        %v2976 = vld [vmem:[#allocation11 + $0x300] sm:$0xff]
        %v2977 = vld [vmem:[#allocation11 + $0x308] sm:$0xff]
        %v2978 = vld [vmem:[#allocation11 + $0x310] sm:$0xff]
        %v2979 = vld [vmem:[#allocation11 + $0x318] sm:$0xff]
        %v2980 = vld [vmem:[#allocation11 + $0x320] sm:$0xff]
        %v2981 = vld [vmem:[#allocation11 + $0x328] sm:$0xff]
        %v2982 = vld [vmem:[#allocation11 + $0x330] sm:$0xff]
        %v2983 = vld [vmem:[#allocation11 + $0x338] sm:$0xff]
        %v2984 = vld [vmem:[#allocation11 + $0x340] sm:$0xff]
        %v2985 = vld [vmem:[#allocation11 + $0x348] sm:$0xff]
        %v2986 = vld [vmem:[#allocation11 + $0x350] sm:$0xff]
        %v2987 = vld [vmem:[#allocation11 + $0x358] sm:$0xff]
        %v2988 = vld [vmem:[#allocation11 + $0x360] sm:$0xff]
        %v2989 = vld [vmem:[#allocation11 + $0x368] sm:$0xff]
        %v2990 = vld [vmem:[#allocation11 + $0x370] sm:$0xff]
        %v2991 = vld [vmem:[#allocation11 + $0x378] sm:$0xff]
        %v2992 = vld [vmem:[#allocation11 + $0x380] sm:$0xff]
        %v2993 = vld [vmem:[#allocation11 + $0x388] sm:$0xff]
        %v2994 = vld [vmem:[#allocation11 + $0x390] sm:$0xff]
        %v2995 = vld [vmem:[#allocation11 + $0x398] sm:$0xff]
        %v2996 = vld [vmem:[#allocation11 + $0x3a0] sm:$0xff]
        %v2997 = vld [vmem:[#allocation11 + $0x3a8] sm:$0xff]
        %v2998 = vld [vmem:[#allocation11 + $0x3b0] sm:$0xff]
        %v2999 = vld [vmem:[#allocation11 + $0x3b8] sm:$0xff]
        %v3000 = vld [vmem:[#allocation11 + $0x3c0] sm:$0xff]
        %v3001 = vld [vmem:[#allocation11 + $0x3c8] sm:$0xff]
        %v3002 = vld [vmem:[#allocation11 + $0x3d0] sm:$0xff]
        %v3003 = vld [vmem:[#allocation11 + $0x3d8] sm:$0xff]
        %v3004 = vld [vmem:[#allocation11 + $0x3e0] sm:$0xff]
        %v3005 = vld [vmem:[#allocation11 + $0x3e8] sm:$0xff]
        %v3006 = vld [vmem:[#allocation11 + $0x3f0] sm:$0xff]
        %v3007 = vld [vmem:[#allocation11 + $0x3f8] sm:$0xff]
        %v3008 = vld [vmem:[%s8] sm:$0x3]
        %v3010 = vlaneseq
        %v3011 = vshrl.u32 %v3010, 7
        %v3012 = vsub.s32 0, %v3011
        %v3013 = vrot.slane %v3008, %v3012
        %v3014 = vlaneseq
        %v3015 = vshrl.u32 %v3014, 7
        %v3016 = vsub.s32 1, %v3015
        %v3017 = vrot.slane %v3008, %v3016
        %v3148 = vunpack.c.l.b16 %v2880
        %v3149 = vunpack.c.h.b16 %v2880
        %v3150 = vunpack.c.l.b16 %v2881
        %v3151 = vunpack.c.h.b16 %v2881
        %v3152 = vunpack.c.l.b16 %v2882
        %v3153 = vunpack.c.h.b16 %v2882
        %v3154 = vunpack.c.l.b16 %v2883
        %v3155 = vunpack.c.h.b16 %v2883
        %v3156 = vunpack.c.l.b16 %v2884
        %v3157 = vunpack.c.h.b16 %v2884
        %v3158 = vunpack.c.l.b16 %v2885
        %v3159 = vunpack.c.h.b16 %v2885
        %v3160 = vunpack.c.l.b16 %v2886
        %v3161 = vunpack.c.h.b16 %v2886
        %v3162 = vunpack.c.l.b16 %v2887
        %v3163 = vunpack.c.h.b16 %v2887
        %v3164 = vunpack.c.l.b16 %v2888
        %v3165 = vunpack.c.h.b16 %v2888
        %v3166 = vunpack.c.l.b16 %v2889
        %v3167 = vunpack.c.h.b16 %v2889
        %v3168 = vunpack.c.l.b16 %v2890
        %v3169 = vunpack.c.h.b16 %v2890
        %v3170 = vunpack.c.l.b16 %v2891
        %v3171 = vunpack.c.h.b16 %v2891
        %v3172 = vunpack.c.l.b16 %v2892
        %v3173 = vunpack.c.h.b16 %v2892
        %v3174 = vunpack.c.l.b16 %v2893
        %v3175 = vunpack.c.h.b16 %v2893
        %v3176 = vunpack.c.l.b16 %v2894
        %v3177 = vunpack.c.h.b16 %v2894
        %v3178 = vunpack.c.l.b16 %v2895
        %v3179 = vunpack.c.h.b16 %v2895
        %v3180 = vunpack.c.l.b16 %v2896
        %v3181 = vunpack.c.h.b16 %v2896
        %v3182 = vunpack.c.l.b16 %v2897
        %v3183 = vunpack.c.h.b16 %v2897
        %v3184 = vunpack.c.l.b16 %v2898
        %v3185 = vunpack.c.h.b16 %v2898
        %v3186 = vunpack.c.l.b16 %v2899
        %v3187 = vunpack.c.h.b16 %v2899
        %v3188 = vunpack.c.l.b16 %v2900
        %v3189 = vunpack.c.h.b16 %v2900
        %v3190 = vunpack.c.l.b16 %v2901
        %v3191 = vunpack.c.h.b16 %v2901
        %v3192 = vunpack.c.l.b16 %v2902
        %v3193 = vunpack.c.h.b16 %v2902
        %v3194 = vunpack.c.l.b16 %v2903
        %v3195 = vunpack.c.h.b16 %v2903
        %v3196 = vunpack.c.l.b16 %v2904
        %v3197 = vunpack.c.h.b16 %v2904
        %v3198 = vunpack.c.l.b16 %v2905
        %v3199 = vunpack.c.h.b16 %v2905
        %v3200 = vunpack.c.l.b16 %v2906
        %v3201 = vunpack.c.h.b16 %v2906
        %v3202 = vunpack.c.l.b16 %v2907
        %v3203 = vunpack.c.h.b16 %v2907
        %v3204 = vunpack.c.l.b16 %v2908
        %v3205 = vunpack.c.h.b16 %v2908
        %v3206 = vunpack.c.l.b16 %v2909
        %v3207 = vunpack.c.h.b16 %v2909
        %v3208 = vunpack.c.l.b16 %v2910
        %v3209 = vunpack.c.h.b16 %v2910
        %v3210 = vunpack.c.l.b16 %v2911
        %v3211 = vunpack.c.h.b16 %v2911
        %v3212 = vunpack.c.l.b16 %v2912
        %v3213 = vunpack.c.h.b16 %v2912
        %v3214 = vunpack.c.l.b16 %v2913
        %v3215 = vunpack.c.h.b16 %v2913
        %v3216 = vunpack.c.l.b16 %v2914
        %v3217 = vunpack.c.h.b16 %v2914
        %v3218 = vunpack.c.l.b16 %v2915
        %v3219 = vunpack.c.h.b16 %v2915
        %v3220 = vunpack.c.l.b16 %v2916
        %v3221 = vunpack.c.h.b16 %v2916
        %v3222 = vunpack.c.l.b16 %v2917
        %v3223 = vunpack.c.h.b16 %v2917
        %v3224 = vunpack.c.l.b16 %v2918
        %v3225 = vunpack.c.h.b16 %v2918
        %v3226 = vunpack.c.l.b16 %v2919
        %v3227 = vunpack.c.h.b16 %v2919
        %v3228 = vunpack.c.l.b16 %v2920
        %v3229 = vunpack.c.h.b16 %v2920
        %v3230 = vunpack.c.l.b16 %v2921
        %v3231 = vunpack.c.h.b16 %v2921
        %v3232 = vunpack.c.l.b16 %v2922
        %v3233 = vunpack.c.h.b16 %v2922
        %v3234 = vunpack.c.l.b16 %v2923
        %v3235 = vunpack.c.h.b16 %v2923
        %v3236 = vunpack.c.l.b16 %v2924
        %v3237 = vunpack.c.h.b16 %v2924
        %v3238 = vunpack.c.l.b16 %v2925
        %v3239 = vunpack.c.h.b16 %v2925
        %v3240 = vunpack.c.l.b16 %v2926
        %v3241 = vunpack.c.h.b16 %v2926
        %v3242 = vunpack.c.l.b16 %v2927
        %v3243 = vunpack.c.h.b16 %v2927
        %v3244 = vunpack.c.l.b16 %v2928
        %v3245 = vunpack.c.h.b16 %v2928
        %v3246 = vunpack.c.l.b16 %v2929
        %v3247 = vunpack.c.h.b16 %v2929
        %v3248 = vunpack.c.l.b16 %v2930
        %v3249 = vunpack.c.h.b16 %v2930
        %v3250 = vunpack.c.l.b16 %v2931
        %v3251 = vunpack.c.h.b16 %v2931
        %v3252 = vunpack.c.l.b16 %v2932
        %v3253 = vunpack.c.h.b16 %v2932
        %v3254 = vunpack.c.l.b16 %v2933
        %v3255 = vunpack.c.h.b16 %v2933
        %v3256 = vunpack.c.l.b16 %v2934
        %v3257 = vunpack.c.h.b16 %v2934
        %v3258 = vunpack.c.l.b16 %v2935
        %v3259 = vunpack.c.h.b16 %v2935
        %v3260 = vunpack.c.l.b16 %v2936
        %v3261 = vunpack.c.h.b16 %v2936
        %v3262 = vunpack.c.l.b16 %v2937
        %v3263 = vunpack.c.h.b16 %v2937
        %v3264 = vunpack.c.l.b16 %v2938
        %v3265 = vunpack.c.h.b16 %v2938
        %v3266 = vunpack.c.l.b16 %v2939
        %v3267 = vunpack.c.h.b16 %v2939
        %v3268 = vunpack.c.l.b16 %v2940
        %v3269 = vunpack.c.h.b16 %v2940
        %v3270 = vunpack.c.l.b16 %v2941
        %v3271 = vunpack.c.h.b16 %v2941
        %v3272 = vunpack.c.l.b16 %v2942
        %v3273 = vunpack.c.h.b16 %v2942
        %v3274 = vunpack.c.l.b16 %v2943
        %v3275 = vunpack.c.h.b16 %v2943
        %v3276 = vunpack.c.l.b16 %v2944
        %v3277 = vunpack.c.h.b16 %v2944
        %v3278 = vunpack.c.l.b16 %v2945
        %v3279 = vunpack.c.h.b16 %v2945
        %v3280 = vunpack.c.l.b16 %v2946
        %v3281 = vunpack.c.h.b16 %v2946
        %v3282 = vunpack.c.l.b16 %v2947
        %v3283 = vunpack.c.h.b16 %v2947
        %v3284 = vunpack.c.l.b16 %v2948
        %v3285 = vunpack.c.h.b16 %v2948
        %v3286 = vunpack.c.l.b16 %v2949
        %v3287 = vunpack.c.h.b16 %v2949
        %v3288 = vunpack.c.l.b16 %v2950
        %v3289 = vunpack.c.h.b16 %v2950
        %v3290 = vunpack.c.l.b16 %v2951
        %v3291 = vunpack.c.h.b16 %v2951
        %v3292 = vunpack.c.l.b16 %v2952
        %v3293 = vunpack.c.h.b16 %v2952
        %v3294 = vunpack.c.l.b16 %v2953
        %v3295 = vunpack.c.h.b16 %v2953
        %v3296 = vunpack.c.l.b16 %v2954
        %v3297 = vunpack.c.h.b16 %v2954
        %v3298 = vunpack.c.l.b16 %v2955
        %v3299 = vunpack.c.h.b16 %v2955
        %v3300 = vunpack.c.l.b16 %v2956
        %v3301 = vunpack.c.h.b16 %v2956
        %v3302 = vunpack.c.l.b16 %v2957
        %v3303 = vunpack.c.h.b16 %v2957
        %v3304 = vunpack.c.l.b16 %v2958
        %v3305 = vunpack.c.h.b16 %v2958
        %v3306 = vunpack.c.l.b16 %v2959
        %v3307 = vunpack.c.h.b16 %v2959
        %v3308 = vunpack.c.l.b16 %v2960
        %v3309 = vunpack.c.h.b16 %v2960
        %v3310 = vunpack.c.l.b16 %v2961
        %v3311 = vunpack.c.h.b16 %v2961
        %v3312 = vunpack.c.l.b16 %v2962
        %v3313 = vunpack.c.h.b16 %v2962
        %v3314 = vunpack.c.l.b16 %v2963
        %v3315 = vunpack.c.h.b16 %v2963
        %v3316 = vunpack.c.l.b16 %v2964
        %v3317 = vunpack.c.h.b16 %v2964
        %v3318 = vunpack.c.l.b16 %v2965
        %v3319 = vunpack.c.h.b16 %v2965
        %v3320 = vunpack.c.l.b16 %v2966
        %v3321 = vunpack.c.h.b16 %v2966
        %v3322 = vunpack.c.l.b16 %v2967
        %v3323 = vunpack.c.h.b16 %v2967
        %v3324 = vunpack.c.l.b16 %v2968
        %v3325 = vunpack.c.h.b16 %v2968
        %v3326 = vunpack.c.l.b16 %v2969
        %v3327 = vunpack.c.h.b16 %v2969
        %v3328 = vunpack.c.l.b16 %v2970
        %v3329 = vunpack.c.h.b16 %v2970
        %v3330 = vunpack.c.l.b16 %v2971
        %v3331 = vunpack.c.h.b16 %v2971
        %v3332 = vunpack.c.l.b16 %v2972
        %v3333 = vunpack.c.h.b16 %v2972
        %v3334 = vunpack.c.l.b16 %v2973
        %v3335 = vunpack.c.h.b16 %v2973
        %v3336 = vunpack.c.l.b16 %v2974
        %v3337 = vunpack.c.h.b16 %v2974
        %v3338 = vunpack.c.l.b16 %v2975
        %v3339 = vunpack.c.h.b16 %v2975
        %v3340 = vunpack.c.l.b16 %v2976
        %v3341 = vunpack.c.h.b16 %v2976
        %v3342 = vunpack.c.l.b16 %v2977
        %v3343 = vunpack.c.h.b16 %v2977
        %v3344 = vunpack.c.l.b16 %v2978
        %v3345 = vunpack.c.h.b16 %v2978
        %v3346 = vunpack.c.l.b16 %v2979
        %v3347 = vunpack.c.h.b16 %v2979
        %v3348 = vunpack.c.l.b16 %v2980
        %v3349 = vunpack.c.h.b16 %v2980
        %v3350 = vunpack.c.l.b16 %v2981
        %v3351 = vunpack.c.h.b16 %v2981
        %v3352 = vunpack.c.l.b16 %v2982
        %v3353 = vunpack.c.h.b16 %v2982
        %v3354 = vunpack.c.l.b16 %v2983
        %v3355 = vunpack.c.h.b16 %v2983
        %v3356 = vunpack.c.l.b16 %v2984
        %v3357 = vunpack.c.h.b16 %v2984
        %v3358 = vunpack.c.l.b16 %v2985
        %v3359 = vunpack.c.h.b16 %v2985
        %v3360 = vunpack.c.l.b16 %v2986
        %v3361 = vunpack.c.h.b16 %v2986
        %v3362 = vunpack.c.l.b16 %v2987
        %v3363 = vunpack.c.h.b16 %v2987
        %v3364 = vunpack.c.l.b16 %v2988
        %v3365 = vunpack.c.h.b16 %v2988
        %v3366 = vunpack.c.l.b16 %v2989
        %v3367 = vunpack.c.h.b16 %v2989
        %v3368 = vunpack.c.l.b16 %v2990
        %v3369 = vunpack.c.h.b16 %v2990
        %v3370 = vunpack.c.l.b16 %v2991
        %v3371 = vunpack.c.h.b16 %v2991
        %v3372 = vunpack.c.l.b16 %v2992
        %v3373 = vunpack.c.h.b16 %v2992
        %v3374 = vunpack.c.l.b16 %v2993
        %v3375 = vunpack.c.h.b16 %v2993
        %v3376 = vunpack.c.l.b16 %v2994
        %v3377 = vunpack.c.h.b16 %v2994
        %v3378 = vunpack.c.l.b16 %v2995
        %v3379 = vunpack.c.h.b16 %v2995
        %v3380 = vunpack.c.l.b16 %v2996
        %v3381 = vunpack.c.h.b16 %v2996
        %v3382 = vunpack.c.l.b16 %v2997
        %v3383 = vunpack.c.h.b16 %v2997
        %v3384 = vunpack.c.l.b16 %v2998
        %v3385 = vunpack.c.h.b16 %v2998
        %v3386 = vunpack.c.l.b16 %v2999
        %v3387 = vunpack.c.h.b16 %v2999
        %v3388 = vunpack.c.l.b16 %v3000
        %v3389 = vunpack.c.h.b16 %v3000
        %v3390 = vunpack.c.l.b16 %v3001
        %v3391 = vunpack.c.h.b16 %v3001
        %v3392 = vunpack.c.l.b16 %v3002
        %v3393 = vunpack.c.h.b16 %v3002
        %v3394 = vunpack.c.l.b16 %v3003
        %v3395 = vunpack.c.h.b16 %v3003
        %v3396 = vunpack.c.l.b16 %v3004
        %v3397 = vunpack.c.h.b16 %v3004
        %v3398 = vunpack.c.l.b16 %v3005
        %v3399 = vunpack.c.h.b16 %v3005
        %v3400 = vunpack.c.l.b16 %v3006
        %v3401 = vunpack.c.h.b16 %v3006
        %v3402 = vunpack.c.l.b16 %v3007
        %v3403 = vunpack.c.h.b16 %v3007
        %v3404 = vpack.c.b16 %v3150, %v3148
        %v3405 = vpack.c.b16 %v3151, %v3149
        %v3406 = vpack.c.b16 %v3154, %v3152
        %v3407 = vpack.c.b16 %v3155, %v3153
        %v3408 = vpack.c.b16 %v3158, %v3156
        %v3409 = vpack.c.b16 %v3159, %v3157
        %v3410 = vpack.c.b16 %v3162, %v3160
        %v3411 = vpack.c.b16 %v3163, %v3161
        %v3412 = vpack.c.b16 %v3166, %v3164
        %v3413 = vpack.c.b16 %v3167, %v3165
        %v3414 = vpack.c.b16 %v3170, %v3168
        %v3415 = vpack.c.b16 %v3171, %v3169
        %v3416 = vpack.c.b16 %v3174, %v3172
        %v3417 = vpack.c.b16 %v3175, %v3173
        %v3418 = vpack.c.b16 %v3178, %v3176
        %v3419 = vpack.c.b16 %v3179, %v3177
        %v3420 = vpack.c.b16 %v3182, %v3180
        %v3421 = vpack.c.b16 %v3183, %v3181
        %v3422 = vpack.c.b16 %v3186, %v3184
        %v3423 = vpack.c.b16 %v3187, %v3185
        %v3424 = vpack.c.b16 %v3190, %v3188
        %v3425 = vpack.c.b16 %v3191, %v3189
        %v3426 = vpack.c.b16 %v3194, %v3192
        %v3427 = vpack.c.b16 %v3195, %v3193
        %v3428 = vpack.c.b16 %v3198, %v3196
        %v3429 = vpack.c.b16 %v3199, %v3197
        %v3430 = vpack.c.b16 %v3202, %v3200
        %v3431 = vpack.c.b16 %v3203, %v3201
        %v3432 = vpack.c.b16 %v3206, %v3204
        %v3433 = vpack.c.b16 %v3207, %v3205
        %v3434 = vpack.c.b16 %v3210, %v3208
        %v3435 = vpack.c.b16 %v3211, %v3209
        %v3436 = vpack.c.b16 %v3214, %v3212
        %v3437 = vpack.c.b16 %v3215, %v3213
        %v3438 = vpack.c.b16 %v3218, %v3216
        %v3439 = vpack.c.b16 %v3219, %v3217
        %v3440 = vpack.c.b16 %v3222, %v3220
        %v3441 = vpack.c.b16 %v3223, %v3221
        %v3442 = vpack.c.b16 %v3226, %v3224
        %v3443 = vpack.c.b16 %v3227, %v3225
        %v3444 = vpack.c.b16 %v3230, %v3228
        %v3445 = vpack.c.b16 %v3231, %v3229
        %v3446 = vpack.c.b16 %v3234, %v3232
        %v3447 = vpack.c.b16 %v3235, %v3233
        %v3448 = vpack.c.b16 %v3238, %v3236
        %v3449 = vpack.c.b16 %v3239, %v3237
        %v3450 = vpack.c.b16 %v3242, %v3240
        %v3451 = vpack.c.b16 %v3243, %v3241
        %v3452 = vpack.c.b16 %v3246, %v3244
        %v3453 = vpack.c.b16 %v3247, %v3245
        %v3454 = vpack.c.b16 %v3250, %v3248
        %v3455 = vpack.c.b16 %v3251, %v3249
        %v3456 = vpack.c.b16 %v3254, %v3252
        %v3457 = vpack.c.b16 %v3255, %v3253
        %v3458 = vpack.c.b16 %v3258, %v3256
        %v3459 = vpack.c.b16 %v3259, %v3257
        %v3460 = vpack.c.b16 %v3262, %v3260
        %v3461 = vpack.c.b16 %v3263, %v3261
        %v3462 = vpack.c.b16 %v3266, %v3264
        %v3463 = vpack.c.b16 %v3267, %v3265
        %v3464 = vpack.c.b16 %v3270, %v3268
        %v3465 = vpack.c.b16 %v3271, %v3269
        %v3466 = vpack.c.b16 %v3274, %v3272
        %v3467 = vpack.c.b16 %v3275, %v3273
        %v3468 = vpack.c.b16 %v3278, %v3276
        %v3469 = vpack.c.b16 %v3279, %v3277
        %v3470 = vpack.c.b16 %v3282, %v3280
        %v3471 = vpack.c.b16 %v3283, %v3281
        %v3472 = vpack.c.b16 %v3286, %v3284
        %v3473 = vpack.c.b16 %v3287, %v3285
        %v3474 = vpack.c.b16 %v3290, %v3288
        %v3475 = vpack.c.b16 %v3291, %v3289
        %v3476 = vpack.c.b16 %v3294, %v3292
        %v3477 = vpack.c.b16 %v3295, %v3293
        %v3478 = vpack.c.b16 %v3298, %v3296
        %v3479 = vpack.c.b16 %v3299, %v3297
        %v3480 = vpack.c.b16 %v3302, %v3300
        %v3481 = vpack.c.b16 %v3303, %v3301
        %v3482 = vpack.c.b16 %v3306, %v3304
        %v3483 = vpack.c.b16 %v3307, %v3305
        %v3484 = vpack.c.b16 %v3310, %v3308
        %v3485 = vpack.c.b16 %v3311, %v3309
        %v3486 = vpack.c.b16 %v3314, %v3312
        %v3487 = vpack.c.b16 %v3315, %v3313
        %v3488 = vpack.c.b16 %v3318, %v3316
        %v3489 = vpack.c.b16 %v3319, %v3317
        %v3490 = vpack.c.b16 %v3322, %v3320
        %v3491 = vpack.c.b16 %v3323, %v3321
        %v3492 = vpack.c.b16 %v3326, %v3324
        %v3493 = vpack.c.b16 %v3327, %v3325
        %v3494 = vpack.c.b16 %v3330, %v3328
        %v3495 = vpack.c.b16 %v3331, %v3329
        %v3496 = vpack.c.b16 %v3334, %v3332
        %v3497 = vpack.c.b16 %v3335, %v3333
        %v3498 = vpack.c.b16 %v3338, %v3336
        %v3499 = vpack.c.b16 %v3339, %v3337
        %v3500 = vpack.c.b16 %v3342, %v3340
        %v3501 = vpack.c.b16 %v3343, %v3341
        %v3502 = vpack.c.b16 %v3346, %v3344
        %v3503 = vpack.c.b16 %v3347, %v3345
        %v3504 = vpack.c.b16 %v3350, %v3348
        %v3505 = vpack.c.b16 %v3351, %v3349
        %v3506 = vpack.c.b16 %v3354, %v3352
        %v3507 = vpack.c.b16 %v3355, %v3353
        %v3508 = vpack.c.b16 %v3358, %v3356
        %v3509 = vpack.c.b16 %v3359, %v3357
        %v3510 = vpack.c.b16 %v3362, %v3360
        %v3511 = vpack.c.b16 %v3363, %v3361
        %v3512 = vpack.c.b16 %v3366, %v3364
        %v3513 = vpack.c.b16 %v3367, %v3365
        %v3514 = vpack.c.b16 %v3370, %v3368
        %v3515 = vpack.c.b16 %v3371, %v3369
        %v3516 = vpack.c.b16 %v3374, %v3372
        %v3517 = vpack.c.b16 %v3375, %v3373
        %v3518 = vpack.c.b16 %v3378, %v3376
        %v3519 = vpack.c.b16 %v3379, %v3377
        %v3520 = vpack.c.b16 %v3382, %v3380
        %v3521 = vpack.c.b16 %v3383, %v3381
        %v3522 = vpack.c.b16 %v3386, %v3384
        %v3523 = vpack.c.b16 %v3387, %v3385
        %v3524 = vpack.c.b16 %v3390, %v3388
        %v3525 = vpack.c.b16 %v3391, %v3389
        %v3526 = vpack.c.b16 %v3394, %v3392
        %v3527 = vpack.c.b16 %v3395, %v3393
        %v3528 = vpack.c.b16 %v3398, %v3396
        %v3529 = vpack.c.b16 %v3399, %v3397
        %v3530 = vpack.c.b16 %v3402, %v3400
        %v3531 = vpack.c.b16 %v3403, %v3401
        %3660 = vmatprep.subr.bf16.mxu0 %v3405
        %3661 = vmatpush1.bf16.msra.mxu0 %v3404
        %3662 = vmatprep.subr.bf16.mxu0 %v3407
        %3663 = vmatpush1.bf16.msra.mxu0 %v3406
        %3664 = vmatprep.subr.bf16.mxu0 %v3409
        %3665 = vmatpush1.bf16.msra.mxu0 %v3408
        %3666 = vmatprep.subr.bf16.mxu0 %v3411
        %3667 = vmatpush1.bf16.msra.mxu0 %v3410
        %3668 = vmatprep.subr.bf16.mxu0 %v3413
        %3669 = vmatpush1.bf16.msra.mxu0 %v3412
        %3670 = vmatprep.subr.bf16.mxu0 %v3415
        %3671 = vmatpush1.bf16.msra.mxu0 %v3414
        %3672 = vmatprep.subr.bf16.mxu0 %v3417
        %3673 = vmatpush1.bf16.msra.mxu0 %v3416
        %3674 = vmatprep.subr.bf16.mxu0 %v3419
        %3675 = vmatpush1.bf16.msra.mxu0 %v3418
        %3676 = vmatprep.subr.bf16.mxu0 %v3421
        %3677 = vmatpush1.bf16.msra.mxu0 %v3420
        %3678 = vmatprep.subr.bf16.mxu0 %v3423
        %3679 = vmatpush1.bf16.msra.mxu0 %v3422
        %3680 = vmatprep.subr.bf16.mxu0 %v3425
        %3681 = vmatpush1.bf16.msra.mxu0 %v3424
        %3682 = vmatprep.subr.bf16.mxu0 %v3427
        %3683 = vmatpush1.bf16.msra.mxu0 %v3426
        %3684 = vmatprep.subr.bf16.mxu0 %v3429
        %3685 = vmatpush1.bf16.msra.mxu0 %v3428
        %3686 = vmatprep.subr.bf16.mxu0 %v3431
        %3687 = vmatpush1.bf16.msra.mxu0 %v3430
        %3688 = vmatprep.subr.bf16.mxu0 %v3433
        %3689 = vmatpush1.bf16.msra.mxu0 %v3432
        %3690 = vmatprep.subr.bf16.mxu0 %v3435
        %3691 = vmatpush1.bf16.msra.mxu0 %v3434
        %3692 = vmatprep.mubr.bf16.mxu0 %v2873
        %3693 = vmatmul.mubr.bf16.gmra.mrb[0].mxu0 %v2872
        %v3694 = vpop.f32.mrb[0].mxu0
        %v3695 = vadd.f32 %v3013, %v3694
        %v3696 = vpop.f32.mrb[0].mxu0
        %v3697 = vadd.f32 %v3017, %v3696
        %v3698 = vpop.f32.mrb[0].mxu0
        %v3699 = vadd.f32 %v3013, %v3698
        %v3700 = vpop.f32.mrb[0].mxu0
        %v3701 = vadd.f32 %v3017, %v3700
        %3702 = vdwg.mxu0
        %3703 = vmatprep.subr.bf16.mxu0 %v3437
        %3704 = vmatpush1.bf16.msra.mxu0 %v3436
        %3705 = vmatprep.subr.bf16.mxu0 %v3439
        %3706 = vmatpush1.bf16.msra.mxu0 %v3438
        %3707 = vmatprep.subr.bf16.mxu0 %v3441
        %3708 = vmatpush1.bf16.msra.mxu0 %v3440
        %3709 = vmatprep.subr.bf16.mxu0 %v3443
        %3710 = vmatpush1.bf16.msra.mxu0 %v3442
        %3711 = vmatprep.subr.bf16.mxu0 %v3445
        %3712 = vmatpush1.bf16.msra.mxu0 %v3444
        %3713 = vmatprep.subr.bf16.mxu0 %v3447
        %3714 = vmatpush1.bf16.msra.mxu0 %v3446
        %3715 = vmatprep.subr.bf16.mxu0 %v3449
        %3716 = vmatpush1.bf16.msra.mxu0 %v3448
        %3717 = vmatprep.subr.bf16.mxu0 %v3451
        %3718 = vmatpush1.bf16.msra.mxu0 %v3450
        %3719 = vmatprep.subr.bf16.mxu0 %v3453
        %3720 = vmatpush1.bf16.msra.mxu0 %v3452
        %3721 = vmatprep.subr.bf16.mxu0 %v3455
        %3722 = vmatpush1.bf16.msra.mxu0 %v3454
        %3723 = vmatprep.subr.bf16.mxu0 %v3457
        %3724 = vmatpush1.bf16.msra.mxu0 %v3456
        %3725 = vmatprep.subr.bf16.mxu0 %v3459
        %3726 = vmatpush1.bf16.msra.mxu0 %v3458
        %3727 = vmatprep.subr.bf16.mxu0 %v3461
        %3728 = vmatpush1.bf16.msra.mxu0 %v3460
        %3729 = vmatprep.subr.bf16.mxu0 %v3463
        %3730 = vmatpush1.bf16.msra.mxu0 %v3462
        %3731 = vmatprep.subr.bf16.mxu0 %v3465
        %3732 = vmatpush1.bf16.msra.mxu0 %v3464
        %3733 = vmatprep.subr.bf16.mxu0 %v3467
        %3734 = vmatpush1.bf16.msra.mxu0 %v3466
        %3735 = vmatprep.mubr.bf16.mxu0 %v2875
        %3736 = vmatmul.mubr.bf16.gmra.mrb[0].mxu0 %v2874
        %v3737 = vpop.f32.mrb[0].mxu0
        %v3738 = vadd.f32 %v3695, %v3737
        %v3739 = vpop.f32.mrb[0].mxu0
        %v3740 = vadd.f32 %v3697, %v3739
        %v3741 = vpop.f32.mrb[0].mxu0
        %v3742 = vadd.f32 %v3699, %v3741
        %v3743 = vpop.f32.mrb[0].mxu0
        %v3744 = vadd.f32 %v3701, %v3743
        %3745 = vdwg.mxu0
        %3746 = vmatprep.subr.bf16.mxu0 %v3469
        %3747 = vmatpush1.bf16.msra.mxu0 %v3468
        %3748 = vmatprep.subr.bf16.mxu0 %v3471
        %3749 = vmatpush1.bf16.msra.mxu0 %v3470
        %3750 = vmatprep.subr.bf16.mxu0 %v3473
        %3751 = vmatpush1.bf16.msra.mxu0 %v3472
        %3752 = vmatprep.subr.bf16.mxu0 %v3475
        %3753 = vmatpush1.bf16.msra.mxu0 %v3474
        %3754 = vmatprep.subr.bf16.mxu0 %v3477
        %3755 = vmatpush1.bf16.msra.mxu0 %v3476
        %3756 = vmatprep.subr.bf16.mxu0 %v3479
        %3757 = vmatpush1.bf16.msra.mxu0 %v3478
        %3758 = vmatprep.subr.bf16.mxu0 %v3481
        %3759 = vmatpush1.bf16.msra.mxu0 %v3480
        %3760 = vmatprep.subr.bf16.mxu0 %v3483
        %3761 = vmatpush1.bf16.msra.mxu0 %v3482
        %3762 = vmatprep.subr.bf16.mxu0 %v3485
        %3763 = vmatpush1.bf16.msra.mxu0 %v3484
        %3764 = vmatprep.subr.bf16.mxu0 %v3487
        %3765 = vmatpush1.bf16.msra.mxu0 %v3486
        %3766 = vmatprep.subr.bf16.mxu0 %v3489
        %3767 = vmatpush1.bf16.msra.mxu0 %v3488
        %3768 = vmatprep.subr.bf16.mxu0 %v3491
        %3769 = vmatpush1.bf16.msra.mxu0 %v3490
        %3770 = vmatprep.subr.bf16.mxu0 %v3493
        %3771 = vmatpush1.bf16.msra.mxu0 %v3492
        %3772 = vmatprep.subr.bf16.mxu0 %v3495
        %3773 = vmatpush1.bf16.msra.mxu0 %v3494
        %3774 = vmatprep.subr.bf16.mxu0 %v3497
        %3775 = vmatpush1.bf16.msra.mxu0 %v3496
        %3776 = vmatprep.subr.bf16.mxu0 %v3499
        %3777 = vmatpush1.bf16.msra.mxu0 %v3498
        %3778 = vmatprep.mubr.bf16.mxu0 %v2877
        %3779 = vmatmul.mubr.bf16.gmra.mrb[0].mxu0 %v2876
        %v3780 = vpop.f32.mrb[0].mxu0
        %v3781 = vadd.f32 %v3738, %v3780
        %v3782 = vpop.f32.mrb[0].mxu0
        %v3783 = vadd.f32 %v3740, %v3782
        %v3784 = vpop.f32.mrb[0].mxu0
        %v3785 = vadd.f32 %v3742, %v3784
        %v3786 = vpop.f32.mrb[0].mxu0
        %v3787 = vadd.f32 %v3744, %v3786
        %3788 = vdwg.mxu0
        %3789 = vmatprep.subr.bf16.mxu0 %v3501
        %3790 = vmatpush1.bf16.msra.mxu0 %v3500
        %3791 = vmatprep.subr.bf16.mxu0 %v3503
        %3792 = vmatpush1.bf16.msra.mxu0 %v3502
        %3793 = vmatprep.subr.bf16.mxu0 %v3505
        %3794 = vmatpush1.bf16.msra.mxu0 %v3504
        %3795 = vmatprep.subr.bf16.mxu0 %v3507
        %3796 = vmatpush1.bf16.msra.mxu0 %v3506
        %3797 = vmatprep.subr.bf16.mxu0 %v3509
        %3798 = vmatpush1.bf16.msra.mxu0 %v3508
        %3799 = vmatprep.subr.bf16.mxu0 %v3511
        %3800 = vmatpush1.bf16.msra.mxu0 %v3510
        %3801 = vmatprep.subr.bf16.mxu0 %v3513
        %3802 = vmatpush1.bf16.msra.mxu0 %v3512
        %3803 = vmatprep.subr.bf16.mxu0 %v3515
        %3804 = vmatpush1.bf16.msra.mxu0 %v3514
        %3805 = vmatprep.subr.bf16.mxu0 %v3517
        %3806 = vmatpush1.bf16.msra.mxu0 %v3516
        %3807 = vmatprep.subr.bf16.mxu0 %v3519
        %3808 = vmatpush1.bf16.msra.mxu0 %v3518
        %3809 = vmatprep.subr.bf16.mxu0 %v3521
        %3810 = vmatpush1.bf16.msra.mxu0 %v3520
        %3811 = vmatprep.subr.bf16.mxu0 %v3523
        %3812 = vmatpush1.bf16.msra.mxu0 %v3522
        %3813 = vmatprep.subr.bf16.mxu0 %v3525
        %3814 = vmatpush1.bf16.msra.mxu0 %v3524
        %3815 = vmatprep.subr.bf16.mxu0 %v3527
        %3816 = vmatpush1.bf16.msra.mxu0 %v3526
        %3817 = vmatprep.subr.bf16.mxu0 %v3529
        %3818 = vmatpush1.bf16.msra.mxu0 %v3528
        %3819 = vmatprep.subr.bf16.mxu0 %v3531
        %3820 = vmatpush1.bf16.msra.mxu0 %v3530
        %3821 = vmatprep.mubr.bf16.mxu0 %v2879
        %3822 = vmatmul.mubr.bf16.gmra.mrb[0].mxu0 %v2878
        %v3823 = vpop.f32.mrb[0].mxu0
        %v3824 = vadd.f32 %v3781, %v3823
        %v3825 = vpop.f32.mrb[0].mxu0
        %v3826 = vadd.f32 %v3783, %v3825
        %v3827 = vpop.f32.mrb[0].mxu0
        %v3828 = vadd.f32 %v3785, %v3827
        %v3829 = vpop.f32.mrb[0].mxu0
        %v3830 = vadd.f32 %v3787, %v3829
        %3831 = vdwg.mxu0
        %v3832 = vadd.f32 %v1868, %v3824
        %v3833 = vadd.f32 %v1869, %v3826
        %v3834 = vadd.f32 %v1870, %v3828
        %v3835 = vadd.f32 %v1871, %v3830
        %v3836 = vld [vmem:[%s11] sm:$0x3]
        %v3837 = vld [vmem:[%s12] sm:$0x3]
        %v3838 = vadd.f32 %v3832, %v3833
        %3839 = vadd.xlane.f32.xlu0 %v3838
        %v3840 = vpop.xlane.xlu0 %3839
        %v3841 = vadd.f32 %v3834, %v3835
        %3842 = vadd.xlane.f32.xlu0 %v3841
        %v3843 = vpop.xlane.xlu0 %3842
        %v3844 = vmul.f32 %v3840, %v1815
        %v3845 = vmul.f32 %v3843, %v1815
        %v3846 = vsub.f32 %v3832, %v3844
        %v3847 = vsub.f32 %v3833, %v3844
        %v3848 = vsub.f32 %v3834, %v3845
        %v3849 = vsub.f32 %v3835, %v3845
        %v3850 = vmul.f32 %v3846, %v3846
        %v3851 = vmul.f32 %v3847, %v3847
        %v3852 = vmul.f32 %v3848, %v3848
        %v3853 = vmul.f32 %v3849, %v3849
        %v3854 = vadd.f32 %v3850, %v3851
        %3855 = vadd.xlane.f32.xlu0 %v3854
        %v3856 = vpop.xlane.xlu0 %3855
        %v3857 = vadd.f32 %v3852, %v3853
        %3858 = vadd.xlane.f32.xlu0 %v3857
        %v3859 = vpop.xlane.xlu0 %3858
        %v3860 = vmul.f32 %v3856, %v1815
        %v3861 = vmul.f32 %v3859, %v1815
        %v3862 = vadd.f32 %v3860, 1e-05
        %v3863 = vadd.f32 %v3861, 1e-05
        %v3864 = vrsqrt.pop %v3862
        %v3865 = vrsqrt.pop %v3863
        %v3866 = vmul.f32 %v3846, %v3864
        %v3867 = vmul.f32 %v3847, %v3864
        %v3868 = vmul.f32 %v3848, %v3865
        %v3869 = vmul.f32 %v3849, %v3865
        %v3871 = vlaneseq
        %v3872 = vshrl.u32 %v3871, 7
        %v3873 = vsub.s32 0, %v3872
        %v3874 = vrot.slane %v3836, %v3873
        %v3875 = vlaneseq
        %v3876 = vshrl.u32 %v3875, 7
        %v3877 = vsub.s32 1, %v3876
        %v3878 = vrot.slane %v3836, %v3877
        %v3881 = vmul.f32 %v3866, %v3874
        %v3882 = vmul.f32 %v3867, %v3878
        %v3883 = vmul.f32 %v3868, %v3874
        %v3884 = vmul.f32 %v3869, %v3878
        %v3886 = vlaneseq
        %v3887 = vshrl.u32 %v3886, 7
        %v3888 = vsub.s32 0, %v3887
        %v3889 = vrot.slane %v3837, %v3888
        %v3890 = vlaneseq
        %v3891 = vshrl.u32 %v3890, 7
        %v3892 = vsub.s32 1, %v3891
        %v3893 = vrot.slane %v3837, %v3892
        %v3896 = vadd.f32 %v3881, %v3889
        %v3897 = vadd.f32 %v3882, %v3893
        %v3898 = vadd.f32 %v3883, %v3889
        %v3899 = vadd.f32 %v3884, %v3893
        %v3900 = vpack.c.bf16 %v3898, %v3896
        %v3901 = vpack.c.bf16 %v3899, %v3897
        %v3904 = vunpack.c.l.b16 %v3900
        %v3905 = vunpack.c.l.b16 %v3901
        %v3906 = vunpack.c.h.b16 %v3900
        %v3907 = vunpack.c.h.b16 %v3901
        %v3908 = vpack.c.b16 %v3905, %v3904
        %v3909 = vpack.c.b16 %v3907, %v3906
        %3912 = vst [vmem:[%s529] sm:$0xff] %v3908
        %3913 = vst [vmem:[%s529 + $0x8] sm:$0xff] %v3909
        %s3914 = sand.u32 %s319, 1
        %s3915 = scalar_lea.sflag [#allocation4], %s3914
        %s3916 = sand.u32 %s319, 1
        %s3917 = smul.addr %s3916, 16
        %s3918 = scalar_lea.vmem [#allocation13], %s3917
        // Predicated region
        $region97: #{tpu_custom_call.1} parent=71 // pred_check
          %p3919 = pneg %p329
        $region98: #{tpu_custom_call.1} parent=71 // pred_check_branch
          %3921 = sbr.rel (%p3919) target = $region100
        $region99: #{tpu_custom_call.1} parent=71 // pred_region
          %s3923 = ssub.s32 256, 256
          %3924 = vsyncadd %s3915, %s3923
          %s3925 = smul.addr %s33, 4
          %s3926 = smul.addr %s3925, 64
          %s3927 = scalar_lea.hbm %s13, %s3926
          %s3928 = sshll.u32 %s3918, 4
          %s3929 = int_to_ptr.vmem [resolvable:$true] %s3928
          %3934 = dma.vmem_to_hbm [thread:$0]  %s3929, 256, %s3927, %s3915, 128, 128, 8
        $region100: #{tpu_custom_call.1} parent=71 // pred_fallthru
          _
      $region72: #{tpu_custom_call.1} parent=5 // pred_fallthru
        _
      %p3935 = scmp.le.s32.totalorder 2, %s28
      // Predicated region
      $region101: #{tpu_custom_call.1} parent=5 // pred_check
        %p3936 = pneg %p3935
      $region102: #{tpu_custom_call.1} parent=5 // pred_check_branch
        %3938 = sbr.rel (%p3936) target = $region104
      $region103: #{tpu_custom_call.1} parent=5 // pred_region
        %s3939 = ssub.s32 %s28, 2
        // Predicated region
        $region105: #{tpu_custom_call.1} parent=103 // pred_check
          %p3940 = pneg %p335
        $region106: #{tpu_custom_call.1} parent=103 // pred_check_branch
          %3942 = sbr.rel (%p3940) target = $region108
        $region107: #{tpu_custom_call.1} parent=103 // pred_region
          %s3943 = sand.u32 %s320, 1
          %s3944 = scalar_lea.sflag [#allocation4], %s3943
          %s3945 = sand.u32 %s320, 1
          %s3946 = smul.addr %s3945, 16
          %s3947 = scalar_lea.vmem [#allocation13], %s3946
          %3948 = dma.done %s3944, 256
        $region108: #{tpu_custom_call.1} parent=103 // pred_fallthru
          _
      $region104: #{tpu_custom_call.1} parent=5 // pred_fallthru
        _
    $region6: #{tpu_custom_call.1} parent=1 // loop_footer
      %s32 = sadd.s32 1, %s28
    $region7: #{tpu_custom_call.1} parent=1 // loop_footer_branch
      %27 = sbr.rel target = $region3
    $region8: #{tpu_custom_call.1} parent=1 // loop_exit
      _
    %3949 = vsyncpa [#allocation3], 1
    %s3950 = scalar_lea.sflag [#allocation3], 1
    %3951 = vsyncpa %s3950, 1
    %3952 = vsyncpa [#allocation6], 1
    %3953 = vsyncpa [#allocation9], 1
    %3954 = vsyncpa [#allocation12], 1
    %3955 = vsyncpa [#allocation4], 1
    %s3956 = scalar_lea.sflag [#allocation4], 1
    %3957 = vsyncpa %s3956, 1

// kernel: tpu_custom_call.1
$region0: #{tpu_custom_call.1}
  #allocation0 [shape = 'u32[]', space=smem, size = 0x4, offset = 0x4, fixed_abs, tag = 'smem constant byte address 0x4 - core index']
  #allocation1 [shape = 'u32[144,128]{1,0:T(1,128)}', space=vmem, size = 0x12000, scoped, tag = 'internal scratch']
  %s0 = inlined_call_operand.hbm [shape: bf16[2,16,256], index: 0, kind: input, shape index: {}]
  %s1 = inlined_call_operand.hbm [shape: bf16[256,768], index: 1, kind: input, shape index: {}]
  %s2 = inlined_call_operand.vmem [shape: f32[1,768], index: 2, kind: input, shape index: {}]
  %s3 = inlined_call_operand.hbm [shape: bf16[256,256], index: 3, kind: input, shape index: {}]
  %s4 = inlined_call_operand.hbm [shape: f32[1,256], index: 4, kind: input, shape index: {}]
  %s5 = inlined_call_operand.hbm [shape: bf16[256,1024], index: 5, kind: input, shape index: {}]
  %s6 = inlined_call_operand.vmem [shape: f32[1,1024], index: 6, kind: input, shape index: {}]
  %s7 = inlined_call_operand.hbm [shape: bf16[1024,256], index: 7, kind: input, shape index: {}]
  %s8 = inlined_call_operand.vmem [shape: f32[1,256], index: 8, kind: input, shape index: {}]
  %s9 = inlined_call_operand.vmem [shape: f32[1,256], index: 9, kind: input, shape index: {}]
  %s10 = inlined_call_operand.vmem [shape: f32[1,256], index: 10, kind: input, shape index: {}]
  %s11 = inlined_call_operand.vmem [shape: f32[1,256], index: 11, kind: input, shape index: {}]
  %s12 = inlined_call_operand.vmem [shape: f32[1,256], index: 12, kind: input, shape index: {}]
  %s13 = inlined_call_operand.hbm [shape: bf16[2,16,256], index: 13, kind: output, shape index: {}]
  %s14 = sld [smem:[#allocation0]]
  $region109: #{tpu_custom_call.1} parent=0
    _
  %s16 = ssub.s32 1, %s14
  %s17 = scalar_select 0, %s16, %s14
  $region1: #{tpu_custom_call.1} parent=0
    #allocation2 [shape = 'u8[16384]{0}', space=vmem, size = 0x4000, scoped, tag = 'input window, operand 0']
    #allocation3 [shape = 's32[2]{0}', space=sflag, size = 0x8, scoped, tag = 'scoped memory for tpu_custom_call.1']
    #allocation4 [shape = 's32[2]{0}', space=sflag, size = 0x8, scoped, tag = 'scoped memory for tpu_custom_call.1']
    #allocation5 [shape = 'u8[393216]{0}', space=vmem, size = 0x60000, scoped, tag = 'input window, operand 1, single buffered']
    #allocation6 [shape = 's32[1]{0}', space=sflag, size = 0x4, scoped, tag = 'scoped memory for tpu_custom_call.1']
    #allocation7 [shape = 'u8[131072]{0}', space=vmem, size = 0x20000, scoped, tag = 'input window, operand 3, single buffered']
    #allocation8 [shape = 'u8[1024]{0}', space=vmem, size = 0x400, scoped, tag = 'input window, operand 4, single buffered']
    #allocation9 [shape = 's32[1]{0}', space=sflag, size = 0x4, scoped, tag = 'scoped memory for tpu_custom_call.1']
    #allocation10 [shape = 'u8[524288]{0}', space=vmem, size = 0x80000, scoped, tag = 'input window, operand 5, single buffered']
    #allocation11 [shape = 'u8[524288]{0}', space=vmem, size = 0x80000, scoped, tag = 'input window, operand 7, single buffered']
    #allocation12 [shape = 's32[1]{0}', space=sflag, size = 0x4, scoped, tag = 'scoped memory for tpu_custom_call.1']
    #allocation13 [shape = 'u8[16384]{0}', space=vmem, size = 0x4000, scoped, tag = 'output window, operand 0']
    %18 = vsyncpa [#allocation3], 0
    %s19 = scalar_lea.sflag [#allocation3], 1
    %20 = vsyncpa %s19, 0
    %21 = vsyncpa [#allocation6], 0
    %22 = vsyncpa [#allocation9], 0
    %23 = vsyncpa [#allocation12], 0
    %24 = vsyncpa [#allocation4], 0
    %s25 = scalar_lea.sflag [#allocation4], 1
    %26 = vsyncpa %s25, 0
    loop: start=0, step=1, limit=4
    $region2: #{tpu_custom_call.1} parent=1 // loop_pre_header
      _
    $region3: #{tpu_custom_call.1} parent=1 // loop_header
      %s28 = sphi 0, %s32
      %p29 = scmp.ge.s32.totalorder %s28, 4
      %s38 = sphi 0, %s40
      %s41 = sphi 0, %s38
      %s42 = sphi 0, %s41
      %s58 = sphi 0, %s42
      %s62 = sphi 0, %s62
      %s64 = sphi 0, %s62
      %s65 = sphi 0, %s64
      %s79 = sphi 0, %s65
      %s83 = sphi 0, %s83
      %s85 = sphi 0, %s83
      %s86 = sphi 0, %s85
      %s100 = sphi 0, %s86
      %s104 = sphi 0, %s104
      %s106 = sphi 0, %s104
      %s107 = sphi 0, %s106
      %s121 = sphi 0, %s107
      %s125 = sphi 0, %s125
      %s127 = sphi 0, %s125
      %s128 = sphi 0, %s127
      %s142 = sphi 0, %s128
      %s146 = sphi 0, %s146
      %s148 = sphi 0, %s146
      %s149 = sphi 0, %s148
      %s163 = sphi 0, %s149
      %s167 = sphi 0, %s167
      %s169 = sphi 0, %s167
      %s170 = sphi 0, %s169
      %s184 = sphi 0, %s170
      %s188 = sphi 0, %s188
      %s190 = sphi 0, %s188
      %s191 = sphi 0, %s190
      %s205 = sphi 0, %s191
      %s209 = sphi 0, %s209
      %s211 = sphi 0, %s209
      %s212 = sphi 0, %s211
      %s226 = sphi 0, %s212
      %s230 = sphi 0, %s230
      %s232 = sphi 0, %s230
      %s233 = sphi 0, %s232
      %s247 = sphi 0, %s233
      %s251 = sphi 0, %s251
      %s253 = sphi 0, %s251
      %s254 = sphi 0, %s253
      %s268 = sphi 0, %s254
      %s272 = sphi 0, %s272
      %s274 = sphi 0, %s272
      %s275 = sphi 0, %s274
      %s289 = sphi 0, %s275
      %s293 = sphi 0, %s293
      %s295 = sphi 0, %s293
      %s296 = sphi 0, %s295
      %s310 = sphi 0, %s296
      %s316 = sphi 0, %s318
      %s319 = sphi 0, %s316
      %s320 = sphi 0, %s319
      %s336 = sphi 0, %s320
    $region4: #{tpu_custom_call.1} parent=1 // loop_header_branch
      %31 = sbr.rel (%p29) target = $region8
    $region5: #{tpu_custom_call.1} parent=1 // loop_body
      %s33 = ssub.s32 %s28, 1
      %s34 = ssub.s32 %s28, 2
      %s35 = sadd.s32 %s28, 1
      %s36 = ssub.s32 %s28, %s35
      %p37 = scmp.eq.s32.totalorder %s36, 0
      %s39 = sadd.s32 %s38, 1
      %s40 = scalar_select %p37, %s38, %s39
      %p43 = pneg %p37
      %p44 = scmp.eq.s32.totalorder %s28, 1
      %p45 = por %p43, %p44
      %p46 = scmp.ne.s32.totalorder %s38, %s41
      %p47 = scmp.eq.s32.totalorder %s28, 0
      %p48 = por %p46, %p47
      %p49 = scmp.ne.s32.totalorder %s38, %s41
      %p50 = scmp.eq.s32.totalorder %s33, 1
      %p51 = por %p49, %p50
      %p52 = scmp.ne.s32.totalorder %s41, %s42
      %p53 = scmp.eq.s32.totalorder %s33, 0
      %p54 = por %p52, %p53
      %p55 = scmp.ne.s32.totalorder %s41, %s42
      %p56 = scmp.eq.s32.totalorder %s34, 1
      %p57 = por %p55, %p56
      %p59 = scmp.ne.s32.totalorder %s42, %s58
      %p60 = scmp.eq.s32.totalorder %s34, 0
      %p61 = por %p59, %p60
      %s63 = sadd.s32 %s62, 1
      %p66 = scmp.eq.s32.totalorder %s28, 1
      %p67 = scmp.ne.s32.totalorder %s62, %s64
      %p68 = scmp.eq.s32.totalorder %s28, 0
      %p69 = por %p67, %p68
      %p70 = scmp.ne.s32.totalorder %s62, %s64
      %p71 = scmp.eq.s32.totalorder %s33, 1
      %p72 = por %p70, %p71
      %p73 = scmp.ne.s32.totalorder %s64, %s65
      %p74 = scmp.eq.s32.totalorder %s33, 0
      %p75 = por %p73, %p74
      %p76 = scmp.ne.s32.totalorder %s64, %s65
      %p77 = scmp.eq.s32.totalorder %s34, 1
      %p78 = por %p76, %p77
      %p80 = scmp.ne.s32.totalorder %s65, %s79
      %p81 = scmp.eq.s32.totalorder %s34, 0
      %p82 = por %p80, %p81
      %s84 = sadd.s32 %s83, 1
      %p87 = scmp.eq.s32.totalorder %s28, 1
      %p88 = scmp.ne.s32.totalorder %s83, %s85
      %p89 = scmp.eq.s32.totalorder %s28, 0
      %p90 = por %p88, %p89
      %p91 = scmp.ne.s32.totalorder %s83, %s85
      %p92 = scmp.eq.s32.totalorder %s33, 1
      %p93 = por %p91, %p92
      %p94 = scmp.ne.s32.totalorder %s85, %s86
      %p95 = scmp.eq.s32.totalorder %s33, 0
      %p96 = por %p94, %p95
      %p97 = scmp.ne.s32.totalorder %s85, %s86
      %p98 = scmp.eq.s32.totalorder %s34, 1
      %p99 = por %p97, %p98
      %p101 = scmp.ne.s32.totalorder %s86, %s100
      %p102 = scmp.eq.s32.totalorder %s34, 0
      %p103 = por %p101, %p102
      %s105 = sadd.s32 %s104, 1
      %p108 = scmp.eq.s32.totalorder %s28, 1
      %p109 = scmp.ne.s32.totalorder %s104, %s106
      %p110 = scmp.eq.s32.totalorder %s28, 0
      %p111 = por %p109, %p110
      %p112 = scmp.ne.s32.totalorder %s104, %s106
      %p113 = scmp.eq.s32.totalorder %s33, 1
      %p114 = por %p112, %p113
      %p115 = scmp.ne.s32.totalorder %s106, %s107
      %p116 = scmp.eq.s32.totalorder %s33, 0
      %p117 = por %p115, %p116
      %p118 = scmp.ne.s32.totalorder %s106, %s107
      %p119 = scmp.eq.s32.totalorder %s34, 1
      %p120 = por %p118, %p119
      %p122 = scmp.ne.s32.totalorder %s107, %s121
      %p123 = scmp.eq.s32.totalorder %s34, 0
      %p124 = por %p122, %p123
      %s126 = sadd.s32 %s125, 1
      %p129 = scmp.eq.s32.totalorder %s28, 1
      %p130 = scmp.ne.s32.totalorder %s125, %s127
      %p131 = scmp.eq.s32.totalorder %s28, 0
      %p132 = por %p130, %p131
      %p133 = scmp.ne.s32.totalorder %s125, %s127
      %p134 = scmp.eq.s32.totalorder %s33, 1
      %p135 = por %p133, %p134
      %p136 = scmp.ne.s32.totalorder %s127, %s128
      %p137 = scmp.eq.s32.totalorder %s33, 0
      %p138 = por %p136, %p137
      %p139 = scmp.ne.s32.totalorder %s127, %s128
      %p140 = scmp.eq.s32.totalorder %s34, 1
      %p141 = por %p139, %p140
      %p143 = scmp.ne.s32.totalorder %s128, %s142
      %p144 = scmp.eq.s32.totalorder %s34, 0
      %p145 = por %p143, %p144
      %s147 = sadd.s32 %s146, 1
      %p150 = scmp.eq.s32.totalorder %s28, 1
      %p151 = scmp.ne.s32.totalorder %s146, %s148
      %p152 = scmp.eq.s32.totalorder %s28, 0
      %p153 = por %p151, %p152
      %p154 = scmp.ne.s32.totalorder %s146, %s148
      %p155 = scmp.eq.s32.totalorder %s33, 1
      %p156 = por %p154, %p155
      %p157 = scmp.ne.s32.totalorder %s148, %s149
      %p158 = scmp.eq.s32.totalorder %s33, 0
      %p159 = por %p157, %p158
      %p160 = scmp.ne.s32.totalorder %s148, %s149
      %p161 = scmp.eq.s32.totalorder %s34, 1
      %p162 = por %p160, %p161
      %p164 = scmp.ne.s32.totalorder %s149, %s163
      %p165 = scmp.eq.s32.totalorder %s34, 0
      %p166 = por %p164, %p165
      %s168 = sadd.s32 %s167, 1
      %p171 = scmp.eq.s32.totalorder %s28, 1
      %p172 = scmp.ne.s32.totalorder %s167, %s169
      %p173 = scmp.eq.s32.totalorder %s28, 0
      %p174 = por %p172, %p173
      %p175 = scmp.ne.s32.totalorder %s167, %s169
      %p176 = scmp.eq.s32.totalorder %s33, 1
      %p177 = por %p175, %p176
      %p178 = scmp.ne.s32.totalorder %s169, %s170
      %p179 = scmp.eq.s32.totalorder %s33, 0
      %p180 = por %p178, %p179
      %p181 = scmp.ne.s32.totalorder %s169, %s170
      %p182 = scmp.eq.s32.totalorder %s34, 1
      %p183 = por %p181, %p182
      %p185 = scmp.ne.s32.totalorder %s170, %s184
      %p186 = scmp.eq.s32.totalorder %s34, 0
      %p187 = por %p185, %p186
      %s189 = sadd.s32 %s188, 1
      %p192 = scmp.eq.s32.totalorder %s28, 1
      %p193 = scmp.ne.s32.totalorder %s188, %s190
      %p194 = scmp.eq.s32.totalorder %s28, 0
      %p195 = por %p193, %p194
      %p196 = scmp.ne.s32.totalorder %s188, %s190
      %p197 = scmp.eq.s32.totalorder %s33, 1
      %p198 = por %p196, %p197
      %p199 = scmp.ne.s32.totalorder %s190, %s191
      %p200 = scmp.eq.s32.totalorder %s33, 0
      %p201 = por %p199, %p200
      %p202 = scmp.ne.s32.totalorder %s190, %s191
      %p203 = scmp.eq.s32.totalorder %s34, 1
      %p204 = por %p202, %p203
      %p206 = scmp.ne.s32.totalorder %s191, %s205
      %p207 = scmp.eq.s32.totalorder %s34, 0
      %p208 = por %p206, %p207
      %s210 = sadd.s32 %s209, 1
      %p213 = scmp.eq.s32.totalorder %s28, 1
      %p214 = scmp.ne.s32.totalorder %s209, %s211
      %p215 = scmp.eq.s32.totalorder %s28, 0
      %p216 = por %p214, %p215
      %p217 = scmp.ne.s32.totalorder %s209, %s211
      %p218 = scmp.eq.s32.totalorder %s33, 1
      %p219 = por %p217, %p218
      %p220 = scmp.ne.s32.totalorder %s211, %s212
      %p221 = scmp.eq.s32.totalorder %s33, 0
      %p222 = por %p220, %p221
      %p223 = scmp.ne.s32.totalorder %s211, %s212
      %p224 = scmp.eq.s32.totalorder %s34, 1
      %p225 = por %p223, %p224
      %p227 = scmp.ne.s32.totalorder %s212, %s226
      %p228 = scmp.eq.s32.totalorder %s34, 0
      %p229 = por %p227, %p228
      %s231 = sadd.s32 %s230, 1
      %p234 = scmp.eq.s32.totalorder %s28, 1
      %p235 = scmp.ne.s32.totalorder %s230, %s232
      %p236 = scmp.eq.s32.totalorder %s28, 0
      %p237 = por %p235, %p236
      %p238 = scmp.ne.s32.totalorder %s230, %s232
      %p239 = scmp.eq.s32.totalorder %s33, 1
      %p240 = por %p238, %p239
      %p241 = scmp.ne.s32.totalorder %s232, %s233
      %p242 = scmp.eq.s32.totalorder %s33, 0
      %p243 = por %p241, %p242
      %p244 = scmp.ne.s32.totalorder %s232, %s233
      %p245 = scmp.eq.s32.totalorder %s34, 1
      %p246 = por %p244, %p245
      %p248 = scmp.ne.s32.totalorder %s233, %s247
      %p249 = scmp.eq.s32.totalorder %s34, 0
      %p250 = por %p248, %p249
      %s252 = sadd.s32 %s251, 1
      %p255 = scmp.eq.s32.totalorder %s28, 1
      %p256 = scmp.ne.s32.totalorder %s251, %s253
      %p257 = scmp.eq.s32.totalorder %s28, 0
      %p258 = por %p256, %p257
      %p259 = scmp.ne.s32.totalorder %s251, %s253
      %p260 = scmp.eq.s32.totalorder %s33, 1
      %p261 = por %p259, %p260
      %p262 = scmp.ne.s32.totalorder %s253, %s254
      %p263 = scmp.eq.s32.totalorder %s33, 0
      %p264 = por %p262, %p263
      %p265 = scmp.ne.s32.totalorder %s253, %s254
      %p266 = scmp.eq.s32.totalorder %s34, 1
      %p267 = por %p265, %p266
      %p269 = scmp.ne.s32.totalorder %s254, %s268
      %p270 = scmp.eq.s32.totalorder %s34, 0
      %p271 = por %p269, %p270
      %s273 = sadd.s32 %s272, 1
      %p276 = scmp.eq.s32.totalorder %s28, 1
      %p277 = scmp.ne.s32.totalorder %s272, %s274
      %p278 = scmp.eq.s32.totalorder %s28, 0
      %p279 = por %p277, %p278
      %p280 = scmp.ne.s32.totalorder %s272, %s274
      %p281 = scmp.eq.s32.totalorder %s33, 1
      %p282 = por %p280, %p281
      %p283 = scmp.ne.s32.totalorder %s274, %s275
      %p284 = scmp.eq.s32.totalorder %s33, 0
      %p285 = por %p283, %p284
      %p286 = scmp.ne.s32.totalorder %s274, %s275
      %p287 = scmp.eq.s32.totalorder %s34, 1
      %p288 = por %p286, %p287
      %p290 = scmp.ne.s32.totalorder %s275, %s289
      %p291 = scmp.eq.s32.totalorder %s34, 0
      %p292 = por %p290, %p291
      %s294 = sadd.s32 %s293, 1
      %p297 = scmp.eq.s32.totalorder %s28, 1
      %p298 = scmp.ne.s32.totalorder %s293, %s295
      %p299 = scmp.eq.s32.totalorder %s28, 0
      %p300 = por %p298, %p299
      %p301 = scmp.ne.s32.totalorder %s293, %s295
      %p302 = scmp.eq.s32.totalorder %s33, 1
      %p303 = por %p301, %p302
      %p304 = scmp.ne.s32.totalorder %s295, %s296
      %p305 = scmp.eq.s32.totalorder %s33, 0
      %p306 = por %p304, %p305
      %p307 = scmp.ne.s32.totalorder %s295, %s296
      %p308 = scmp.eq.s32.totalorder %s34, 1
      %p309 = por %p307, %p308
      %p311 = scmp.ne.s32.totalorder %s296, %s310
      %p312 = scmp.eq.s32.totalorder %s34, 0
      %p313 = por %p311, %p312
      %s314 = ssub.s32 %s28, %s35
      %p315 = scmp.eq.s32.totalorder %s314, 0
      %s317 = sadd.s32 %s316, 1
      %s318 = scalar_select %p315, %s316, %s317
      %p321 = pneg %p315
      %p322 = scmp.eq.s32.totalorder %s28, 1
      %p323 = por %p321, %p322
      %p324 = scmp.ne.s32.totalorder %s316, %s319
      %p325 = scmp.eq.s32.totalorder %s28, 0
      %p326 = por %p324, %p325
      %p327 = scmp.ne.s32.totalorder %s316, %s319
      %p328 = scmp.eq.s32.totalorder %s33, 1
      %p329 = por %p327, %p328
      %p330 = scmp.ne.s32.totalorder %s319, %s320
      %p331 = scmp.eq.s32.totalorder %s33, 0
      %p332 = por %p330, %p331
      %p333 = scmp.ne.s32.totalorder %s319, %s320
      %p334 = scmp.eq.s32.totalorder %s34, 1
      %p335 = por %p333, %p334
      %p337 = scmp.ne.s32.totalorder %s320, %s336
      %p338 = scmp.eq.s32.totalorder %s34, 0
      %p339 = por %p337, %p338
      %p340 = scmp.le.s32.totalorder 1, %s28
      %p341 = scmp.lt.s32.totalorder %s28, 3
      %p342 = pnand %p340, %p341
      %p343 = pneg %p342
      // Predicated region
      $region9: #{tpu_custom_call.1} parent=5 // pred_check
        _
      $region10: #{tpu_custom_call.1} parent=5 // pred_check_branch
        %345 = sbr.rel (%p342) target = $region12
      $region11: #{tpu_custom_call.1} parent=5 // pred_region
        %s346 = ssub.s32 %s28, 1
        // Predicated region
        $region13: #{tpu_custom_call.1} parent=11 // pred_check
          %p347 = pneg %p75
        $region14: #{tpu_custom_call.1} parent=11 // pred_check_branch
          %349 = sbr.rel (%p347) target = $region16
        $region15: #{tpu_custom_call.1} parent=11 // pred_region
          %s351 = ssub.s32 12288, 12288
          %352 = vsyncadd [#allocation6], %s351
          %s353 = sshll.u32 [#allocation5], 4
          %s354 = int_to_ptr.vmem [resolvable:$true] %s353
          %359 = dma.hbm_to_vmem [thread:$0]  %s1, 12288, %s354, [#allocation6], 384, 384, 24
        $region16: #{tpu_custom_call.1} parent=11 // pred_fallthru
          _
        // Predicated region
        $region17: #{tpu_custom_call.1} parent=11 // pred_check
          %p360 = pneg %p96
        $region18: #{tpu_custom_call.1} parent=11 // pred_check_branch
          %362 = sbr.rel (%p360) target = $region20
        $region19: #{tpu_custom_call.1} parent=11 // pred_region
          _
        $region20: #{tpu_custom_call.1} parent=11 // pred_fallthru
          _
        // Predicated region
        $region21: #{tpu_custom_call.1} parent=11 // pred_check
          %p363 = pneg %p117
        $region22: #{tpu_custom_call.1} parent=11 // pred_check_branch
          %365 = sbr.rel (%p363) target = $region24
        $region23: #{tpu_custom_call.1} parent=11 // pred_region
          %s367 = ssub.s32 4096, 4096
          %368 = vsyncadd [#allocation6], %s367
          %s369 = sshll.u32 [#allocation7], 4
          %s370 = int_to_ptr.vmem [resolvable:$true] %s369
          %375 = dma.hbm_to_vmem [thread:$0]  %s3, 4096, %s370, [#allocation6], 128, 128, 8
        $region24: #{tpu_custom_call.1} parent=11 // pred_fallthru
          _
        // Predicated region
        $region25: #{tpu_custom_call.1} parent=11 // pred_check
          %p376 = pneg %p138
        $region26: #{tpu_custom_call.1} parent=11 // pred_check_branch
          %378 = sbr.rel (%p376) target = $region28
        $region27: #{tpu_custom_call.1} parent=11 // pred_region
          %s380 = ssub.s32 32, 32
          %381 = vsyncadd [#allocation9], %s380
          %s383 = sshll.u32 [#allocation8], 4
          %s384 = int_to_ptr.vmem [resolvable:$true] %s383
          %386 = dma.hbm_to_vmem [thread:$0]  %s4, 32, %s384, [#allocation9]
        $region28: #{tpu_custom_call.1} parent=11 // pred_fallthru
          _
        // Predicated region
        $region29: #{tpu_custom_call.1} parent=11 // pred_check
          %p387 = pneg %p159
        $region30: #{tpu_custom_call.1} parent=11 // pred_check_branch
          %389 = sbr.rel (%p387) target = $region32
        $region31: #{tpu_custom_call.1} parent=11 // pred_region
          %s391 = ssub.s32 16384, 16384
          %392 = vsyncadd [#allocation9], %s391
          %s393 = sshll.u32 [#allocation10], 4
          %s394 = int_to_ptr.vmem [resolvable:$true] %s393
          %399 = dma.hbm_to_vmem [thread:$0]  %s5, 16384, %s394, [#allocation9], 512, 512, 32
        $region32: #{tpu_custom_call.1} parent=11 // pred_fallthru
          _
        // Predicated region
        $region33: #{tpu_custom_call.1} parent=11 // pred_check
          %p400 = pneg %p180
        $region34: #{tpu_custom_call.1} parent=11 // pred_check_branch
          %402 = sbr.rel (%p400) target = $region36
        $region35: #{tpu_custom_call.1} parent=11 // pred_region
          _
        $region36: #{tpu_custom_call.1} parent=11 // pred_fallthru
          _
        // Predicated region
        $region37: #{tpu_custom_call.1} parent=11 // pred_check
          %p403 = pneg %p201
        $region38: #{tpu_custom_call.1} parent=11 // pred_check_branch
          %405 = sbr.rel (%p403) target = $region40
        $region39: #{tpu_custom_call.1} parent=11 // pred_region
          %s407 = ssub.s32 16384, 16384
          %408 = vsyncadd [#allocation12], %s407
          %s409 = sshll.u32 [#allocation11], 4
          %s410 = int_to_ptr.vmem [resolvable:$true] %s409
          %415 = dma.hbm_to_vmem [thread:$0]  %s7, 16384, %s410, [#allocation12], 128, 128, 8
        $region40: #{tpu_custom_call.1} parent=11 // pred_fallthru
          _
        // Predicated region
        $region41: #{tpu_custom_call.1} parent=11 // pred_check
          %p416 = pneg %p222
        $region42: #{tpu_custom_call.1} parent=11 // pred_check_branch
          %418 = sbr.rel (%p416) target = $region44
        $region43: #{tpu_custom_call.1} parent=11 // pred_region
          _
        $region44: #{tpu_custom_call.1} parent=11 // pred_fallthru
          _
        // Predicated region
        $region45: #{tpu_custom_call.1} parent=11 // pred_check
          %p419 = pneg %p243
        $region46: #{tpu_custom_call.1} parent=11 // pred_check_branch
          %421 = sbr.rel (%p419) target = $region48
        $region47: #{tpu_custom_call.1} parent=11 // pred_region
          _
        $region48: #{tpu_custom_call.1} parent=11 // pred_fallthru
          _
        // Predicated region
        $region49: #{tpu_custom_call.1} parent=11 // pred_check
          %p422 = pneg %p264
        $region50: #{tpu_custom_call.1} parent=11 // pred_check_branch
          %424 = sbr.rel (%p422) target = $region52
        $region51: #{tpu_custom_call.1} parent=11 // pred_region
          _
        $region52: #{tpu_custom_call.1} parent=11 // pred_fallthru
          _
        // Predicated region
        $region53: #{tpu_custom_call.1} parent=11 // pred_check
          %p425 = pneg %p285
        $region54: #{tpu_custom_call.1} parent=11 // pred_check_branch
          %427 = sbr.rel (%p425) target = $region56
        $region55: #{tpu_custom_call.1} parent=11 // pred_region
          _
        $region56: #{tpu_custom_call.1} parent=11 // pred_fallthru
          _
        // Predicated region
        $region57: #{tpu_custom_call.1} parent=11 // pred_check
          %p428 = pneg %p306
        $region58: #{tpu_custom_call.1} parent=11 // pred_check_branch
          %430 = sbr.rel (%p428) target = $region60
        $region59: #{tpu_custom_call.1} parent=11 // pred_region
          _
        $region60: #{tpu_custom_call.1} parent=11 // pred_fallthru
          _
      $region12: #{tpu_custom_call.1} parent=5 // pred_fallthru
        _
      %p431 = scmp.lt.s32.totalorder %s28, 2
      // Predicated region
      $region61: #{tpu_custom_call.1} parent=5 // pred_check
        %p432 = pneg %p431
      $region62: #{tpu_custom_call.1} parent=5 // pred_check_branch
        %434 = sbr.rel (%p432) target = $region64
      $region63: #{tpu_custom_call.1} parent=5 // pred_region
        // Predicated region
        $region65: #{tpu_custom_call.1} parent=63 // pred_check
          %p435 = pneg %p48
        $region66: #{tpu_custom_call.1} parent=63 // pred_check_branch
          %437 = sbr.rel (%p435) target = $region68
        $region67: #{tpu_custom_call.1} parent=63 // pred_region
          %s438 = sand.u32 %s38, 1
          %s439 = scalar_lea.sflag [#allocation3], %s438
          %s440 = sand.u32 %s38, 1
          %s441 = smul.addr %s440, 16
          %s442 = scalar_lea.vmem [#allocation2], %s441
          %s444 = ssub.s32 256, 256
          %445 = vsyncadd %s439, %s444
          %s446 = smul.addr %s28, 4
          %s447 = smul.addr %s446, 64
          %s448 = scalar_lea.hbm %s0, %s447
          %s449 = sshll.u32 %s442, 4
          %s450 = int_to_ptr.vmem [resolvable:$true] %s449
          %455 = dma.hbm_to_vmem [thread:$0]  %s448, 256, %s450, %s439, 128, 128, 8
        $region68: #{tpu_custom_call.1} parent=63 // pred_fallthru
          _
      $region64: #{tpu_custom_call.1} parent=5 // pred_fallthru
        _
      %p456 = scmp.le.s32.totalorder 1, %s28
      %p457 = scmp.lt.s32.totalorder %s28, 3
      %p458 = pnand %p456, %p457
      %p459 = pneg %p458
      // Predicated region
      $region69: #{tpu_custom_call.1} parent=5 // pred_check
        _
      $region70: #{tpu_custom_call.1} parent=5 // pred_check_branch
        %461 = sbr.rel (%p458) target = $region72
      $region71: #{tpu_custom_call.1} parent=5 // pred_region
        %s462 = ssub.s32 %s28, 1
        %s463 = sand.u32 %s41, 1
        %s464 = scalar_lea.sflag [#allocation3], %s463
        %s465 = sand.u32 %s41, 1
        %s466 = smul.addr %s465, 16
        %s467 = scalar_lea.vmem [#allocation2], %s466
        // Predicated region
        $region73: #{tpu_custom_call.1} parent=71 // pred_check
          %p468 = pneg %p54
        $region74: #{tpu_custom_call.1} parent=71 // pred_check_branch
          %470 = sbr.rel (%p468) target = $region76
        $region75: #{tpu_custom_call.1} parent=71 // pred_region
          %471 = dma.done %s464, 256
        $region76: #{tpu_custom_call.1} parent=71 // pred_fallthru
          _
        // Predicated region
        $region77: #{tpu_custom_call.1} parent=71 // pred_check
          %p472 = pneg %p75
        $region78: #{tpu_custom_call.1} parent=71 // pred_check_branch
          %474 = sbr.rel (%p472) target = $region80
        $region79: #{tpu_custom_call.1} parent=71 // pred_region
          %475 = dma.done [#allocation6], 12288
        $region80: #{tpu_custom_call.1} parent=71 // pred_fallthru
          _
        // Predicated region
        $region81: #{tpu_custom_call.1} parent=71 // pred_check
          %p476 = pneg %p117
        $region82: #{tpu_custom_call.1} parent=71 // pred_check_branch
          %478 = sbr.rel (%p476) target = $region84
        $region83: #{tpu_custom_call.1} parent=71 // pred_region
          %479 = dma.done [#allocation6], 4096
        $region84: #{tpu_custom_call.1} parent=71 // pred_fallthru
          _
        // Predicated region
        $region85: #{tpu_custom_call.1} parent=71 // pred_check
          %p480 = pneg %p138
        $region86: #{tpu_custom_call.1} parent=71 // pred_check_branch
          %482 = sbr.rel (%p480) target = $region88
        $region87: #{tpu_custom_call.1} parent=71 // pred_region
          %483 = dma.done [#allocation9], 32
        $region88: #{tpu_custom_call.1} parent=71 // pred_fallthru
          _
        // Predicated region
        $region89: #{tpu_custom_call.1} parent=71 // pred_check
          %p484 = pneg %p159
        $region90: #{tpu_custom_call.1} parent=71 // pred_check_branch
          %486 = sbr.rel (%p484) target = $region92
        $region91: #{tpu_custom_call.1} parent=71 // pred_region
          %487 = dma.done [#allocation9], 16384
        $region92: #{tpu_custom_call.1} parent=71 // pred_fallthru
          _
        // Predicated region
        $region93: #{tpu_custom_call.1} parent=71 // pred_check
          %p488 = pneg %p201
        $region94: #{tpu_custom_call.1} parent=71 // pred_check_branch
          %490 = sbr.rel (%p488) target = $region96
        $region95: #{tpu_custom_call.1} parent=71 // pred_region
          %491 = dma.done [#allocation12], 16384
        $region96: #{tpu_custom_call.1} parent=71 // pred_fallthru
          _
        %s492 = sand.u32 %s41, 1
        %s493 = scalar_lea.sflag [#allocation3], %s492
        %s494 = sand.u32 %s41, 1
        %s495 = smul.addr %s494, 16
        %s496 = scalar_lea.vmem [#allocation2], %s495
        %p497 = pneg %p54
        %p498 = pneg %p51
        %p499 = pneg %p75
        %p500 = pneg %p72
        %p501 = pneg %p96
        %p502 = pneg %p93
        %p503 = pneg %p117
        %p504 = pneg %p114
        %p505 = pneg %p138
        %p506 = pneg %p135
        %p507 = pneg %p159
        %p508 = pneg %p156
        %p509 = pneg %p180
        %p510 = pneg %p177
        %p511 = pneg %p201
        %p512 = pneg %p198
        %p513 = pneg %p222
        %p514 = pneg %p219
        %p515 = pneg %p243
        %p516 = pneg %p240
        %p517 = pneg %p264
        %p518 = pneg %p261
        %p519 = pneg %p285
        %p520 = pneg %p282
        %p521 = pneg %p306
        %p522 = pneg %p303
        %p523 = pneg %p332
        %p524 = pneg %p329
        %s525 = sand.u32 %s319, 1
        %s526 = scalar_lea.sflag [#allocation4], %s525
        %s527 = sand.u32 %s319, 1
        %s528 = smul.addr %s527, 16
        %s529 = scalar_lea.vmem [#allocation13], %s528
        %v531 = vld [vmem:[%s467] sm:$0xff]
        %v532 = vld [vmem:[%s467 + $0x8] sm:$0xff]
        %v533 = vunpack.c.l.bf16 %v531
        %v534 = vunpack.c.h.bf16 %v531
        %v535 = vunpack.c.l.bf16 %v532
        %v536 = vunpack.c.h.bf16 %v532
        %v537 = vld [vmem:[#allocation5] sm:$0xff]
        %v538 = vld [vmem:[#allocation5 + $0x8] sm:$0xff]
        %v539 = vld [vmem:[#allocation5 + $0x10] sm:$0xff]
        %v540 = vld [vmem:[#allocation5 + $0x18] sm:$0xff]
        %v541 = vld [vmem:[#allocation5 + $0x20] sm:$0xff]
        %v542 = vld [vmem:[#allocation5 + $0x28] sm:$0xff]
        %v543 = vld [vmem:[#allocation5 + $0x30] sm:$0xff]
        %v544 = vld [vmem:[#allocation5 + $0x38] sm:$0xff]
        %v545 = vld [vmem:[#allocation5 + $0x40] sm:$0xff]
        %v546 = vld [vmem:[#allocation5 + $0x48] sm:$0xff]
        %v547 = vld [vmem:[#allocation5 + $0x50] sm:$0xff]
        %v548 = vld [vmem:[#allocation5 + $0x58] sm:$0xff]
        %v549 = vld [vmem:[#allocation5 + $0x60] sm:$0xff]
        %v550 = vld [vmem:[#allocation5 + $0x68] sm:$0xff]
        %v551 = vld [vmem:[#allocation5 + $0x70] sm:$0xff]
        %v552 = vld [vmem:[#allocation5 + $0x78] sm:$0xff]
        %v553 = vld [vmem:[#allocation5 + $0x80] sm:$0xff]
        %v554 = vld [vmem:[#allocation5 + $0x88] sm:$0xff]
        %v555 = vld [vmem:[#allocation5 + $0x90] sm:$0xff]
        %v556 = vld [vmem:[#allocation5 + $0x98] sm:$0xff]
        %v557 = vld [vmem:[#allocation5 + $0xa0] sm:$0xff]
        %v558 = vld [vmem:[#allocation5 + $0xa8] sm:$0xff]
        %v559 = vld [vmem:[#allocation5 + $0xb0] sm:$0xff]
        %v560 = vld [vmem:[#allocation5 + $0xb8] sm:$0xff]
        %v561 = vld [vmem:[#allocation5 + $0xc0] sm:$0xff]
        %v562 = vld [vmem:[#allocation5 + $0xc8] sm:$0xff]
        %v563 = vld [vmem:[#allocation5 + $0xd0] sm:$0xff]
        %v564 = vld [vmem:[#allocation5 + $0xd8] sm:$0xff]
        %v565 = vld [vmem:[#allocation5 + $0xe0] sm:$0xff]
        %v566 = vld [vmem:[#allocation5 + $0xe8] sm:$0xff]
        %v567 = vld [vmem:[#allocation5 + $0xf0] sm:$0xff]
        %v568 = vld [vmem:[#allocation5 + $0xf8] sm:$0xff]
        %v569 = vld [vmem:[#allocation5 + $0x100] sm:$0xff]
        %v570 = vld [vmem:[#allocation5 + $0x108] sm:$0xff]
        %v571 = vld [vmem:[#allocation5 + $0x110] sm:$0xff]
        %v572 = vld [vmem:[#allocation5 + $0x118] sm:$0xff]
        %v573 = vld [vmem:[#allocation5 + $0x120] sm:$0xff]
        %v574 = vld [vmem:[#allocation5 + $0x128] sm:$0xff]
        %v575 = vld [vmem:[#allocation5 + $0x130] sm:$0xff]
        %v576 = vld [vmem:[#allocation5 + $0x138] sm:$0xff]
        %v577 = vld [vmem:[#allocation5 + $0x140] sm:$0xff]
        %v578 = vld [vmem:[#allocation5 + $0x148] sm:$0xff]
        %v579 = vld [vmem:[#allocation5 + $0x150] sm:$0xff]
        %v580 = vld [vmem:[#allocation5 + $0x158] sm:$0xff]
        %v581 = vld [vmem:[#allocation5 + $0x160] sm:$0xff]
        %v582 = vld [vmem:[#allocation5 + $0x168] sm:$0xff]
        %v583 = vld [vmem:[#allocation5 + $0x170] sm:$0xff]
        %v584 = vld [vmem:[#allocation5 + $0x178] sm:$0xff]
        %v585 = vld [vmem:[#allocation5 + $0x180] sm:$0xff]
        %v586 = vld [vmem:[#allocation5 + $0x188] sm:$0xff]
        %v587 = vld [vmem:[#allocation5 + $0x190] sm:$0xff]
        %v588 = vld [vmem:[#allocation5 + $0x198] sm:$0xff]
        %v589 = vld [vmem:[#allocation5 + $0x1a0] sm:$0xff]
        %v590 = vld [vmem:[#allocation5 + $0x1a8] sm:$0xff]
        %v591 = vld [vmem:[#allocation5 + $0x1b0] sm:$0xff]
        %v592 = vld [vmem:[#allocation5 + $0x1b8] sm:$0xff]
        %v593 = vld [vmem:[#allocation5 + $0x1c0] sm:$0xff]
        %v594 = vld [vmem:[#allocation5 + $0x1c8] sm:$0xff]
        %v595 = vld [vmem:[#allocation5 + $0x1d0] sm:$0xff]
        %v596 = vld [vmem:[#allocation5 + $0x1d8] sm:$0xff]
        %v597 = vld [vmem:[#allocation5 + $0x1e0] sm:$0xff]
        %v598 = vld [vmem:[#allocation5 + $0x1e8] sm:$0xff]
        %v599 = vld [vmem:[#allocation5 + $0x1f0] sm:$0xff]
        %v600 = vld [vmem:[#allocation5 + $0x1f8] sm:$0xff]
        %v601 = vld [vmem:[#allocation5 + $0x200] sm:$0xff]
        %v602 = vld [vmem:[#allocation5 + $0x208] sm:$0xff]
        %v603 = vld [vmem:[#allocation5 + $0x210] sm:$0xff]
        %v604 = vld [vmem:[#allocation5 + $0x218] sm:$0xff]
        %v605 = vld [vmem:[#allocation5 + $0x220] sm:$0xff]
        %v606 = vld [vmem:[#allocation5 + $0x228] sm:$0xff]
        %v607 = vld [vmem:[#allocation5 + $0x230] sm:$0xff]
        %v608 = vld [vmem:[#allocation5 + $0x238] sm:$0xff]
        %v609 = vld [vmem:[#allocation5 + $0x240] sm:$0xff]
        %v610 = vld [vmem:[#allocation5 + $0x248] sm:$0xff]
        %v611 = vld [vmem:[#allocation5 + $0x250] sm:$0xff]
        %v612 = vld [vmem:[#allocation5 + $0x258] sm:$0xff]
        %v613 = vld [vmem:[#allocation5 + $0x260] sm:$0xff]
        %v614 = vld [vmem:[#allocation5 + $0x268] sm:$0xff]
        %v615 = vld [vmem:[#allocation5 + $0x270] sm:$0xff]
        %v616 = vld [vmem:[#allocation5 + $0x278] sm:$0xff]
        %v617 = vld [vmem:[#allocation5 + $0x280] sm:$0xff]
        %v618 = vld [vmem:[#allocation5 + $0x288] sm:$0xff]
        %v619 = vld [vmem:[#allocation5 + $0x290] sm:$0xff]
        %v620 = vld [vmem:[#allocation5 + $0x298] sm:$0xff]
        %v621 = vld [vmem:[#allocation5 + $0x2a0] sm:$0xff]
        %v622 = vld [vmem:[#allocation5 + $0x2a8] sm:$0xff]
        %v623 = vld [vmem:[#allocation5 + $0x2b0] sm:$0xff]
        %v624 = vld [vmem:[#allocation5 + $0x2b8] sm:$0xff]
        %v625 = vld [vmem:[#allocation5 + $0x2c0] sm:$0xff]
        %v626 = vld [vmem:[#allocation5 + $0x2c8] sm:$0xff]
        %v627 = vld [vmem:[#allocation5 + $0x2d0] sm:$0xff]
        %v628 = vld [vmem:[#allocation5 + $0x2d8] sm:$0xff]
        %v629 = vld [vmem:[#allocation5 + $0x2e0] sm:$0xff]
        %v630 = vld [vmem:[#allocation5 + $0x2e8] sm:$0xff]
        %v631 = vld [vmem:[#allocation5 + $0x2f0] sm:$0xff]
        %v632 = vld [vmem:[#allocation5 + $0x2f8] sm:$0xff]
        %v633 = vld [vmem:[%s2] sm:$0x3f]
        %v635 = vlaneseq
        %v636 = vshrl.u32 %v635, 7
        %v637 = vsub.s32 0, %v636
        %v638 = vrot.slane %v633, %v637
        %v639 = vlaneseq
        %v640 = vshrl.u32 %v639, 7
        %v641 = vsub.s32 1, %v640
        %v642 = vrot.slane %v633, %v641
        %v643 = vlaneseq
        %v644 = vshrl.u32 %v643, 7
        %v645 = vsub.s32 2, %v644
        %v646 = vrot.slane %v633, %v645
        %v647 = vlaneseq
        %v648 = vshrl.u32 %v647, 7
        %v649 = vsub.s32 3, %v648
        %v650 = vrot.slane %v633, %v649
        %v651 = vlaneseq
        %v652 = vshrl.u32 %v651, 7
        %v653 = vsub.s32 4, %v652
        %v654 = vrot.slane %v633, %v653
        %v655 = vlaneseq
        %v656 = vshrl.u32 %v655, 7
        %v657 = vsub.s32 5, %v656
        %v658 = vrot.slane %v633, %v657
        %v667 = vunpack.c.l.b16 %v531
        %v668 = vunpack.c.h.b16 %v531
        %v669 = vunpack.c.l.b16 %v532
        %v670 = vunpack.c.h.b16 %v532
        %v671 = vpack.c.b16 %v669, %v667
        %v672 = vpack.c.b16 %v670, %v668
        %v771 = vunpack.c.l.b16 %v537
        %v772 = vunpack.c.h.b16 %v537
        %v773 = vunpack.c.l.b16 %v538
        %v774 = vunpack.c.h.b16 %v538
        %v775 = vunpack.c.l.b16 %v539
        %v776 = vunpack.c.h.b16 %v539
        %v777 = vunpack.c.l.b16 %v540
        %v778 = vunpack.c.h.b16 %v540
        %v779 = vunpack.c.l.b16 %v541
        %v780 = vunpack.c.h.b16 %v541
        %v781 = vunpack.c.l.b16 %v542
        %v782 = vunpack.c.h.b16 %v542
        %v783 = vunpack.c.l.b16 %v543
        %v784 = vunpack.c.h.b16 %v543
        %v785 = vunpack.c.l.b16 %v544
        %v786 = vunpack.c.h.b16 %v544
        %v787 = vunpack.c.l.b16 %v545
        %v788 = vunpack.c.h.b16 %v545
        %v789 = vunpack.c.l.b16 %v546
        %v790 = vunpack.c.h.b16 %v546
        %v791 = vunpack.c.l.b16 %v547
        %v792 = vunpack.c.h.b16 %v547
        %v793 = vunpack.c.l.b16 %v548
        %v794 = vunpack.c.h.b16 %v548
        %v795 = vunpack.c.l.b16 %v549
        %v796 = vunpack.c.h.b16 %v549
        %v797 = vunpack.c.l.b16 %v550
        %v798 = vunpack.c.h.b16 %v550
        %v799 = vunpack.c.l.b16 %v551
        %v800 = vunpack.c.h.b16 %v551
        %v801 = vunpack.c.l.b16 %v552
        %v802 = vunpack.c.h.b16 %v552
        %v803 = vunpack.c.l.b16 %v553
        %v804 = vunpack.c.h.b16 %v553
        %v805 = vunpack.c.l.b16 %v554
        %v806 = vunpack.c.h.b16 %v554
        %v807 = vunpack.c.l.b16 %v555
        %v808 = vunpack.c.h.b16 %v555
        %v809 = vunpack.c.l.b16 %v556
        %v810 = vunpack.c.h.b16 %v556
        %v811 = vunpack.c.l.b16 %v557
        %v812 = vunpack.c.h.b16 %v557
        %v813 = vunpack.c.l.b16 %v558
        %v814 = vunpack.c.h.b16 %v558
        %v815 = vunpack.c.l.b16 %v559
        %v816 = vunpack.c.h.b16 %v559
        %v817 = vunpack.c.l.b16 %v560
        %v818 = vunpack.c.h.b16 %v560
        %v819 = vunpack.c.l.b16 %v561
        %v820 = vunpack.c.h.b16 %v561
        %v821 = vunpack.c.l.b16 %v562
        %v822 = vunpack.c.h.b16 %v562
        %v823 = vunpack.c.l.b16 %v563
        %v824 = vunpack.c.h.b16 %v563
        %v825 = vunpack.c.l.b16 %v564
        %v826 = vunpack.c.h.b16 %v564
        %v827 = vunpack.c.l.b16 %v565
        %v828 = vunpack.c.h.b16 %v565
        %v829 = vunpack.c.l.b16 %v566
        %v830 = vunpack.c.h.b16 %v566
        %v831 = vunpack.c.l.b16 %v567
        %v832 = vunpack.c.h.b16 %v567
        %v833 = vunpack.c.l.b16 %v568
        %v834 = vunpack.c.h.b16 %v568
        %v835 = vunpack.c.l.b16 %v569
        %v836 = vunpack.c.h.b16 %v569
        %v837 = vunpack.c.l.b16 %v570
        %v838 = vunpack.c.h.b16 %v570
        %v839 = vunpack.c.l.b16 %v571
        %v840 = vunpack.c.h.b16 %v571
        %v841 = vunpack.c.l.b16 %v572
        %v842 = vunpack.c.h.b16 %v572
        %v843 = vunpack.c.l.b16 %v573
        %v844 = vunpack.c.h.b16 %v573
        %v845 = vunpack.c.l.b16 %v574
        %v846 = vunpack.c.h.b16 %v574
        %v847 = vunpack.c.l.b16 %v575
        %v848 = vunpack.c.h.b16 %v575
        %v849 = vunpack.c.l.b16 %v576
        %v850 = vunpack.c.h.b16 %v576
        %v851 = vunpack.c.l.b16 %v577
        %v852 = vunpack.c.h.b16 %v577
        %v853 = vunpack.c.l.b16 %v578
        %v854 = vunpack.c.h.b16 %v578
        %v855 = vunpack.c.l.b16 %v579
        %v856 = vunpack.c.h.b16 %v579
        %v857 = vunpack.c.l.b16 %v580
        %v858 = vunpack.c.h.b16 %v580
        %v859 = vunpack.c.l.b16 %v581
        %v860 = vunpack.c.h.b16 %v581
        %v861 = vunpack.c.l.b16 %v582
        %v862 = vunpack.c.h.b16 %v582
        %v863 = vunpack.c.l.b16 %v583
        %v864 = vunpack.c.h.b16 %v583
        %v865 = vunpack.c.l.b16 %v584
        %v866 = vunpack.c.h.b16 %v584
        %v867 = vunpack.c.l.b16 %v585
        %v868 = vunpack.c.h.b16 %v585
        %v869 = vunpack.c.l.b16 %v586
        %v870 = vunpack.c.h.b16 %v586
        %v871 = vunpack.c.l.b16 %v587
        %v872 = vunpack.c.h.b16 %v587
        %v873 = vunpack.c.l.b16 %v588
        %v874 = vunpack.c.h.b16 %v588
        %v875 = vunpack.c.l.b16 %v589
        %v876 = vunpack.c.h.b16 %v589
        %v877 = vunpack.c.l.b16 %v590
        %v878 = vunpack.c.h.b16 %v590
        %v879 = vunpack.c.l.b16 %v591
        %v880 = vunpack.c.h.b16 %v591
        %v881 = vunpack.c.l.b16 %v592
        %v882 = vunpack.c.h.b16 %v592
        %v883 = vunpack.c.l.b16 %v593
        %v884 = vunpack.c.h.b16 %v593
        %v885 = vunpack.c.l.b16 %v594
        %v886 = vunpack.c.h.b16 %v594
        %v887 = vunpack.c.l.b16 %v595
        %v888 = vunpack.c.h.b16 %v595
        %v889 = vunpack.c.l.b16 %v596
        %v890 = vunpack.c.h.b16 %v596
        %v891 = vunpack.c.l.b16 %v597
        %v892 = vunpack.c.h.b16 %v597
        %v893 = vunpack.c.l.b16 %v598
        %v894 = vunpack.c.h.b16 %v598
        %v895 = vunpack.c.l.b16 %v599
        %v896 = vunpack.c.h.b16 %v599
        %v897 = vunpack.c.l.b16 %v600
        %v898 = vunpack.c.h.b16 %v600
        %v899 = vunpack.c.l.b16 %v601
        %v900 = vunpack.c.h.b16 %v601
        %v901 = vunpack.c.l.b16 %v602
        %v902 = vunpack.c.h.b16 %v602
        %v903 = vunpack.c.l.b16 %v603
        %v904 = vunpack.c.h.b16 %v603
        %v905 = vunpack.c.l.b16 %v604
        %v906 = vunpack.c.h.b16 %v604
        %v907 = vunpack.c.l.b16 %v605
        %v908 = vunpack.c.h.b16 %v605
        %v909 = vunpack.c.l.b16 %v606
        %v910 = vunpack.c.h.b16 %v606
        %v911 = vunpack.c.l.b16 %v607
        %v912 = vunpack.c.h.b16 %v607
        %v913 = vunpack.c.l.b16 %v608
        %v914 = vunpack.c.h.b16 %v608
        %v915 = vunpack.c.l.b16 %v609
        %v916 = vunpack.c.h.b16 %v609
        %v917 = vunpack.c.l.b16 %v610
        %v918 = vunpack.c.h.b16 %v610
        %v919 = vunpack.c.l.b16 %v611
        %v920 = vunpack.c.h.b16 %v611
        %v921 = vunpack.c.l.b16 %v612
        %v922 = vunpack.c.h.b16 %v612
        %v923 = vunpack.c.l.b16 %v613
        %v924 = vunpack.c.h.b16 %v613
        %v925 = vunpack.c.l.b16 %v614
        %v926 = vunpack.c.h.b16 %v614
        %v927 = vunpack.c.l.b16 %v615
        %v928 = vunpack.c.h.b16 %v615
        %v929 = vunpack.c.l.b16 %v616
        %v930 = vunpack.c.h.b16 %v616
        %v931 = vunpack.c.l.b16 %v617
        %v932 = vunpack.c.h.b16 %v617
        %v933 = vunpack.c.l.b16 %v618
        %v934 = vunpack.c.h.b16 %v618
        %v935 = vunpack.c.l.b16 %v619
        %v936 = vunpack.c.h.b16 %v619
        %v937 = vunpack.c.l.b16 %v620
        %v938 = vunpack.c.h.b16 %v620
        %v939 = vunpack.c.l.b16 %v621
        %v940 = vunpack.c.h.b16 %v621
        %v941 = vunpack.c.l.b16 %v622
        %v942 = vunpack.c.h.b16 %v622
        %v943 = vunpack.c.l.b16 %v623
        %v944 = vunpack.c.h.b16 %v623
        %v945 = vunpack.c.l.b16 %v624
        %v946 = vunpack.c.h.b16 %v624
        %v947 = vunpack.c.l.b16 %v625
        %v948 = vunpack.c.h.b16 %v625
        %v949 = vunpack.c.l.b16 %v626
        %v950 = vunpack.c.h.b16 %v626
        %v951 = vunpack.c.l.b16 %v627
        %v952 = vunpack.c.h.b16 %v627
        %v953 = vunpack.c.l.b16 %v628
        %v954 = vunpack.c.h.b16 %v628
        %v955 = vunpack.c.l.b16 %v629
        %v956 = vunpack.c.h.b16 %v629
        %v957 = vunpack.c.l.b16 %v630
        %v958 = vunpack.c.h.b16 %v630
        %v959 = vunpack.c.l.b16 %v631
        %v960 = vunpack.c.h.b16 %v631
        %v961 = vunpack.c.l.b16 %v632
        %v962 = vunpack.c.h.b16 %v632
        %v963 = vpack.c.b16 %v777, %v771
        %v964 = vpack.c.b16 %v778, %v772
        %v965 = vpack.c.b16 %v779, %v773
        %v966 = vpack.c.b16 %v780, %v774
        %v967 = vpack.c.b16 %v781, %v775
        %v968 = vpack.c.b16 %v782, %v776
        %v969 = vpack.c.b16 %v789, %v783
        %v970 = vpack.c.b16 %v790, %v784
        %v971 = vpack.c.b16 %v791, %v785
        %v972 = vpack.c.b16 %v792, %v786
        %v973 = vpack.c.b16 %v793, %v787
        %v974 = vpack.c.b16 %v794, %v788
        %v975 = vpack.c.b16 %v801, %v795
        %v976 = vpack.c.b16 %v802, %v796
        %v977 = vpack.c.b16 %v803, %v797
        %v978 = vpack.c.b16 %v804, %v798
        %v979 = vpack.c.b16 %v805, %v799
        %v980 = vpack.c.b16 %v806, %v800
        %v981 = vpack.c.b16 %v813, %v807
        %v982 = vpack.c.b16 %v814, %v808
        %v983 = vpack.c.b16 %v815, %v809
        %v984 = vpack.c.b16 %v816, %v810
        %v985 = vpack.c.b16 %v817, %v811
        %v986 = vpack.c.b16 %v818, %v812
        %v987 = vpack.c.b16 %v825, %v819
        %v988 = vpack.c.b16 %v826, %v820
        %v989 = vpack.c.b16 %v827, %v821
        %v990 = vpack.c.b16 %v828, %v822
        %v991 = vpack.c.b16 %v829, %v823
        %v992 = vpack.c.b16 %v830, %v824
        %v993 = vpack.c.b16 %v837, %v831
        %v994 = vpack.c.b16 %v838, %v832
        %v995 = vpack.c.b16 %v839, %v833
        %v996 = vpack.c.b16 %v840, %v834
        %v997 = vpack.c.b16 %v841, %v835
        %v998 = vpack.c.b16 %v842, %v836
        %v999 = vpack.c.b16 %v849, %v843
        %v1000 = vpack.c.b16 %v850, %v844
        %v1001 = vpack.c.b16 %v851, %v845
        %v1002 = vpack.c.b16 %v852, %v846
        %v1003 = vpack.c.b16 %v853, %v847
        %v1004 = vpack.c.b16 %v854, %v848
        %v1005 = vpack.c.b16 %v861, %v855
        %v1006 = vpack.c.b16 %v862, %v856
        %v1007 = vpack.c.b16 %v863, %v857
        %v1008 = vpack.c.b16 %v864, %v858
        %v1009 = vpack.c.b16 %v865, %v859
        %v1010 = vpack.c.b16 %v866, %v860
        %v1011 = vpack.c.b16 %v873, %v867
        %v1012 = vpack.c.b16 %v874, %v868
        %v1013 = vpack.c.b16 %v875, %v869
        %v1014 = vpack.c.b16 %v876, %v870
        %v1015 = vpack.c.b16 %v877, %v871
        %v1016 = vpack.c.b16 %v878, %v872
        %v1017 = vpack.c.b16 %v885, %v879
        %v1018 = vpack.c.b16 %v886, %v880
        %v1019 = vpack.c.b16 %v887, %v881
        %v1020 = vpack.c.b16 %v888, %v882
        %v1021 = vpack.c.b16 %v889, %v883
        %v1022 = vpack.c.b16 %v890, %v884
        %v1023 = vpack.c.b16 %v897, %v891
        %v1024 = vpack.c.b16 %v898, %v892
        %v1025 = vpack.c.b16 %v899, %v893
        %v1026 = vpack.c.b16 %v900, %v894
        %v1027 = vpack.c.b16 %v901, %v895
        %v1028 = vpack.c.b16 %v902, %v896
        %v1029 = vpack.c.b16 %v909, %v903
        %v1030 = vpack.c.b16 %v910, %v904
        %v1031 = vpack.c.b16 %v911, %v905
        %v1032 = vpack.c.b16 %v912, %v906
        %v1033 = vpack.c.b16 %v913, %v907
        %v1034 = vpack.c.b16 %v914, %v908
        %v1035 = vpack.c.b16 %v921, %v915
        %v1036 = vpack.c.b16 %v922, %v916
        %v1037 = vpack.c.b16 %v923, %v917
        %v1038 = vpack.c.b16 %v924, %v918
        %v1039 = vpack.c.b16 %v925, %v919
        %v1040 = vpack.c.b16 %v926, %v920
        %v1041 = vpack.c.b16 %v933, %v927
        %v1042 = vpack.c.b16 %v934, %v928
        %v1043 = vpack.c.b16 %v935, %v929
        %v1044 = vpack.c.b16 %v936, %v930
        %v1045 = vpack.c.b16 %v937, %v931
        %v1046 = vpack.c.b16 %v938, %v932
        %v1047 = vpack.c.b16 %v945, %v939
        %v1048 = vpack.c.b16 %v946, %v940
        %v1049 = vpack.c.b16 %v947, %v941
        %v1050 = vpack.c.b16 %v948, %v942
        %v1051 = vpack.c.b16 %v949, %v943
        %v1052 = vpack.c.b16 %v950, %v944
        %v1053 = vpack.c.b16 %v957, %v951
        %v1054 = vpack.c.b16 %v958, %v952
        %v1055 = vpack.c.b16 %v959, %v953
        %v1056 = vpack.c.b16 %v960, %v954
        %v1057 = vpack.c.b16 %v961, %v955
        %v1058 = vpack.c.b16 %v962, %v956
        %1155 = vmatprep.subr.bf16.mxu0 %v964
        %1156 = vmatpush1.bf16.msra.mxu0 %v963
        %1157 = vmatprep.subr.bf16.mxu0 %v970
        %1158 = vmatpush1.bf16.msra.mxu0 %v969
        %1159 = vmatprep.subr.bf16.mxu0 %v976
        %1160 = vmatpush1.bf16.msra.mxu0 %v975
        %1161 = vmatprep.subr.bf16.mxu0 %v982
        %1162 = vmatpush1.bf16.msra.mxu0 %v981
        %1163 = vmatprep.subr.bf16.mxu0 %v988
        %1164 = vmatpush1.bf16.msra.mxu0 %v987
        %1165 = vmatprep.subr.bf16.mxu0 %v994
        %1166 = vmatpush1.bf16.msra.mxu0 %v993
        %1167 = vmatprep.subr.bf16.mxu0 %v1000
        %1168 = vmatpush1.bf16.msra.mxu0 %v999
        %1169 = vmatprep.subr.bf16.mxu0 %v1006
        %1170 = vmatpush1.bf16.msra.mxu0 %v1005
        %1171 = vmatprep.subr.bf16.mxu0 %v1012
        %1172 = vmatpush1.bf16.msra.mxu0 %v1011
        %1173 = vmatprep.subr.bf16.mxu0 %v1018
        %1174 = vmatpush1.bf16.msra.mxu0 %v1017
        %1175 = vmatprep.subr.bf16.mxu0 %v1024
        %1176 = vmatpush1.bf16.msra.mxu0 %v1023
        %1177 = vmatprep.subr.bf16.mxu0 %v1030
        %1178 = vmatpush1.bf16.msra.mxu0 %v1029
        %1179 = vmatprep.subr.bf16.mxu0 %v1036
        %1180 = vmatpush1.bf16.msra.mxu0 %v1035
        %1181 = vmatprep.subr.bf16.mxu0 %v1042
        %1182 = vmatpush1.bf16.msra.mxu0 %v1041
        %1183 = vmatprep.subr.bf16.mxu0 %v1048
        %1184 = vmatpush1.bf16.msra.mxu0 %v1047
        %1185 = vmatprep.subr.bf16.mxu0 %v1054
        %1186 = vmatpush1.bf16.msra.mxu0 %v1053
        %1187 = vmatprep.mubr.bf16.mxu0 %v672
        %1188 = vmatmul.mubr.bf16.gmra.mrb[0].mxu0 %v671
        %v1189 = vpop.f32.mrb[0].mxu0
        %v1190 = vadd.f32 %v638, %v1189
        %v1191 = vpop.f32.mrb[0].mxu0
        %v1192 = vadd.f32 %v642, %v1191
        %v1193 = vpop.f32.mrb[0].mxu0
        %v1194 = vadd.f32 %v638, %v1193
        %v1195 = vpop.f32.mrb[0].mxu0
        %v1196 = vadd.f32 %v642, %v1195
        %1197 = vdwg.mxu0
        %1198 = vmatprep.subr.bf16.mxu0 %v966
        %1199 = vmatpush1.bf16.msra.mxu0 %v965
        %1200 = vmatprep.subr.bf16.mxu0 %v972
        %1201 = vmatpush1.bf16.msra.mxu0 %v971
        %1202 = vmatprep.subr.bf16.mxu0 %v978
        %1203 = vmatpush1.bf16.msra.mxu0 %v977
        %1204 = vmatprep.subr.bf16.mxu0 %v984
        %1205 = vmatpush1.bf16.msra.mxu0 %v983
        %1206 = vmatprep.subr.bf16.mxu0 %v990
        %1207 = vmatpush1.bf16.msra.mxu0 %v989
        %1208 = vmatprep.subr.bf16.mxu0 %v996
        %1209 = vmatpush1.bf16.msra.mxu0 %v995
        %1210 = vmatprep.subr.bf16.mxu0 %v1002
        %1211 = vmatpush1.bf16.msra.mxu0 %v1001
        %1212 = vmatprep.subr.bf16.mxu0 %v1008
        %1213 = vmatpush1.bf16.msra.mxu0 %v1007
        %1214 = vmatprep.subr.bf16.mxu0 %v1014
        %1215 = vmatpush1.bf16.msra.mxu0 %v1013
        %1216 = vmatprep.subr.bf16.mxu0 %v1020
        %1217 = vmatpush1.bf16.msra.mxu0 %v1019
        %1218 = vmatprep.subr.bf16.mxu0 %v1026
        %1219 = vmatpush1.bf16.msra.mxu0 %v1025
        %1220 = vmatprep.subr.bf16.mxu0 %v1032
        %1221 = vmatpush1.bf16.msra.mxu0 %v1031
        %1222 = vmatprep.subr.bf16.mxu0 %v1038
        %1223 = vmatpush1.bf16.msra.mxu0 %v1037
        %1224 = vmatprep.subr.bf16.mxu0 %v1044
        %1225 = vmatpush1.bf16.msra.mxu0 %v1043
        %1226 = vmatprep.subr.bf16.mxu0 %v1050
        %1227 = vmatpush1.bf16.msra.mxu0 %v1049
        %1228 = vmatprep.subr.bf16.mxu0 %v1056
        %1229 = vmatpush1.bf16.msra.mxu0 %v1055
        %1230 = vmatprep.mubr.bf16.mxu0 %v672
        %1231 = vmatmul.mubr.bf16.gmra.mrb[0].mxu0 %v671
        %v1232 = vpop.f32.mrb[0].mxu0
        %v1233 = vadd.f32 %v646, %v1232
        %v1234 = vpop.f32.mrb[0].mxu0
        %v1235 = vadd.f32 %v650, %v1234
        %v1236 = vpop.f32.mrb[0].mxu0
        %v1237 = vadd.f32 %v646, %v1236
        %v1238 = vpop.f32.mrb[0].mxu0
        %v1239 = vadd.f32 %v650, %v1238
        %1240 = vdwg.mxu0
        %1241 = vmatprep.subr.bf16.mxu0 %v968
        %1242 = vmatpush1.bf16.msra.mxu0 %v967
        %1243 = vmatprep.subr.bf16.mxu0 %v974
        %1244 = vmatpush1.bf16.msra.mxu0 %v973
        %1245 = vmatprep.subr.bf16.mxu0 %v980
        %1246 = vmatpush1.bf16.msra.mxu0 %v979
        %1247 = vmatprep.subr.bf16.mxu0 %v986
        %1248 = vmatpush1.bf16.msra.mxu0 %v985
        %1249 = vmatprep.subr.bf16.mxu0 %v992
        %1250 = vmatpush1.bf16.msra.mxu0 %v991
        %1251 = vmatprep.subr.bf16.mxu0 %v998
        %1252 = vmatpush1.bf16.msra.mxu0 %v997
        %1253 = vmatprep.subr.bf16.mxu0 %v1004
        %1254 = vmatpush1.bf16.msra.mxu0 %v1003
        %1255 = vmatprep.subr.bf16.mxu0 %v1010
        %1256 = vmatpush1.bf16.msra.mxu0 %v1009
        %1257 = vmatprep.subr.bf16.mxu0 %v1016
        %1258 = vmatpush1.bf16.msra.mxu0 %v1015
        %1259 = vmatprep.subr.bf16.mxu0 %v1022
        %1260 = vmatpush1.bf16.msra.mxu0 %v1021
        %1261 = vmatprep.subr.bf16.mxu0 %v1028
        %1262 = vmatpush1.bf16.msra.mxu0 %v1027
        %1263 = vmatprep.subr.bf16.mxu0 %v1034
        %1264 = vmatpush1.bf16.msra.mxu0 %v1033
        %1265 = vmatprep.subr.bf16.mxu0 %v1040
        %1266 = vmatpush1.bf16.msra.mxu0 %v1039
        %1267 = vmatprep.subr.bf16.mxu0 %v1046
        %1268 = vmatpush1.bf16.msra.mxu0 %v1045
        %1269 = vmatprep.subr.bf16.mxu0 %v1052
        %1270 = vmatpush1.bf16.msra.mxu0 %v1051
        %1271 = vmatprep.subr.bf16.mxu0 %v1058
        %1272 = vmatpush1.bf16.msra.mxu0 %v1057
        %1273 = vmatprep.mubr.bf16.mxu0 %v672
        %1274 = vmatmul.mubr.bf16.gmra.mrb[0].mxu0 %v671
        %v1275 = vpop.f32.mrb[0].mxu0
        %v1276 = vadd.f32 %v654, %v1275
        %v1277 = vpop.f32.mrb[0].mxu0
        %v1278 = vadd.f32 %v658, %v1277
        %v1279 = vpop.f32.mrb[0].mxu0
        %v1280 = vadd.f32 %v654, %v1279
        %v1281 = vpop.f32.mrb[0].mxu0
        %v1282 = vadd.f32 %v658, %v1281
        %1283 = vdwg.mxu0
        %v1284 = vpack.c.bf16 %v1194, %v1190
        %v1285 = vpack.c.bf16 %v1237, %v1233
        %v1286 = vpack.c.bf16 %v1280, %v1276
        %1287 = vmatprep.subr.bf16.mxu0 0
        %1288 = vmatpush1.bf16.xpose.msra.mxu0 %v1285
        %1289 = vmatprep.subr.bf16.mxu0 0
        %1290 = vmatpush1.bf16.xpose.msra.mxu0 0
        %1291 = vmatprep.subr.bf16.mxu0 0
        %1292 = vmatpush1.bf16.xpose.msra.mxu0 0
        %1293 = vmatprep.subr.bf16.mxu0 0
        %1294 = vmatpush1.bf16.xpose.msra.mxu0 0
        %1295 = vmatprep.subr.bf16.mxu0 0
        %1296 = vmatpush1.bf16.xpose.msra.mxu0 0
        %1297 = vmatprep.subr.bf16.mxu0 0
        %1298 = vmatpush1.bf16.xpose.msra.mxu0 0
        %1299 = vmatprep.subr.bf16.mxu0 0
        %1300 = vmatpush1.bf16.xpose.msra.mxu0 0
        %1301 = vmatprep.subr.bf16.mxu0 0
        %1302 = vmatpush1.bf16.xpose.msra.mxu0 0
        %1303 = vmatprep.subr.bf16.mxu0 0
        %1304 = vmatpush1.bf16.xpose.msra.mxu0 0
        %1305 = vmatprep.subr.bf16.mxu0 0
        %1306 = vmatpush1.bf16.xpose.msra.mxu0 0
        %1307 = vmatprep.subr.bf16.mxu0 0
        %1308 = vmatpush1.bf16.xpose.msra.mxu0 0
        %1309 = vmatprep.subr.bf16.mxu0 0
        %1310 = vmatpush1.bf16.xpose.msra.mxu0 0
        %1311 = vmatprep.subr.bf16.mxu0 0
        %1312 = vmatpush1.bf16.xpose.msra.mxu0 0
        %1313 = vmatprep.subr.bf16.mxu0 0
        %1314 = vmatpush1.bf16.xpose.msra.mxu0 0
        %1315 = vmatprep.subr.bf16.mxu0 0
        %1316 = vmatpush1.bf16.xpose.msra.mxu0 0
        %1317 = vmatprep.subr.bf16.mxu0 0
        %1318 = vmatpush1.bf16.xpose.msra.mxu0 0
        %1319 = vmatprep.mubr.bf16.mxu0 0
        %1320 = vmatmul.mubr.bf16.gmra.mrb[0].mxu0 %v1284
        %v1321 = vpop.f32.mrb[0].mxu0
        %v1322 = vadd.f32 0.0, %v1321
        %v1323 = vpop.f32.mrb[0].mxu0
        %v1324 = vpop.f32.mrb[0].mxu0
        %v1325 = vadd.f32 0.0, %v1324
        %v1326 = vpop.f32.mrb[0].mxu0
        %1327 = vdwg.mxu0
        %vm1328 = vcmask 130048
        %v1329 = vsel %vm1328, %v1322, -inf
        %1330 = vmax.xlane.f32.xlu0 %v1329
        %v1331 = vpop.xlane.xlu0 %1330
        %v1332 = vsel %vm1328, %v1325, -inf
        %1333 = vmax.xlane.f32.xlu0 %v1332
        %v1334 = vpop.xlane.xlu0 %1333
        %v1335 = vsub.f32 %v1322, %v1331
        %v1336 = vsub.f32 %v1325, %v1334
        %v1337 = vmul.f32 %v1335, 1.442695
        %v1338 = vpow.pop %v1337
        %v1339 = vmul.f32 %v1336, 1.442695
        %v1340 = vpow.pop %v1339
        %v1341 = vsel %vm1328, %v1338, 0.0
        %1342 = vadd.xlane.f32.xlu0 %v1341
        %v1343 = vpop.xlane.xlu0 %1342
        %v1344 = vsel %vm1328, %v1340, 0.0
        %1345 = vadd.xlane.f32.xlu0 %v1344
        %v1346 = vpop.xlane.xlu0 %1345
        %v1347 = vrcp.pop %v1343
        %v1348 = vrcp.pop %v1346
        %v1349 = vmul.f32 %v1338, %v1347
        %v1350 = vmul.f32 %v1340, %v1348
        %v1351 = vpack.c.bf16 %v1350, %v1349
        %v1353 = vsel %vm1328, %v1351, 0
        %1355 = vmatprep.subr.bf16.mxu0 0
        %1356 = vmatpush1.bf16.msra.mxu0 %v1286
        %1357 = vmatprep.subr.bf16.mxu0 0
        %1358 = vmatpush1.bf16.msra.mxu0 0
        %1359 = vmatprep.subr.bf16.mxu0 0
        %1360 = vmatpush1.bf16.msra.mxu0 0
        %1361 = vmatprep.subr.bf16.mxu0 0
        %1362 = vmatpush1.bf16.msra.mxu0 0
        %1363 = vmatprep.subr.bf16.mxu0 0
        %1364 = vmatpush1.bf16.msra.mxu0 0
        %1365 = vmatprep.subr.bf16.mxu0 0
        %1366 = vmatpush1.bf16.msra.mxu0 0
        %1367 = vmatprep.subr.bf16.mxu0 0
        %1368 = vmatpush1.bf16.msra.mxu0 0
        %1369 = vmatprep.subr.bf16.mxu0 0
        %1370 = vmatpush1.bf16.msra.mxu0 0
        %1371 = vmatprep.subr.bf16.mxu0 0
        %1372 = vmatpush1.bf16.msra.mxu0 0
        %1373 = vmatprep.subr.bf16.mxu0 0
        %1374 = vmatpush1.bf16.msra.mxu0 0
        %1375 = vmatprep.subr.bf16.mxu0 0
        %1376 = vmatpush1.bf16.msra.mxu0 0
        %1377 = vmatprep.subr.bf16.mxu0 0
        %1378 = vmatpush1.bf16.msra.mxu0 0
        %1379 = vmatprep.subr.bf16.mxu0 0
        %1380 = vmatpush1.bf16.msra.mxu0 0
        %1381 = vmatprep.subr.bf16.mxu0 0
        %1382 = vmatpush1.bf16.msra.mxu0 0
        %1383 = vmatprep.subr.bf16.mxu0 0
        %1384 = vmatpush1.bf16.msra.mxu0 0
        %1385 = vmatprep.subr.bf16.mxu0 0
        %1386 = vmatpush1.bf16.msra.mxu0 0
        %1387 = vmatprep.mubr.bf16.mxu0 0
        %1388 = vmatmul.mubr.bf16.gmra.mrb[0].mxu0 %v1353
        %v1389 = vpop.f32.mrb[0].mxu0
        %v1390 = vadd.f32 0.0, %v1389
        %v1391 = vpop.f32.mrb[0].mxu0
        %v1392 = vpop.f32.mrb[0].mxu0
        %v1393 = vadd.f32 0.0, %v1392
        %v1394 = vpop.f32.mrb[0].mxu0
        %1395 = vdwg.mxu0
        %v1396 = vpack.c.bf16 %v1393, %v1390
        %v1397 = vld [vmem:[#allocation7] sm:$0xff]
        %v1398 = vld [vmem:[#allocation7 + $0x8] sm:$0xff]
        %v1399 = vld [vmem:[#allocation7 + $0x10] sm:$0xff]
        %v1400 = vld [vmem:[#allocation7 + $0x18] sm:$0xff]
        %v1401 = vld [vmem:[#allocation7 + $0x20] sm:$0xff]
        %v1402 = vld [vmem:[#allocation7 + $0x28] sm:$0xff]
        %v1403 = vld [vmem:[#allocation7 + $0x30] sm:$0xff]
        %v1404 = vld [vmem:[#allocation7 + $0x38] sm:$0xff]
        %v1405 = vld [vmem:[#allocation7 + $0x40] sm:$0xff]
        %v1406 = vld [vmem:[#allocation7 + $0x48] sm:$0xff]
        %v1407 = vld [vmem:[#allocation7 + $0x50] sm:$0xff]
        %v1408 = vld [vmem:[#allocation7 + $0x58] sm:$0xff]
        %v1409 = vld [vmem:[#allocation7 + $0x60] sm:$0xff]
        %v1410 = vld [vmem:[#allocation7 + $0x68] sm:$0xff]
        %v1411 = vld [vmem:[#allocation7 + $0x70] sm:$0xff]
        %v1412 = vld [vmem:[#allocation7 + $0x78] sm:$0xff]
        %v1413 = vpack.c.bf16 %v1196, %v1192
        %v1414 = vpack.c.bf16 %v1239, %v1235
        %v1415 = vpack.c.bf16 %v1282, %v1278
        %1416 = vmatprep.subr.bf16.mxu0 0
        %1417 = vmatpush1.bf16.xpose.msra.mxu0 %v1414
        %1418 = vmatprep.subr.bf16.mxu0 0
        %1419 = vmatpush1.bf16.xpose.msra.mxu0 0
        %1420 = vmatprep.subr.bf16.mxu0 0
        %1421 = vmatpush1.bf16.xpose.msra.mxu0 0
        %1422 = vmatprep.subr.bf16.mxu0 0
        %1423 = vmatpush1.bf16.xpose.msra.mxu0 0
        %1424 = vmatprep.subr.bf16.mxu0 0
        %1425 = vmatpush1.bf16.xpose.msra.mxu0 0
        %1426 = vmatprep.subr.bf16.mxu0 0
        %1427 = vmatpush1.bf16.xpose.msra.mxu0 0
        %1428 = vmatprep.subr.bf16.mxu0 0
        %1429 = vmatpush1.bf16.xpose.msra.mxu0 0
        %1430 = vmatprep.subr.bf16.mxu0 0
        %1431 = vmatpush1.bf16.xpose.msra.mxu0 0
        %1432 = vmatprep.subr.bf16.mxu0 0
        %1433 = vmatpush1.bf16.xpose.msra.mxu0 0
        %1434 = vmatprep.subr.bf16.mxu0 0
        %1435 = vmatpush1.bf16.xpose.msra.mxu0 0
        %1436 = vmatprep.subr.bf16.mxu0 0
        %1437 = vmatpush1.bf16.xpose.msra.mxu0 0
        %1438 = vmatprep.subr.bf16.mxu0 0
        %1439 = vmatpush1.bf16.xpose.msra.mxu0 0
        %1440 = vmatprep.subr.bf16.mxu0 0
        %1441 = vmatpush1.bf16.xpose.msra.mxu0 0
        %1442 = vmatprep.subr.bf16.mxu0 0
        %1443 = vmatpush1.bf16.xpose.msra.mxu0 0
        %1444 = vmatprep.subr.bf16.mxu0 0
        %1445 = vmatpush1.bf16.xpose.msra.mxu0 0
        %1446 = vmatprep.subr.bf16.mxu0 0
        %1447 = vmatpush1.bf16.xpose.msra.mxu0 0
        %1448 = vmatprep.mubr.bf16.mxu0 0
        %1449 = vmatmul.mubr.bf16.gmra.mrb[0].mxu0 %v1413
        %v1450 = vpop.f32.mrb[0].mxu0
        %v1451 = vadd.f32 0.0, %v1450
        %v1452 = vpop.f32.mrb[0].mxu0
        %v1453 = vpop.f32.mrb[0].mxu0
        %v1454 = vadd.f32 0.0, %v1453
        %v1455 = vpop.f32.mrb[0].mxu0
        %1456 = vdwg.mxu0
        %v1457 = vsel %vm1328, %v1451, -inf
        %1458 = vmax.xlane.f32.xlu0 %v1457
        %v1459 = vpop.xlane.xlu0 %1458
        %v1460 = vsel %vm1328, %v1454, -inf
        %1461 = vmax.xlane.f32.xlu0 %v1460
        %v1462 = vpop.xlane.xlu0 %1461
        %v1463 = vsub.f32 %v1451, %v1459
        %v1464 = vsub.f32 %v1454, %v1462
        %v1465 = vmul.f32 %v1463, 1.442695
        %v1466 = vpow.pop %v1465
        %v1467 = vmul.f32 %v1464, 1.442695
        %v1468 = vpow.pop %v1467
        %v1469 = vsel %vm1328, %v1466, 0.0
        %1470 = vadd.xlane.f32.xlu0 %v1469
        %v1471 = vpop.xlane.xlu0 %1470
        %v1472 = vsel %vm1328, %v1468, 0.0
        %1473 = vadd.xlane.f32.xlu0 %v1472
        %v1474 = vpop.xlane.xlu0 %1473
        %v1475 = vrcp.pop %v1471
        %v1476 = vrcp.pop %v1474
        %v1477 = vmul.f32 %v1466, %v1475
        %v1478 = vmul.f32 %v1468, %v1476
        %v1479 = vpack.c.bf16 %v1478, %v1477
        %v1481 = vsel %vm1328, %v1479, 0
        %1483 = vmatprep.subr.bf16.mxu0 0
        %1484 = vmatpush1.bf16.msra.mxu0 %v1415
        %1485 = vmatprep.subr.bf16.mxu0 0
        %1486 = vmatpush1.bf16.msra.mxu0 0
        %1487 = vmatprep.subr.bf16.mxu0 0
        %1488 = vmatpush1.bf16.msra.mxu0 0
        %1489 = vmatprep.subr.bf16.mxu0 0
        %1490 = vmatpush1.bf16.msra.mxu0 0
        %1491 = vmatprep.subr.bf16.mxu0 0
        %1492 = vmatpush1.bf16.msra.mxu0 0
        %1493 = vmatprep.subr.bf16.mxu0 0
        %1494 = vmatpush1.bf16.msra.mxu0 0
        %1495 = vmatprep.subr.bf16.mxu0 0
        %1496 = vmatpush1.bf16.msra.mxu0 0
        %1497 = vmatprep.subr.bf16.mxu0 0
        %1498 = vmatpush1.bf16.msra.mxu0 0
        %1499 = vmatprep.subr.bf16.mxu0 0
        %1500 = vmatpush1.bf16.msra.mxu0 0
        %1501 = vmatprep.subr.bf16.mxu0 0
        %1502 = vmatpush1.bf16.msra.mxu0 0
        %1503 = vmatprep.subr.bf16.mxu0 0
        %1504 = vmatpush1.bf16.msra.mxu0 0
        %1505 = vmatprep.subr.bf16.mxu0 0
        %1506 = vmatpush1.bf16.msra.mxu0 0
        %1507 = vmatprep.subr.bf16.mxu0 0
        %1508 = vmatpush1.bf16.msra.mxu0 0
        %1509 = vmatprep.subr.bf16.mxu0 0
        %1510 = vmatpush1.bf16.msra.mxu0 0
        %1511 = vmatprep.subr.bf16.mxu0 0
        %1512 = vmatpush1.bf16.msra.mxu0 0
        %1513 = vmatprep.subr.bf16.mxu0 0
        %1514 = vmatpush1.bf16.msra.mxu0 0
        %1515 = vmatprep.mubr.bf16.mxu0 0
        %1516 = vmatmul.mubr.bf16.gmra.mrb[0].mxu0 %v1481
        %v1517 = vpop.f32.mrb[0].mxu0
        %v1518 = vadd.f32 0.0, %v1517
        %v1519 = vpop.f32.mrb[0].mxu0
        %v1520 = vpop.f32.mrb[0].mxu0
        %v1521 = vadd.f32 0.0, %v1520
        %v1522 = vpop.f32.mrb[0].mxu0
        %1523 = vdwg.mxu0
        %v1524 = vpack.c.bf16 %v1521, %v1518
        %v1525 = vld [vmem:[#allocation7 + $0x80] sm:$0xff]
        %v1526 = vld [vmem:[#allocation7 + $0x88] sm:$0xff]
        %v1527 = vld [vmem:[#allocation7 + $0x90] sm:$0xff]
        %v1528 = vld [vmem:[#allocation7 + $0x98] sm:$0xff]
        %v1529 = vld [vmem:[#allocation7 + $0xa0] sm:$0xff]
        %v1530 = vld [vmem:[#allocation7 + $0xa8] sm:$0xff]
        %v1531 = vld [vmem:[#allocation7 + $0xb0] sm:$0xff]
        %v1532 = vld [vmem:[#allocation7 + $0xb8] sm:$0xff]
        %v1533 = vld [vmem:[#allocation7 + $0xc0] sm:$0xff]
        %v1534 = vld [vmem:[#allocation7 + $0xc8] sm:$0xff]
        %v1535 = vld [vmem:[#allocation7 + $0xd0] sm:$0xff]
        %v1536 = vld [vmem:[#allocation7 + $0xd8] sm:$0xff]
        %v1537 = vld [vmem:[#allocation7 + $0xe0] sm:$0xff]
        %v1538 = vld [vmem:[#allocation7 + $0xe8] sm:$0xff]
        %v1539 = vld [vmem:[#allocation7 + $0xf0] sm:$0xff]
        %v1540 = vld [vmem:[#allocation7 + $0xf8] sm:$0xff]
        %v1557 = vunpack.c.l.b16 %v1525
        %v1558 = vunpack.c.h.b16 %v1525
        %v1559 = vunpack.c.l.b16 %v1526
        %v1560 = vunpack.c.h.b16 %v1526
        %v1561 = vunpack.c.l.b16 %v1527
        %v1562 = vunpack.c.h.b16 %v1527
        %v1563 = vunpack.c.l.b16 %v1528
        %v1564 = vunpack.c.h.b16 %v1528
        %v1565 = vunpack.c.l.b16 %v1529
        %v1566 = vunpack.c.h.b16 %v1529
        %v1567 = vunpack.c.l.b16 %v1530
        %v1568 = vunpack.c.h.b16 %v1530
        %v1569 = vunpack.c.l.b16 %v1531
        %v1570 = vunpack.c.h.b16 %v1531
        %v1571 = vunpack.c.l.b16 %v1532
        %v1572 = vunpack.c.h.b16 %v1532
        %v1573 = vunpack.c.l.b16 %v1533
        %v1574 = vunpack.c.h.b16 %v1533
        %v1575 = vunpack.c.l.b16 %v1534
        %v1576 = vunpack.c.h.b16 %v1534
        %v1577 = vunpack.c.l.b16 %v1535
        %v1578 = vunpack.c.h.b16 %v1535
        %v1579 = vunpack.c.l.b16 %v1536
        %v1580 = vunpack.c.h.b16 %v1536
        %v1581 = vunpack.c.l.b16 %v1537
        %v1582 = vunpack.c.h.b16 %v1537
        %v1583 = vunpack.c.l.b16 %v1538
        %v1584 = vunpack.c.h.b16 %v1538
        %v1585 = vunpack.c.l.b16 %v1539
        %v1586 = vunpack.c.h.b16 %v1539
        %v1587 = vunpack.c.l.b16 %v1540
        %v1588 = vunpack.c.h.b16 %v1540
        %v1589 = vpack.c.b16 %v1559, %v1557
        %v1590 = vpack.c.b16 %v1560, %v1558
        %v1591 = vpack.c.b16 %v1563, %v1561
        %v1592 = vpack.c.b16 %v1564, %v1562
        %v1593 = vpack.c.b16 %v1567, %v1565
        %v1594 = vpack.c.b16 %v1568, %v1566
        %v1595 = vpack.c.b16 %v1571, %v1569
        %v1596 = vpack.c.b16 %v1572, %v1570
        %v1597 = vpack.c.b16 %v1575, %v1573
        %v1598 = vpack.c.b16 %v1576, %v1574
        %v1599 = vpack.c.b16 %v1579, %v1577
        %v1600 = vpack.c.b16 %v1580, %v1578
        %v1601 = vpack.c.b16 %v1583, %v1581
        %v1602 = vpack.c.b16 %v1584, %v1582
        %v1603 = vpack.c.b16 %v1587, %v1585
        %v1604 = vpack.c.b16 %v1588, %v1586
        %1621 = vmatprep.subr.bf16.mxu0 %v1590
        %1622 = vmatpush1.bf16.msra.mxu0 %v1589
        %1623 = vmatprep.subr.bf16.mxu0 %v1592
        %1624 = vmatpush1.bf16.msra.mxu0 %v1591
        %1625 = vmatprep.subr.bf16.mxu0 %v1594
        %1626 = vmatpush1.bf16.msra.mxu0 %v1593
        %1627 = vmatprep.subr.bf16.mxu0 %v1596
        %1628 = vmatpush1.bf16.msra.mxu0 %v1595
        %1629 = vmatprep.subr.bf16.mxu0 %v1598
        %1630 = vmatpush1.bf16.msra.mxu0 %v1597
        %1631 = vmatprep.subr.bf16.mxu0 %v1600
        %1632 = vmatpush1.bf16.msra.mxu0 %v1599
        %1633 = vmatprep.subr.bf16.mxu0 %v1602
        %1634 = vmatpush1.bf16.msra.mxu0 %v1601
        %1635 = vmatprep.subr.bf16.mxu0 %v1604
        %1636 = vmatpush1.bf16.msra.mxu0 %v1603
        %1637 = vmatprep.subr.bf16.mxu0 0
        %1638 = vmatpush1.bf16.msra.mxu0 0
        %1639 = vmatprep.subr.bf16.mxu0 0
        %1640 = vmatpush1.bf16.msra.mxu0 0
        %1641 = vmatprep.subr.bf16.mxu0 0
        %1642 = vmatpush1.bf16.msra.mxu0 0
        %1643 = vmatprep.subr.bf16.mxu0 0
        %1644 = vmatpush1.bf16.msra.mxu0 0
        %1645 = vmatprep.subr.bf16.mxu0 0
        %1646 = vmatpush1.bf16.msra.mxu0 0
        %1647 = vmatprep.subr.bf16.mxu0 0
        %1648 = vmatpush1.bf16.msra.mxu0 0
        %1649 = vmatprep.subr.bf16.mxu0 0
        %1650 = vmatpush1.bf16.msra.mxu0 0
        %1651 = vmatprep.subr.bf16.mxu0 0
        %1652 = vmatpush1.bf16.msra.mxu0 0
        %1653 = vmatprep.mubr.bf16.mxu0 0
        %1654 = vmatmul.mubr.bf16.gmra.mrb[0].mxu0 %v1524
        %v1655 = vpop.f32.mrb[0].mxu0
        %v1656 = vadd.f32 0.0, %v1655
        %v1657 = vpop.f32.mrb[0].mxu0
        %v1658 = vadd.f32 0.0, %v1657
        %v1659 = vpop.f32.mrb[0].mxu0
        %v1660 = vadd.f32 0.0, %v1659
        %v1661 = vpop.f32.mrb[0].mxu0
        %v1662 = vadd.f32 0.0, %v1661
        %1663 = vdwg.mxu0
        %v1680 = vunpack.c.l.b16 %v1397
        %v1681 = vunpack.c.h.b16 %v1397
        %v1682 = vunpack.c.l.b16 %v1398
        %v1683 = vunpack.c.h.b16 %v1398
        %v1684 = vunpack.c.l.b16 %v1399
        %v1685 = vunpack.c.h.b16 %v1399
        %v1686 = vunpack.c.l.b16 %v1400
        %v1687 = vunpack.c.h.b16 %v1400
        %v1688 = vunpack.c.l.b16 %v1401
        %v1689 = vunpack.c.h.b16 %v1401
        %v1690 = vunpack.c.l.b16 %v1402
        %v1691 = vunpack.c.h.b16 %v1402
        %v1692 = vunpack.c.l.b16 %v1403
        %v1693 = vunpack.c.h.b16 %v1403
        %v1694 = vunpack.c.l.b16 %v1404
        %v1695 = vunpack.c.h.b16 %v1404
        %v1696 = vunpack.c.l.b16 %v1405
        %v1697 = vunpack.c.h.b16 %v1405
        %v1698 = vunpack.c.l.b16 %v1406
        %v1699 = vunpack.c.h.b16 %v1406
        %v1700 = vunpack.c.l.b16 %v1407
        %v1701 = vunpack.c.h.b16 %v1407
        %v1702 = vunpack.c.l.b16 %v1408
        %v1703 = vunpack.c.h.b16 %v1408
        %v1704 = vunpack.c.l.b16 %v1409
        %v1705 = vunpack.c.h.b16 %v1409
        %v1706 = vunpack.c.l.b16 %v1410
        %v1707 = vunpack.c.h.b16 %v1410
        %v1708 = vunpack.c.l.b16 %v1411
        %v1709 = vunpack.c.h.b16 %v1411
        %v1710 = vunpack.c.l.b16 %v1412
        %v1711 = vunpack.c.h.b16 %v1412
        %v1712 = vpack.c.b16 %v1682, %v1680
        %v1713 = vpack.c.b16 %v1683, %v1681
        %v1714 = vpack.c.b16 %v1686, %v1684
        %v1715 = vpack.c.b16 %v1687, %v1685
        %v1716 = vpack.c.b16 %v1690, %v1688
        %v1717 = vpack.c.b16 %v1691, %v1689
        %v1718 = vpack.c.b16 %v1694, %v1692
        %v1719 = vpack.c.b16 %v1695, %v1693
        %v1720 = vpack.c.b16 %v1698, %v1696
        %v1721 = vpack.c.b16 %v1699, %v1697
        %v1722 = vpack.c.b16 %v1702, %v1700
        %v1723 = vpack.c.b16 %v1703, %v1701
        %v1724 = vpack.c.b16 %v1706, %v1704
        %v1725 = vpack.c.b16 %v1707, %v1705
        %v1726 = vpack.c.b16 %v1710, %v1708
        %v1727 = vpack.c.b16 %v1711, %v1709
        %1744 = vmatprep.subr.bf16.mxu0 %v1713
        %1745 = vmatpush1.bf16.msra.mxu0 %v1712
        %1746 = vmatprep.subr.bf16.mxu0 %v1715
        %1747 = vmatpush1.bf16.msra.mxu0 %v1714
        %1748 = vmatprep.subr.bf16.mxu0 %v1717
        %1749 = vmatpush1.bf16.msra.mxu0 %v1716
        %1750 = vmatprep.subr.bf16.mxu0 %v1719
        %1751 = vmatpush1.bf16.msra.mxu0 %v1718
        %1752 = vmatprep.subr.bf16.mxu0 %v1721
        %1753 = vmatpush1.bf16.msra.mxu0 %v1720
        %1754 = vmatprep.subr.bf16.mxu0 %v1723
        %1755 = vmatpush1.bf16.msra.mxu0 %v1722
        %1756 = vmatprep.subr.bf16.mxu0 %v1725
        %1757 = vmatpush1.bf16.msra.mxu0 %v1724
        %1758 = vmatprep.subr.bf16.mxu0 %v1727
        %1759 = vmatpush1.bf16.msra.mxu0 %v1726
        %1760 = vmatprep.subr.bf16.mxu0 0
        %1761 = vmatpush1.bf16.msra.mxu0 0
        %1762 = vmatprep.subr.bf16.mxu0 0
        %1763 = vmatpush1.bf16.msra.mxu0 0
        %1764 = vmatprep.subr.bf16.mxu0 0
        %1765 = vmatpush1.bf16.msra.mxu0 0
        %1766 = vmatprep.subr.bf16.mxu0 0
        %1767 = vmatpush1.bf16.msra.mxu0 0
        %1768 = vmatprep.subr.bf16.mxu0 0
        %1769 = vmatpush1.bf16.msra.mxu0 0
        %1770 = vmatprep.subr.bf16.mxu0 0
        %1771 = vmatpush1.bf16.msra.mxu0 0
        %1772 = vmatprep.subr.bf16.mxu0 0
        %1773 = vmatpush1.bf16.msra.mxu0 0
        %1774 = vmatprep.subr.bf16.mxu0 0
        %1775 = vmatpush1.bf16.msra.mxu0 0
        %1776 = vmatprep.mubr.bf16.mxu0 0
        %1777 = vmatmul.mubr.bf16.gmra.mrb[0].mxu0 %v1396
        %v1778 = vpop.f32.mrb[0].mxu0
        %v1779 = vadd.f32 %v1656, %v1778
        %v1780 = vpop.f32.mrb[0].mxu0
        %v1781 = vadd.f32 %v1658, %v1780
        %v1782 = vpop.f32.mrb[0].mxu0
        %v1783 = vadd.f32 %v1660, %v1782
        %v1784 = vpop.f32.mrb[0].mxu0
        %v1785 = vadd.f32 %v1662, %v1784
        %1786 = vdwg.mxu0
        %v1787 = vld [vmem:[#allocation8] sm:$0x3]
        %v1789 = vlaneseq
        %v1790 = vshrl.u32 %v1789, 7
        %v1791 = vsub.s32 0, %v1790
        %v1792 = vrot.slane %v1787, %v1791
        %v1793 = vlaneseq
        %v1794 = vshrl.u32 %v1793, 7
        %v1795 = vsub.s32 1, %v1794
        %v1796 = vrot.slane %v1787, %v1795
        %v1799 = vadd.f32 %v1779, %v1792
        %v1800 = vadd.f32 %v1781, %v1796
        %v1801 = vadd.f32 %v1783, %v1792
        %v1802 = vadd.f32 %v1785, %v1796
        %v1803 = vadd.f32 %v533, %v1799
        %v1804 = vadd.f32 %v534, %v1800
        %v1805 = vadd.f32 %v535, %v1801
        %v1806 = vadd.f32 %v536, %v1802
        %v1807 = vld [vmem:[%s9] sm:$0x3]
        %v1808 = vld [vmem:[%s10] sm:$0x3]
        %v1809 = vadd.f32 %v1803, %v1804
        %1810 = vadd.xlane.f32.xlu0 %v1809
        %v1811 = vpop.xlane.xlu0 %1810
        %v1812 = vadd.f32 %v1805, %v1806
        %1813 = vadd.xlane.f32.xlu0 %v1812
        %v1814 = vpop.xlane.xlu0 %1813
        %v1815 = vrcp.pop 256.0
        %v1816 = vmul.f32 %v1811, %v1815
        %v1817 = vmul.f32 %v1814, %v1815
        %v1818 = vsub.f32 %v1803, %v1816
        %v1819 = vsub.f32 %v1804, %v1816
        %v1820 = vsub.f32 %v1805, %v1817
        %v1821 = vsub.f32 %v1806, %v1817
        %v1822 = vmul.f32 %v1818, %v1818
        %v1823 = vmul.f32 %v1819, %v1819
        %v1824 = vmul.f32 %v1820, %v1820
        %v1825 = vmul.f32 %v1821, %v1821
        %v1826 = vadd.f32 %v1822, %v1823
        %1827 = vadd.xlane.f32.xlu0 %v1826
        %v1828 = vpop.xlane.xlu0 %1827
        %v1829 = vadd.f32 %v1824, %v1825
        %1830 = vadd.xlane.f32.xlu0 %v1829
        %v1831 = vpop.xlane.xlu0 %1830
        %v1832 = vmul.f32 %v1828, %v1815
        %v1833 = vmul.f32 %v1831, %v1815
        %v1834 = vadd.f32 %v1832, 1e-05
        %v1835 = vadd.f32 %v1833, 1e-05
        %v1836 = vrsqrt.pop %v1834
        %v1837 = vrsqrt.pop %v1835
        %v1838 = vmul.f32 %v1818, %v1836
        %v1839 = vmul.f32 %v1819, %v1836
        %v1840 = vmul.f32 %v1820, %v1837
        %v1841 = vmul.f32 %v1821, %v1837
        %v1843 = vlaneseq
        %v1844 = vshrl.u32 %v1843, 7
        %v1845 = vsub.s32 0, %v1844
        %v1846 = vrot.slane %v1807, %v1845
        %v1847 = vlaneseq
        %v1848 = vshrl.u32 %v1847, 7
        %v1849 = vsub.s32 1, %v1848
        %v1850 = vrot.slane %v1807, %v1849
        %v1853 = vmul.f32 %v1838, %v1846
        %v1854 = vmul.f32 %v1839, %v1850
        %v1855 = vmul.f32 %v1840, %v1846
        %v1856 = vmul.f32 %v1841, %v1850
        %v1858 = vlaneseq
        %v1859 = vshrl.u32 %v1858, 7
        %v1860 = vsub.s32 0, %v1859
        %v1861 = vrot.slane %v1808, %v1860
        %v1862 = vlaneseq
        %v1863 = vshrl.u32 %v1862, 7
        %v1864 = vsub.s32 1, %v1863
        %v1865 = vrot.slane %v1808, %v1864
        %v1868 = vadd.f32 %v1853, %v1861
        %v1869 = vadd.f32 %v1854, %v1865
        %v1870 = vadd.f32 %v1855, %v1861
        %v1871 = vadd.f32 %v1856, %v1865
        %v1872 = vpack.c.bf16 %v1870, %v1868
        %v1873 = vpack.c.bf16 %v1871, %v1869
        %v1874 = vld [vmem:[#allocation10] sm:$0xff]
        %v1875 = vld [vmem:[#allocation10 + $0x8] sm:$0xff]
        %v1876 = vld [vmem:[#allocation10 + $0x10] sm:$0xff]
        %v1877 = vld [vmem:[#allocation10 + $0x18] sm:$0xff]
        %v1878 = vld [vmem:[#allocation10 + $0x20] sm:$0xff]
        %v1879 = vld [vmem:[#allocation10 + $0x28] sm:$0xff]
        %v1880 = vld [vmem:[#allocation10 + $0x30] sm:$0xff]
        %v1881 = vld [vmem:[#allocation10 + $0x38] sm:$0xff]
        %v1882 = vld [vmem:[#allocation10 + $0x40] sm:$0xff]
        %v1883 = vld [vmem:[#allocation10 + $0x48] sm:$0xff]
        %v1884 = vld [vmem:[#allocation10 + $0x50] sm:$0xff]
        %v1885 = vld [vmem:[#allocation10 + $0x58] sm:$0xff]
        %v1886 = vld [vmem:[#allocation10 + $0x60] sm:$0xff]
        %v1887 = vld [vmem:[#allocation10 + $0x68] sm:$0xff]
        %v1888 = vld [vmem:[#allocation10 + $0x70] sm:$0xff]
        %v1889 = vld [vmem:[#allocation10 + $0x78] sm:$0xff]
        %v1890 = vld [vmem:[#allocation10 + $0x80] sm:$0xff]
        %v1891 = vld [vmem:[#allocation10 + $0x88] sm:$0xff]
        %v1892 = vld [vmem:[#allocation10 + $0x90] sm:$0xff]
        %v1893 = vld [vmem:[#allocation10 + $0x98] sm:$0xff]
        %v1894 = vld [vmem:[#allocation10 + $0xa0] sm:$0xff]
        %v1895 = vld [vmem:[#allocation10 + $0xa8] sm:$0xff]
        %v1896 = vld [vmem:[#allocation10 + $0xb0] sm:$0xff]
        %v1897 = vld [vmem:[#allocation10 + $0xb8] sm:$0xff]
        %v1898 = vld [vmem:[#allocation10 + $0xc0] sm:$0xff]
        %v1899 = vld [vmem:[#allocation10 + $0xc8] sm:$0xff]
        %v1900 = vld [vmem:[#allocation10 + $0xd0] sm:$0xff]
        %v1901 = vld [vmem:[#allocation10 + $0xd8] sm:$0xff]
        %v1902 = vld [vmem:[#allocation10 + $0xe0] sm:$0xff]
        %v1903 = vld [vmem:[#allocation10 + $0xe8] sm:$0xff]
        %v1904 = vld [vmem:[#allocation10 + $0xf0] sm:$0xff]
        %v1905 = vld [vmem:[#allocation10 + $0xf8] sm:$0xff]
        %v1906 = vld [vmem:[#allocation10 + $0x100] sm:$0xff]
        %v1907 = vld [vmem:[#allocation10 + $0x108] sm:$0xff]
        %v1908 = vld [vmem:[#allocation10 + $0x110] sm:$0xff]
        %v1909 = vld [vmem:[#allocation10 + $0x118] sm:$0xff]
        %v1910 = vld [vmem:[#allocation10 + $0x120] sm:$0xff]
        %v1911 = vld [vmem:[#allocation10 + $0x128] sm:$0xff]
        %v1912 = vld [vmem:[#allocation10 + $0x130] sm:$0xff]
        %v1913 = vld [vmem:[#allocation10 + $0x138] sm:$0xff]
        %v1914 = vld [vmem:[#allocation10 + $0x140] sm:$0xff]
        %v1915 = vld [vmem:[#allocation10 + $0x148] sm:$0xff]
        %v1916 = vld [vmem:[#allocation10 + $0x150] sm:$0xff]
        %v1917 = vld [vmem:[#allocation10 + $0x158] sm:$0xff]
        %v1918 = vld [vmem:[#allocation10 + $0x160] sm:$0xff]
        %v1919 = vld [vmem:[#allocation10 + $0x168] sm:$0xff]
        %v1920 = vld [vmem:[#allocation10 + $0x170] sm:$0xff]
        %v1921 = vld [vmem:[#allocation10 + $0x178] sm:$0xff]
        %v1922 = vld [vmem:[#allocation10 + $0x180] sm:$0xff]
        %v1923 = vld [vmem:[#allocation10 + $0x188] sm:$0xff]
        %v1924 = vld [vmem:[#allocation10 + $0x190] sm:$0xff]
        %v1925 = vld [vmem:[#allocation10 + $0x198] sm:$0xff]
        %v1926 = vld [vmem:[#allocation10 + $0x1a0] sm:$0xff]
        %v1927 = vld [vmem:[#allocation10 + $0x1a8] sm:$0xff]
        %v1928 = vld [vmem:[#allocation10 + $0x1b0] sm:$0xff]
        %v1929 = vld [vmem:[#allocation10 + $0x1b8] sm:$0xff]
        %v1930 = vld [vmem:[#allocation10 + $0x1c0] sm:$0xff]
        %v1931 = vld [vmem:[#allocation10 + $0x1c8] sm:$0xff]
        %v1932 = vld [vmem:[#allocation10 + $0x1d0] sm:$0xff]
        %v1933 = vld [vmem:[#allocation10 + $0x1d8] sm:$0xff]
        %v1934 = vld [vmem:[#allocation10 + $0x1e0] sm:$0xff]
        %v1935 = vld [vmem:[#allocation10 + $0x1e8] sm:$0xff]
        %v1936 = vld [vmem:[#allocation10 + $0x1f0] sm:$0xff]
        %v1937 = vld [vmem:[#allocation10 + $0x1f8] sm:$0xff]
        %v1938 = vld [vmem:[#allocation10 + $0x200] sm:$0xff]
        %v1939 = vld [vmem:[#allocation10 + $0x208] sm:$0xff]
        %v1940 = vld [vmem:[#allocation10 + $0x210] sm:$0xff]
        %v1941 = vld [vmem:[#allocation10 + $0x218] sm:$0xff]
        %v1942 = vld [vmem:[#allocation10 + $0x220] sm:$0xff]
        %v1943 = vld [vmem:[#allocation10 + $0x228] sm:$0xff]
        %v1944 = vld [vmem:[#allocation10 + $0x230] sm:$0xff]
        %v1945 = vld [vmem:[#allocation10 + $0x238] sm:$0xff]
        %v1946 = vld [vmem:[#allocation10 + $0x240] sm:$0xff]
        %v1947 = vld [vmem:[#allocation10 + $0x248] sm:$0xff]
        %v1948 = vld [vmem:[#allocation10 + $0x250] sm:$0xff]
        %v1949 = vld [vmem:[#allocation10 + $0x258] sm:$0xff]
        %v1950 = vld [vmem:[#allocation10 + $0x260] sm:$0xff]
        %v1951 = vld [vmem:[#allocation10 + $0x268] sm:$0xff]
        %v1952 = vld [vmem:[#allocation10 + $0x270] sm:$0xff]
        %v1953 = vld [vmem:[#allocation10 + $0x278] sm:$0xff]
        %v1954 = vld [vmem:[#allocation10 + $0x280] sm:$0xff]
        %v1955 = vld [vmem:[#allocation10 + $0x288] sm:$0xff]
        %v1956 = vld [vmem:[#allocation10 + $0x290] sm:$0xff]
        %v1957 = vld [vmem:[#allocation10 + $0x298] sm:$0xff]
        %v1958 = vld [vmem:[#allocation10 + $0x2a0] sm:$0xff]
        %v1959 = vld [vmem:[#allocation10 + $0x2a8] sm:$0xff]
        %v1960 = vld [vmem:[#allocation10 + $0x2b0] sm:$0xff]
        %v1961 = vld [vmem:[#allocation10 + $0x2b8] sm:$0xff]
        %v1962 = vld [vmem:[#allocation10 + $0x2c0] sm:$0xff]
        %v1963 = vld [vmem:[#allocation10 + $0x2c8] sm:$0xff]
        %v1964 = vld [vmem:[#allocation10 + $0x2d0] sm:$0xff]
        %v1965 = vld [vmem:[#allocation10 + $0x2d8] sm:$0xff]
        %v1966 = vld [vmem:[#allocation10 + $0x2e0] sm:$0xff]
        %v1967 = vld [vmem:[#allocation10 + $0x2e8] sm:$0xff]
        %v1968 = vld [vmem:[#allocation10 + $0x2f0] sm:$0xff]
        %v1969 = vld [vmem:[#allocation10 + $0x2f8] sm:$0xff]
        %v1970 = vld [vmem:[#allocation10 + $0x300] sm:$0xff]
        %v1971 = vld [vmem:[#allocation10 + $0x308] sm:$0xff]
        %v1972 = vld [vmem:[#allocation10 + $0x310] sm:$0xff]
        %v1973 = vld [vmem:[#allocation10 + $0x318] sm:$0xff]
        %v1974 = vld [vmem:[#allocation10 + $0x320] sm:$0xff]
        %v1975 = vld [vmem:[#allocation10 + $0x328] sm:$0xff]
        %v1976 = vld [vmem:[#allocation10 + $0x330] sm:$0xff]
        %v1977 = vld [vmem:[#allocation10 + $0x338] sm:$0xff]
        %v1978 = vld [vmem:[#allocation10 + $0x340] sm:$0xff]
        %v1979 = vld [vmem:[#allocation10 + $0x348] sm:$0xff]
        %v1980 = vld [vmem:[#allocation10 + $0x350] sm:$0xff]
        %v1981 = vld [vmem:[#allocation10 + $0x358] sm:$0xff]
        %v1982 = vld [vmem:[#allocation10 + $0x360] sm:$0xff]
        %v1983 = vld [vmem:[#allocation10 + $0x368] sm:$0xff]
        %v1984 = vld [vmem:[#allocation10 + $0x370] sm:$0xff]
        %v1985 = vld [vmem:[#allocation10 + $0x378] sm:$0xff]
        %v1986 = vld [vmem:[#allocation10 + $0x380] sm:$0xff]
        %v1987 = vld [vmem:[#allocation10 + $0x388] sm:$0xff]
        %v1988 = vld [vmem:[#allocation10 + $0x390] sm:$0xff]
        %v1989 = vld [vmem:[#allocation10 + $0x398] sm:$0xff]
        %v1990 = vld [vmem:[#allocation10 + $0x3a0] sm:$0xff]
        %v1991 = vld [vmem:[#allocation10 + $0x3a8] sm:$0xff]
        %v1992 = vld [vmem:[#allocation10 + $0x3b0] sm:$0xff]
        %v1993 = vld [vmem:[#allocation10 + $0x3b8] sm:$0xff]
        %v1994 = vld [vmem:[#allocation10 + $0x3c0] sm:$0xff]
        %v1995 = vld [vmem:[#allocation10 + $0x3c8] sm:$0xff]
        %v1996 = vld [vmem:[#allocation10 + $0x3d0] sm:$0xff]
        %v1997 = vld [vmem:[#allocation10 + $0x3d8] sm:$0xff]
        %v1998 = vld [vmem:[#allocation10 + $0x3e0] sm:$0xff]
        %v1999 = vld [vmem:[#allocation10 + $0x3e8] sm:$0xff]
        %v2000 = vld [vmem:[#allocation10 + $0x3f0] sm:$0xff]
        %v2001 = vld [vmem:[#allocation10 + $0x3f8] sm:$0xff]
        %v2002 = vld [vmem:[%s6] sm:$0xff]
        %v2004 = vlaneseq
        %v2005 = vshrl.u32 %v2004, 7
        %v2006 = vsub.s32 0, %v2005
        %v2007 = vrot.slane %v2002, %v2006
        %v2008 = vlaneseq
        %v2009 = vshrl.u32 %v2008, 7
        %v2010 = vsub.s32 1, %v2009
        %v2011 = vrot.slane %v2002, %v2010
        %v2012 = vlaneseq
        %v2013 = vshrl.u32 %v2012, 7
        %v2014 = vsub.s32 2, %v2013
        %v2015 = vrot.slane %v2002, %v2014
        %v2016 = vlaneseq
        %v2017 = vshrl.u32 %v2016, 7
        %v2018 = vsub.s32 3, %v2017
        %v2019 = vrot.slane %v2002, %v2018
        %v2020 = vlaneseq
        %v2021 = vshrl.u32 %v2020, 7
        %v2022 = vsub.s32 4, %v2021
        %v2023 = vrot.slane %v2002, %v2022
        %v2024 = vlaneseq
        %v2025 = vshrl.u32 %v2024, 7
        %v2026 = vsub.s32 5, %v2025
        %v2027 = vrot.slane %v2002, %v2026
        %v2028 = vlaneseq
        %v2029 = vshrl.u32 %v2028, 7
        %v2030 = vsub.s32 6, %v2029
        %v2031 = vrot.slane %v2002, %v2030
        %v2032 = vlaneseq
        %v2033 = vshrl.u32 %v2032, 7
        %v2034 = vsub.s32 7, %v2033
        %v2035 = vrot.slane %v2002, %v2034
        %v2172 = vunpack.c.l.b16 %v1874
        %v2173 = vunpack.c.h.b16 %v1874
        %v2174 = vunpack.c.l.b16 %v1875
        %v2175 = vunpack.c.h.b16 %v1875
        %v2176 = vunpack.c.l.b16 %v1876
        %v2177 = vunpack.c.h.b16 %v1876
        %v2178 = vunpack.c.l.b16 %v1877
        %v2179 = vunpack.c.h.b16 %v1877
        %v2180 = vunpack.c.l.b16 %v1878
        %v2181 = vunpack.c.h.b16 %v1878
        %v2182 = vunpack.c.l.b16 %v1879
        %v2183 = vunpack.c.h.b16 %v1879
        %v2184 = vunpack.c.l.b16 %v1880
        %v2185 = vunpack.c.h.b16 %v1880
        %v2186 = vunpack.c.l.b16 %v1881
        %v2187 = vunpack.c.h.b16 %v1881
        %v2188 = vunpack.c.l.b16 %v1882
        %v2189 = vunpack.c.h.b16 %v1882
        %v2190 = vunpack.c.l.b16 %v1883
        %v2191 = vunpack.c.h.b16 %v1883
        %v2192 = vunpack.c.l.b16 %v1884
        %v2193 = vunpack.c.h.b16 %v1884
        %v2194 = vunpack.c.l.b16 %v1885
        %v2195 = vunpack.c.h.b16 %v1885
        %v2196 = vunpack.c.l.b16 %v1886
        %v2197 = vunpack.c.h.b16 %v1886
        %v2198 = vunpack.c.l.b16 %v1887
        %v2199 = vunpack.c.h.b16 %v1887
        %v2200 = vunpack.c.l.b16 %v1888
        %v2201 = vunpack.c.h.b16 %v1888
        %v2202 = vunpack.c.l.b16 %v1889
        %v2203 = vunpack.c.h.b16 %v1889
        %v2204 = vunpack.c.l.b16 %v1890
        %v2205 = vunpack.c.h.b16 %v1890
        %v2206 = vunpack.c.l.b16 %v1891
        %v2207 = vunpack.c.h.b16 %v1891
        %v2208 = vunpack.c.l.b16 %v1892
        %v2209 = vunpack.c.h.b16 %v1892
        %v2210 = vunpack.c.l.b16 %v1893
        %v2211 = vunpack.c.h.b16 %v1893
        %v2212 = vunpack.c.l.b16 %v1894
        %v2213 = vunpack.c.h.b16 %v1894
        %v2214 = vunpack.c.l.b16 %v1895
        %v2215 = vunpack.c.h.b16 %v1895
        %v2216 = vunpack.c.l.b16 %v1896
        %v2217 = vunpack.c.h.b16 %v1896
        %v2218 = vunpack.c.l.b16 %v1897
        %v2219 = vunpack.c.h.b16 %v1897
        %v2220 = vunpack.c.l.b16 %v1898
        %v2221 = vunpack.c.h.b16 %v1898
        %v2222 = vunpack.c.l.b16 %v1899
        %v2223 = vunpack.c.h.b16 %v1899
        %v2224 = vunpack.c.l.b16 %v1900
        %v2225 = vunpack.c.h.b16 %v1900
        %v2226 = vunpack.c.l.b16 %v1901
        %v2227 = vunpack.c.h.b16 %v1901
        %v2228 = vunpack.c.l.b16 %v1902
        %v2229 = vunpack.c.h.b16 %v1902
        %v2230 = vunpack.c.l.b16 %v1903
        %v2231 = vunpack.c.h.b16 %v1903
        %v2232 = vunpack.c.l.b16 %v1904
        %v2233 = vunpack.c.h.b16 %v1904
        %v2234 = vunpack.c.l.b16 %v1905
        %v2235 = vunpack.c.h.b16 %v1905
        %v2236 = vunpack.c.l.b16 %v1906
        %v2237 = vunpack.c.h.b16 %v1906
        %v2238 = vunpack.c.l.b16 %v1907
        %v2239 = vunpack.c.h.b16 %v1907
        %v2240 = vunpack.c.l.b16 %v1908
        %v2241 = vunpack.c.h.b16 %v1908
        %v2242 = vunpack.c.l.b16 %v1909
        %v2243 = vunpack.c.h.b16 %v1909
        %v2244 = vunpack.c.l.b16 %v1910
        %v2245 = vunpack.c.h.b16 %v1910
        %v2246 = vunpack.c.l.b16 %v1911
        %v2247 = vunpack.c.h.b16 %v1911
        %v2248 = vunpack.c.l.b16 %v1912
        %v2249 = vunpack.c.h.b16 %v1912
        %v2250 = vunpack.c.l.b16 %v1913
        %v2251 = vunpack.c.h.b16 %v1913
        %v2252 = vunpack.c.l.b16 %v1914
        %v2253 = vunpack.c.h.b16 %v1914
        %v2254 = vunpack.c.l.b16 %v1915
        %v2255 = vunpack.c.h.b16 %v1915
        %v2256 = vunpack.c.l.b16 %v1916
        %v2257 = vunpack.c.h.b16 %v1916
        %v2258 = vunpack.c.l.b16 %v1917
        %v2259 = vunpack.c.h.b16 %v1917
        %v2260 = vunpack.c.l.b16 %v1918
        %v2261 = vunpack.c.h.b16 %v1918
        %v2262 = vunpack.c.l.b16 %v1919
        %v2263 = vunpack.c.h.b16 %v1919
        %v2264 = vunpack.c.l.b16 %v1920
        %v2265 = vunpack.c.h.b16 %v1920
        %v2266 = vunpack.c.l.b16 %v1921
        %v2267 = vunpack.c.h.b16 %v1921
        %v2268 = vunpack.c.l.b16 %v1922
        %v2269 = vunpack.c.h.b16 %v1922
        %v2270 = vunpack.c.l.b16 %v1923
        %v2271 = vunpack.c.h.b16 %v1923
        %v2272 = vunpack.c.l.b16 %v1924
        %v2273 = vunpack.c.h.b16 %v1924
        %v2274 = vunpack.c.l.b16 %v1925
        %v2275 = vunpack.c.h.b16 %v1925
        %v2276 = vunpack.c.l.b16 %v1926
        %v2277 = vunpack.c.h.b16 %v1926
        %v2278 = vunpack.c.l.b16 %v1927
        %v2279 = vunpack.c.h.b16 %v1927
        %v2280 = vunpack.c.l.b16 %v1928
        %v2281 = vunpack.c.h.b16 %v1928
        %v2282 = vunpack.c.l.b16 %v1929
        %v2283 = vunpack.c.h.b16 %v1929
        %v2284 = vunpack.c.l.b16 %v1930
        %v2285 = vunpack.c.h.b16 %v1930
        %v2286 = vunpack.c.l.b16 %v1931
        %v2287 = vunpack.c.h.b16 %v1931
        %v2288 = vunpack.c.l.b16 %v1932
        %v2289 = vunpack.c.h.b16 %v1932
        %v2290 = vunpack.c.l.b16 %v1933
        %v2291 = vunpack.c.h.b16 %v1933
        %v2292 = vunpack.c.l.b16 %v1934
        %v2293 = vunpack.c.h.b16 %v1934
        %v2294 = vunpack.c.l.b16 %v1935
        %v2295 = vunpack.c.h.b16 %v1935
        %v2296 = vunpack.c.l.b16 %v1936
        %v2297 = vunpack.c.h.b16 %v1936
        %v2298 = vunpack.c.l.b16 %v1937
        %v2299 = vunpack.c.h.b16 %v1937
        %v2300 = vunpack.c.l.b16 %v1938
        %v2301 = vunpack.c.h.b16 %v1938
        %v2302 = vunpack.c.l.b16 %v1939
        %v2303 = vunpack.c.h.b16 %v1939
        %v2304 = vunpack.c.l.b16 %v1940
        %v2305 = vunpack.c.h.b16 %v1940
        %v2306 = vunpack.c.l.b16 %v1941
        %v2307 = vunpack.c.h.b16 %v1941
        %v2308 = vunpack.c.l.b16 %v1942
        %v2309 = vunpack.c.h.b16 %v1942
        %v2310 = vunpack.c.l.b16 %v1943
        %v2311 = vunpack.c.h.b16 %v1943
        %v2312 = vunpack.c.l.b16 %v1944
        %v2313 = vunpack.c.h.b16 %v1944
        %v2314 = vunpack.c.l.b16 %v1945
        %v2315 = vunpack.c.h.b16 %v1945
        %v2316 = vunpack.c.l.b16 %v1946
        %v2317 = vunpack.c.h.b16 %v1946
        %v2318 = vunpack.c.l.b16 %v1947
        %v2319 = vunpack.c.h.b16 %v1947
        %v2320 = vunpack.c.l.b16 %v1948
        %v2321 = vunpack.c.h.b16 %v1948
        %v2322 = vunpack.c.l.b16 %v1949
        %v2323 = vunpack.c.h.b16 %v1949
        %v2324 = vunpack.c.l.b16 %v1950
        %v2325 = vunpack.c.h.b16 %v1950
        %v2326 = vunpack.c.l.b16 %v1951
        %v2327 = vunpack.c.h.b16 %v1951
        %v2328 = vunpack.c.l.b16 %v1952
        %v2329 = vunpack.c.h.b16 %v1952
        %v2330 = vunpack.c.l.b16 %v1953
        %v2331 = vunpack.c.h.b16 %v1953
        %v2332 = vunpack.c.l.b16 %v1954
        %v2333 = vunpack.c.h.b16 %v1954
        %v2334 = vunpack.c.l.b16 %v1955
        %v2335 = vunpack.c.h.b16 %v1955
        %v2336 = vunpack.c.l.b16 %v1956
        %v2337 = vunpack.c.h.b16 %v1956
        %v2338 = vunpack.c.l.b16 %v1957
        %v2339 = vunpack.c.h.b16 %v1957
        %v2340 = vunpack.c.l.b16 %v1958
        %v2341 = vunpack.c.h.b16 %v1958
        %v2342 = vunpack.c.l.b16 %v1959
        %v2343 = vunpack.c.h.b16 %v1959
        %v2344 = vunpack.c.l.b16 %v1960
        %v2345 = vunpack.c.h.b16 %v1960
        %v2346 = vunpack.c.l.b16 %v1961
        %v2347 = vunpack.c.h.b16 %v1961
        %v2348 = vunpack.c.l.b16 %v1962
        %v2349 = vunpack.c.h.b16 %v1962
        %v2350 = vunpack.c.l.b16 %v1963
        %v2351 = vunpack.c.h.b16 %v1963
        %v2352 = vunpack.c.l.b16 %v1964
        %v2353 = vunpack.c.h.b16 %v1964
        %v2354 = vunpack.c.l.b16 %v1965
        %v2355 = vunpack.c.h.b16 %v1965
        %v2356 = vunpack.c.l.b16 %v1966
        %v2357 = vunpack.c.h.b16 %v1966
        %v2358 = vunpack.c.l.b16 %v1967
        %v2359 = vunpack.c.h.b16 %v1967
        %v2360 = vunpack.c.l.b16 %v1968
        %v2361 = vunpack.c.h.b16 %v1968
        %v2362 = vunpack.c.l.b16 %v1969
        %v2363 = vunpack.c.h.b16 %v1969
        %v2364 = vunpack.c.l.b16 %v1970
        %v2365 = vunpack.c.h.b16 %v1970
        %v2366 = vunpack.c.l.b16 %v1971
        %v2367 = vunpack.c.h.b16 %v1971
        %v2368 = vunpack.c.l.b16 %v1972
        %v2369 = vunpack.c.h.b16 %v1972
        %v2370 = vunpack.c.l.b16 %v1973
        %v2371 = vunpack.c.h.b16 %v1973
        %v2372 = vunpack.c.l.b16 %v1974
        %v2373 = vunpack.c.h.b16 %v1974
        %v2374 = vunpack.c.l.b16 %v1975
        %v2375 = vunpack.c.h.b16 %v1975
        %v2376 = vunpack.c.l.b16 %v1976
        %v2377 = vunpack.c.h.b16 %v1976
        %v2378 = vunpack.c.l.b16 %v1977
        %v2379 = vunpack.c.h.b16 %v1977
        %v2380 = vunpack.c.l.b16 %v1978
        %v2381 = vunpack.c.h.b16 %v1978
        %v2382 = vunpack.c.l.b16 %v1979
        %v2383 = vunpack.c.h.b16 %v1979
        %v2384 = vunpack.c.l.b16 %v1980
        %v2385 = vunpack.c.h.b16 %v1980
        %v2386 = vunpack.c.l.b16 %v1981
        %v2387 = vunpack.c.h.b16 %v1981
        %v2388 = vunpack.c.l.b16 %v1982
        %v2389 = vunpack.c.h.b16 %v1982
        %v2390 = vunpack.c.l.b16 %v1983
        %v2391 = vunpack.c.h.b16 %v1983
        %v2392 = vunpack.c.l.b16 %v1984
        %v2393 = vunpack.c.h.b16 %v1984
        %v2394 = vunpack.c.l.b16 %v1985
        %v2395 = vunpack.c.h.b16 %v1985
        %v2396 = vunpack.c.l.b16 %v1986
        %v2397 = vunpack.c.h.b16 %v1986
        %v2398 = vunpack.c.l.b16 %v1987
        %v2399 = vunpack.c.h.b16 %v1987
        %v2400 = vunpack.c.l.b16 %v1988
        %v2401 = vunpack.c.h.b16 %v1988
        %v2402 = vunpack.c.l.b16 %v1989
        %v2403 = vunpack.c.h.b16 %v1989
        %v2404 = vunpack.c.l.b16 %v1990
        %v2405 = vunpack.c.h.b16 %v1990
        %v2406 = vunpack.c.l.b16 %v1991
        %v2407 = vunpack.c.h.b16 %v1991
        %v2408 = vunpack.c.l.b16 %v1992
        %v2409 = vunpack.c.h.b16 %v1992
        %v2410 = vunpack.c.l.b16 %v1993
        %v2411 = vunpack.c.h.b16 %v1993
        %v2412 = vunpack.c.l.b16 %v1994
        %v2413 = vunpack.c.h.b16 %v1994
        %v2414 = vunpack.c.l.b16 %v1995
        %v2415 = vunpack.c.h.b16 %v1995
        %v2416 = vunpack.c.l.b16 %v1996
        %v2417 = vunpack.c.h.b16 %v1996
        %v2418 = vunpack.c.l.b16 %v1997
        %v2419 = vunpack.c.h.b16 %v1997
        %v2420 = vunpack.c.l.b16 %v1998
        %v2421 = vunpack.c.h.b16 %v1998
        %v2422 = vunpack.c.l.b16 %v1999
        %v2423 = vunpack.c.h.b16 %v1999
        %v2424 = vunpack.c.l.b16 %v2000
        %v2425 = vunpack.c.h.b16 %v2000
        %v2426 = vunpack.c.l.b16 %v2001
        %v2427 = vunpack.c.h.b16 %v2001
        %v2428 = vpack.c.b16 %v2180, %v2172
        %v2429 = vpack.c.b16 %v2181, %v2173
        %v2430 = vpack.c.b16 %v2182, %v2174
        %v2431 = vpack.c.b16 %v2183, %v2175
        %v2432 = vpack.c.b16 %v2184, %v2176
        %v2433 = vpack.c.b16 %v2185, %v2177
        %v2434 = vpack.c.b16 %v2186, %v2178
        %v2435 = vpack.c.b16 %v2187, %v2179
        %v2436 = vpack.c.b16 %v2196, %v2188
        %v2437 = vpack.c.b16 %v2197, %v2189
        %v2438 = vpack.c.b16 %v2198, %v2190
        %v2439 = vpack.c.b16 %v2199, %v2191
        %v2440 = vpack.c.b16 %v2200, %v2192
        %v2441 = vpack.c.b16 %v2201, %v2193
        %v2442 = vpack.c.b16 %v2202, %v2194
        %v2443 = vpack.c.b16 %v2203, %v2195
        %v2444 = vpack.c.b16 %v2212, %v2204
        %v2445 = vpack.c.b16 %v2213, %v2205
        %v2446 = vpack.c.b16 %v2214, %v2206
        %v2447 = vpack.c.b16 %v2215, %v2207
        %v2448 = vpack.c.b16 %v2216, %v2208
        %v2449 = vpack.c.b16 %v2217, %v2209
        %v2450 = vpack.c.b16 %v2218, %v2210
        %v2451 = vpack.c.b16 %v2219, %v2211
        %v2452 = vpack.c.b16 %v2228, %v2220
        %v2453 = vpack.c.b16 %v2229, %v2221
        %v2454 = vpack.c.b16 %v2230, %v2222
        %v2455 = vpack.c.b16 %v2231, %v2223
        %v2456 = vpack.c.b16 %v2232, %v2224
        %v2457 = vpack.c.b16 %v2233, %v2225
        %v2458 = vpack.c.b16 %v2234, %v2226
        %v2459 = vpack.c.b16 %v2235, %v2227
        %v2460 = vpack.c.b16 %v2244, %v2236
        %v2461 = vpack.c.b16 %v2245, %v2237
        %v2462 = vpack.c.b16 %v2246, %v2238
        %v2463 = vpack.c.b16 %v2247, %v2239
        %v2464 = vpack.c.b16 %v2248, %v2240
        %v2465 = vpack.c.b16 %v2249, %v2241
        %v2466 = vpack.c.b16 %v2250, %v2242
        %v2467 = vpack.c.b16 %v2251, %v2243
        %v2468 = vpack.c.b16 %v2260, %v2252
        %v2469 = vpack.c.b16 %v2261, %v2253
        %v2470 = vpack.c.b16 %v2262, %v2254
        %v2471 = vpack.c.b16 %v2263, %v2255
        %v2472 = vpack.c.b16 %v2264, %v2256
        %v2473 = vpack.c.b16 %v2265, %v2257
        %v2474 = vpack.c.b16 %v2266, %v2258
        %v2475 = vpack.c.b16 %v2267, %v2259
        %v2476 = vpack.c.b16 %v2276, %v2268
        %v2477 = vpack.c.b16 %v2277, %v2269
        %v2478 = vpack.c.b16 %v2278, %v2270
        %v2479 = vpack.c.b16 %v2279, %v2271
        %v2480 = vpack.c.b16 %v2280, %v2272
        %v2481 = vpack.c.b16 %v2281, %v2273
        %v2482 = vpack.c.b16 %v2282, %v2274
        %v2483 = vpack.c.b16 %v2283, %v2275
        %v2484 = vpack.c.b16 %v2292, %v2284
        %v2485 = vpack.c.b16 %v2293, %v2285
        %v2486 = vpack.c.b16 %v2294, %v2286
        %v2487 = vpack.c.b16 %v2295, %v2287
        %v2488 = vpack.c.b16 %v2296, %v2288
        %v2489 = vpack.c.b16 %v2297, %v2289
        %v2490 = vpack.c.b16 %v2298, %v2290
        %v2491 = vpack.c.b16 %v2299, %v2291
        %v2492 = vpack.c.b16 %v2308, %v2300
        %v2493 = vpack.c.b16 %v2309, %v2301
        %v2494 = vpack.c.b16 %v2310, %v2302
        %v2495 = vpack.c.b16 %v2311, %v2303
        %v2496 = vpack.c.b16 %v2312, %v2304
        %v2497 = vpack.c.b16 %v2313, %v2305
        %v2498 = vpack.c.b16 %v2314, %v2306
        %v2499 = vpack.c.b16 %v2315, %v2307
        %v2500 = vpack.c.b16 %v2324, %v2316
        %v2501 = vpack.c.b16 %v2325, %v2317
        %v2502 = vpack.c.b16 %v2326, %v2318
        %v2503 = vpack.c.b16 %v2327, %v2319
        %v2504 = vpack.c.b16 %v2328, %v2320
        %v2505 = vpack.c.b16 %v2329, %v2321
        %v2506 = vpack.c.b16 %v2330, %v2322
        %v2507 = vpack.c.b16 %v2331, %v2323
        %v2508 = vpack.c.b16 %v2340, %v2332
        %v2509 = vpack.c.b16 %v2341, %v2333
        %v2510 = vpack.c.b16 %v2342, %v2334
        %v2511 = vpack.c.b16 %v2343, %v2335
        %v2512 = vpack.c.b16 %v2344, %v2336
        %v2513 = vpack.c.b16 %v2345, %v2337
        %v2514 = vpack.c.b16 %v2346, %v2338
        %v2515 = vpack.c.b16 %v2347, %v2339
        %v2516 = vpack.c.b16 %v2356, %v2348
        %v2517 = vpack.c.b16 %v2357, %v2349
        %v2518 = vpack.c.b16 %v2358, %v2350
        %v2519 = vpack.c.b16 %v2359, %v2351
        %v2520 = vpack.c.b16 %v2360, %v2352
        %v2521 = vpack.c.b16 %v2361, %v2353
        %v2522 = vpack.c.b16 %v2362, %v2354
        %v2523 = vpack.c.b16 %v2363, %v2355
        %v2524 = vpack.c.b16 %v2372, %v2364
        %v2525 = vpack.c.b16 %v2373, %v2365
        %v2526 = vpack.c.b16 %v2374, %v2366
        %v2527 = vpack.c.b16 %v2375, %v2367
        %v2528 = vpack.c.b16 %v2376, %v2368
        %v2529 = vpack.c.b16 %v2377, %v2369
        %v2530 = vpack.c.b16 %v2378, %v2370
        %v2531 = vpack.c.b16 %v2379, %v2371
        %v2532 = vpack.c.b16 %v2388, %v2380
        %v2533 = vpack.c.b16 %v2389, %v2381
        %v2534 = vpack.c.b16 %v2390, %v2382
        %v2535 = vpack.c.b16 %v2391, %v2383
        %v2536 = vpack.c.b16 %v2392, %v2384
        %v2537 = vpack.c.b16 %v2393, %v2385
        %v2538 = vpack.c.b16 %v2394, %v2386
        %v2539 = vpack.c.b16 %v2395, %v2387
        %v2540 = vpack.c.b16 %v2404, %v2396
        %v2541 = vpack.c.b16 %v2405, %v2397
        %v2542 = vpack.c.b16 %v2406, %v2398
        %v2543 = vpack.c.b16 %v2407, %v2399
        %v2544 = vpack.c.b16 %v2408, %v2400
        %v2545 = vpack.c.b16 %v2409, %v2401
        %v2546 = vpack.c.b16 %v2410, %v2402
        %v2547 = vpack.c.b16 %v2411, %v2403
        %v2548 = vpack.c.b16 %v2420, %v2412
        %v2549 = vpack.c.b16 %v2421, %v2413
        %v2550 = vpack.c.b16 %v2422, %v2414
        %v2551 = vpack.c.b16 %v2423, %v2415
        %v2552 = vpack.c.b16 %v2424, %v2416
        %v2553 = vpack.c.b16 %v2425, %v2417
        %v2554 = vpack.c.b16 %v2426, %v2418
        %v2555 = vpack.c.b16 %v2427, %v2419
        %2684 = vmatprep.subr.bf16.mxu0 %v2429
        %2685 = vmatpush1.bf16.msra.mxu0 %v2428
        %2686 = vmatprep.subr.bf16.mxu0 %v2437
        %2687 = vmatpush1.bf16.msra.mxu0 %v2436
        %2688 = vmatprep.subr.bf16.mxu0 %v2445
        %2689 = vmatpush1.bf16.msra.mxu0 %v2444
        %2690 = vmatprep.subr.bf16.mxu0 %v2453
        %2691 = vmatpush1.bf16.msra.mxu0 %v2452
        %2692 = vmatprep.subr.bf16.mxu0 %v2461
        %2693 = vmatpush1.bf16.msra.mxu0 %v2460
        %2694 = vmatprep.subr.bf16.mxu0 %v2469
        %2695 = vmatpush1.bf16.msra.mxu0 %v2468
        %2696 = vmatprep.subr.bf16.mxu0 %v2477
        %2697 = vmatpush1.bf16.msra.mxu0 %v2476
        %2698 = vmatprep.subr.bf16.mxu0 %v2485
        %2699 = vmatpush1.bf16.msra.mxu0 %v2484
        %2700 = vmatprep.subr.bf16.mxu0 %v2493
        %2701 = vmatpush1.bf16.msra.mxu0 %v2492
        %2702 = vmatprep.subr.bf16.mxu0 %v2501
        %2703 = vmatpush1.bf16.msra.mxu0 %v2500
        %2704 = vmatprep.subr.bf16.mxu0 %v2509
        %2705 = vmatpush1.bf16.msra.mxu0 %v2508
        %2706 = vmatprep.subr.bf16.mxu0 %v2517
        %2707 = vmatpush1.bf16.msra.mxu0 %v2516
        %2708 = vmatprep.subr.bf16.mxu0 %v2525
        %2709 = vmatpush1.bf16.msra.mxu0 %v2524
        %2710 = vmatprep.subr.bf16.mxu0 %v2533
        %2711 = vmatpush1.bf16.msra.mxu0 %v2532
        %2712 = vmatprep.subr.bf16.mxu0 %v2541
        %2713 = vmatpush1.bf16.msra.mxu0 %v2540
        %2714 = vmatprep.subr.bf16.mxu0 %v2549
        %2715 = vmatpush1.bf16.msra.mxu0 %v2548
        %2716 = vmatprep.mubr.bf16.mxu0 %v1873
        %2717 = vmatmul.mubr.bf16.gmra.mrb[0].mxu0 %v1872
        %v2718 = vpop.f32.mrb[0].mxu0
        %v2719 = vadd.f32 %v2007, %v2718
        %v2720 = vpop.f32.mrb[0].mxu0
        %v2721 = vadd.f32 %v2011, %v2720
        %v2722 = vpop.f32.mrb[0].mxu0
        %v2723 = vadd.f32 %v2007, %v2722
        %v2724 = vpop.f32.mrb[0].mxu0
        %v2725 = vadd.f32 %v2011, %v2724
        %2726 = vdwg.mxu0
        %2727 = vmatprep.subr.bf16.mxu0 %v2431
        %2728 = vmatpush1.bf16.msra.mxu0 %v2430
        %2729 = vmatprep.subr.bf16.mxu0 %v2439
        %2730 = vmatpush1.bf16.msra.mxu0 %v2438
        %2731 = vmatprep.subr.bf16.mxu0 %v2447
        %2732 = vmatpush1.bf16.msra.mxu0 %v2446
        %2733 = vmatprep.subr.bf16.mxu0 %v2455
        %2734 = vmatpush1.bf16.msra.mxu0 %v2454
        %2735 = vmatprep.subr.bf16.mxu0 %v2463
        %2736 = vmatpush1.bf16.msra.mxu0 %v2462
        %2737 = vmatprep.subr.bf16.mxu0 %v2471
        %2738 = vmatpush1.bf16.msra.mxu0 %v2470
        %2739 = vmatprep.subr.bf16.mxu0 %v2479
        %2740 = vmatpush1.bf16.msra.mxu0 %v2478
        %2741 = vmatprep.subr.bf16.mxu0 %v2487
        %2742 = vmatpush1.bf16.msra.mxu0 %v2486
        %2743 = vmatprep.subr.bf16.mxu0 %v2495
        %2744 = vmatpush1.bf16.msra.mxu0 %v2494
        %2745 = vmatprep.subr.bf16.mxu0 %v2503
        %2746 = vmatpush1.bf16.msra.mxu0 %v2502
        %2747 = vmatprep.subr.bf16.mxu0 %v2511
        %2748 = vmatpush1.bf16.msra.mxu0 %v2510
        %2749 = vmatprep.subr.bf16.mxu0 %v2519
        %2750 = vmatpush1.bf16.msra.mxu0 %v2518
        %2751 = vmatprep.subr.bf16.mxu0 %v2527
        %2752 = vmatpush1.bf16.msra.mxu0 %v2526
        %2753 = vmatprep.subr.bf16.mxu0 %v2535
        %2754 = vmatpush1.bf16.msra.mxu0 %v2534
        %2755 = vmatprep.subr.bf16.mxu0 %v2543
        %2756 = vmatpush1.bf16.msra.mxu0 %v2542
        %2757 = vmatprep.subr.bf16.mxu0 %v2551
        %2758 = vmatpush1.bf16.msra.mxu0 %v2550
        %2759 = vmatprep.mubr.bf16.mxu0 %v1873
        %2760 = vmatmul.mubr.bf16.gmra.mrb[0].mxu0 %v1872
        %v2761 = vpop.f32.mrb[0].mxu0
        %v2762 = vadd.f32 %v2015, %v2761
        %v2763 = vpop.f32.mrb[0].mxu0
        %v2764 = vadd.f32 %v2019, %v2763
        %v2765 = vpop.f32.mrb[0].mxu0
        %v2766 = vadd.f32 %v2015, %v2765
        %v2767 = vpop.f32.mrb[0].mxu0
        %v2768 = vadd.f32 %v2019, %v2767
        %2769 = vdwg.mxu0
        %2770 = vmatprep.subr.bf16.mxu0 %v2433
        %2771 = vmatpush1.bf16.msra.mxu0 %v2432
        %2772 = vmatprep.subr.bf16.mxu0 %v2441
        %2773 = vmatpush1.bf16.msra.mxu0 %v2440
        %2774 = vmatprep.subr.bf16.mxu0 %v2449
        %2775 = vmatpush1.bf16.msra.mxu0 %v2448
        %2776 = vmatprep.subr.bf16.mxu0 %v2457
        %2777 = vmatpush1.bf16.msra.mxu0 %v2456
        %2778 = vmatprep.subr.bf16.mxu0 %v2465
        %2779 = vmatpush1.bf16.msra.mxu0 %v2464
        %2780 = vmatprep.subr.bf16.mxu0 %v2473
        %2781 = vmatpush1.bf16.msra.mxu0 %v2472
        %2782 = vmatprep.subr.bf16.mxu0 %v2481
        %2783 = vmatpush1.bf16.msra.mxu0 %v2480
        %2784 = vmatprep.subr.bf16.mxu0 %v2489
        %2785 = vmatpush1.bf16.msra.mxu0 %v2488
        %2786 = vmatprep.subr.bf16.mxu0 %v2497
        %2787 = vmatpush1.bf16.msra.mxu0 %v2496
        %2788 = vmatprep.subr.bf16.mxu0 %v2505
        %2789 = vmatpush1.bf16.msra.mxu0 %v2504
        %2790 = vmatprep.subr.bf16.mxu0 %v2513
        %2791 = vmatpush1.bf16.msra.mxu0 %v2512
        %2792 = vmatprep.subr.bf16.mxu0 %v2521
        %2793 = vmatpush1.bf16.msra.mxu0 %v2520
        %2794 = vmatprep.subr.bf16.mxu0 %v2529
        %2795 = vmatpush1.bf16.msra.mxu0 %v2528
        %2796 = vmatprep.subr.bf16.mxu0 %v2537
        %2797 = vmatpush1.bf16.msra.mxu0 %v2536
        %2798 = vmatprep.subr.bf16.mxu0 %v2545
        %2799 = vmatpush1.bf16.msra.mxu0 %v2544
        %2800 = vmatprep.subr.bf16.mxu0 %v2553
        %2801 = vmatpush1.bf16.msra.mxu0 %v2552
        %2802 = vmatprep.mubr.bf16.mxu0 %v1873
        %2803 = vmatmul.mubr.bf16.gmra.mrb[0].mxu0 %v1872
        %v2804 = vpop.f32.mrb[0].mxu0
        %v2805 = vadd.f32 %v2023, %v2804
        %v2806 = vpop.f32.mrb[0].mxu0
        %v2807 = vadd.f32 %v2027, %v2806
        %v2808 = vpop.f32.mrb[0].mxu0
        %v2809 = vadd.f32 %v2023, %v2808
        %v2810 = vpop.f32.mrb[0].mxu0
        %v2811 = vadd.f32 %v2027, %v2810
        %2812 = vdwg.mxu0
        %2813 = vmatprep.subr.bf16.mxu0 %v2435
        %2814 = vmatpush1.bf16.msra.mxu0 %v2434
        %2815 = vmatprep.subr.bf16.mxu0 %v2443
        %2816 = vmatpush1.bf16.msra.mxu0 %v2442
        %2817 = vmatprep.subr.bf16.mxu0 %v2451
        %2818 = vmatpush1.bf16.msra.mxu0 %v2450
        %2819 = vmatprep.subr.bf16.mxu0 %v2459
        %2820 = vmatpush1.bf16.msra.mxu0 %v2458
        %2821 = vmatprep.subr.bf16.mxu0 %v2467
        %2822 = vmatpush1.bf16.msra.mxu0 %v2466
        %2823 = vmatprep.subr.bf16.mxu0 %v2475
        %2824 = vmatpush1.bf16.msra.mxu0 %v2474
        %2825 = vmatprep.subr.bf16.mxu0 %v2483
        %2826 = vmatpush1.bf16.msra.mxu0 %v2482
        %2827 = vmatprep.subr.bf16.mxu0 %v2491
        %2828 = vmatpush1.bf16.msra.mxu0 %v2490
        %2829 = vmatprep.subr.bf16.mxu0 %v2499
        %2830 = vmatpush1.bf16.msra.mxu0 %v2498
        %2831 = vmatprep.subr.bf16.mxu0 %v2507
        %2832 = vmatpush1.bf16.msra.mxu0 %v2506
        %2833 = vmatprep.subr.bf16.mxu0 %v2515
        %2834 = vmatpush1.bf16.msra.mxu0 %v2514
        %2835 = vmatprep.subr.bf16.mxu0 %v2523
        %2836 = vmatpush1.bf16.msra.mxu0 %v2522
        %2837 = vmatprep.subr.bf16.mxu0 %v2531
        %2838 = vmatpush1.bf16.msra.mxu0 %v2530
        %2839 = vmatprep.subr.bf16.mxu0 %v2539
        %2840 = vmatpush1.bf16.msra.mxu0 %v2538
        %2841 = vmatprep.subr.bf16.mxu0 %v2547
        %2842 = vmatpush1.bf16.msra.mxu0 %v2546
        %2843 = vmatprep.subr.bf16.mxu0 %v2555
        %2844 = vmatpush1.bf16.msra.mxu0 %v2554
        %2845 = vmatprep.mubr.bf16.mxu0 %v1873
        %2846 = vmatmul.mubr.bf16.gmra.mrb[0].mxu0 %v1872
        %v2847 = vpop.f32.mrb[0].mxu0
        %v2848 = vadd.f32 %v2031, %v2847
        %v2849 = vpop.f32.mrb[0].mxu0
        %v2850 = vadd.f32 %v2035, %v2849
        %v2851 = vpop.f32.mrb[0].mxu0
        %v2852 = vadd.f32 %v2031, %v2851
        %v2853 = vpop.f32.mrb[0].mxu0
        %v2854 = vadd.f32 %v2035, %v2853
        %2855 = vdwg.mxu0
        %v2856 = vmax.f32 %v2719, 0.0
        %v2857 = vmax.f32 %v2721, 0.0
        %v2858 = vmax.f32 %v2762, 0.0
        %v2859 = vmax.f32 %v2764, 0.0
        %v2860 = vmax.f32 %v2805, 0.0
        %v2861 = vmax.f32 %v2807, 0.0
        %v2862 = vmax.f32 %v2848, 0.0
        %v2863 = vmax.f32 %v2850, 0.0
        %v2864 = vmax.f32 %v2723, 0.0
        %v2865 = vmax.f32 %v2725, 0.0
        %v2866 = vmax.f32 %v2766, 0.0
        %v2867 = vmax.f32 %v2768, 0.0
        %v2868 = vmax.f32 %v2809, 0.0
        %v2869 = vmax.f32 %v2811, 0.0
        %v2870 = vmax.f32 %v2852, 0.0
        %v2871 = vmax.f32 %v2854, 0.0
        %v2872 = vpack.c.bf16 %v2864, %v2856
        %v2873 = vpack.c.bf16 %v2865, %v2857
        %v2874 = vpack.c.bf16 %v2866, %v2858
        %v2875 = vpack.c.bf16 %v2867, %v2859
        %v2876 = vpack.c.bf16 %v2868, %v2860
        %v2877 = vpack.c.bf16 %v2869, %v2861
        %v2878 = vpack.c.bf16 %v2870, %v2862
        %v2879 = vpack.c.bf16 %v2871, %v2863
        %v2880 = vld [vmem:[#allocation11] sm:$0xff]
        %v2881 = vld [vmem:[#allocation11 + $0x8] sm:$0xff]
        %v2882 = vld [vmem:[#allocation11 + $0x10] sm:$0xff]
        %v2883 = vld [vmem:[#allocation11 + $0x18] sm:$0xff]
        %v2884 = vld [vmem:[#allocation11 + $0x20] sm:$0xff]
        %v2885 = vld [vmem:[#allocation11 + $0x28] sm:$0xff]
        %v2886 = vld [vmem:[#allocation11 + $0x30] sm:$0xff]
        %v2887 = vld [vmem:[#allocation11 + $0x38] sm:$0xff]
        %v2888 = vld [vmem:[#allocation11 + $0x40] sm:$0xff]
        %v2889 = vld [vmem:[#allocation11 + $0x48] sm:$0xff]
        %v2890 = vld [vmem:[#allocation11 + $0x50] sm:$0xff]
        %v2891 = vld [vmem:[#allocation11 + $0x58] sm:$0xff]
        %v2892 = vld [vmem:[#allocation11 + $0x60] sm:$0xff]
        %v2893 = vld [vmem:[#allocation11 + $0x68] sm:$0xff]
        %v2894 = vld [vmem:[#allocation11 + $0x70] sm:$0xff]
        %v2895 = vld [vmem:[#allocation11 + $0x78] sm:$0xff]
        %v2896 = vld [vmem:[#allocation11 + $0x80] sm:$0xff]
        %v2897 = vld [vmem:[#allocation11 + $0x88] sm:$0xff]
        %v2898 = vld [vmem:[#allocation11 + $0x90] sm:$0xff]
        %v2899 = vld [vmem:[#allocation11 + $0x98] sm:$0xff]
        %v2900 = vld [vmem:[#allocation11 + $0xa0] sm:$0xff]
        %v2901 = vld [vmem:[#allocation11 + $0xa8] sm:$0xff]
        %v2902 = vld [vmem:[#allocation11 + $0xb0] sm:$0xff]
        %v2903 = vld [vmem:[#allocation11 + $0xb8] sm:$0xff]
        %v2904 = vld [vmem:[#allocation11 + $0xc0] sm:$0xff]
        %v2905 = vld [vmem:[#allocation11 + $0xc8] sm:$0xff]
        %v2906 = vld [vmem:[#allocation11 + $0xd0] sm:$0xff]
        %v2907 = vld [vmem:[#allocation11 + $0xd8] sm:$0xff]
        %v2908 = vld [vmem:[#allocation11 + $0xe0] sm:$0xff]
        %v2909 = vld [vmem:[#allocation11 + $0xe8] sm:$0xff]
        %v2910 = vld [vmem:[#allocation11 + $0xf0] sm:$0xff]
        %v2911 = vld [vmem:[#allocation11 + $0xf8] sm:$0xff]
        %v2912 = vld [vmem:[#allocation11 + $0x100] sm:$0xff]
        %v2913 = vld [vmem:[#allocation11 + $0x108] sm:$0xff]
        %v2914 = vld [vmem:[#allocation11 + $0x110] sm:$0xff]
        %v2915 = vld [vmem:[#allocation11 + $0x118] sm:$0xff]
        %v2916 = vld [vmem:[#allocation11 + $0x120] sm:$0xff]
        %v2917 = vld [vmem:[#allocation11 + $0x128] sm:$0xff]
        %v2918 = vld [vmem:[#allocation11 + $0x130] sm:$0xff]
        %v2919 = vld [vmem:[#allocation11 + $0x138] sm:$0xff]
        %v2920 = vld [vmem:[#allocation11 + $0x140] sm:$0xff]
        %v2921 = vld [vmem:[#allocation11 + $0x148] sm:$0xff]
        %v2922 = vld [vmem:[#allocation11 + $0x150] sm:$0xff]
        %v2923 = vld [vmem:[#allocation11 + $0x158] sm:$0xff]
        %v2924 = vld [vmem:[#allocation11 + $0x160] sm:$0xff]
        %v2925 = vld [vmem:[#allocation11 + $0x168] sm:$0xff]
        %v2926 = vld [vmem:[#allocation11 + $0x170] sm:$0xff]
        %v2927 = vld [vmem:[#allocation11 + $0x178] sm:$0xff]
        %v2928 = vld [vmem:[#allocation11 + $0x180] sm:$0xff]
        %v2929 = vld [vmem:[#allocation11 + $0x188] sm:$0xff]
        %v2930 = vld [vmem:[#allocation11 + $0x190] sm:$0xff]
        %v2931 = vld [vmem:[#allocation11 + $0x198] sm:$0xff]
        %v2932 = vld [vmem:[#allocation11 + $0x1a0] sm:$0xff]
        %v2933 = vld [vmem:[#allocation11 + $0x1a8] sm:$0xff]
        %v2934 = vld [vmem:[#allocation11 + $0x1b0] sm:$0xff]
        %v2935 = vld [vmem:[#allocation11 + $0x1b8] sm:$0xff]
        %v2936 = vld [vmem:[#allocation11 + $0x1c0] sm:$0xff]
        %v2937 = vld [vmem:[#allocation11 + $0x1c8] sm:$0xff]
        %v2938 = vld [vmem:[#allocation11 + $0x1d0] sm:$0xff]
        %v2939 = vld [vmem:[#allocation11 + $0x1d8] sm:$0xff]
        %v2940 = vld [vmem:[#allocation11 + $0x1e0] sm:$0xff]
        %v2941 = vld [vmem:[#allocation11 + $0x1e8] sm:$0xff]
        %v2942 = vld [vmem:[#allocation11 + $0x1f0] sm:$0xff]
        %v2943 = vld [vmem:[#allocation11 + $0x1f8] sm:$0xff]
        %v2944 = vld [vmem:[#allocation11 + $0x200] sm:$0xff]
        %v2945 = vld [vmem:[#allocation11 + $0x208] sm:$0xff]
        %v2946 = vld [vmem:[#allocation11 + $0x210] sm:$0xff]
        %v2947 = vld [vmem:[#allocation11 + $0x218] sm:$0xff]
        %v2948 = vld [vmem:[#allocation11 + $0x220] sm:$0xff]
        %v2949 = vld [vmem:[#allocation11 + $0x228] sm:$0xff]
        %v2950 = vld [vmem:[#allocation11 + $0x230] sm:$0xff]
        %v2951 = vld [vmem:[#allocation11 + $0x238] sm:$0xff]
        %v2952 = vld [vmem:[#allocation11 + $0x240] sm:$0xff]
        %v2953 = vld [vmem:[#allocation11 + $0x248] sm:$0xff]
        %v2954 = vld [vmem:[#allocation11 + $0x250] sm:$0xff]
        %v2955 = vld [vmem:[#allocation11 + $0x258] sm:$0xff]
        %v2956 = vld [vmem:[#allocation11 + $0x260] sm:$0xff]
        %v2957 = vld [vmem:[#allocation11 + $0x268] sm:$0xff]
        %v2958 = vld [vmem:[#allocation11 + $0x270] sm:$0xff]
        %v2959 = vld [vmem:[#allocation11 + $0x278] sm:$0xff]
        %v2960 = vld [vmem:[#allocation11 + $0x280] sm:$0xff]
        %v2961 = vld [vmem:[#allocation11 + $0x288] sm:$0xff]
        %v2962 = vld [vmem:[#allocation11 + $0x290] sm:$0xff]
        %v2963 = vld [vmem:[#allocation11 + $0x298] sm:$0xff]
        %v2964 = vld [vmem:[#allocation11 + $0x2a0] sm:$0xff]
        %v2965 = vld [vmem:[#allocation11 + $0x2a8] sm:$0xff]
        %v2966 = vld [vmem:[#allocation11 + $0x2b0] sm:$0xff]
        %v2967 = vld [vmem:[#allocation11 + $0x2b8] sm:$0xff]
        %v2968 = vld [vmem:[#allocation11 + $0x2c0] sm:$0xff]
        %v2969 = vld [vmem:[#allocation11 + $0x2c8] sm:$0xff]
        %v2970 = vld [vmem:[#allocation11 + $0x2d0] sm:$0xff]
        %v2971 = vld [vmem:[#allocation11 + $0x2d8] sm:$0xff]
        %v2972 = vld [vmem:[#allocation11 + $0x2e0] sm:$0xff]
        %v2973 = vld [vmem:[#allocation11 + $0x2e8] sm:$0xff]
        %v2974 = vld [vmem:[#allocation11 + $0x2f0] sm:$0xff]
        %v2975 = vld [vmem:[#allocation11 + $0x2f8] sm:$0xff]
        %v2976 = vld [vmem:[#allocation11 + $0x300] sm:$0xff]
        %v2977 = vld [vmem:[#allocation11 + $0x308] sm:$0xff]
        %v2978 = vld [vmem:[#allocation11 + $0x310] sm:$0xff]
        %v2979 = vld [vmem:[#allocation11 + $0x318] sm:$0xff]
        %v2980 = vld [vmem:[#allocation11 + $0x320] sm:$0xff]
        %v2981 = vld [vmem:[#allocation11 + $0x328] sm:$0xff]
        %v2982 = vld [vmem:[#allocation11 + $0x330] sm:$0xff]
        %v2983 = vld [vmem:[#allocation11 + $0x338] sm:$0xff]
        %v2984 = vld [vmem:[#allocation11 + $0x340] sm:$0xff]
        %v2985 = vld [vmem:[#allocation11 + $0x348] sm:$0xff]
        %v2986 = vld [vmem:[#allocation11 + $0x350] sm:$0xff]
        %v2987 = vld [vmem:[#allocation11 + $0x358] sm:$0xff]
        %v2988 = vld [vmem:[#allocation11 + $0x360] sm:$0xff]
        %v2989 = vld [vmem:[#allocation11 + $0x368] sm:$0xff]
        %v2990 = vld [vmem:[#allocation11 + $0x370] sm:$0xff]
        %v2991 = vld [vmem:[#allocation11 + $0x378] sm:$0xff]
        %v2992 = vld [vmem:[#allocation11 + $0x380] sm:$0xff]
        %v2993 = vld [vmem:[#allocation11 + $0x388] sm:$0xff]
        %v2994 = vld [vmem:[#allocation11 + $0x390] sm:$0xff]
        %v2995 = vld [vmem:[#allocation11 + $0x398] sm:$0xff]
        %v2996 = vld [vmem:[#allocation11 + $0x3a0] sm:$0xff]
        %v2997 = vld [vmem:[#allocation11 + $0x3a8] sm:$0xff]
        %v2998 = vld [vmem:[#allocation11 + $0x3b0] sm:$0xff]
        %v2999 = vld [vmem:[#allocation11 + $0x3b8] sm:$0xff]
        %v3000 = vld [vmem:[#allocation11 + $0x3c0] sm:$0xff]
        %v3001 = vld [vmem:[#allocation11 + $0x3c8] sm:$0xff]
        %v3002 = vld [vmem:[#allocation11 + $0x3d0] sm:$0xff]
        %v3003 = vld [vmem:[#allocation11 + $0x3d8] sm:$0xff]
        %v3004 = vld [vmem:[#allocation11 + $0x3e0] sm:$0xff]
        %v3005 = vld [vmem:[#allocation11 + $0x3e8] sm:$0xff]
        %v3006 = vld [vmem:[#allocation11 + $0x3f0] sm:$0xff]
        %v3007 = vld [vmem:[#allocation11 + $0x3f8] sm:$0xff]
        %v3008 = vld [vmem:[%s8] sm:$0x3]
        %v3010 = vlaneseq
        %v3011 = vshrl.u32 %v3010, 7
        %v3012 = vsub.s32 0, %v3011
        %v3013 = vrot.slane %v3008, %v3012
        %v3014 = vlaneseq
        %v3015 = vshrl.u32 %v3014, 7
        %v3016 = vsub.s32 1, %v3015
        %v3017 = vrot.slane %v3008, %v3016
        %v3148 = vunpack.c.l.b16 %v2880
        %v3149 = vunpack.c.h.b16 %v2880
        %v3150 = vunpack.c.l.b16 %v2881
        %v3151 = vunpack.c.h.b16 %v2881
        %v3152 = vunpack.c.l.b16 %v2882
        %v3153 = vunpack.c.h.b16 %v2882
        %v3154 = vunpack.c.l.b16 %v2883
        %v3155 = vunpack.c.h.b16 %v2883
        %v3156 = vunpack.c.l.b16 %v2884
        %v3157 = vunpack.c.h.b16 %v2884
        %v3158 = vunpack.c.l.b16 %v2885
        %v3159 = vunpack.c.h.b16 %v2885
        %v3160 = vunpack.c.l.b16 %v2886
        %v3161 = vunpack.c.h.b16 %v2886
        %v3162 = vunpack.c.l.b16 %v2887
        %v3163 = vunpack.c.h.b16 %v2887
        %v3164 = vunpack.c.l.b16 %v2888
        %v3165 = vunpack.c.h.b16 %v2888
        %v3166 = vunpack.c.l.b16 %v2889
        %v3167 = vunpack.c.h.b16 %v2889
        %v3168 = vunpack.c.l.b16 %v2890
        %v3169 = vunpack.c.h.b16 %v2890
        %v3170 = vunpack.c.l.b16 %v2891
        %v3171 = vunpack.c.h.b16 %v2891
        %v3172 = vunpack.c.l.b16 %v2892
        %v3173 = vunpack.c.h.b16 %v2892
        %v3174 = vunpack.c.l.b16 %v2893
        %v3175 = vunpack.c.h.b16 %v2893
        %v3176 = vunpack.c.l.b16 %v2894
        %v3177 = vunpack.c.h.b16 %v2894
        %v3178 = vunpack.c.l.b16 %v2895
        %v3179 = vunpack.c.h.b16 %v2895
        %v3180 = vunpack.c.l.b16 %v2896
        %v3181 = vunpack.c.h.b16 %v2896
        %v3182 = vunpack.c.l.b16 %v2897
        %v3183 = vunpack.c.h.b16 %v2897
        %v3184 = vunpack.c.l.b16 %v2898
        %v3185 = vunpack.c.h.b16 %v2898
        %v3186 = vunpack.c.l.b16 %v2899
        %v3187 = vunpack.c.h.b16 %v2899
        %v3188 = vunpack.c.l.b16 %v2900
        %v3189 = vunpack.c.h.b16 %v2900
        %v3190 = vunpack.c.l.b16 %v2901
        %v3191 = vunpack.c.h.b16 %v2901
        %v3192 = vunpack.c.l.b16 %v2902
        %v3193 = vunpack.c.h.b16 %v2902
        %v3194 = vunpack.c.l.b16 %v2903
        %v3195 = vunpack.c.h.b16 %v2903
        %v3196 = vunpack.c.l.b16 %v2904
        %v3197 = vunpack.c.h.b16 %v2904
        %v3198 = vunpack.c.l.b16 %v2905
        %v3199 = vunpack.c.h.b16 %v2905
        %v3200 = vunpack.c.l.b16 %v2906
        %v3201 = vunpack.c.h.b16 %v2906
        %v3202 = vunpack.c.l.b16 %v2907
        %v3203 = vunpack.c.h.b16 %v2907
        %v3204 = vunpack.c.l.b16 %v2908
        %v3205 = vunpack.c.h.b16 %v2908
        %v3206 = vunpack.c.l.b16 %v2909
        %v3207 = vunpack.c.h.b16 %v2909
        %v3208 = vunpack.c.l.b16 %v2910
        %v3209 = vunpack.c.h.b16 %v2910
        %v3210 = vunpack.c.l.b16 %v2911
        %v3211 = vunpack.c.h.b16 %v2911
        %v3212 = vunpack.c.l.b16 %v2912
        %v3213 = vunpack.c.h.b16 %v2912
        %v3214 = vunpack.c.l.b16 %v2913
        %v3215 = vunpack.c.h.b16 %v2913
        %v3216 = vunpack.c.l.b16 %v2914
        %v3217 = vunpack.c.h.b16 %v2914
        %v3218 = vunpack.c.l.b16 %v2915
        %v3219 = vunpack.c.h.b16 %v2915
        %v3220 = vunpack.c.l.b16 %v2916
        %v3221 = vunpack.c.h.b16 %v2916
        %v3222 = vunpack.c.l.b16 %v2917
        %v3223 = vunpack.c.h.b16 %v2917
        %v3224 = vunpack.c.l.b16 %v2918
        %v3225 = vunpack.c.h.b16 %v2918
        %v3226 = vunpack.c.l.b16 %v2919
        %v3227 = vunpack.c.h.b16 %v2919
        %v3228 = vunpack.c.l.b16 %v2920
        %v3229 = vunpack.c.h.b16 %v2920
        %v3230 = vunpack.c.l.b16 %v2921
        %v3231 = vunpack.c.h.b16 %v2921
        %v3232 = vunpack.c.l.b16 %v2922
        %v3233 = vunpack.c.h.b16 %v2922
        %v3234 = vunpack.c.l.b16 %v2923
        %v3235 = vunpack.c.h.b16 %v2923
        %v3236 = vunpack.c.l.b16 %v2924
        %v3237 = vunpack.c.h.b16 %v2924
        %v3238 = vunpack.c.l.b16 %v2925
        %v3239 = vunpack.c.h.b16 %v2925
        %v3240 = vunpack.c.l.b16 %v2926
        %v3241 = vunpack.c.h.b16 %v2926
        %v3242 = vunpack.c.l.b16 %v2927
        %v3243 = vunpack.c.h.b16 %v2927
        %v3244 = vunpack.c.l.b16 %v2928
        %v3245 = vunpack.c.h.b16 %v2928
        %v3246 = vunpack.c.l.b16 %v2929
        %v3247 = vunpack.c.h.b16 %v2929
        %v3248 = vunpack.c.l.b16 %v2930
        %v3249 = vunpack.c.h.b16 %v2930
        %v3250 = vunpack.c.l.b16 %v2931
        %v3251 = vunpack.c.h.b16 %v2931
        %v3252 = vunpack.c.l.b16 %v2932
        %v3253 = vunpack.c.h.b16 %v2932
        %v3254 = vunpack.c.l.b16 %v2933
        %v3255 = vunpack.c.h.b16 %v2933
        %v3256 = vunpack.c.l.b16 %v2934
        %v3257 = vunpack.c.h.b16 %v2934
        %v3258 = vunpack.c.l.b16 %v2935
        %v3259 = vunpack.c.h.b16 %v2935
        %v3260 = vunpack.c.l.b16 %v2936
        %v3261 = vunpack.c.h.b16 %v2936
        %v3262 = vunpack.c.l.b16 %v2937
        %v3263 = vunpack.c.h.b16 %v2937
        %v3264 = vunpack.c.l.b16 %v2938
        %v3265 = vunpack.c.h.b16 %v2938
        %v3266 = vunpack.c.l.b16 %v2939
        %v3267 = vunpack.c.h.b16 %v2939
        %v3268 = vunpack.c.l.b16 %v2940
        %v3269 = vunpack.c.h.b16 %v2940
        %v3270 = vunpack.c.l.b16 %v2941
        %v3271 = vunpack.c.h.b16 %v2941
        %v3272 = vunpack.c.l.b16 %v2942
        %v3273 = vunpack.c.h.b16 %v2942
        %v3274 = vunpack.c.l.b16 %v2943
        %v3275 = vunpack.c.h.b16 %v2943
        %v3276 = vunpack.c.l.b16 %v2944
        %v3277 = vunpack.c.h.b16 %v2944
        %v3278 = vunpack.c.l.b16 %v2945
        %v3279 = vunpack.c.h.b16 %v2945
        %v3280 = vunpack.c.l.b16 %v2946
        %v3281 = vunpack.c.h.b16 %v2946
        %v3282 = vunpack.c.l.b16 %v2947
        %v3283 = vunpack.c.h.b16 %v2947
        %v3284 = vunpack.c.l.b16 %v2948
        %v3285 = vunpack.c.h.b16 %v2948
        %v3286 = vunpack.c.l.b16 %v2949
        %v3287 = vunpack.c.h.b16 %v2949
        %v3288 = vunpack.c.l.b16 %v2950
        %v3289 = vunpack.c.h.b16 %v2950
        %v3290 = vunpack.c.l.b16 %v2951
        %v3291 = vunpack.c.h.b16 %v2951
        %v3292 = vunpack.c.l.b16 %v2952
        %v3293 = vunpack.c.h.b16 %v2952
        %v3294 = vunpack.c.l.b16 %v2953
        %v3295 = vunpack.c.h.b16 %v2953
        %v3296 = vunpack.c.l.b16 %v2954
        %v3297 = vunpack.c.h.b16 %v2954
        %v3298 = vunpack.c.l.b16 %v2955
        %v3299 = vunpack.c.h.b16 %v2955
        %v3300 = vunpack.c.l.b16 %v2956
        %v3301 = vunpack.c.h.b16 %v2956
        %v3302 = vunpack.c.l.b16 %v2957
        %v3303 = vunpack.c.h.b16 %v2957
        %v3304 = vunpack.c.l.b16 %v2958
        %v3305 = vunpack.c.h.b16 %v2958
        %v3306 = vunpack.c.l.b16 %v2959
        %v3307 = vunpack.c.h.b16 %v2959
        %v3308 = vunpack.c.l.b16 %v2960
        %v3309 = vunpack.c.h.b16 %v2960
        %v3310 = vunpack.c.l.b16 %v2961
        %v3311 = vunpack.c.h.b16 %v2961
        %v3312 = vunpack.c.l.b16 %v2962
        %v3313 = vunpack.c.h.b16 %v2962
        %v3314 = vunpack.c.l.b16 %v2963
        %v3315 = vunpack.c.h.b16 %v2963
        %v3316 = vunpack.c.l.b16 %v2964
        %v3317 = vunpack.c.h.b16 %v2964
        %v3318 = vunpack.c.l.b16 %v2965
        %v3319 = vunpack.c.h.b16 %v2965
        %v3320 = vunpack.c.l.b16 %v2966
        %v3321 = vunpack.c.h.b16 %v2966
        %v3322 = vunpack.c.l.b16 %v2967
        %v3323 = vunpack.c.h.b16 %v2967
        %v3324 = vunpack.c.l.b16 %v2968
        %v3325 = vunpack.c.h.b16 %v2968
        %v3326 = vunpack.c.l.b16 %v2969
        %v3327 = vunpack.c.h.b16 %v2969
        %v3328 = vunpack.c.l.b16 %v2970
        %v3329 = vunpack.c.h.b16 %v2970
        %v3330 = vunpack.c.l.b16 %v2971
        %v3331 = vunpack.c.h.b16 %v2971
        %v3332 = vunpack.c.l.b16 %v2972
        %v3333 = vunpack.c.h.b16 %v2972
        %v3334 = vunpack.c.l.b16 %v2973
        %v3335 = vunpack.c.h.b16 %v2973
        %v3336 = vunpack.c.l.b16 %v2974
        %v3337 = vunpack.c.h.b16 %v2974
        %v3338 = vunpack.c.l.b16 %v2975
        %v3339 = vunpack.c.h.b16 %v2975
        %v3340 = vunpack.c.l.b16 %v2976
        %v3341 = vunpack.c.h.b16 %v2976
        %v3342 = vunpack.c.l.b16 %v2977
        %v3343 = vunpack.c.h.b16 %v2977
        %v3344 = vunpack.c.l.b16 %v2978
        %v3345 = vunpack.c.h.b16 %v2978
        %v3346 = vunpack.c.l.b16 %v2979
        %v3347 = vunpack.c.h.b16 %v2979
        %v3348 = vunpack.c.l.b16 %v2980
        %v3349 = vunpack.c.h.b16 %v2980
        %v3350 = vunpack.c.l.b16 %v2981
        %v3351 = vunpack.c.h.b16 %v2981
        %v3352 = vunpack.c.l.b16 %v2982
        %v3353 = vunpack.c.h.b16 %v2982
        %v3354 = vunpack.c.l.b16 %v2983
        %v3355 = vunpack.c.h.b16 %v2983
        %v3356 = vunpack.c.l.b16 %v2984
        %v3357 = vunpack.c.h.b16 %v2984
        %v3358 = vunpack.c.l.b16 %v2985
        %v3359 = vunpack.c.h.b16 %v2985
        %v3360 = vunpack.c.l.b16 %v2986
        %v3361 = vunpack.c.h.b16 %v2986
        %v3362 = vunpack.c.l.b16 %v2987
        %v3363 = vunpack.c.h.b16 %v2987
        %v3364 = vunpack.c.l.b16 %v2988
        %v3365 = vunpack.c.h.b16 %v2988
        %v3366 = vunpack.c.l.b16 %v2989
        %v3367 = vunpack.c.h.b16 %v2989
        %v3368 = vunpack.c.l.b16 %v2990
        %v3369 = vunpack.c.h.b16 %v2990
        %v3370 = vunpack.c.l.b16 %v2991
        %v3371 = vunpack.c.h.b16 %v2991
        %v3372 = vunpack.c.l.b16 %v2992
        %v3373 = vunpack.c.h.b16 %v2992
        %v3374 = vunpack.c.l.b16 %v2993
        %v3375 = vunpack.c.h.b16 %v2993
        %v3376 = vunpack.c.l.b16 %v2994
        %v3377 = vunpack.c.h.b16 %v2994
        %v3378 = vunpack.c.l.b16 %v2995
        %v3379 = vunpack.c.h.b16 %v2995
        %v3380 = vunpack.c.l.b16 %v2996
        %v3381 = vunpack.c.h.b16 %v2996
        %v3382 = vunpack.c.l.b16 %v2997
        %v3383 = vunpack.c.h.b16 %v2997
        %v3384 = vunpack.c.l.b16 %v2998
        %v3385 = vunpack.c.h.b16 %v2998
        %v3386 = vunpack.c.l.b16 %v2999
        %v3387 = vunpack.c.h.b16 %v2999
        %v3388 = vunpack.c.l.b16 %v3000
        %v3389 = vunpack.c.h.b16 %v3000
        %v3390 = vunpack.c.l.b16 %v3001
        %v3391 = vunpack.c.h.b16 %v3001
        %v3392 = vunpack.c.l.b16 %v3002
        %v3393 = vunpack.c.h.b16 %v3002
        %v3394 = vunpack.c.l.b16 %v3003
        %v3395 = vunpack.c.h.b16 %v3003
        %v3396 = vunpack.c.l.b16 %v3004
        %v3397 = vunpack.c.h.b16 %v3004
        %v3398 = vunpack.c.l.b16 %v3005
        %v3399 = vunpack.c.h.b16 %v3005
        %v3400 = vunpack.c.l.b16 %v3006
        %v3401 = vunpack.c.h.b16 %v3006
        %v3402 = vunpack.c.l.b16 %v3007
        %v3403 = vunpack.c.h.b16 %v3007
        %v3404 = vpack.c.b16 %v3150, %v3148
        %v3405 = vpack.c.b16 %v3151, %v3149
        %v3406 = vpack.c.b16 %v3154, %v3152
        %v3407 = vpack.c.b16 %v3155, %v3153
        %v3408 = vpack.c.b16 %v3158, %v3156
        %v3409 = vpack.c.b16 %v3159, %v3157
        %v3410 = vpack.c.b16 %v3162, %v3160
        %v3411 = vpack.c.b16 %v3163, %v3161
        %v3412 = vpack.c.b16 %v3166, %v3164
        %v3413 = vpack.c.b16 %v3167, %v3165
        %v3414 = vpack.c.b16 %v3170, %v3168
        %v3415 = vpack.c.b16 %v3171, %v3169
        %v3416 = vpack.c.b16 %v3174, %v3172
        %v3417 = vpack.c.b16 %v3175, %v3173
        %v3418 = vpack.c.b16 %v3178, %v3176
        %v3419 = vpack.c.b16 %v3179, %v3177
        %v3420 = vpack.c.b16 %v3182, %v3180
        %v3421 = vpack.c.b16 %v3183, %v3181
        %v3422 = vpack.c.b16 %v3186, %v3184
        %v3423 = vpack.c.b16 %v3187, %v3185
        %v3424 = vpack.c.b16 %v3190, %v3188
        %v3425 = vpack.c.b16 %v3191, %v3189
        %v3426 = vpack.c.b16 %v3194, %v3192
        %v3427 = vpack.c.b16 %v3195, %v3193
        %v3428 = vpack.c.b16 %v3198, %v3196
        %v3429 = vpack.c.b16 %v3199, %v3197
        %v3430 = vpack.c.b16 %v3202, %v3200
        %v3431 = vpack.c.b16 %v3203, %v3201
        %v3432 = vpack.c.b16 %v3206, %v3204
        %v3433 = vpack.c.b16 %v3207, %v3205
        %v3434 = vpack.c.b16 %v3210, %v3208
        %v3435 = vpack.c.b16 %v3211, %v3209
        %v3436 = vpack.c.b16 %v3214, %v3212
        %v3437 = vpack.c.b16 %v3215, %v3213
        %v3438 = vpack.c.b16 %v3218, %v3216
        %v3439 = vpack.c.b16 %v3219, %v3217
        %v3440 = vpack.c.b16 %v3222, %v3220
        %v3441 = vpack.c.b16 %v3223, %v3221
        %v3442 = vpack.c.b16 %v3226, %v3224
        %v3443 = vpack.c.b16 %v3227, %v3225
        %v3444 = vpack.c.b16 %v3230, %v3228
        %v3445 = vpack.c.b16 %v3231, %v3229
        %v3446 = vpack.c.b16 %v3234, %v3232
        %v3447 = vpack.c.b16 %v3235, %v3233
        %v3448 = vpack.c.b16 %v3238, %v3236
        %v3449 = vpack.c.b16 %v3239, %v3237
        %v3450 = vpack.c.b16 %v3242, %v3240
        %v3451 = vpack.c.b16 %v3243, %v3241
        %v3452 = vpack.c.b16 %v3246, %v3244
        %v3453 = vpack.c.b16 %v3247, %v3245
        %v3454 = vpack.c.b16 %v3250, %v3248
        %v3455 = vpack.c.b16 %v3251, %v3249
        %v3456 = vpack.c.b16 %v3254, %v3252
        %v3457 = vpack.c.b16 %v3255, %v3253
        %v3458 = vpack.c.b16 %v3258, %v3256
        %v3459 = vpack.c.b16 %v3259, %v3257
        %v3460 = vpack.c.b16 %v3262, %v3260
        %v3461 = vpack.c.b16 %v3263, %v3261
        %v3462 = vpack.c.b16 %v3266, %v3264
        %v3463 = vpack.c.b16 %v3267, %v3265
        %v3464 = vpack.c.b16 %v3270, %v3268
        %v3465 = vpack.c.b16 %v3271, %v3269
        %v3466 = vpack.c.b16 %v3274, %v3272
        %v3467 = vpack.c.b16 %v3275, %v3273
        %v3468 = vpack.c.b16 %v3278, %v3276
        %v3469 = vpack.c.b16 %v3279, %v3277
        %v3470 = vpack.c.b16 %v3282, %v3280
        %v3471 = vpack.c.b16 %v3283, %v3281
        %v3472 = vpack.c.b16 %v3286, %v3284
        %v3473 = vpack.c.b16 %v3287, %v3285
        %v3474 = vpack.c.b16 %v3290, %v3288
        %v3475 = vpack.c.b16 %v3291, %v3289
        %v3476 = vpack.c.b16 %v3294, %v3292
        %v3477 = vpack.c.b16 %v3295, %v3293
        %v3478 = vpack.c.b16 %v3298, %v3296
        %v3479 = vpack.c.b16 %v3299, %v3297
        %v3480 = vpack.c.b16 %v3302, %v3300
        %v3481 = vpack.c.b16 %v3303, %v3301
        %v3482 = vpack.c.b16 %v3306, %v3304
        %v3483 = vpack.c.b16 %v3307, %v3305
        %v3484 = vpack.c.b16 %v3310, %v3308
        %v3485 = vpack.c.b16 %v3311, %v3309
        %v3486 = vpack.c.b16 %v3314, %v3312
        %v3487 = vpack.c.b16 %v3315, %v3313
        %v3488 = vpack.c.b16 %v3318, %v3316
        %v3489 = vpack.c.b16 %v3319, %v3317
        %v3490 = vpack.c.b16 %v3322, %v3320
        %v3491 = vpack.c.b16 %v3323, %v3321
        %v3492 = vpack.c.b16 %v3326, %v3324
        %v3493 = vpack.c.b16 %v3327, %v3325
        %v3494 = vpack.c.b16 %v3330, %v3328
        %v3495 = vpack.c.b16 %v3331, %v3329
        %v3496 = vpack.c.b16 %v3334, %v3332
        %v3497 = vpack.c.b16 %v3335, %v3333
        %v3498 = vpack.c.b16 %v3338, %v3336
        %v3499 = vpack.c.b16 %v3339, %v3337
        %v3500 = vpack.c.b16 %v3342, %v3340
        %v3501 = vpack.c.b16 %v3343, %v3341
        %v3502 = vpack.c.b16 %v3346, %v3344
        %v3503 = vpack.c.b16 %v3347, %v3345
        %v3504 = vpack.c.b16 %v3350, %v3348
        %v3505 = vpack.c.b16 %v3351, %v3349
        %v3506 = vpack.c.b16 %v3354, %v3352
        %v3507 = vpack.c.b16 %v3355, %v3353
        %v3508 = vpack.c.b16 %v3358, %v3356
        %v3509 = vpack.c.b16 %v3359, %v3357
        %v3510 = vpack.c.b16 %v3362, %v3360
        %v3511 = vpack.c.b16 %v3363, %v3361
        %v3512 = vpack.c.b16 %v3366, %v3364
        %v3513 = vpack.c.b16 %v3367, %v3365
        %v3514 = vpack.c.b16 %v3370, %v3368
        %v3515 = vpack.c.b16 %v3371, %v3369
        %v3516 = vpack.c.b16 %v3374, %v3372
        %v3517 = vpack.c.b16 %v3375, %v3373
        %v3518 = vpack.c.b16 %v3378, %v3376
        %v3519 = vpack.c.b16 %v3379, %v3377
        %v3520 = vpack.c.b16 %v3382, %v3380
        %v3521 = vpack.c.b16 %v3383, %v3381
        %v3522 = vpack.c.b16 %v3386, %v3384
        %v3523 = vpack.c.b16 %v3387, %v3385
        %v3524 = vpack.c.b16 %v3390, %v3388
        %v3525 = vpack.c.b16 %v3391, %v3389
        %v3526 = vpack.c.b16 %v3394, %v3392
        %v3527 = vpack.c.b16 %v3395, %v3393
        %v3528 = vpack.c.b16 %v3398, %v3396
        %v3529 = vpack.c.b16 %v3399, %v3397
        %v3530 = vpack.c.b16 %v3402, %v3400
        %v3531 = vpack.c.b16 %v3403, %v3401
        %3660 = vmatprep.subr.bf16.mxu0 %v3405
        %3661 = vmatpush1.bf16.msra.mxu0 %v3404
        %3662 = vmatprep.subr.bf16.mxu0 %v3407
        %3663 = vmatpush1.bf16.msra.mxu0 %v3406
        %3664 = vmatprep.subr.bf16.mxu0 %v3409
        %3665 = vmatpush1.bf16.msra.mxu0 %v3408
        %3666 = vmatprep.subr.bf16.mxu0 %v3411
        %3667 = vmatpush1.bf16.msra.mxu0 %v3410
        %3668 = vmatprep.subr.bf16.mxu0 %v3413
        %3669 = vmatpush1.bf16.msra.mxu0 %v3412
        %3670 = vmatprep.subr.bf16.mxu0 %v3415
        %3671 = vmatpush1.bf16.msra.mxu0 %v3414
        %3672 = vmatprep.subr.bf16.mxu0 %v3417
        %3673 = vmatpush1.bf16.msra.mxu0 %v3416
        %3674 = vmatprep.subr.bf16.mxu0 %v3419
        %3675 = vmatpush1.bf16.msra.mxu0 %v3418
        %3676 = vmatprep.subr.bf16.mxu0 %v3421
        %3677 = vmatpush1.bf16.msra.mxu0 %v3420
        %3678 = vmatprep.subr.bf16.mxu0 %v3423
        %3679 = vmatpush1.bf16.msra.mxu0 %v3422
        %3680 = vmatprep.subr.bf16.mxu0 %v3425
        %3681 = vmatpush1.bf16.msra.mxu0 %v3424
        %3682 = vmatprep.subr.bf16.mxu0 %v3427
        %3683 = vmatpush1.bf16.msra.mxu0 %v3426
        %3684 = vmatprep.subr.bf16.mxu0 %v3429
        %3685 = vmatpush1.bf16.msra.mxu0 %v3428
        %3686 = vmatprep.subr.bf16.mxu0 %v3431
        %3687 = vmatpush1.bf16.msra.mxu0 %v3430
        %3688 = vmatprep.subr.bf16.mxu0 %v3433
        %3689 = vmatpush1.bf16.msra.mxu0 %v3432
        %3690 = vmatprep.subr.bf16.mxu0 %v3435
        %3691 = vmatpush1.bf16.msra.mxu0 %v3434
        %3692 = vmatprep.mubr.bf16.mxu0 %v2873
        %3693 = vmatmul.mubr.bf16.gmra.mrb[0].mxu0 %v2872
        %v3694 = vpop.f32.mrb[0].mxu0
        %v3695 = vadd.f32 %v3013, %v3694
        %v3696 = vpop.f32.mrb[0].mxu0
        %v3697 = vadd.f32 %v3017, %v3696
        %v3698 = vpop.f32.mrb[0].mxu0
        %v3699 = vadd.f32 %v3013, %v3698
        %v3700 = vpop.f32.mrb[0].mxu0
        %v3701 = vadd.f32 %v3017, %v3700
        %3702 = vdwg.mxu0
        %3703 = vmatprep.subr.bf16.mxu0 %v3437
        %3704 = vmatpush1.bf16.msra.mxu0 %v3436
        %3705 = vmatprep.subr.bf16.mxu0 %v3439
        %3706 = vmatpush1.bf16.msra.mxu0 %v3438
        %3707 = vmatprep.subr.bf16.mxu0 %v3441
        %3708 = vmatpush1.bf16.msra.mxu0 %v3440
        %3709 = vmatprep.subr.bf16.mxu0 %v3443
        %3710 = vmatpush1.bf16.msra.mxu0 %v3442
        %3711 = vmatprep.subr.bf16.mxu0 %v3445
        %3712 = vmatpush1.bf16.msra.mxu0 %v3444
        %3713 = vmatprep.subr.bf16.mxu0 %v3447
        %3714 = vmatpush1.bf16.msra.mxu0 %v3446
        %3715 = vmatprep.subr.bf16.mxu0 %v3449
        %3716 = vmatpush1.bf16.msra.mxu0 %v3448
        %3717 = vmatprep.subr.bf16.mxu0 %v3451
        %3718 = vmatpush1.bf16.msra.mxu0 %v3450
        %3719 = vmatprep.subr.bf16.mxu0 %v3453
        %3720 = vmatpush1.bf16.msra.mxu0 %v3452
        %3721 = vmatprep.subr.bf16.mxu0 %v3455
        %3722 = vmatpush1.bf16.msra.mxu0 %v3454
        %3723 = vmatprep.subr.bf16.mxu0 %v3457
        %3724 = vmatpush1.bf16.msra.mxu0 %v3456
        %3725 = vmatprep.subr.bf16.mxu0 %v3459
        %3726 = vmatpush1.bf16.msra.mxu0 %v3458
        %3727 = vmatprep.subr.bf16.mxu0 %v3461
        %3728 = vmatpush1.bf16.msra.mxu0 %v3460
        %3729 = vmatprep.subr.bf16.mxu0 %v3463
        %3730 = vmatpush1.bf16.msra.mxu0 %v3462
        %3731 = vmatprep.subr.bf16.mxu0 %v3465
        %3732 = vmatpush1.bf16.msra.mxu0 %v3464
        %3733 = vmatprep.subr.bf16.mxu0 %v3467
        %3734 = vmatpush1.bf16.msra.mxu0 %v3466
        %3735 = vmatprep.mubr.bf16.mxu0 %v2875
        %3736 = vmatmul.mubr.bf16.gmra.mrb[0].mxu0 %v2874
        %v3737 = vpop.f32.mrb[0].mxu0
        %v3738 = vadd.f32 %v3695, %v3737
        %v3739 = vpop.f32.mrb[0].mxu0
        %v3740 = vadd.f32 %v3697, %v3739
        %v3741 = vpop.f32.mrb[0].mxu0
        %v3742 = vadd.f32 %v3699, %v3741
        %v3743 = vpop.f32.mrb[0].mxu0
        %v3744 = vadd.f32 %v3701, %v3743
        %3745 = vdwg.mxu0
        %3746 = vmatprep.subr.bf16.mxu0 %v3469
        %3747 = vmatpush1.bf16.msra.mxu0 %v3468
        %3748 = vmatprep.subr.bf16.mxu0 %v3471
        %3749 = vmatpush1.bf16.msra.mxu0 %v3470
        %3750 = vmatprep.subr.bf16.mxu0 %v3473
        %3751 = vmatpush1.bf16.msra.mxu0 %v3472
        %3752 = vmatprep.subr.bf16.mxu0 %v3475
        %3753 = vmatpush1.bf16.msra.mxu0 %v3474
        %3754 = vmatprep.subr.bf16.mxu0 %v3477
        %3755 = vmatpush1.bf16.msra.mxu0 %v3476
        %3756 = vmatprep.subr.bf16.mxu0 %v3479
        %3757 = vmatpush1.bf16.msra.mxu0 %v3478
        %3758 = vmatprep.subr.bf16.mxu0 %v3481
        %3759 = vmatpush1.bf16.msra.mxu0 %v3480
        %3760 = vmatprep.subr.bf16.mxu0 %v3483
        %3761 = vmatpush1.bf16.msra.mxu0 %v3482
        %3762 = vmatprep.subr.bf16.mxu0 %v3485
        %3763 = vmatpush1.bf16.msra.mxu0 %v3484
        %3764 = vmatprep.subr.bf16.mxu0 %v3487
        %3765 = vmatpush1.bf16.msra.mxu0 %v3486
        %3766 = vmatprep.subr.bf16.mxu0 %v3489
        %3767 = vmatpush1.bf16.msra.mxu0 %v3488
        %3768 = vmatprep.subr.bf16.mxu0 %v3491
        %3769 = vmatpush1.bf16.msra.mxu0 %v3490
        %3770 = vmatprep.subr.bf16.mxu0 %v3493
        %3771 = vmatpush1.bf16.msra.mxu0 %v3492
        %3772 = vmatprep.subr.bf16.mxu0 %v3495
        %3773 = vmatpush1.bf16.msra.mxu0 %v3494
        %3774 = vmatprep.subr.bf16.mxu0 %v3497
        %3775 = vmatpush1.bf16.msra.mxu0 %v3496
        %3776 = vmatprep.subr.bf16.mxu0 %v3499
        %3777 = vmatpush1.bf16.msra.mxu0 %v3498
        %3778 = vmatprep.mubr.bf16.mxu0 %v2877
        %3779 = vmatmul.mubr.bf16.gmra.mrb[0].mxu0 %v2876
        %v3780 = vpop.f32.mrb[0].mxu0
        %v3781 = vadd.f32 %v3738, %v3780
        %v3782 = vpop.f32.mrb[0].mxu0
        %v3783 = vadd.f32 %v3740, %v3782
        %v3784 = vpop.f32.mrb[0].mxu0
        %v3785 = vadd.f32 %v3742, %v3784
        %v3786 = vpop.f32.mrb[0].mxu0
        %v3787 = vadd.f32 %v3744, %v3786
        %3788 = vdwg.mxu0
        %3789 = vmatprep.subr.bf16.mxu0 %v3501
        %3790 = vmatpush1.bf16.msra.mxu0 %v3500
        %3791 = vmatprep.subr.bf16.mxu0 %v3503
        %3792 = vmatpush1.bf16.msra.mxu0 %v3502
        %3793 = vmatprep.subr.bf16.mxu0 %v3505
        %3794 = vmatpush1.bf16.msra.mxu0 %v3504
        %3795 = vmatprep.subr.bf16.mxu0 %v3507
        %3796 = vmatpush1.bf16.msra.mxu0 %v3506
        %3797 = vmatprep.subr.bf16.mxu0 %v3509
        %3798 = vmatpush1.bf16.msra.mxu0 %v3508
        %3799 = vmatprep.subr.bf16.mxu0 %v3511
        %3800 = vmatpush1.bf16.msra.mxu0 %v3510
        %3801 = vmatprep.subr.bf16.mxu0 %v3513
        %3802 = vmatpush1.bf16.msra.mxu0 %v3512
        %3803 = vmatprep.subr.bf16.mxu0 %v3515
        %3804 = vmatpush1.bf16.msra.mxu0 %v3514
        %3805 = vmatprep.subr.bf16.mxu0 %v3517
        %3806 = vmatpush1.bf16.msra.mxu0 %v3516
        %3807 = vmatprep.subr.bf16.mxu0 %v3519
        %3808 = vmatpush1.bf16.msra.mxu0 %v3518
        %3809 = vmatprep.subr.bf16.mxu0 %v3521
        %3810 = vmatpush1.bf16.msra.mxu0 %v3520
        %3811 = vmatprep.subr.bf16.mxu0 %v3523
        %3812 = vmatpush1.bf16.msra.mxu0 %v3522
        %3813 = vmatprep.subr.bf16.mxu0 %v3525
        %3814 = vmatpush1.bf16.msra.mxu0 %v3524
        %3815 = vmatprep.subr.bf16.mxu0 %v3527
        %3816 = vmatpush1.bf16.msra.mxu0 %v3526
        %3817 = vmatprep.subr.bf16.mxu0 %v3529
        %3818 = vmatpush1.bf16.msra.mxu0 %v3528
        %3819 = vmatprep.subr.bf16.mxu0 %v3531
        %3820 = vmatpush1.bf16.msra.mxu0 %v3530
        %3821 = vmatprep.mubr.bf16.mxu0 %v2879
        %3822 = vmatmul.mubr.bf16.gmra.mrb[0].mxu0 %v2878
        %v3823 = vpop.f32.mrb[0].mxu0
        %v3824 = vadd.f32 %v3781, %v3823
        %v3825 = vpop.f32.mrb[0].mxu0
        %v3826 = vadd.f32 %v3783, %v3825
        %v3827 = vpop.f32.mrb[0].mxu0
        %v3828 = vadd.f32 %v3785, %v3827
        %v3829 = vpop.f32.mrb[0].mxu0
        %v3830 = vadd.f32 %v3787, %v3829
        %3831 = vdwg.mxu0
        %v3832 = vadd.f32 %v1868, %v3824
        %v3833 = vadd.f32 %v1869, %v3826
        %v3834 = vadd.f32 %v1870, %v3828
        %v3835 = vadd.f32 %v1871, %v3830
        %v3836 = vld [vmem:[%s11] sm:$0x3]
        %v3837 = vld [vmem:[%s12] sm:$0x3]
        %v3838 = vadd.f32 %v3832, %v3833
        %3839 = vadd.xlane.f32.xlu0 %v3838
        %v3840 = vpop.xlane.xlu0 %3839
        %v3841 = vadd.f32 %v3834, %v3835
        %3842 = vadd.xlane.f32.xlu0 %v3841
        %v3843 = vpop.xlane.xlu0 %3842
        %v3844 = vmul.f32 %v3840, %v1815
        %v3845 = vmul.f32 %v3843, %v1815
        %v3846 = vsub.f32 %v3832, %v3844
        %v3847 = vsub.f32 %v3833, %v3844
        %v3848 = vsub.f32 %v3834, %v3845
        %v3849 = vsub.f32 %v3835, %v3845
        %v3850 = vmul.f32 %v3846, %v3846
        %v3851 = vmul.f32 %v3847, %v3847
        %v3852 = vmul.f32 %v3848, %v3848
        %v3853 = vmul.f32 %v3849, %v3849
        %v3854 = vadd.f32 %v3850, %v3851
        %3855 = vadd.xlane.f32.xlu0 %v3854
        %v3856 = vpop.xlane.xlu0 %3855
        %v3857 = vadd.f32 %v3852, %v3853
        %3858 = vadd.xlane.f32.xlu0 %v3857
        %v3859 = vpop.xlane.xlu0 %3858
        %v3860 = vmul.f32 %v3856, %v1815
        %v3861 = vmul.f32 %v3859, %v1815
        %v3862 = vadd.f32 %v3860, 1e-05
        %v3863 = vadd.f32 %v3861, 1e-05
        %v3864 = vrsqrt.pop %v3862
        %v3865 = vrsqrt.pop %v3863
        %v3866 = vmul.f32 %v3846, %v3864
        %v3867 = vmul.f32 %v3847, %v3864
        %v3868 = vmul.f32 %v3848, %v3865
        %v3869 = vmul.f32 %v3849, %v3865
        %v3871 = vlaneseq
        %v3872 = vshrl.u32 %v3871, 7
        %v3873 = vsub.s32 0, %v3872
        %v3874 = vrot.slane %v3836, %v3873
        %v3875 = vlaneseq
        %v3876 = vshrl.u32 %v3875, 7
        %v3877 = vsub.s32 1, %v3876
        %v3878 = vrot.slane %v3836, %v3877
        %v3881 = vmul.f32 %v3866, %v3874
        %v3882 = vmul.f32 %v3867, %v3878
        %v3883 = vmul.f32 %v3868, %v3874
        %v3884 = vmul.f32 %v3869, %v3878
        %v3886 = vlaneseq
        %v3887 = vshrl.u32 %v3886, 7
        %v3888 = vsub.s32 0, %v3887
        %v3889 = vrot.slane %v3837, %v3888
        %v3890 = vlaneseq
        %v3891 = vshrl.u32 %v3890, 7
        %v3892 = vsub.s32 1, %v3891
        %v3893 = vrot.slane %v3837, %v3892
        %v3896 = vadd.f32 %v3881, %v3889
        %v3897 = vadd.f32 %v3882, %v3893
        %v3898 = vadd.f32 %v3883, %v3889
        %v3899 = vadd.f32 %v3884, %v3893
        %v3900 = vpack.c.bf16 %v3898, %v3896
        %v3901 = vpack.c.bf16 %v3899, %v3897
        %v3904 = vunpack.c.l.b16 %v3900
        %v3905 = vunpack.c.l.b16 %v3901
        %v3906 = vunpack.c.h.b16 %v3900
        %v3907 = vunpack.c.h.b16 %v3901
        %v3908 = vpack.c.b16 %v3905, %v3904
        %v3909 = vpack.c.b16 %v3907, %v3906
        %3912 = vst [vmem:[%s529] sm:$0xff] %v3908
        %3913 = vst [vmem:[%s529 + $0x8] sm:$0xff] %v3909
        %s3914 = sand.u32 %s319, 1
        %s3915 = scalar_lea.sflag [#allocation4], %s3914
        %s3916 = sand.u32 %s319, 1
        %s3917 = smul.addr %s3916, 16
        %s3918 = scalar_lea.vmem [#allocation13], %s3917
        // Predicated region
        $region97: #{tpu_custom_call.1} parent=71 // pred_check
          %p3919 = pneg %p329
        $region98: #{tpu_custom_call.1} parent=71 // pred_check_branch
          %3921 = sbr.rel (%p3919) target = $region100
        $region99: #{tpu_custom_call.1} parent=71 // pred_region
          %s3923 = ssub.s32 256, 256
          %3924 = vsyncadd %s3915, %s3923
          %s3925 = smul.addr %s33, 4
          %s3926 = smul.addr %s3925, 64
          %s3927 = scalar_lea.hbm %s13, %s3926
          %s3928 = sshll.u32 %s3918, 4
          %s3929 = int_to_ptr.vmem [resolvable:$true] %s3928
          %3934 = dma.vmem_to_hbm [thread:$0]  %s3929, 256, %s3927, %s3915, 128, 128, 8
        $region100: #{tpu_custom_call.1} parent=71 // pred_fallthru
          _
      $region72: #{tpu_custom_call.1} parent=5 // pred_fallthru
        _
      %p3935 = scmp.le.s32.totalorder 2, %s28
      // Predicated region
      $region101: #{tpu_custom_call.1} parent=5 // pred_check
        %p3936 = pneg %p3935
      $region102: #{tpu_custom_call.1} parent=5 // pred_check_branch
        %3938 = sbr.rel (%p3936) target = $region104
      $region103: #{tpu_custom_call.1} parent=5 // pred_region
        %s3939 = ssub.s32 %s28, 2
        // Predicated region
        $region105: #{tpu_custom_call.1} parent=103 // pred_check
          %p3940 = pneg %p335
        $region106: #{tpu_custom_call.1} parent=103 // pred_check_branch
          %3942 = sbr.rel (%p3940) target = $region108
        $region107: #{tpu_custom_call.1} parent=103 // pred_region
          %s3943 = sand.u32 %s320, 1
          %s3944 = scalar_lea.sflag [#allocation4], %s3943
          %s3945 = sand.u32 %s320, 1
          %s3946 = smul.addr %s3945, 16
          %s3947 = scalar_lea.vmem [#allocation13], %s3946
          %3948 = dma.done %s3944, 256
        $region108: #{tpu_custom_call.1} parent=103 // pred_fallthru
          _
      $region104: #{tpu_custom_call.1} parent=5 // pred_fallthru
        _
    $region6: #{tpu_custom_call.1} parent=1 // loop_footer
      %s32 = sadd.s32 1, %s28
    $region7: #{tpu_custom_call.1} parent=1 // loop_footer_branch
      %27 = sbr.rel target = $region3
    $region8: #{tpu_custom_call.1} parent=1 // loop_exit
      _
    %3949 = vsyncpa [#allocation3], 1
    %s3950 = scalar_lea.sflag [#allocation3], 1
    %3951 = vsyncpa %s3950, 1
    %3952 = vsyncpa [#allocation6], 1
    %3953 = vsyncpa [#allocation9], 1
    %3954 = vsyncpa [#allocation12], 1
    %3955 = vsyncpa [#allocation4], 1
    %s3956 = scalar_lea.sflag [#allocation4], 1
    %3957 = vsyncpa %s3956, 1

</llo_original>
